<compile_context>
chip_gen: v7x
topology: tpu7x:2x2x1
jax: 0.10.0
libtpu: 0.0.40
codegen_flags: <defaults>
</compile_context>

<pallas_src>
import math
import numpy as np
import jax
import jax.numpy as jnp
from jax.experimental import pallas as pl
from jax.experimental.pallas import tpu as pltpu

d_k = d_v = 64
d_model = 768
n_heads = 8
LN_EPS = 1e-5
_HDK = n_heads * d_k          # 512


def _vmem_limit_bytes():
    """Generation-aware scoped VMEM limit (review item)."""
    try:
        cap = int(getattr(pltpu.get_tpu_info(), "vmem_capacity_bytes",
                          64 * 1024 * 1024))
    except Exception:
        cap = 64 * 1024 * 1024
    if cap <= 64 * 1024 * 1024:          # v7x: 64 MiB physical per TensorCore
        return 44 * 1024 * 1024
    return 100 * 1024 * 1024             # v5e / v6e: 128 MiB physical


# ----------------------------------------------------------------------------
# Fused MHA kernel, grid = (B,).  Per grid step (one batch row):
#   x block      : [1, S, 768] f32   (activation row; also the residual)
#   key bias     : [1, 1, S]   f32   (additive pad mask, -1e9 on padded keys)
#   W_qkv, b_qkv : resident          (Q columns pre-scaled by 1/sqrt(d_k))
#   W_O, b_O     : resident
#   gamma, beta  : resident
# Outputs:
#   out  : [1, S, 768] (LayerNorm(residual + W_O(context)))
#   attn : [1, H, S, S] bf16 (optional)
# ----------------------------------------------------------------------------
def _make_fused_mha_kernel(return_attn):
    def kernel(x_ref, kbias_ref, wqkv_ref, bqkv_ref, wo_ref, bo_ref,
               g_ref, beta_ref, *out_refs):
        if return_attn:
            out_ref, attn_ref = out_refs
        else:
            (out_ref,) = out_refs

        x_f32 = x_ref[0]                                  # [S, 768] f32 (residual)
        x_bf = x_f32.astype(jnp.bfloat16)

        # Fused Q|K|V projection (single 768x1536 matmul, f32 accumulation).
        qkv = (jnp.dot(x_bf, wqkv_ref[...], preferred_element_type=jnp.float32)
               + bqkv_ref[...]).astype(jnp.bfloat16)      # [S, 1536] bf16

        kbias = kbias_ref[0]                              # [1, S] f32, broadcast-added

        ctx_parts = []
        for h in range(n_heads):                          # static unroll over heads
            q = qkv[:, h * d_k:(h + 1) * d_k]                                 # [S, dk]
            k = qkv[:, _HDK + h * d_k:_HDK + (h + 1) * d_k]                   # [S, dk]
            v = qkv[:, 2 * _HDK + h * d_v:2 * _HDK + (h + 1) * d_v]           # [S, dv]

            # q @ k.T (scale already folded into q), f32 accumulation on MXU.
            scores = jax.lax.dot_general(
                q, k, (((1,), (1,)), ((), ())),
                preferred_element_type=jnp.float32) + kbias                   # [S, S]

            s_max = jnp.max(scores, axis=-1, keepdims=True)
            e = jnp.exp(scores - s_max)
            denom = jnp.sum(e, axis=-1, keepdims=True)
            if return_attn:
                p = e / denom                              # exact: probs are returned
            else:
                p = e * pl.reciprocal(denom, approx=True)  # EUP slot, off the VPU path

            ctx_parts.append(
                jnp.dot(p.astype(jnp.bfloat16), v,
                        preferred_element_type=jnp.float32).astype(jnp.bfloat16))

            if return_attn:
                attn_ref[0, h] = p.astype(attn_ref.dtype)  # bf16 writeback

        ctx = jnp.concatenate(ctx_parts, axis=-1)          # [S, 512] bf16

        # Output projection + residual + LayerNorm (statistics in f32).
        y = (jnp.dot(ctx, wo_ref[...], preferred_element_type=jnp.float32)
             + bo_ref[...]) + x_f32
        mean = jnp.mean(y, axis=-1, keepdims=True)
        var = jnp.mean((y - mean) ** 2, axis=-1, keepdims=True)
        y_hat = (y - mean) * jax.lax.rsqrt(var + LN_EPS)
        out_ref[0] = (y_hat * g_ref[...] + beta_ref[...]).astype(out_ref.dtype)

    return kernel


def fused_self_attention(x, key_bias, w_qkv, b_qkv, w_o, b_o, ln_g, ln_b,
                         return_attn, out_dtype=jnp.float32):
    B, S, _ = x.shape
    out_shape = jax.ShapeDtypeStruct((B, S, d_model), out_dtype)
    out_spec = pl.BlockSpec((1, S, d_model), lambda b: (b, 0, 0))
    if return_attn:
        # TODO(synk): for S >= 1024 on v7x, tile heads onto a second grid axis so
        # this (1,H,S,S) block + double buffering stays inside 64 MiB VMEM.
        out_shapes = (out_shape,
                      jax.ShapeDtypeStruct((B, n_heads, S, S), jnp.bfloat16))
        out_specs = (out_spec,
                     pl.BlockSpec((1, n_heads, S, S), lambda b: (b, 0, 0, 0)))
    else:
        out_shapes = out_shape
        out_specs = out_spec

    res = pl.pallas_call(
        _make_fused_mha_kernel(return_attn),
        out_shape=out_shapes,
        grid=(B,),
        in_specs=[
            pl.BlockSpec((1, S, d_model), lambda b: (b, 0, 0)),     # x (+ residual)
            pl.BlockSpec((1, 1, S), lambda b: (b, 0, 0)),           # additive key mask
            pl.BlockSpec((d_model, 3 * _HDK), lambda b: (0, 0)),    # W_qkv, resident
            pl.BlockSpec((1, 3 * _HDK), lambda b: (0, 0)),          # b_qkv
            pl.BlockSpec((_HDK, d_model), lambda b: (0, 0)),        # W_O, resident
            pl.BlockSpec((1, d_model), lambda b: (0, 0)),           # b_O
            pl.BlockSpec((1, d_model), lambda b: (0, 0)),           # LN gamma
            pl.BlockSpec((1, d_model), lambda b: (0, 0)),           # LN beta
        ],
        out_specs=out_specs,
        compiler_params=pltpu.CompilerParams(
            dimension_semantics=("parallel",),
            vmem_limit_bytes=_vmem_limit_bytes(),
        ),
    )(x, key_bias, w_qkv, b_qkv, w_o, b_o, ln_g, ln_b)

    if return_attn:
        return res[0], res[1]
    return res, None


# ----------------------------------------------------------------------------
# Full MultiHeadAttention forward (BERT encoder self-attention: Q = K = V).
# ----------------------------------------------------------------------------
def multi_head_attention(Q, K, V, attn_mask, params, return_attn=True,
                         out_dtype=jnp.float32):
    """Q, K, V: [B, S, d_model] f32 (must be the same activations — BERT only
    ever calls self-attention).  attn_mask: [B, S] key pad mask or [B, S, S]
    pad mask (True == masked key)."""
    if (K is not Q) or (V is not Q):
        # TODO(synk): cross-attention (distinct K/V) is never used by BERT and
        # is not kernelized here.
        raise NotImplementedError("Only self-attention (Q is K is V) is kernelized.")

    B, S, _ = Q.shape

    # Fused QKV weight/bias; 1/sqrt(d_k) folded into the Q columns.
    scale = 1.0 / math.sqrt(d_k)
    w_qkv = jnp.concatenate(
        [params["w_q"] * scale, params["w_k"], params["w_v"]], axis=1
    ).astype(jnp.bfloat16)                                        # [768, 1536]
    b_qkv = jnp.concatenate(
        [params["b_q"] * scale, params["b_k"], params["b_v"]], axis=0
    ).astype(jnp.float32).reshape(1, 3 * _HDK)

    # BERT's pad mask depends only on the key position -> keep a [B, S] vector.
    key_mask = attn_mask[:, 0, :] if attn_mask.ndim == 3 else attn_mask
    key_bias = jnp.where(key_mask, jnp.float32(-1e9),
                         jnp.float32(0.0)).reshape(B, 1, S)

    out, attn = fused_self_attention(
        Q.astype(jnp.float32), key_bias, w_qkv, b_qkv,
        params["w_o"].astype(jnp.bfloat16),
        params["b_o"].astype(jnp.float32).reshape(1, d_model),
        params["ln_g"].reshape(1, d_model),
        params["ln_b"].reshape(1, d_model),
        return_attn, out_dtype)
    return out, attn


def init_params(key):
    ks = jax.random.split(key, 8)

    def lin(kw, kb, din, dout):
        bound = 1.0 / math.sqrt(din)
        w = jax.random.uniform(kw, (din, dout), jnp.float32, -bound, bound)
        b = jax.random.uniform(kb, (dout,), jnp.float32, -bound, bound)
        return w, b

    w_q, b_q = lin(ks[0], ks[1], d_model, d_k * n_heads)
    w_k, b_k = lin(ks[2], ks[3], d_model, d_k * n_heads)
    w_v, b_v = lin(ks[4], ks[5], d_model, d_v * n_heads)
    w_o, b_o = lin(ks[6], ks[7], n_heads * d_v, d_model)
    return dict(
        w_q=w_q, b_q=b_q, w_k=w_k, b_k=b_k, w_v=w_v, b_v=b_v,
        w_o=w_o, b_o=b_o,
        ln_g=jnp.ones((d_model,), jnp.float32),
        ln_b=jnp.zeros((d_model,), jnp.float32),
    )


# Pure-JAX f32 reference for a correctness check.
def reference_mha(Q, K, V, attn_mask, p):
    B, S, _ = Q.shape

    def proj(x, w, b, dh):
        return (x @ w + b).reshape(B, S, n_heads, dh).transpose(0, 2, 1, 3)

    q_s = proj(Q, p["w_q"], p["b_q"], d_k)
    k_s = proj(K, p["w_k"], p["b_k"], d_k)
    v_s = proj(V, p["w_v"], p["b_v"], d_v)
    scores = jnp.einsum("bhqd,bhkd->bhqk", q_s, k_s) / np.sqrt(d_k)
    scores = jnp.where(attn_mask[:, None, :, :], -1e9, scores)
    attn = jax.nn.softmax(scores, axis=-1)
    ctx = jnp.einsum("bhqk,bhkd->bhqd", attn, v_s)
    ctx = ctx.transpose(0, 2, 1, 3).reshape(B, S, n_heads * d_v)
    out = ctx @ p["w_o"] + p["b_o"] + Q
    mean = out.mean(-1, keepdims=True)
    var = ((out - mean) ** 2).mean(-1, keepdims=True)
    out = (out - mean) / jnp.sqrt(var + LN_EPS) * p["ln_g"] + p["ln_b"]
    return out, attn


if __name__ == "__main__":
    key = jax.random.PRNGKey(0)
    kp, kx = jax.random.split(key, 2)

    B, S = 2, 8
    params = init_params(kp)
    # BERT self-attention: Q = K = V = encoder activations.
    x = jax.random.normal(kx, (B, S, d_model), jnp.float32)
    # Pad-style mask: mask out the last 2 key positions (True == masked).
    attn_mask = jnp.zeros((B, S, S), dtype=bool).at[:, :, -2:].set(True)

    out, attn = multi_head_attention(x, x, x, attn_mask, params, return_attn=True)
    out = jax.block_until_ready(out)
    attn = jax.block_until_ready(attn)

    ref_out, ref_attn = reference_mha(x, x, x, attn_mask, params)
    assert out.shape == (B, S, d_model) and attn.shape == (B, n_heads, S, S)
    # bf16 matmuls / bf16 attn writeback -> loosened tolerances.
    assert np.allclose(np.asarray(out), np.asarray(ref_out), atol=5e-2, rtol=5e-2)
    assert np.allclose(np.asarray(attn, dtype=np.float32),
                       np.asarray(ref_attn), atol=1e-2, rtol=5e-2)

    # Fast path: no attention-probability writeback at all.
    out2, attn2 = multi_head_attention(x, x, x, attn_mask, params, return_attn=False)
    out2 = jax.block_until_ready(out2)
    assert attn2 is None
    assert np.allclose(np.asarray(out2), np.asarray(ref_out), atol=5e-2, rtol=5e-2)

    print("KERNEL_OK")
</pallas_src>

<mosaic_0001>
module attributes {stable_mosaic.version = 11 : i64} {
  func.func @kernel(%arg0: i32, %arg1: memref<1x8x768xf32, #tpu.memory_space<vmem>>, %arg2: memref<1x1x8xf32, #tpu.memory_space<vmem>>, %arg3: memref<768x1536xbf16, #tpu.memory_space<vmem>>, %arg4: memref<1x1536xf32, #tpu.memory_space<vmem>>, %arg5: memref<512x768xbf16, #tpu.memory_space<vmem>>, %arg6: memref<1x768xf32, #tpu.memory_space<vmem>>, %arg7: memref<1x768xf32, #tpu.memory_space<vmem>>, %arg8: memref<1x768xf32, #tpu.memory_space<vmem>>, %arg9: memref<1x8x768xf32, #tpu.memory_space<vmem>>, %arg10: memref<1x8x8x8xbf16, #tpu.memory_space<vmem>>) attributes {dimension_semantics = [#tpu.dimension_semantics<parallel>], iteration_bounds = array<i64: 2>, scalar_prefetch = 0 : i64, scratch_operands = 0 : i64, tpu.core_type = #tpu.core_type<tc>, window_params = [{transform_indices = @transform_0, window_bounds = array<i64: 1, 8, 768>}, {transform_indices = @transform_1, window_bounds = array<i64: 1, 1, 8>}, {pipeline_mode = #tpu.pipeline_mode<synchronous>, transform_indices = @transform_2, window_bounds = array<i64: 768, 1536>}, {pipeline_mode = #tpu.pipeline_mode<synchronous>, transform_indices = @transform_3, window_bounds = array<i64: 1, 1536>}, {pipeline_mode = #tpu.pipeline_mode<synchronous>, transform_indices = @transform_4, window_bounds = array<i64: 512, 768>}, {pipeline_mode = #tpu.pipeline_mode<synchronous>, transform_indices = @transform_5, window_bounds = array<i64: 1, 768>}, {pipeline_mode = #tpu.pipeline_mode<synchronous>, transform_indices = @transform_6, window_bounds = array<i64: 1, 768>}, {pipeline_mode = #tpu.pipeline_mode<synchronous>, transform_indices = @transform_7, window_bounds = array<i64: 1, 768>}, {transform_indices = @transform_8, window_bounds = array<i64: 1, 8, 768>}, {transform_indices = @transform_9, window_bounds = array<i64: 1, 8, 8, 8>}]} {
    %c0 = arith.constant 0 : index
    %c0_0 = arith.constant 0 : index
    %c0_1 = arith.constant 0 : index
    %0 = vector.load %arg1[%c0, %c0_0, %c0_1] : memref<1x8x768xf32, #tpu.memory_space<vmem>>, vector<1x8x768xf32>
    %1 = vector.shape_cast %0 : vector<1x8x768xf32> to vector<8x768xf32>
    %2 = arith.truncf %1 : vector<8x768xf32> to vector<8x768xbf16>
    %c0_2 = arith.constant 0 : index
    %c0_3 = arith.constant 0 : index
    %3 = vector.load %arg3[%c0_2, %c0_3] : memref<768x1536xbf16, #tpu.memory_space<vmem>>, vector<768x1536xbf16>
    %cst = arith.constant dense<0.000000e+00> : vector<8x1536xf32>
    %4 = tpu.matmul %2, %3, %cst {dimension_numbers = #tpu.dot_dimension_numbers<[1], [0], [0], [1], [0, 0, 1, 1], [], []>} : vector<8x768xbf16>, vector<768x1536xbf16>, vector<8x1536xf32> -> vector<8x1536xf32>
    %c0_4 = arith.constant 0 : index
    %c0_5 = arith.constant 0 : index
    %5 = vector.load %arg4[%c0_4, %c0_5] : memref<1x1536xf32, #tpu.memory_space<vmem>>, vector<1x1536xf32>
    %6 = vector.broadcast %5 : vector<1x1536xf32> to vector<8x1536xf32>
    %7 = arith.addf %4, %6 : vector<8x1536xf32>
    %8 = arith.truncf %7 : vector<8x1536xf32> to vector<8x1536xbf16>
    %c0_6 = arith.constant 0 : index
    %c0_7 = arith.constant 0 : index
    %c0_8 = arith.constant 0 : index
    %9 = vector.load %arg2[%c0_6, %c0_7, %c0_8] : memref<1x1x8xf32, #tpu.memory_space<vmem>>, vector<1x1x8xf32>
    %10 = vector.shape_cast %9 : vector<1x1x8xf32> to vector<1x8xf32>
    %11 = vector.extract_strided_slice %8 {offsets = [0, 0], sizes = [8, 64], strides = [1, 1]} : vector<8x1536xbf16> to vector<8x64xbf16>
    %12 = vector.extract_strided_slice %8 {offsets = [0, 512], sizes = [8, 64], strides = [1, 1]} : vector<8x1536xbf16> to vector<8x64xbf16>
    %13 = vector.extract_strided_slice %8 {offsets = [0, 1024], sizes = [8, 64], strides = [1, 1]} : vector<8x1536xbf16> to vector<8x64xbf16>
    %cst_9 = arith.constant dense<0.000000e+00> : vector<8x8xf32>
    %14 = tpu.matmul %11, %12, %cst_9 {dimension_numbers = #tpu.dot_dimension_numbers<[1], [1], [0], [0], [0, 0, 1, 0], [], []>} : vector<8x64xbf16>, vector<8x64xbf16>, vector<8x8xf32> -> vector<8x8xf32>
    %15 = vector.broadcast %10 : vector<1x8xf32> to vector<8x8xf32>
    %16 = arith.addf %14, %15 : vector<8x8xf32>
    %cst_10 = arith.constant dense<0xFF800000> : vector<8xf32>
    %17 = vector.multi_reduction <maximumf>, %16, %cst_10 [1] : vector<8x8xf32> to vector<8xf32>
    %18 = vector.shape_cast %17 : vector<8xf32> to vector<8x1xf32>
    %19 = vector.broadcast %18 : vector<8x1xf32> to vector<8x8xf32>
    %20 = arith.subf %16, %19 : vector<8x8xf32>
    %21 = math.exp %20 : vector<8x8xf32>
    %cst_11 = arith.constant dense<0.000000e+00> : vector<8xf32>
    %22 = vector.multi_reduction <add>, %21, %cst_11 [1] : vector<8x8xf32> to vector<8xf32>
    %23 = vector.shape_cast %22 : vector<8xf32> to vector<8x1xf32>
    %24 = vector.broadcast %23 : vector<8x1xf32> to vector<8x8xf32>
    %25 = arith.divf %21, %24 : vector<8x8xf32>
    %26 = arith.truncf %25 : vector<8x8xf32> to vector<8x8xbf16>
    %cst_12 = arith.constant dense<0.000000e+00> : vector<8x64xf32>
    %27 = tpu.matmul %26, %13, %cst_12 {dimension_numbers = #tpu.dot_dimension_numbers<[1], [0], [0], [1], [0, 0, 1, 1], [], []>} : vector<8x8xbf16>, vector<8x64xbf16>, vector<8x64xf32> -> vector<8x64xf32>
    %28 = arith.truncf %27 : vector<8x64xf32> to vector<8x64xbf16>
    %29 = arith.truncf %25 : vector<8x8xf32> to vector<8x8xbf16>
    %c0_13 = arith.constant 0 : index
    %c0_14 = arith.constant 0 : index
    %c0_15 = arith.constant 0 : index
    %c0_16 = arith.constant 0 : index
    %30 = vector.load %arg10[%c0_13, %c0_14, %c0_15, %c0_16] : memref<1x8x8x8xbf16, #tpu.memory_space<vmem>>, vector<1x1x8x8xbf16>
    %31 = vector.shape_cast %30 : vector<1x1x8x8xbf16> to vector<8x8xbf16>
    %32 = vector.shape_cast %29 : vector<8x8xbf16> to vector<1x1x8x8xbf16>
    tpu.vector_store %arg10[%c0_13, %c0_14, %c0_15, %c0_16], %32 {strides = array<i32>} : memref<1x8x8x8xbf16, #tpu.memory_space<vmem>>, vector<1x1x8x8xbf16>,
    %33 = vector.extract_strided_slice %8 {offsets = [0, 64], sizes = [8, 64], strides = [1, 1]} : vector<8x1536xbf16> to vector<8x64xbf16>
    %34 = vector.extract_strided_slice %8 {offsets = [0, 576], sizes = [8, 64], strides = [1, 1]} : vector<8x1536xbf16> to vector<8x64xbf16>
    %35 = vector.extract_strided_slice %8 {offsets = [0, 1088], sizes = [8, 64], strides = [1, 1]} : vector<8x1536xbf16> to vector<8x64xbf16>
    %cst_17 = arith.constant dense<0.000000e+00> : vector<8x8xf32>
    %36 = tpu.matmul %33, %34, %cst_17 {dimension_numbers = #tpu.dot_dimension_numbers<[1], [1], [0], [0], [0, 0, 1, 0], [], []>} : vector<8x64xbf16>, vector<8x64xbf16>, vector<8x8xf32> -> vector<8x8xf32>
    %37 = vector.broadcast %10 : vector<1x8xf32> to vector<8x8xf32>
    %38 = arith.addf %36, %37 : vector<8x8xf32>
    %cst_18 = arith.constant dense<0xFF800000> : vector<8xf32>
    %39 = vector.multi_reduction <maximumf>, %38, %cst_18 [1] : vector<8x8xf32> to vector<8xf32>
    %40 = vector.shape_cast %39 : vector<8xf32> to vector<8x1xf32>
    %41 = vector.broadcast %40 : vector<8x1xf32> to vector<8x8xf32>
    %42 = arith.subf %38, %41 : vector<8x8xf32>
    %43 = math.exp %42 : vector<8x8xf32>
    %cst_19 = arith.constant dense<0.000000e+00> : vector<8xf32>
    %44 = vector.multi_reduction <add>, %43, %cst_19 [1] : vector<8x8xf32> to vector<8xf32>
    %45 = vector.shape_cast %44 : vector<8xf32> to vector<8x1xf32>
    %46 = vector.broadcast %45 : vector<8x1xf32> to vector<8x8xf32>
    %47 = arith.divf %43, %46 : vector<8x8xf32>
    %48 = arith.truncf %47 : vector<8x8xf32> to vector<8x8xbf16>
    %cst_20 = arith.constant dense<0.000000e+00> : vector<8x64xf32>
    %49 = tpu.matmul %48, %35, %cst_20 {dimension_numbers = #tpu.dot_dimension_numbers<[1], [0], [0], [1], [0, 0, 1, 1], [], []>} : vector<8x8xbf16>, vector<8x64xbf16>, vector<8x64xf32> -> vector<8x64xf32>
    %50 = arith.truncf %49 : vector<8x64xf32> to vector<8x64xbf16>
    %51 = arith.truncf %47 : vector<8x8xf32> to vector<8x8xbf16>
    %c0_21 = arith.constant 0 : index
    %c1 = arith.constant 1 : index
    %c0_22 = arith.constant 0 : index
    %c0_23 = arith.constant 0 : index
    %52 = vector.load %arg10[%c0_21, %c1, %c0_22, %c0_23] : memref<1x8x8x8xbf16, #tpu.memory_space<vmem>>, vector<1x1x8x8xbf16>
    %53 = vector.shape_cast %52 : vector<1x1x8x8xbf16> to vector<8x8xbf16>
    %54 = vector.shape_cast %51 : vector<8x8xbf16> to vector<1x1x8x8xbf16>
    tpu.vector_store %arg10[%c0_21, %c1, %c0_22, %c0_23], %54 {strides = array<i32>} : memref<1x8x8x8xbf16, #tpu.memory_space<vmem>>, vector<1x1x8x8xbf16>,
    %55 = vector.extract_strided_slice %8 {offsets = [0, 128], sizes = [8, 64], strides = [1, 1]} : vector<8x1536xbf16> to vector<8x64xbf16>
    %56 = vector.extract_strided_slice %8 {offsets = [0, 640], sizes = [8, 64], strides = [1, 1]} : vector<8x1536xbf16> to vector<8x64xbf16>
    %57 = vector.extract_strided_slice %8 {offsets = [0, 1152], sizes = [8, 64], strides = [1, 1]} : vector<8x1536xbf16> to vector<8x64xbf16>
    %cst_24 = arith.constant dense<0.000000e+00> : vector<8x8xf32>
    %58 = tpu.matmul %55, %56, %cst_24 {dimension_numbers = #tpu.dot_dimension_numbers<[1], [1], [0], [0], [0, 0, 1, 0], [], []>} : vector<8x64xbf16>, vector<8x64xbf16>, vector<8x8xf32> -> vector<8x8xf32>
    %59 = vector.broadcast %10 : vector<1x8xf32> to vector<8x8xf32>
    %60 = arith.addf %58, %59 : vector<8x8xf32>
    %cst_25 = arith.constant dense<0xFF800000> : vector<8xf32>
    %61 = vector.multi_reduction <maximumf>, %60, %cst_25 [1] : vector<8x8xf32> to vector<8xf32>
    %62 = vector.shape_cast %61 : vector<8xf32> to vector<8x1xf32>
    %63 = vector.broadcast %62 : vector<8x1xf32> to vector<8x8xf32>
    %64 = arith.subf %60, %63 : vector<8x8xf32>
    %65 = math.exp %64 : vector<8x8xf32>
    %cst_26 = arith.constant dense<0.000000e+00> : vector<8xf32>
    %66 = vector.multi_reduction <add>, %65, %cst_26 [1] : vector<8x8xf32> to vector<8xf32>
    %67 = vector.shape_cast %66 : vector<8xf32> to vector<8x1xf32>
    %68 = vector.broadcast %67 : vector<8x1xf32> to vector<8x8xf32>
    %69 = arith.divf %65, %68 : vector<8x8xf32>
    %70 = arith.truncf %69 : vector<8x8xf32> to vector<8x8xbf16>
    %cst_27 = arith.constant dense<0.000000e+00> : vector<8x64xf32>
    %71 = tpu.matmul %70, %57, %cst_27 {dimension_numbers = #tpu.dot_dimension_numbers<[1], [0], [0], [1], [0, 0, 1, 1], [], []>} : vector<8x8xbf16>, vector<8x64xbf16>, vector<8x64xf32> -> vector<8x64xf32>
    %72 = arith.truncf %71 : vector<8x64xf32> to vector<8x64xbf16>
    %73 = arith.truncf %69 : vector<8x8xf32> to vector<8x8xbf16>
    %c0_28 = arith.constant 0 : index
    %c2 = arith.constant 2 : index
    %c0_29 = arith.constant 0 : index
    %c0_30 = arith.constant 0 : index
    %74 = vector.load %arg10[%c0_28, %c2, %c0_29, %c0_30] : memref<1x8x8x8xbf16, #tpu.memory_space<vmem>>, vector<1x1x8x8xbf16>
    %75 = vector.shape_cast %74 : vector<1x1x8x8xbf16> to vector<8x8xbf16>
    %76 = vector.shape_cast %73 : vector<8x8xbf16> to vector<1x1x8x8xbf16>
    tpu.vector_store %arg10[%c0_28, %c2, %c0_29, %c0_30], %76 {strides = array<i32>} : memref<1x8x8x8xbf16, #tpu.memory_space<vmem>>, vector<1x1x8x8xbf16>,
    %77 = vector.extract_strided_slice %8 {offsets = [0, 192], sizes = [8, 64], strides = [1, 1]} : vector<8x1536xbf16> to vector<8x64xbf16>
    %78 = vector.extract_strided_slice %8 {offsets = [0, 704], sizes = [8, 64], strides = [1, 1]} : vector<8x1536xbf16> to vector<8x64xbf16>
    %79 = vector.extract_strided_slice %8 {offsets = [0, 1216], sizes = [8, 64], strides = [1, 1]} : vector<8x1536xbf16> to vector<8x64xbf16>
    %cst_31 = arith.constant dense<0.000000e+00> : vector<8x8xf32>
    %80 = tpu.matmul %77, %78, %cst_31 {dimension_numbers = #tpu.dot_dimension_numbers<[1], [1], [0], [0], [0, 0, 1, 0], [], []>} : vector<8x64xbf16>, vector<8x64xbf16>, vector<8x8xf32> -> vector<8x8xf32>
    %81 = vector.broadcast %10 : vector<1x8xf32> to vector<8x8xf32>
    %82 = arith.addf %80, %81 : vector<8x8xf32>
    %cst_32 = arith.constant dense<0xFF800000> : vector<8xf32>
    %83 = vector.multi_reduction <maximumf>, %82, %cst_32 [1] : vector<8x8xf32> to vector<8xf32>
    %84 = vector.shape_cast %83 : vector<8xf32> to vector<8x1xf32>
    %85 = vector.broadcast %84 : vector<8x1xf32> to vector<8x8xf32>
    %86 = arith.subf %82, %85 : vector<8x8xf32>
    %87 = math.exp %86 : vector<8x8xf32>
    %cst_33 = arith.constant dense<0.000000e+00> : vector<8xf32>
    %88 = vector.multi_reduction <add>, %87, %cst_33 [1] : vector<8x8xf32> to vector<8xf32>
    %89 = vector.shape_cast %88 : vector<8xf32> to vector<8x1xf32>
    %90 = vector.broadcast %89 : vector<8x1xf32> to vector<8x8xf32>
    %91 = arith.divf %87, %90 : vector<8x8xf32>
    %92 = arith.truncf %91 : vector<8x8xf32> to vector<8x8xbf16>
    %cst_34 = arith.constant dense<0.000000e+00> : vector<8x64xf32>
    %93 = tpu.matmul %92, %79, %cst_34 {dimension_numbers = #tpu.dot_dimension_numbers<[1], [0], [0], [1], [0, 0, 1, 1], [], []>} : vector<8x8xbf16>, vector<8x64xbf16>, vector<8x64xf32> -> vector<8x64xf32>
    %94 = arith.truncf %93 : vector<8x64xf32> to vector<8x64xbf16>
    %95 = arith.truncf %91 : vector<8x8xf32> to vector<8x8xbf16>
    %c0_35 = arith.constant 0 : index
    %c3 = arith.constant 3 : index
    %c0_36 = arith.constant 0 : index
    %c0_37 = arith.constant 0 : index
    %96 = vector.load %arg10[%c0_35, %c3, %c0_36, %c0_37] : memref<1x8x8x8xbf16, #tpu.memory_space<vmem>>, vector<1x1x8x8xbf16>
    %97 = vector.shape_cast %96 : vector<1x1x8x8xbf16> to vector<8x8xbf16>
    %98 = vector.shape_cast %95 : vector<8x8xbf16> to vector<1x1x8x8xbf16>
    tpu.vector_store %arg10[%c0_35, %c3, %c0_36, %c0_37], %98 {strides = array<i32>} : memref<1x8x8x8xbf16, #tpu.memory_space<vmem>>, vector<1x1x8x8xbf16>,
    %99 = vector.extract_strided_slice %8 {offsets = [0, 256], sizes = [8, 64], strides = [1, 1]} : vector<8x1536xbf16> to vector<8x64xbf16>
    %100 = vector.extract_strided_slice %8 {offsets = [0, 768], sizes = [8, 64], strides = [1, 1]} : vector<8x1536xbf16> to vector<8x64xbf16>
    %101 = vector.extract_strided_slice %8 {offsets = [0, 1280], sizes = [8, 64], strides = [1, 1]} : vector<8x1536xbf16> to vector<8x64xbf16>
    %cst_38 = arith.constant dense<0.000000e+00> : vector<8x8xf32>
    %102 = tpu.matmul %99, %100, %cst_38 {dimension_numbers = #tpu.dot_dimension_numbers<[1], [1], [0], [0], [0, 0, 1, 0], [], []>} : vector<8x64xbf16>, vector<8x64xbf16>, vector<8x8xf32> -> vector<8x8xf32>
    %103 = vector.broadcast %10 : vector<1x8xf32> to vector<8x8xf32>
    %104 = arith.addf %102, %103 : vector<8x8xf32>
    %cst_39 = arith.constant dense<0xFF800000> : vector<8xf32>
    %105 = vector.multi_reduction <maximumf>, %104, %cst_39 [1] : vector<8x8xf32> to vector<8xf32>
    %106 = vector.shape_cast %105 : vector<8xf32> to vector<8x1xf32>
    %107 = vector.broadcast %106 : vector<8x1xf32> to vector<8x8xf32>
    %108 = arith.subf %104, %107 : vector<8x8xf32>
    %109 = math.exp %108 : vector<8x8xf32>
    %cst_40 = arith.constant dense<0.000000e+00> : vector<8xf32>
    %110 = vector.multi_reduction <add>, %109, %cst_40 [1] : vector<8x8xf32> to vector<8xf32>
    %111 = vector.shape_cast %110 : vector<8xf32> to vector<8x1xf32>
    %112 = vector.broadcast %111 : vector<8x1xf32> to vector<8x8xf32>
    %113 = arith.divf %109, %112 : vector<8x8xf32>
    %114 = arith.truncf %113 : vector<8x8xf32> to vector<8x8xbf16>
    %cst_41 = arith.constant dense<0.000000e+00> : vector<8x64xf32>
    %115 = tpu.matmul %114, %101, %cst_41 {dimension_numbers = #tpu.dot_dimension_numbers<[1], [0], [0], [1], [0, 0, 1, 1], [], []>} : vector<8x8xbf16>, vector<8x64xbf16>, vector<8x64xf32> -> vector<8x64xf32>
    %116 = arith.truncf %115 : vector<8x64xf32> to vector<8x64xbf16>
    %117 = arith.truncf %113 : vector<8x8xf32> to vector<8x8xbf16>
    %c0_42 = arith.constant 0 : index
    %c4 = arith.constant 4 : index
    %c0_43 = arith.constant 0 : index
    %c0_44 = arith.constant 0 : index
    %118 = vector.load %arg10[%c0_42, %c4, %c0_43, %c0_44] : memref<1x8x8x8xbf16, #tpu.memory_space<vmem>>, vector<1x1x8x8xbf16>
    %119 = vector.shape_cast %118 : vector<1x1x8x8xbf16> to vector<8x8xbf16>
    %120 = vector.shape_cast %117 : vector<8x8xbf16> to vector<1x1x8x8xbf16>
    tpu.vector_store %arg10[%c0_42, %c4, %c0_43, %c0_44], %120 {strides = array<i32>} : memref<1x8x8x8xbf16, #tpu.memory_space<vmem>>, vector<1x1x8x8xbf16>,
    %121 = vector.extract_strided_slice %8 {offsets = [0, 320], sizes = [8, 64], strides = [1, 1]} : vector<8x1536xbf16> to vector<8x64xbf16>
    %122 = vector.extract_strided_slice %8 {offsets = [0, 832], sizes = [8, 64], strides = [1, 1]} : vector<8x1536xbf16> to vector<8x64xbf16>
    %123 = vector.extract_strided_slice %8 {offsets = [0, 1344], sizes = [8, 64], strides = [1, 1]} : vector<8x1536xbf16> to vector<8x64xbf16>
    %cst_45 = arith.constant dense<0.000000e+00> : vector<8x8xf32>
    %124 = tpu.matmul %121, %122, %cst_45 {dimension_numbers = #tpu.dot_dimension_numbers<[1], [1], [0], [0], [0, 0, 1, 0], [], []>} : vector<8x64xbf16>, vector<8x64xbf16>, vector<8x8xf32> -> vector<8x8xf32>
    %125 = vector.broadcast %10 : vector<1x8xf32> to vector<8x8xf32>
    %126 = arith.addf %124, %125 : vector<8x8xf32>
    %cst_46 = arith.constant dense<0xFF800000> : vector<8xf32>
    %127 = vector.multi_reduction <maximumf>, %126, %cst_46 [1] : vector<8x8xf32> to vector<8xf32>
    %128 = vector.shape_cast %127 : vector<8xf32> to vector<8x1xf32>
    %129 = vector.broadcast %128 : vector<8x1xf32> to vector<8x8xf32>
    %130 = arith.subf %126, %129 : vector<8x8xf32>
    %131 = math.exp %130 : vector<8x8xf32>
    %cst_47 = arith.constant dense<0.000000e+00> : vector<8xf32>
    %132 = vector.multi_reduction <add>, %131, %cst_47 [1] : vector<8x8xf32> to vector<8xf32>
    %133 = vector.shape_cast %132 : vector<8xf32> to vector<8x1xf32>
    %134 = vector.broadcast %133 : vector<8x1xf32> to vector<8x8xf32>
    %135 = arith.divf %131, %134 : vector<8x8xf32>
    %136 = arith.truncf %135 : vector<8x8xf32> to vector<8x8xbf16>
    %cst_48 = arith.constant dense<0.000000e+00> : vector<8x64xf32>
    %137 = tpu.matmul %136, %123, %cst_48 {dimension_numbers = #tpu.dot_dimension_numbers<[1], [0], [0], [1], [0, 0, 1, 1], [], []>} : vector<8x8xbf16>, vector<8x64xbf16>, vector<8x64xf32> -> vector<8x64xf32>
    %138 = arith.truncf %137 : vector<8x64xf32> to vector<8x64xbf16>
    %139 = arith.truncf %135 : vector<8x8xf32> to vector<8x8xbf16>
    %c0_49 = arith.constant 0 : index
    %c5 = arith.constant 5 : index
    %c0_50 = arith.constant 0 : index
    %c0_51 = arith.constant 0 : index
    %140 = vector.load %arg10[%c0_49, %c5, %c0_50, %c0_51] : memref<1x8x8x8xbf16, #tpu.memory_space<vmem>>, vector<1x1x8x8xbf16>
    %141 = vector.shape_cast %140 : vector<1x1x8x8xbf16> to vector<8x8xbf16>
    %142 = vector.shape_cast %139 : vector<8x8xbf16> to vector<1x1x8x8xbf16>
    tpu.vector_store %arg10[%c0_49, %c5, %c0_50, %c0_51], %142 {strides = array<i32>} : memref<1x8x8x8xbf16, #tpu.memory_space<vmem>>, vector<1x1x8x8xbf16>,
    %143 = vector.extract_strided_slice %8 {offsets = [0, 384], sizes = [8, 64], strides = [1, 1]} : vector<8x1536xbf16> to vector<8x64xbf16>
    %144 = vector.extract_strided_slice %8 {offsets = [0, 896], sizes = [8, 64], strides = [1, 1]} : vector<8x1536xbf16> to vector<8x64xbf16>
    %145 = vector.extract_strided_slice %8 {offsets = [0, 1408], sizes = [8, 64], strides = [1, 1]} : vector<8x1536xbf16> to vector<8x64xbf16>
    %cst_52 = arith.constant dense<0.000000e+00> : vector<8x8xf32>
    %146 = tpu.matmul %143, %144, %cst_52 {dimension_numbers = #tpu.dot_dimension_numbers<[1], [1], [0], [0], [0, 0, 1, 0], [], []>} : vector<8x64xbf16>, vector<8x64xbf16>, vector<8x8xf32> -> vector<8x8xf32>
    %147 = vector.broadcast %10 : vector<1x8xf32> to vector<8x8xf32>
    %148 = arith.addf %146, %147 : vector<8x8xf32>
    %cst_53 = arith.constant dense<0xFF800000> : vector<8xf32>
    %149 = vector.multi_reduction <maximumf>, %148, %cst_53 [1] : vector<8x8xf32> to vector<8xf32>
    %150 = vector.shape_cast %149 : vector<8xf32> to vector<8x1xf32>
    %151 = vector.broadcast %150 : vector<8x1xf32> to vector<8x8xf32>
    %152 = arith.subf %148, %151 : vector<8x8xf32>
    %153 = math.exp %152 : vector<8x8xf32>
    %cst_54 = arith.constant dense<0.000000e+00> : vector<8xf32>
    %154 = vector.multi_reduction <add>, %153, %cst_54 [1] : vector<8x8xf32> to vector<8xf32>
    %155 = vector.shape_cast %154 : vector<8xf32> to vector<8x1xf32>
    %156 = vector.broadcast %155 : vector<8x1xf32> to vector<8x8xf32>
    %157 = arith.divf %153, %156 : vector<8x8xf32>
    %158 = arith.truncf %157 : vector<8x8xf32> to vector<8x8xbf16>
    %cst_55 = arith.constant dense<0.000000e+00> : vector<8x64xf32>
    %159 = tpu.matmul %158, %145, %cst_55 {dimension_numbers = #tpu.dot_dimension_numbers<[1], [0], [0], [1], [0, 0, 1, 1], [], []>} : vector<8x8xbf16>, vector<8x64xbf16>, vector<8x64xf32> -> vector<8x64xf32>
    %160 = arith.truncf %159 : vector<8x64xf32> to vector<8x64xbf16>
    %161 = arith.truncf %157 : vector<8x8xf32> to vector<8x8xbf16>
    %c0_56 = arith.constant 0 : index
    %c6 = arith.constant 6 : index
    %c0_57 = arith.constant 0 : index
    %c0_58 = arith.constant 0 : index
    %162 = vector.load %arg10[%c0_56, %c6, %c0_57, %c0_58] : memref<1x8x8x8xbf16, #tpu.memory_space<vmem>>, vector<1x1x8x8xbf16>
    %163 = vector.shape_cast %162 : vector<1x1x8x8xbf16> to vector<8x8xbf16>
    %164 = vector.shape_cast %161 : vector<8x8xbf16> to vector<1x1x8x8xbf16>
    tpu.vector_store %arg10[%c0_56, %c6, %c0_57, %c0_58], %164 {strides = array<i32>} : memref<1x8x8x8xbf16, #tpu.memory_space<vmem>>, vector<1x1x8x8xbf16>,
    %165 = vector.extract_strided_slice %8 {offsets = [0, 448], sizes = [8, 64], strides = [1, 1]} : vector<8x1536xbf16> to vector<8x64xbf16>
    %166 = vector.extract_strided_slice %8 {offsets = [0, 960], sizes = [8, 64], strides = [1, 1]} : vector<8x1536xbf16> to vector<8x64xbf16>
    %167 = vector.extract_strided_slice %8 {offsets = [0, 1472], sizes = [8, 64], strides = [1, 1]} : vector<8x1536xbf16> to vector<8x64xbf16>
    %cst_59 = arith.constant dense<0.000000e+00> : vector<8x8xf32>
    %168 = tpu.matmul %165, %166, %cst_59 {dimension_numbers = #tpu.dot_dimension_numbers<[1], [1], [0], [0], [0, 0, 1, 0], [], []>} : vector<8x64xbf16>, vector<8x64xbf16>, vector<8x8xf32> -> vector<8x8xf32>
    %169 = vector.broadcast %10 : vector<1x8xf32> to vector<8x8xf32>
    %170 = arith.addf %168, %169 : vector<8x8xf32>
    %cst_60 = arith.constant dense<0xFF800000> : vector<8xf32>
    %171 = vector.multi_reduction <maximumf>, %170, %cst_60 [1] : vector<8x8xf32> to vector<8xf32>
    %172 = vector.shape_cast %171 : vector<8xf32> to vector<8x1xf32>
    %173 = vector.broadcast %172 : vector<8x1xf32> to vector<8x8xf32>
    %174 = arith.subf %170, %173 : vector<8x8xf32>
    %175 = math.exp %174 : vector<8x8xf32>
    %cst_61 = arith.constant dense<0.000000e+00> : vector<8xf32>
    %176 = vector.multi_reduction <add>, %175, %cst_61 [1] : vector<8x8xf32> to vector<8xf32>
    %177 = vector.shape_cast %176 : vector<8xf32> to vector<8x1xf32>
    %178 = vector.broadcast %177 : vector<8x1xf32> to vector<8x8xf32>
    %179 = arith.divf %175, %178 : vector<8x8xf32>
    %180 = arith.truncf %179 : vector<8x8xf32> to vector<8x8xbf16>
    %cst_62 = arith.constant dense<0.000000e+00> : vector<8x64xf32>
    %181 = tpu.matmul %180, %167, %cst_62 {dimension_numbers = #tpu.dot_dimension_numbers<[1], [0], [0], [1], [0, 0, 1, 1], [], []>} : vector<8x8xbf16>, vector<8x64xbf16>, vector<8x64xf32> -> vector<8x64xf32>
    %182 = arith.truncf %181 : vector<8x64xf32> to vector<8x64xbf16>
    %183 = arith.truncf %179 : vector<8x8xf32> to vector<8x8xbf16>
    %c0_63 = arith.constant 0 : index
    %c7 = arith.constant 7 : index
    %c0_64 = arith.constant 0 : index
    %c0_65 = arith.constant 0 : index
    %184 = vector.load %arg10[%c0_63, %c7, %c0_64, %c0_65] : memref<1x8x8x8xbf16, #tpu.memory_space<vmem>>, vector<1x1x8x8xbf16>
    %185 = vector.shape_cast %184 : vector<1x1x8x8xbf16> to vector<8x8xbf16>
    %186 = vector.shape_cast %183 : vector<8x8xbf16> to vector<1x1x8x8xbf16>
    tpu.vector_store %arg10[%c0_63, %c7, %c0_64, %c0_65], %186 {strides = array<i32>} : memref<1x8x8x8xbf16, #tpu.memory_space<vmem>>, vector<1x1x8x8xbf16>,
    %187 = tpu.concatenate %28, %50, %72, %94, %116, %138, %160, %182 in 1 : vector<8x64xbf16>, vector<8x64xbf16>, vector<8x64xbf16>, vector<8x64xbf16>, vector<8x64xbf16>, vector<8x64xbf16>, vector<8x64xbf16>, vector<8x64xbf16> -> vector<8x512xbf16>
    %c0_66 = arith.constant 0 : index
    %c0_67 = arith.constant 0 : index
    %188 = vector.load %arg5[%c0_66, %c0_67] : memref<512x768xbf16, #tpu.memory_space<vmem>>, vector<512x768xbf16>
    %cst_68 = arith.constant dense<0.000000e+00> : vector<8x768xf32>
    %189 = tpu.matmul %187, %188, %cst_68 {dimension_numbers = #tpu.dot_dimension_numbers<[1], [0], [0], [1], [0, 0, 1, 1], [], []>} : vector<8x512xbf16>, vector<512x768xbf16>, vector<8x768xf32> -> vector<8x768xf32>
    %c0_69 = arith.constant 0 : index
    %c0_70 = arith.constant 0 : index
    %190 = vector.load %arg6[%c0_69, %c0_70] : memref<1x768xf32, #tpu.memory_space<vmem>>, vector<1x768xf32>
    %191 = vector.broadcast %190 : vector<1x768xf32> to vector<8x768xf32>
    %192 = arith.addf %189, %191 : vector<8x768xf32>
    %193 = arith.addf %192, %1 : vector<8x768xf32>
    %cst_71 = arith.constant dense<0.000000e+00> : vector<8xf32>
    %194 = vector.multi_reduction <add>, %193, %cst_71 [1] : vector<8x768xf32> to vector<8xf32>
    %195 = vector.shape_cast %194 : vector<8xf32> to vector<8x1xf32>
    %cst_72 = arith.constant 7.680000e+02 : f32
    %196 = vector.broadcast %cst_72 : f32 to vector<8x1xf32>
    %197 = arith.divf %195, %196 : vector<8x1xf32>
    %198 = vector.broadcast %197 : vector<8x1xf32> to vector<8x768xf32>
    %199 = arith.subf %193, %198 : vector<8x768xf32>
    %200 = arith.mulf %199, %199 : vector<8x768xf32>
    %cst_73 = arith.constant dense<0.000000e+00> : vector<8xf32>
    %201 = vector.multi_reduction <add>, %200, %cst_73 [1] : vector<8x768xf32> to vector<8xf32>
    %202 = vector.shape_cast %201 : vector<8xf32> to vector<8x1xf32>
    %cst_74 = arith.constant 7.680000e+02 : f32
    %203 = vector.broadcast %cst_74 : f32 to vector<8x1xf32>
    %204 = arith.divf %202, %203 : vector<8x1xf32>
    %205 = vector.broadcast %197 : vector<8x1xf32> to vector<8x768xf32>
    %206 = arith.subf %193, %205 : vector<8x768xf32>
    %cst_75 = arith.constant 9.99999974E-6 : f32
    %207 = vector.broadcast %cst_75 : f32 to vector<8x1xf32>
    %208 = arith.addf %204, %207 : vector<8x1xf32>
    %209 = math.rsqrt %208 : vector<8x1xf32>
    %210 = vector.broadcast %209 : vector<8x1xf32> to vector<8x768xf32>
    %211 = arith.mulf %206, %210 : vector<8x768xf32>
    %c0_76 = arith.constant 0 : index
    %c0_77 = arith.constant 0 : index
    %212 = vector.load %arg7[%c0_76, %c0_77] : memref<1x768xf32, #tpu.memory_space<vmem>>, vector<1x768xf32>
    %213 = vector.broadcast %212 : vector<1x768xf32> to vector<8x768xf32>
    %214 = arith.mulf %211, %213 : vector<8x768xf32>
    %c0_78 = arith.constant 0 : index
    %c0_79 = arith.constant 0 : index
    %215 = vector.load %arg8[%c0_78, %c0_79] : memref<1x768xf32, #tpu.memory_space<vmem>>, vector<1x768xf32>
    %216 = vector.broadcast %215 : vector<1x768xf32> to vector<8x768xf32>
    %217 = arith.addf %214, %216 : vector<8x768xf32>
    %c0_80 = arith.constant 0 : index
    %c0_81 = arith.constant 0 : index
    %c0_82 = arith.constant 0 : index
    %218 = vector.load %arg9[%c0_80, %c0_81, %c0_82] : memref<1x8x768xf32, #tpu.memory_space<vmem>>, vector<1x8x768xf32>
    %219 = vector.shape_cast %218 : vector<1x8x768xf32> to vector<8x768xf32>
    %220 = vector.shape_cast %217 : vector<8x768xf32> to vector<1x8x768xf32>
    tpu.vector_store %arg9[%c0_80, %c0_81, %c0_82], %220 {strides = array<i32>} : memref<1x8x768xf32, #tpu.memory_space<vmem>>, vector<1x8x768xf32>,
    return
  }
  func.func @transform_0(%arg0: i32) -> (i32, i32, i32) {
    %c0_i32 = arith.constant 0 : i32
    %c0_i32_0 = arith.constant 0 : i32
    %c0_i32_1 = arith.constant 0 : i32
    return %arg0, %c0_i32, %c0_i32_0 : i32, i32, i32
  }
  func.func @transform_1(%arg0: i32) -> (i32, i32, i32) {
    %c0_i32 = arith.constant 0 : i32
    %c0_i32_0 = arith.constant 0 : i32
    %c0_i32_1 = arith.constant 0 : i32
    return %arg0, %c0_i32, %c0_i32_0 : i32, i32, i32
  }
  func.func @transform_2(%arg0: i32) -> (i32, i32) {
    %c0_i32 = arith.constant 0 : i32
    %c0_i32_0 = arith.constant 0 : i32
    %c0_i32_1 = arith.constant 0 : i32
    return %c0_i32, %c0_i32_0 : i32, i32
  }
  func.func @transform_3(%arg0: i32) -> (i32, i32) {
    %c0_i32 = arith.constant 0 : i32
    %c0_i32_0 = arith.constant 0 : i32
    %c0_i32_1 = arith.constant 0 : i32
    return %c0_i32, %c0_i32_0 : i32, i32
  }
  func.func @transform_4(%arg0: i32) -> (i32, i32) {
    %c0_i32 = arith.constant 0 : i32
    %c0_i32_0 = arith.constant 0 : i32
    %c0_i32_1 = arith.constant 0 : i32
    return %c0_i32, %c0_i32_0 : i32, i32
  }
  func.func @transform_5(%arg0: i32) -> (i32, i32) {
    %c0_i32 = arith.constant 0 : i32
    %c0_i32_0 = arith.constant 0 : i32
    %c0_i32_1 = arith.constant 0 : i32
    return %c0_i32, %c0_i32_0 : i32, i32
  }
  func.func @transform_6(%arg0: i32) -> (i32, i32) {
    %c0_i32 = arith.constant 0 : i32
    %c0_i32_0 = arith.constant 0 : i32
    %c0_i32_1 = arith.constant 0 : i32
    return %c0_i32, %c0_i32_0 : i32, i32
  }
  func.func @transform_7(%arg0: i32) -> (i32, i32) {
    %c0_i32 = arith.constant 0 : i32
    %c0_i32_0 = arith.constant 0 : i32
    %c0_i32_1 = arith.constant 0 : i32
    return %c0_i32, %c0_i32_0 : i32, i32
  }
  func.func @transform_8(%arg0: i32) -> (i32, i32, i32) {
    %c0_i32 = arith.constant 0 : i32
    %c0_i32_0 = arith.constant 0 : i32
    %c0_i32_1 = arith.constant 0 : i32
    return %arg0, %c0_i32, %c0_i32_0 : i32, i32, i32
  }
  func.func @transform_9(%arg0: i32) -> (i32, i32, i32, i32) {
    %c0_i32 = arith.constant 0 : i32
    %c0_i32_0 = arith.constant 0 : i32
    %c0_i32_1 = arith.constant 0 : i32
    %c0_i32_2 = arith.constant 0 : i32
    return %arg0, %c0_i32, %c0_i32_0, %c0_i32_1 : i32, i32, i32, i32
  }
}

</mosaic_0001>

<llo_original>
// kernel: tpu_custom_call.1
$region0: #{tpu_custom_call.1}
  #allocation0 [shape = 'u32[]', space=smem, size = 0x4, offset = 0x4, fixed_abs, tag = 'smem constant byte address 0x4 - core index']
  #allocation1 [shape = 'u32[144,128]{1,0:T(1,128)}', space=vmem, size = 0x12000, scoped, tag = 'internal scratch']
  %s0 = inlined_call_operand.hbm [shape: f32[2,8,768], index: 0, kind: input, shape index: {}]
  %s1 = inlined_call_operand.hbm [shape: f32[2,1,8], index: 1, kind: input, shape index: {}]
  %s2 = inlined_call_operand.hbm [shape: bf16[768,1536], index: 2, kind: input, shape index: {}]
  %s3 = inlined_call_operand.hbm [shape: f32[1,1536], index: 3, kind: input, shape index: {}]
  %s4 = inlined_call_operand.hbm [shape: bf16[512,768], index: 4, kind: input, shape index: {}]
  %s5 = inlined_call_operand.hbm [shape: f32[1,768], index: 5, kind: input, shape index: {}]
  %s6 = inlined_call_operand.hbm [shape: f32[1,768], index: 6, kind: input, shape index: {}]
  %s7 = inlined_call_operand.hbm [shape: f32[1,768], index: 7, kind: input, shape index: {}]
  %s8 = inlined_call_operand.hbm [shape: f32[2,8,768], index: 8, kind: output, shape index: {0}]
  %s9 = inlined_call_operand.hbm [shape: bf16[2,8,8,8], index: 9, kind: output, shape index: {1}]
  %10 = xla_tuple %s8, %s9
  %s11 = sld [smem:[#allocation0]]
  $region105: #{tpu_custom_call.1} parent=0
    _
  %s13 = ssub.s32 1, %s11
  %s14 = scalar_select 0, %s13, %s11
  $region1: #{tpu_custom_call.1} parent=0
    #allocation2 [shape = 'u8[49152]{0}', space=vmem, size = 0xc000, scoped, tag = 'input window, operand 0']
    #allocation3 [shape = 's32[2]{0}', space=sflag, size = 0x8, scoped, tag = 'scoped memory for tpu_custom_call.1']
    #allocation4 [shape = 's32[2]{0}', space=sflag, size = 0x8, scoped, tag = 'scoped memory for tpu_custom_call.1']
    #allocation5 [shape = 'u8[1024]{0}', space=vmem, size = 0x400, scoped, tag = 'input window, operand 1']
    #allocation6 [shape = 's32[2]{0}', space=sflag, size = 0x8, scoped, tag = 'scoped memory for tpu_custom_call.1']
    #allocation7 [shape = 'u8[2359296]{0}', space=vmem, size = 0x240000, scoped, tag = 'input window, operand 2, single buffered']
    #allocation8 [shape = 'u8[6144]{0}', space=vmem, size = 0x1800, scoped, tag = 'input window, operand 3, single buffered']
    #allocation9 [shape = 's32[1]{0}', space=sflag, size = 0x4, scoped, tag = 'scoped memory for tpu_custom_call.1']
    #allocation10 [shape = 'u8[786432]{0}', space=vmem, size = 0xc0000, scoped, tag = 'input window, operand 4, single buffered']
    #allocation11 [shape = 'u8[3072]{0}', space=vmem, size = 0xc00, scoped, tag = 'input window, operand 5, single buffered']
    #allocation12 [shape = 's32[1]{0}', space=sflag, size = 0x4, scoped, tag = 'scoped memory for tpu_custom_call.1']
    #allocation13 [shape = 'u8[3072]{0}', space=vmem, size = 0xc00, scoped, tag = 'input window, operand 6, single buffered']
    #allocation14 [shape = 'u8[3072]{0}', space=vmem, size = 0xc00, scoped, tag = 'input window, operand 7, single buffered']
    #allocation15 [shape = 's32[1]{0}', space=sflag, size = 0x4, scoped, tag = 'scoped memory for tpu_custom_call.1']
    #allocation16 [shape = 'u8[49152]{0}', space=vmem, size = 0xc000, scoped, tag = 'output window, operand 0']
    #allocation17 [shape = 'u8[32768]{0}', space=vmem, size = 0x8000, scoped, tag = 'output window, operand 1']
    #allocation18 [shape = 's32[2]{0}', space=sflag, size = 0x8, scoped, tag = 'scoped memory for tpu_custom_call.1']
    %15 = vsyncpa [#allocation3], 0
    %s16 = scalar_lea.sflag [#allocation3], 1
    %17 = vsyncpa %s16, 0
    %18 = vsyncpa [#allocation6], 0
    %s19 = scalar_lea.sflag [#allocation6], 1
    %20 = vsyncpa %s19, 0
    %21 = vsyncpa [#allocation9], 0
    %22 = vsyncpa [#allocation12], 0
    %23 = vsyncpa [#allocation15], 0
    %24 = vsyncpa [#allocation4], 0
    %s25 = scalar_lea.sflag [#allocation4], 1
    %26 = vsyncpa %s25, 0
    %27 = vsyncpa [#allocation18], 0
    %s28 = scalar_lea.sflag [#allocation18], 1
    %29 = vsyncpa %s28, 0
    loop: start=0, step=1, limit=4
    $region2: #{tpu_custom_call.1} parent=1 // loop_pre_header
      _
    $region3: #{tpu_custom_call.1} parent=1 // loop_header
      %s31 = sphi 0, %s35
      %p32 = scmp.ge.s32.totalorder %s31, 4
      %s41 = sphi 0, %s43
      %s44 = sphi 0, %s41
      %s45 = sphi 0, %s44
      %s61 = sphi 0, %s45
      %s67 = sphi 0, %s69
      %s70 = sphi 0, %s67
      %s71 = sphi 0, %s70
      %s87 = sphi 0, %s71
      %s91 = sphi 0, %s91
      %s93 = sphi 0, %s91
      %s94 = sphi 0, %s93
      %s108 = sphi 0, %s94
      %s112 = sphi 0, %s112
      %s114 = sphi 0, %s112
      %s115 = sphi 0, %s114
      %s129 = sphi 0, %s115
      %s133 = sphi 0, %s133
      %s135 = sphi 0, %s133
      %s136 = sphi 0, %s135
      %s150 = sphi 0, %s136
      %s154 = sphi 0, %s154
      %s156 = sphi 0, %s154
      %s157 = sphi 0, %s156
      %s171 = sphi 0, %s157
      %s175 = sphi 0, %s175
      %s177 = sphi 0, %s175
      %s178 = sphi 0, %s177
      %s192 = sphi 0, %s178
      %s196 = sphi 0, %s196
      %s198 = sphi 0, %s196
      %s199 = sphi 0, %s198
      %s213 = sphi 0, %s199
      %s219 = sphi 0, %s221
      %s222 = sphi 0, %s219
      %s223 = sphi 0, %s222
      %s239 = sphi 0, %s223
      %s245 = sphi 0, %s247
      %s248 = sphi 0, %s245
      %s249 = sphi 0, %s248
      %s265 = sphi 0, %s249
    $region4: #{tpu_custom_call.1} parent=1 // loop_header_branch
      %34 = sbr.rel (%p32) target = $region8
    $region5: #{tpu_custom_call.1} parent=1 // loop_body
      %s36 = ssub.s32 %s31, 1
      %s37 = ssub.s32 %s31, 2
      %s38 = sadd.s32 %s31, 1
      %s39 = ssub.s32 %s31, %s38
      %p40 = scmp.eq.s32.totalorder %s39, 0
      %s42 = sadd.s32 %s41, 1
      %s43 = scalar_select %p40, %s41, %s42
      %p46 = pneg %p40
      %p47 = scmp.eq.s32.totalorder %s31, 1
      %p48 = por %p46, %p47
      %p49 = scmp.ne.s32.totalorder %s41, %s44
      %p50 = scmp.eq.s32.totalorder %s31, 0
      %p51 = por %p49, %p50
      %p52 = scmp.ne.s32.totalorder %s41, %s44
      %p53 = scmp.eq.s32.totalorder %s36, 1
      %p54 = por %p52, %p53
      %p55 = scmp.ne.s32.totalorder %s44, %s45
      %p56 = scmp.eq.s32.totalorder %s36, 0
      %p57 = por %p55, %p56
      %p58 = scmp.ne.s32.totalorder %s44, %s45
      %p59 = scmp.eq.s32.totalorder %s37, 1
      %p60 = por %p58, %p59
      %p62 = scmp.ne.s32.totalorder %s45, %s61
      %p63 = scmp.eq.s32.totalorder %s37, 0
      %p64 = por %p62, %p63
      %s65 = ssub.s32 %s31, %s38
      %p66 = scmp.eq.s32.totalorder %s65, 0
      %s68 = sadd.s32 %s67, 1
      %s69 = scalar_select %p66, %s67, %s68
      %p72 = pneg %p66
      %p73 = scmp.eq.s32.totalorder %s31, 1
      %p74 = por %p72, %p73
      %p75 = scmp.ne.s32.totalorder %s67, %s70
      %p76 = scmp.eq.s32.totalorder %s31, 0
      %p77 = por %p75, %p76
      %p78 = scmp.ne.s32.totalorder %s67, %s70
      %p79 = scmp.eq.s32.totalorder %s36, 1
      %p80 = por %p78, %p79
      %p81 = scmp.ne.s32.totalorder %s70, %s71
      %p82 = scmp.eq.s32.totalorder %s36, 0
      %p83 = por %p81, %p82
      %p84 = scmp.ne.s32.totalorder %s70, %s71
      %p85 = scmp.eq.s32.totalorder %s37, 1
      %p86 = por %p84, %p85
      %p88 = scmp.ne.s32.totalorder %s71, %s87
      %p89 = scmp.eq.s32.totalorder %s37, 0
      %p90 = por %p88, %p89
      %s92 = sadd.s32 %s91, 1
      %p95 = scmp.eq.s32.totalorder %s31, 1
      %p96 = scmp.ne.s32.totalorder %s91, %s93
      %p97 = scmp.eq.s32.totalorder %s31, 0
      %p98 = por %p96, %p97
      %p99 = scmp.ne.s32.totalorder %s91, %s93
      %p100 = scmp.eq.s32.totalorder %s36, 1
      %p101 = por %p99, %p100
      %p102 = scmp.ne.s32.totalorder %s93, %s94
      %p103 = scmp.eq.s32.totalorder %s36, 0
      %p104 = por %p102, %p103
      %p105 = scmp.ne.s32.totalorder %s93, %s94
      %p106 = scmp.eq.s32.totalorder %s37, 1
      %p107 = por %p105, %p106
      %p109 = scmp.ne.s32.totalorder %s94, %s108
      %p110 = scmp.eq.s32.totalorder %s37, 0
      %p111 = por %p109, %p110
      %s113 = sadd.s32 %s112, 1
      %p116 = scmp.eq.s32.totalorder %s31, 1
      %p117 = scmp.ne.s32.totalorder %s112, %s114
      %p118 = scmp.eq.s32.totalorder %s31, 0
      %p119 = por %p117, %p118
      %p120 = scmp.ne.s32.totalorder %s112, %s114
      %p121 = scmp.eq.s32.totalorder %s36, 1
      %p122 = por %p120, %p121
      %p123 = scmp.ne.s32.totalorder %s114, %s115
      %p124 = scmp.eq.s32.totalorder %s36, 0
      %p125 = por %p123, %p124
      %p126 = scmp.ne.s32.totalorder %s114, %s115
      %p127 = scmp.eq.s32.totalorder %s37, 1
      %p128 = por %p126, %p127
      %p130 = scmp.ne.s32.totalorder %s115, %s129
      %p131 = scmp.eq.s32.totalorder %s37, 0
      %p132 = por %p130, %p131
      %s134 = sadd.s32 %s133, 1
      %p137 = scmp.eq.s32.totalorder %s31, 1
      %p138 = scmp.ne.s32.totalorder %s133, %s135
      %p139 = scmp.eq.s32.totalorder %s31, 0
      %p140 = por %p138, %p139
      %p141 = scmp.ne.s32.totalorder %s133, %s135
      %p142 = scmp.eq.s32.totalorder %s36, 1
      %p143 = por %p141, %p142
      %p144 = scmp.ne.s32.totalorder %s135, %s136
      %p145 = scmp.eq.s32.totalorder %s36, 0
      %p146 = por %p144, %p145
      %p147 = scmp.ne.s32.totalorder %s135, %s136
      %p148 = scmp.eq.s32.totalorder %s37, 1
      %p149 = por %p147, %p148
      %p151 = scmp.ne.s32.totalorder %s136, %s150
      %p152 = scmp.eq.s32.totalorder %s37, 0
      %p153 = por %p151, %p152
      %s155 = sadd.s32 %s154, 1
      %p158 = scmp.eq.s32.totalorder %s31, 1
      %p159 = scmp.ne.s32.totalorder %s154, %s156
      %p160 = scmp.eq.s32.totalorder %s31, 0
      %p161 = por %p159, %p160
      %p162 = scmp.ne.s32.totalorder %s154, %s156
      %p163 = scmp.eq.s32.totalorder %s36, 1
      %p164 = por %p162, %p163
      %p165 = scmp.ne.s32.totalorder %s156, %s157
      %p166 = scmp.eq.s32.totalorder %s36, 0
      %p167 = por %p165, %p166
      %p168 = scmp.ne.s32.totalorder %s156, %s157
      %p169 = scmp.eq.s32.totalorder %s37, 1
      %p170 = por %p168, %p169
      %p172 = scmp.ne.s32.totalorder %s157, %s171
      %p173 = scmp.eq.s32.totalorder %s37, 0
      %p174 = por %p172, %p173
      %s176 = sadd.s32 %s175, 1
      %p179 = scmp.eq.s32.totalorder %s31, 1
      %p180 = scmp.ne.s32.totalorder %s175, %s177
      %p181 = scmp.eq.s32.totalorder %s31, 0
      %p182 = por %p180, %p181
      %p183 = scmp.ne.s32.totalorder %s175, %s177
      %p184 = scmp.eq.s32.totalorder %s36, 1
      %p185 = por %p183, %p184
      %p186 = scmp.ne.s32.totalorder %s177, %s178
      %p187 = scmp.eq.s32.totalorder %s36, 0
      %p188 = por %p186, %p187
      %p189 = scmp.ne.s32.totalorder %s177, %s178
      %p190 = scmp.eq.s32.totalorder %s37, 1
      %p191 = por %p189, %p190
      %p193 = scmp.ne.s32.totalorder %s178, %s192
      %p194 = scmp.eq.s32.totalorder %s37, 0
      %p195 = por %p193, %p194
      %s197 = sadd.s32 %s196, 1
      %p200 = scmp.eq.s32.totalorder %s31, 1
      %p201 = scmp.ne.s32.totalorder %s196, %s198
      %p202 = scmp.eq.s32.totalorder %s31, 0
      %p203 = por %p201, %p202
      %p204 = scmp.ne.s32.totalorder %s196, %s198
      %p205 = scmp.eq.s32.totalorder %s36, 1
      %p206 = por %p204, %p205
      %p207 = scmp.ne.s32.totalorder %s198, %s199
      %p208 = scmp.eq.s32.totalorder %s36, 0
      %p209 = por %p207, %p208
      %p210 = scmp.ne.s32.totalorder %s198, %s199
      %p211 = scmp.eq.s32.totalorder %s37, 1
      %p212 = por %p210, %p211
      %p214 = scmp.ne.s32.totalorder %s199, %s213
      %p215 = scmp.eq.s32.totalorder %s37, 0
      %p216 = por %p214, %p215
      %s217 = ssub.s32 %s31, %s38
      %p218 = scmp.eq.s32.totalorder %s217, 0
      %s220 = sadd.s32 %s219, 1
      %s221 = scalar_select %p218, %s219, %s220
      %p224 = pneg %p218
      %p225 = scmp.eq.s32.totalorder %s31, 1
      %p226 = por %p224, %p225
      %p227 = scmp.ne.s32.totalorder %s219, %s222
      %p228 = scmp.eq.s32.totalorder %s31, 0
      %p229 = por %p227, %p228
      %p230 = scmp.ne.s32.totalorder %s219, %s222
      %p231 = scmp.eq.s32.totalorder %s36, 1
      %p232 = por %p230, %p231
      %p233 = scmp.ne.s32.totalorder %s222, %s223
      %p234 = scmp.eq.s32.totalorder %s36, 0
      %p235 = por %p233, %p234
      %p236 = scmp.ne.s32.totalorder %s222, %s223
      %p237 = scmp.eq.s32.totalorder %s37, 1
      %p238 = por %p236, %p237
      %p240 = scmp.ne.s32.totalorder %s223, %s239
      %p241 = scmp.eq.s32.totalorder %s37, 0
      %p242 = por %p240, %p241
      %s243 = ssub.s32 %s31, %s38
      %p244 = scmp.eq.s32.totalorder %s243, 0
      %s246 = sadd.s32 %s245, 1
      %s247 = scalar_select %p244, %s245, %s246
      %p250 = pneg %p244
      %p251 = scmp.eq.s32.totalorder %s31, 1
      %p252 = por %p250, %p251
      %p253 = scmp.ne.s32.totalorder %s245, %s248
      %p254 = scmp.eq.s32.totalorder %s31, 0
      %p255 = por %p253, %p254
      %p256 = scmp.ne.s32.totalorder %s245, %s248
      %p257 = scmp.eq.s32.totalorder %s36, 1
      %p258 = por %p256, %p257
      %p259 = scmp.ne.s32.totalorder %s248, %s249
      %p260 = scmp.eq.s32.totalorder %s36, 0
      %p261 = por %p259, %p260
      %p262 = scmp.ne.s32.totalorder %s248, %s249
      %p263 = scmp.eq.s32.totalorder %s37, 1
      %p264 = por %p262, %p263
      %p266 = scmp.ne.s32.totalorder %s249, %s265
      %p267 = scmp.eq.s32.totalorder %s37, 0
      %p268 = por %p266, %p267
      %p269 = scmp.le.s32.totalorder 1, %s31
      %p270 = scmp.lt.s32.totalorder %s31, 3
      %p271 = pnand %p269, %p270
      %p272 = pneg %p271
      // Predicated region
      $region9: #{tpu_custom_call.1} parent=5 // pred_check
        _
      $region10: #{tpu_custom_call.1} parent=5 // pred_check_branch
        %274 = sbr.rel (%p271) target = $region12
      $region11: #{tpu_custom_call.1} parent=5 // pred_region
        %s275 = ssub.s32 %s31, 1
        // Predicated region
        $region13: #{tpu_custom_call.1} parent=11 // pred_check
          %p276 = pneg %p104
        $region14: #{tpu_custom_call.1} parent=11 // pred_check_branch
          %278 = sbr.rel (%p276) target = $region16
        $region15: #{tpu_custom_call.1} parent=11 // pred_region
          %s280 = ssub.s32 73728, 73728
          %281 = vsyncadd [#allocation6], %s280
          %s282 = sshll.u32 [#allocation7], 4
          %s283 = int_to_ptr.vmem [resolvable:$true] %s282
          %288 = dma.hbm_to_vmem [thread:$0]  %s2, 73728, %s283, [#allocation6], 768, 768, 48
        $region16: #{tpu_custom_call.1} parent=11 // pred_fallthru
          _
        // Predicated region
        $region17: #{tpu_custom_call.1} parent=11 // pred_check
          %p289 = pneg %p125
        $region18: #{tpu_custom_call.1} parent=11 // pred_check_branch
          %291 = sbr.rel (%p289) target = $region20
        $region19: #{tpu_custom_call.1} parent=11 // pred_region
          %s293 = ssub.s32 192, 192
          %294 = vsyncadd [#allocation9], %s293
          %s296 = sshll.u32 [#allocation8], 4
          %s297 = int_to_ptr.vmem [resolvable:$true] %s296
          %299 = dma.hbm_to_vmem [thread:$0]  %s3, 192, %s297, [#allocation9]
        $region20: #{tpu_custom_call.1} parent=11 // pred_fallthru
          _
        // Predicated region
        $region21: #{tpu_custom_call.1} parent=11 // pred_check
          %p300 = pneg %p146
        $region22: #{tpu_custom_call.1} parent=11 // pred_check_branch
          %302 = sbr.rel (%p300) target = $region24
        $region23: #{tpu_custom_call.1} parent=11 // pred_region
          %s304 = ssub.s32 24576, 24576
          %305 = vsyncadd [#allocation9], %s304
          %s306 = sshll.u32 [#allocation10], 4
          %s307 = int_to_ptr.vmem [resolvable:$true] %s306
          %312 = dma.hbm_to_vmem [thread:$0]  %s4, 24576, %s307, [#allocation9], 384, 384, 24
        $region24: #{tpu_custom_call.1} parent=11 // pred_fallthru
          _
        // Predicated region
        $region25: #{tpu_custom_call.1} parent=11 // pred_check
          %p313 = pneg %p167
        $region26: #{tpu_custom_call.1} parent=11 // pred_check_branch
          %315 = sbr.rel (%p313) target = $region28
        $region27: #{tpu_custom_call.1} parent=11 // pred_region
          %s317 = ssub.s32 96, 96
          %318 = vsyncadd [#allocation12], %s317
          %s320 = sshll.u32 [#allocation11], 4
          %s321 = int_to_ptr.vmem [resolvable:$true] %s320
          %323 = dma.hbm_to_vmem [thread:$0]  %s5, 96, %s321, [#allocation12]
        $region28: #{tpu_custom_call.1} parent=11 // pred_fallthru
          _
        // Predicated region
        $region29: #{tpu_custom_call.1} parent=11 // pred_check
          %p324 = pneg %p188
        $region30: #{tpu_custom_call.1} parent=11 // pred_check_branch
          %326 = sbr.rel (%p324) target = $region32
        $region31: #{tpu_custom_call.1} parent=11 // pred_region
          %s328 = ssub.s32 96, 96
          %329 = vsyncadd [#allocation12], %s328
          %s331 = sshll.u32 [#allocation13], 4
          %s332 = int_to_ptr.vmem [resolvable:$true] %s331
          %334 = dma.hbm_to_vmem [thread:$0]  %s6, 96, %s332, [#allocation12]
        $region32: #{tpu_custom_call.1} parent=11 // pred_fallthru
          _
        // Predicated region
        $region33: #{tpu_custom_call.1} parent=11 // pred_check
          %p335 = pneg %p209
        $region34: #{tpu_custom_call.1} parent=11 // pred_check_branch
          %337 = sbr.rel (%p335) target = $region36
        $region35: #{tpu_custom_call.1} parent=11 // pred_region
          %s339 = ssub.s32 96, 96
          %340 = vsyncadd [#allocation15], %s339
          %s342 = sshll.u32 [#allocation14], 4
          %s343 = int_to_ptr.vmem [resolvable:$true] %s342
          %345 = dma.hbm_to_vmem [thread:$0]  %s7, 96, %s343, [#allocation15]
        $region36: #{tpu_custom_call.1} parent=11 // pred_fallthru
          _
      $region12: #{tpu_custom_call.1} parent=5 // pred_fallthru
        _
      %p346 = scmp.lt.s32.totalorder %s31, 2
      // Predicated region
      $region37: #{tpu_custom_call.1} parent=5 // pred_check
        %p347 = pneg %p346
      $region38: #{tpu_custom_call.1} parent=5 // pred_check_branch
        %349 = sbr.rel (%p347) target = $region40
      $region39: #{tpu_custom_call.1} parent=5 // pred_region
        // Predicated region
        $region41: #{tpu_custom_call.1} parent=39 // pred_check
          %p350 = pneg %p51
        $region42: #{tpu_custom_call.1} parent=39 // pred_check_branch
          %352 = sbr.rel (%p350) target = $region44
        $region43: #{tpu_custom_call.1} parent=39 // pred_region
          %s353 = sand.u32 %s41, 1
          %s354 = scalar_lea.sflag [#allocation3], %s353
          %s355 = sand.u32 %s41, 1
          %s356 = smul.addr %s355, 48
          %s357 = scalar_lea.vmem [#allocation2], %s356
          %s359 = ssub.s32 768, 768
          %360 = vsyncadd %s354, %s359
          %s361 = smul.addr %s31, 6
          %s362 = smul.addr %s361, 128
          %s363 = scalar_lea.hbm %s0, %s362
          %s365 = sshll.u32 %s357, 4
          %s366 = int_to_ptr.vmem [resolvable:$true] %s365
          %368 = dma.hbm_to_vmem [thread:$0]  %s363, 768, %s366, %s354
        $region44: #{tpu_custom_call.1} parent=39 // pred_fallthru
          _
        // Predicated region
        $region45: #{tpu_custom_call.1} parent=39 // pred_check
          %p369 = pneg %p77
        $region46: #{tpu_custom_call.1} parent=39 // pred_check_branch
          %371 = sbr.rel (%p369) target = $region48
        $region47: #{tpu_custom_call.1} parent=39 // pred_region
          %s372 = sand.u32 %s31, 1
          %s373 = scalar_lea.sflag [#allocation6], %s372
          %s374 = sand.u32 %s67, 1
          %s375 = scalar_lea.vmem [#allocation5], %s374
          %s377 = ssub.s32 16, 16
          %378 = vsyncadd %s373, %s377
          %s379 = smul.addr %s31, 16
          %s380 = scalar_lea.hbm %s1, %s379
          %s382 = sshll.u32 %s375, 4
          %s383 = int_to_ptr.vmem [resolvable:$true] %s382
          %385 = dma.hbm_to_vmem [thread:$0]  %s380, 16, %s383, %s373
        $region48: #{tpu_custom_call.1} parent=39 // pred_fallthru
          _
      $region40: #{tpu_custom_call.1} parent=5 // pred_fallthru
        _
      %p386 = scmp.le.s32.totalorder 1, %s31
      %p387 = scmp.lt.s32.totalorder %s31, 3
      %p388 = pnand %p386, %p387
      %p389 = pneg %p388
      // Predicated region
      $region49: #{tpu_custom_call.1} parent=5 // pred_check
        _
      $region50: #{tpu_custom_call.1} parent=5 // pred_check_branch
        %391 = sbr.rel (%p388) target = $region52
      $region51: #{tpu_custom_call.1} parent=5 // pred_region
        %s392 = ssub.s32 %s31, 1
        %s393 = sand.u32 %s44, 1
        %s394 = scalar_lea.sflag [#allocation3], %s393
        %s395 = sand.u32 %s44, 1
        %s396 = smul.addr %s395, 48
        %s397 = scalar_lea.vmem [#allocation2], %s396
        // Predicated region
        $region53: #{tpu_custom_call.1} parent=51 // pred_check
          %p398 = pneg %p57
        $region54: #{tpu_custom_call.1} parent=51 // pred_check_branch
          %400 = sbr.rel (%p398) target = $region56
        $region55: #{tpu_custom_call.1} parent=51 // pred_region
          %401 = dma.done %s394, 768
        $region56: #{tpu_custom_call.1} parent=51 // pred_fallthru
          _
        %s402 = sand.u32 %s36, 1
        %s403 = scalar_lea.sflag [#allocation6], %s402
        %s404 = sand.u32 %s70, 1
        %s405 = scalar_lea.vmem [#allocation5], %s404
        // Predicated region
        $region57: #{tpu_custom_call.1} parent=51 // pred_check
          %p406 = pneg %p83
        $region58: #{tpu_custom_call.1} parent=51 // pred_check_branch
          %408 = sbr.rel (%p406) target = $region60
        $region59: #{tpu_custom_call.1} parent=51 // pred_region
          %409 = dma.done %s403, 16
        $region60: #{tpu_custom_call.1} parent=51 // pred_fallthru
          _
        // Predicated region
        $region61: #{tpu_custom_call.1} parent=51 // pred_check
          %p410 = pneg %p104
        $region62: #{tpu_custom_call.1} parent=51 // pred_check_branch
          %412 = sbr.rel (%p410) target = $region64
        $region63: #{tpu_custom_call.1} parent=51 // pred_region
          %413 = dma.done [#allocation6], 73728
        $region64: #{tpu_custom_call.1} parent=51 // pred_fallthru
          _
        // Predicated region
        $region65: #{tpu_custom_call.1} parent=51 // pred_check
          %p414 = pneg %p125
        $region66: #{tpu_custom_call.1} parent=51 // pred_check_branch
          %416 = sbr.rel (%p414) target = $region68
        $region67: #{tpu_custom_call.1} parent=51 // pred_region
          %417 = dma.done [#allocation9], 192
        $region68: #{tpu_custom_call.1} parent=51 // pred_fallthru
          _
        // Predicated region
        $region69: #{tpu_custom_call.1} parent=51 // pred_check
          %p418 = pneg %p146
        $region70: #{tpu_custom_call.1} parent=51 // pred_check_branch
          %420 = sbr.rel (%p418) target = $region72
        $region71: #{tpu_custom_call.1} parent=51 // pred_region
          %421 = dma.done [#allocation9], 24576
        $region72: #{tpu_custom_call.1} parent=51 // pred_fallthru
          _
        // Predicated region
        $region73: #{tpu_custom_call.1} parent=51 // pred_check
          %p422 = pneg %p167
        $region74: #{tpu_custom_call.1} parent=51 // pred_check_branch
          %424 = sbr.rel (%p422) target = $region76
        $region75: #{tpu_custom_call.1} parent=51 // pred_region
          %425 = dma.done [#allocation12], 96
        $region76: #{tpu_custom_call.1} parent=51 // pred_fallthru
          _
        // Predicated region
        $region77: #{tpu_custom_call.1} parent=51 // pred_check
          %p426 = pneg %p188
        $region78: #{tpu_custom_call.1} parent=51 // pred_check_branch
          %428 = sbr.rel (%p426) target = $region80
        $region79: #{tpu_custom_call.1} parent=51 // pred_region
          %429 = dma.done [#allocation12], 96
        $region80: #{tpu_custom_call.1} parent=51 // pred_fallthru
          _
        // Predicated region
        $region81: #{tpu_custom_call.1} parent=51 // pred_check
          %p430 = pneg %p209
        $region82: #{tpu_custom_call.1} parent=51 // pred_check_branch
          %432 = sbr.rel (%p430) target = $region84
        $region83: #{tpu_custom_call.1} parent=51 // pred_region
          %433 = dma.done [#allocation15], 96
        $region84: #{tpu_custom_call.1} parent=51 // pred_fallthru
          _
        %s434 = sand.u32 %s44, 1
        %s435 = scalar_lea.sflag [#allocation3], %s434
        %s436 = sand.u32 %s44, 1
        %s437 = smul.addr %s436, 48
        %s438 = scalar_lea.vmem [#allocation2], %s437
        %p439 = pneg %p57
        %p440 = pneg %p54
        %s441 = sand.u32 %s36, 1
        %s442 = scalar_lea.sflag [#allocation6], %s441
        %s443 = sand.u32 %s70, 1
        %s444 = scalar_lea.vmem [#allocation5], %s443
        %p445 = pneg %p83
        %p446 = pneg %p80
        %p447 = pneg %p104
        %p448 = pneg %p101
        %p449 = pneg %p125
        %p450 = pneg %p122
        %p451 = pneg %p146
        %p452 = pneg %p143
        %p453 = pneg %p167
        %p454 = pneg %p164
        %p455 = pneg %p188
        %p456 = pneg %p185
        %p457 = pneg %p209
        %p458 = pneg %p206
        %p459 = pneg %p235
        %p460 = pneg %p232
        %s461 = sand.u32 %s222, 1
        %s462 = scalar_lea.sflag [#allocation4], %s461
        %s463 = sand.u32 %s222, 1
        %s464 = smul.addr %s463, 48
        %s465 = scalar_lea.vmem [#allocation16], %s464
        %p466 = pneg %p261
        %p467 = pneg %p258
        %s468 = sand.u32 %s248, 1
        %s469 = scalar_lea.sflag [#allocation18], %s468
        %s470 = sand.u32 %s248, 1
        %s471 = smul.addr %s470, 32
        %s472 = scalar_lea.vmem [#allocation17], %s471
        %v474 = vld [vmem:[%s397] sm:$0xff]
        %v475 = vld [vmem:[%s397 + $0x8] sm:$0xff]
        %v476 = vld [vmem:[%s397 + $0x10] sm:$0xff]
        %v477 = vld [vmem:[%s397 + $0x18] sm:$0xff]
        %v478 = vld [vmem:[%s397 + $0x20] sm:$0xff]
        %v479 = vld [vmem:[%s397 + $0x28] sm:$0xff]
        %v480 = vpack.c.bf16 %v474, %v474
        %v481 = vpack.c.bf16 %v475, %v475
        %v482 = vpack.c.bf16 %v476, %v476
        %v483 = vpack.c.bf16 %v477, %v477
        %v484 = vpack.c.bf16 %v478, %v478
        %v485 = vpack.c.bf16 %v479, %v479
        %v486 = vld [vmem:[#allocation7] sm:$0xff]
        %v487 = vld [vmem:[#allocation7 + $0x8] sm:$0xff]
        %v488 = vld [vmem:[#allocation7 + $0x10] sm:$0xff]
        %v489 = vld [vmem:[#allocation7 + $0x18] sm:$0xff]
        %v490 = vld [vmem:[#allocation7 + $0x20] sm:$0xff]
        %v491 = vld [vmem:[#allocation7 + $0x28] sm:$0xff]
        %v492 = vld [vmem:[#allocation7 + $0x30] sm:$0xff]
        %v493 = vld [vmem:[#allocation7 + $0x38] sm:$0xff]
        %v494 = vld [vmem:[#allocation7 + $0x40] sm:$0xff]
        %v495 = vld [vmem:[#allocation7 + $0x48] sm:$0xff]
        %v496 = vld [vmem:[#allocation7 + $0x50] sm:$0xff]
        %v497 = vld [vmem:[#allocation7 + $0x58] sm:$0xff]
        %v498 = vld [vmem:[#allocation7 + $0x60] sm:$0xff]
        %v499 = vld [vmem:[#allocation7 + $0x68] sm:$0xff]
        %v500 = vld [vmem:[#allocation7 + $0x70] sm:$0xff]
        %v501 = vld [vmem:[#allocation7 + $0x78] sm:$0xff]
        %v502 = vld [vmem:[#allocation7 + $0x80] sm:$0xff]
        %v503 = vld [vmem:[#allocation7 + $0x88] sm:$0xff]
        %v504 = vld [vmem:[#allocation7 + $0x90] sm:$0xff]
        %v505 = vld [vmem:[#allocation7 + $0x98] sm:$0xff]
        %v506 = vld [vmem:[#allocation7 + $0xa0] sm:$0xff]
        %v507 = vld [vmem:[#allocation7 + $0xa8] sm:$0xff]
        %v508 = vld [vmem:[#allocation7 + $0xb0] sm:$0xff]
        %v509 = vld [vmem:[#allocation7 + $0xb8] sm:$0xff]
        %v510 = vld [vmem:[#allocation7 + $0xc0] sm:$0xff]
        %v511 = vld [vmem:[#allocation7 + $0xc8] sm:$0xff]
        %v512 = vld [vmem:[#allocation7 + $0xd0] sm:$0xff]
        %v513 = vld [vmem:[#allocation7 + $0xd8] sm:$0xff]
        %v514 = vld [vmem:[#allocation7 + $0xe0] sm:$0xff]
        %v515 = vld [vmem:[#allocation7 + $0xe8] sm:$0xff]
        %v516 = vld [vmem:[#allocation7 + $0xf0] sm:$0xff]
        %v517 = vld [vmem:[#allocation7 + $0xf8] sm:$0xff]
        %v518 = vld [vmem:[#allocation7 + $0x100] sm:$0xff]
        %v519 = vld [vmem:[#allocation7 + $0x108] sm:$0xff]
        %v520 = vld [vmem:[#allocation7 + $0x110] sm:$0xff]
        %v521 = vld [vmem:[#allocation7 + $0x118] sm:$0xff]
        %v522 = vld [vmem:[#allocation7 + $0x120] sm:$0xff]
        %v523 = vld [vmem:[#allocation7 + $0x128] sm:$0xff]
        %v524 = vld [vmem:[#allocation7 + $0x130] sm:$0xff]
        %v525 = vld [vmem:[#allocation7 + $0x138] sm:$0xff]
        %v526 = vld [vmem:[#allocation7 + $0x140] sm:$0xff]
        %v527 = vld [vmem:[#allocation7 + $0x148] sm:$0xff]
        %v528 = vld [vmem:[#allocation7 + $0x150] sm:$0xff]
        %v529 = vld [vmem:[#allocation7 + $0x158] sm:$0xff]
        %v530 = vld [vmem:[#allocation7 + $0x160] sm:$0xff]
        %v531 = vld [vmem:[#allocation7 + $0x168] sm:$0xff]
        %v532 = vld [vmem:[#allocation7 + $0x170] sm:$0xff]
        %v533 = vld [vmem:[#allocation7 + $0x178] sm:$0xff]
        %v534 = vld [vmem:[#allocation7 + $0x180] sm:$0xff]
        %v535 = vld [vmem:[#allocation7 + $0x188] sm:$0xff]
        %v536 = vld [vmem:[#allocation7 + $0x190] sm:$0xff]
        %v537 = vld [vmem:[#allocation7 + $0x198] sm:$0xff]
        %v538 = vld [vmem:[#allocation7 + $0x1a0] sm:$0xff]
        %v539 = vld [vmem:[#allocation7 + $0x1a8] sm:$0xff]
        %v540 = vld [vmem:[#allocation7 + $0x1b0] sm:$0xff]
        %v541 = vld [vmem:[#allocation7 + $0x1b8] sm:$0xff]
        %v542 = vld [vmem:[#allocation7 + $0x1c0] sm:$0xff]
        %v543 = vld [vmem:[#allocation7 + $0x1c8] sm:$0xff]
        %v544 = vld [vmem:[#allocation7 + $0x1d0] sm:$0xff]
        %v545 = vld [vmem:[#allocation7 + $0x1d8] sm:$0xff]
        %v546 = vld [vmem:[#allocation7 + $0x1e0] sm:$0xff]
        %v547 = vld [vmem:[#allocation7 + $0x1e8] sm:$0xff]
        %v548 = vld [vmem:[#allocation7 + $0x1f0] sm:$0xff]
        %v549 = vld [vmem:[#allocation7 + $0x1f8] sm:$0xff]
        %v550 = vld [vmem:[#allocation7 + $0x200] sm:$0xff]
        %v551 = vld [vmem:[#allocation7 + $0x208] sm:$0xff]
        %v552 = vld [vmem:[#allocation7 + $0x210] sm:$0xff]
        %v553 = vld [vmem:[#allocation7 + $0x218] sm:$0xff]
        %v554 = vld [vmem:[#allocation7 + $0x220] sm:$0xff]
        %v555 = vld [vmem:[#allocation7 + $0x228] sm:$0xff]
        %v556 = vld [vmem:[#allocation7 + $0x230] sm:$0xff]
        %v557 = vld [vmem:[#allocation7 + $0x238] sm:$0xff]
        %v558 = vld [vmem:[#allocation7 + $0x240] sm:$0xff]
        %v559 = vld [vmem:[#allocation7 + $0x248] sm:$0xff]
        %v560 = vld [vmem:[#allocation7 + $0x250] sm:$0xff]
        %v561 = vld [vmem:[#allocation7 + $0x258] sm:$0xff]
        %v562 = vld [vmem:[#allocation7 + $0x260] sm:$0xff]
        %v563 = vld [vmem:[#allocation7 + $0x268] sm:$0xff]
        %v564 = vld [vmem:[#allocation7 + $0x270] sm:$0xff]
        %v565 = vld [vmem:[#allocation7 + $0x278] sm:$0xff]
        %v566 = vld [vmem:[#allocation7 + $0x280] sm:$0xff]
        %v567 = vld [vmem:[#allocation7 + $0x288] sm:$0xff]
        %v568 = vld [vmem:[#allocation7 + $0x290] sm:$0xff]
        %v569 = vld [vmem:[#allocation7 + $0x298] sm:$0xff]
        %v570 = vld [vmem:[#allocation7 + $0x2a0] sm:$0xff]
        %v571 = vld [vmem:[#allocation7 + $0x2a8] sm:$0xff]
        %v572 = vld [vmem:[#allocation7 + $0x2b0] sm:$0xff]
        %v573 = vld [vmem:[#allocation7 + $0x2b8] sm:$0xff]
        %v574 = vld [vmem:[#allocation7 + $0x2c0] sm:$0xff]
        %v575 = vld [vmem:[#allocation7 + $0x2c8] sm:$0xff]
        %v576 = vld [vmem:[#allocation7 + $0x2d0] sm:$0xff]
        %v577 = vld [vmem:[#allocation7 + $0x2d8] sm:$0xff]
        %v578 = vld [vmem:[#allocation7 + $0x2e0] sm:$0xff]
        %v579 = vld [vmem:[#allocation7 + $0x2e8] sm:$0xff]
        %v580 = vld [vmem:[#allocation7 + $0x2f0] sm:$0xff]
        %v581 = vld [vmem:[#allocation7 + $0x2f8] sm:$0xff]
        %v582 = vld [vmem:[#allocation7 + $0x300] sm:$0xff]
        %v583 = vld [vmem:[#allocation7 + $0x308] sm:$0xff]
        %v584 = vld [vmem:[#allocation7 + $0x310] sm:$0xff]
        %v585 = vld [vmem:[#allocation7 + $0x318] sm:$0xff]
        %v586 = vld [vmem:[#allocation7 + $0x320] sm:$0xff]
        %v587 = vld [vmem:[#allocation7 + $0x328] sm:$0xff]
        %v588 = vld [vmem:[#allocation7 + $0x330] sm:$0xff]
        %v589 = vld [vmem:[#allocation7 + $0x338] sm:$0xff]
        %v590 = vld [vmem:[#allocation7 + $0x340] sm:$0xff]
        %v591 = vld [vmem:[#allocation7 + $0x348] sm:$0xff]
        %v592 = vld [vmem:[#allocation7 + $0x350] sm:$0xff]
        %v593 = vld [vmem:[#allocation7 + $0x358] sm:$0xff]
        %v594 = vld [vmem:[#allocation7 + $0x360] sm:$0xff]
        %v595 = vld [vmem:[#allocation7 + $0x368] sm:$0xff]
        %v596 = vld [vmem:[#allocation7 + $0x370] sm:$0xff]
        %v597 = vld [vmem:[#allocation7 + $0x378] sm:$0xff]
        %v598 = vld [vmem:[#allocation7 + $0x380] sm:$0xff]
        %v599 = vld [vmem:[#allocation7 + $0x388] sm:$0xff]
        %v600 = vld [vmem:[#allocation7 + $0x390] sm:$0xff]
        %v601 = vld [vmem:[#allocation7 + $0x398] sm:$0xff]
        %v602 = vld [vmem:[#allocation7 + $0x3a0] sm:$0xff]
        %v603 = vld [vmem:[#allocation7 + $0x3a8] sm:$0xff]
        %v604 = vld [vmem:[#allocation7 + $0x3b0] sm:$0xff]
        %v605 = vld [vmem:[#allocation7 + $0x3b8] sm:$0xff]
        %v606 = vld [vmem:[#allocation7 + $0x3c0] sm:$0xff]
        %v607 = vld [vmem:[#allocation7 + $0x3c8] sm:$0xff]
        %v608 = vld [vmem:[#allocation7 + $0x3d0] sm:$0xff]
        %v609 = vld [vmem:[#allocation7 + $0x3d8] sm:$0xff]
        %v610 = vld [vmem:[#allocation7 + $0x3e0] sm:$0xff]
        %v611 = vld [vmem:[#allocation7 + $0x3e8] sm:$0xff]
        %v612 = vld [vmem:[#allocation7 + $0x3f0] sm:$0xff]
        %v613 = vld [vmem:[#allocation7 + $0x3f8] sm:$0xff]
        %v614 = vld [vmem:[#allocation7 + $0x400] sm:$0xff]
        %v615 = vld [vmem:[#allocation7 + $0x408] sm:$0xff]
        %v616 = vld [vmem:[#allocation7 + $0x410] sm:$0xff]
        %v617 = vld [vmem:[#allocation7 + $0x418] sm:$0xff]
        %v618 = vld [vmem:[#allocation7 + $0x420] sm:$0xff]
        %v619 = vld [vmem:[#allocation7 + $0x428] sm:$0xff]
        %v620 = vld [vmem:[#allocation7 + $0x430] sm:$0xff]
        %v621 = vld [vmem:[#allocation7 + $0x438] sm:$0xff]
        %v622 = vld [vmem:[#allocation7 + $0x440] sm:$0xff]
        %v623 = vld [vmem:[#allocation7 + $0x448] sm:$0xff]
        %v624 = vld [vmem:[#allocation7 + $0x450] sm:$0xff]
        %v625 = vld [vmem:[#allocation7 + $0x458] sm:$0xff]
        %v626 = vld [vmem:[#allocation7 + $0x460] sm:$0xff]
        %v627 = vld [vmem:[#allocation7 + $0x468] sm:$0xff]
        %v628 = vld [vmem:[#allocation7 + $0x470] sm:$0xff]
        %v629 = vld [vmem:[#allocation7 + $0x478] sm:$0xff]
        %v630 = vld [vmem:[#allocation7 + $0x480] sm:$0xff]
        %v631 = vld [vmem:[#allocation7 + $0x488] sm:$0xff]
        %v632 = vld [vmem:[#allocation7 + $0x490] sm:$0xff]
        %v633 = vld [vmem:[#allocation7 + $0x498] sm:$0xff]
        %v634 = vld [vmem:[#allocation7 + $0x4a0] sm:$0xff]
        %v635 = vld [vmem:[#allocation7 + $0x4a8] sm:$0xff]
        %v636 = vld [vmem:[#allocation7 + $0x4b0] sm:$0xff]
        %v637 = vld [vmem:[#allocation7 + $0x4b8] sm:$0xff]
        %v638 = vld [vmem:[#allocation7 + $0x4c0] sm:$0xff]
        %v639 = vld [vmem:[#allocation7 + $0x4c8] sm:$0xff]
        %v640 = vld [vmem:[#allocation7 + $0x4d0] sm:$0xff]
        %v641 = vld [vmem:[#allocation7 + $0x4d8] sm:$0xff]
        %v642 = vld [vmem:[#allocation7 + $0x4e0] sm:$0xff]
        %v643 = vld [vmem:[#allocation7 + $0x4e8] sm:$0xff]
        %v644 = vld [vmem:[#allocation7 + $0x4f0] sm:$0xff]
        %v645 = vld [vmem:[#allocation7 + $0x4f8] sm:$0xff]
        %v646 = vld [vmem:[#allocation7 + $0x500] sm:$0xff]
        %v647 = vld [vmem:[#allocation7 + $0x508] sm:$0xff]
        %v648 = vld [vmem:[#allocation7 + $0x510] sm:$0xff]
        %v649 = vld [vmem:[#allocation7 + $0x518] sm:$0xff]
        %v650 = vld [vmem:[#allocation7 + $0x520] sm:$0xff]
        %v651 = vld [vmem:[#allocation7 + $0x528] sm:$0xff]
        %v652 = vld [vmem:[#allocation7 + $0x530] sm:$0xff]
        %v653 = vld [vmem:[#allocation7 + $0x538] sm:$0xff]
        %v654 = vld [vmem:[#allocation7 + $0x540] sm:$0xff]
        %v655 = vld [vmem:[#allocation7 + $0x548] sm:$0xff]
        %v656 = vld [vmem:[#allocation7 + $0x550] sm:$0xff]
        %v657 = vld [vmem:[#allocation7 + $0x558] sm:$0xff]
        %v658 = vld [vmem:[#allocation7 + $0x560] sm:$0xff]
        %v659 = vld [vmem:[#allocation7 + $0x568] sm:$0xff]
        %v660 = vld [vmem:[#allocation7 + $0x570] sm:$0xff]
        %v661 = vld [vmem:[#allocation7 + $0x578] sm:$0xff]
        %v662 = vld [vmem:[#allocation7 + $0x580] sm:$0xff]
        %v663 = vld [vmem:[#allocation7 + $0x588] sm:$0xff]
        %v664 = vld [vmem:[#allocation7 + $0x590] sm:$0xff]
        %v665 = vld [vmem:[#allocation7 + $0x598] sm:$0xff]
        %v666 = vld [vmem:[#allocation7 + $0x5a0] sm:$0xff]
        %v667 = vld [vmem:[#allocation7 + $0x5a8] sm:$0xff]
        %v668 = vld [vmem:[#allocation7 + $0x5b0] sm:$0xff]
        %v669 = vld [vmem:[#allocation7 + $0x5b8] sm:$0xff]
        %v670 = vld [vmem:[#allocation7 + $0x5c0] sm:$0xff]
        %v671 = vld [vmem:[#allocation7 + $0x5c8] sm:$0xff]
        %v672 = vld [vmem:[#allocation7 + $0x5d0] sm:$0xff]
        %v673 = vld [vmem:[#allocation7 + $0x5d8] sm:$0xff]
        %v674 = vld [vmem:[#allocation7 + $0x5e0] sm:$0xff]
        %v675 = vld [vmem:[#allocation7 + $0x5e8] sm:$0xff]
        %v676 = vld [vmem:[#allocation7 + $0x5f0] sm:$0xff]
        %v677 = vld [vmem:[#allocation7 + $0x5f8] sm:$0xff]
        %v678 = vld [vmem:[#allocation7 + $0x600] sm:$0xff]
        %v679 = vld [vmem:[#allocation7 + $0x608] sm:$0xff]
        %v680 = vld [vmem:[#allocation7 + $0x610] sm:$0xff]
        %v681 = vld [vmem:[#allocation7 + $0x618] sm:$0xff]
        %v682 = vld [vmem:[#allocation7 + $0x620] sm:$0xff]
        %v683 = vld [vmem:[#allocation7 + $0x628] sm:$0xff]
        %v684 = vld [vmem:[#allocation7 + $0x630] sm:$0xff]
        %v685 = vld [vmem:[#allocation7 + $0x638] sm:$0xff]
        %v686 = vld [vmem:[#allocation7 + $0x640] sm:$0xff]
        %v687 = vld [vmem:[#allocation7 + $0x648] sm:$0xff]
        %v688 = vld [vmem:[#allocation7 + $0x650] sm:$0xff]
        %v689 = vld [vmem:[#allocation7 + $0x658] sm:$0xff]
        %v690 = vld [vmem:[#allocation7 + $0x660] sm:$0xff]
        %v691 = vld [vmem:[#allocation7 + $0x668] sm:$0xff]
        %v692 = vld [vmem:[#allocation7 + $0x670] sm:$0xff]
        %v693 = vld [vmem:[#allocation7 + $0x678] sm:$0xff]
        %v694 = vld [vmem:[#allocation7 + $0x680] sm:$0xff]
        %v695 = vld [vmem:[#allocation7 + $0x688] sm:$0xff]
        %v696 = vld [vmem:[#allocation7 + $0x690] sm:$0xff]
        %v697 = vld [vmem:[#allocation7 + $0x698] sm:$0xff]
        %v698 = vld [vmem:[#allocation7 + $0x6a0] sm:$0xff]
        %v699 = vld [vmem:[#allocation7 + $0x6a8] sm:$0xff]
        %v700 = vld [vmem:[#allocation7 + $0x6b0] sm:$0xff]
        %v701 = vld [vmem:[#allocation7 + $0x6b8] sm:$0xff]
        %v702 = vld [vmem:[#allocation7 + $0x6c0] sm:$0xff]
        %v703 = vld [vmem:[#allocation7 + $0x6c8] sm:$0xff]
        %v704 = vld [vmem:[#allocation7 + $0x6d0] sm:$0xff]
        %v705 = vld [vmem:[#allocation7 + $0x6d8] sm:$0xff]
        %v706 = vld [vmem:[#allocation7 + $0x6e0] sm:$0xff]
        %v707 = vld [vmem:[#allocation7 + $0x6e8] sm:$0xff]
        %v708 = vld [vmem:[#allocation7 + $0x6f0] sm:$0xff]
        %v709 = vld [vmem:[#allocation7 + $0x6f8] sm:$0xff]
        %v710 = vld [vmem:[#allocation7 + $0x700] sm:$0xff]
        %v711 = vld [vmem:[#allocation7 + $0x708] sm:$0xff]
        %v712 = vld [vmem:[#allocation7 + $0x710] sm:$0xff]
        %v713 = vld [vmem:[#allocation7 + $0x718] sm:$0xff]
        %v714 = vld [vmem:[#allocation7 + $0x720] sm:$0xff]
        %v715 = vld [vmem:[#allocation7 + $0x728] sm:$0xff]
        %v716 = vld [vmem:[#allocation7 + $0x730] sm:$0xff]
        %v717 = vld [vmem:[#allocation7 + $0x738] sm:$0xff]
        %v718 = vld [vmem:[#allocation7 + $0x740] sm:$0xff]
        %v719 = vld [vmem:[#allocation7 + $0x748] sm:$0xff]
        %v720 = vld [vmem:[#allocation7 + $0x750] sm:$0xff]
        %v721 = vld [vmem:[#allocation7 + $0x758] sm:$0xff]
        %v722 = vld [vmem:[#allocation7 + $0x760] sm:$0xff]
        %v723 = vld [vmem:[#allocation7 + $0x768] sm:$0xff]
        %v724 = vld [vmem:[#allocation7 + $0x770] sm:$0xff]
        %v725 = vld [vmem:[#allocation7 + $0x778] sm:$0xff]
        %v726 = vld [vmem:[#allocation7 + $0x780] sm:$0xff]
        %v727 = vld [vmem:[#allocation7 + $0x788] sm:$0xff]
        %v728 = vld [vmem:[#allocation7 + $0x790] sm:$0xff]
        %v729 = vld [vmem:[#allocation7 + $0x798] sm:$0xff]
        %v730 = vld [vmem:[#allocation7 + $0x7a0] sm:$0xff]
        %v731 = vld [vmem:[#allocation7 + $0x7a8] sm:$0xff]
        %v732 = vld [vmem:[#allocation7 + $0x7b0] sm:$0xff]
        %v733 = vld [vmem:[#allocation7 + $0x7b8] sm:$0xff]
        %v734 = vld [vmem:[#allocation7 + $0x7c0] sm:$0xff]
        %v735 = vld [vmem:[#allocation7 + $0x7c8] sm:$0xff]
        %v736 = vld [vmem:[#allocation7 + $0x7d0] sm:$0xff]
        %v737 = vld [vmem:[#allocation7 + $0x7d8] sm:$0xff]
        %v738 = vld [vmem:[#allocation7 + $0x7e0] sm:$0xff]
        %v739 = vld [vmem:[#allocation7 + $0x7e8] sm:$0xff]
        %v740 = vld [vmem:[#allocation7 + $0x7f0] sm:$0xff]
        %v741 = vld [vmem:[#allocation7 + $0x7f8] sm:$0xff]
        %v742 = vld [vmem:[#allocation7 + $0x800] sm:$0xff]
        %v743 = vld [vmem:[#allocation7 + $0x808] sm:$0xff]
        %v744 = vld [vmem:[#allocation7 + $0x810] sm:$0xff]
        %v745 = vld [vmem:[#allocation7 + $0x818] sm:$0xff]
        %v746 = vld [vmem:[#allocation7 + $0x820] sm:$0xff]
        %v747 = vld [vmem:[#allocation7 + $0x828] sm:$0xff]
        %v748 = vld [vmem:[#allocation7 + $0x830] sm:$0xff]
        %v749 = vld [vmem:[#allocation7 + $0x838] sm:$0xff]
        %v750 = vld [vmem:[#allocation7 + $0x840] sm:$0xff]
        %v751 = vld [vmem:[#allocation7 + $0x848] sm:$0xff]
        %v752 = vld [vmem:[#allocation7 + $0x850] sm:$0xff]
        %v753 = vld [vmem:[#allocation7 + $0x858] sm:$0xff]
        %v754 = vld [vmem:[#allocation7 + $0x860] sm:$0xff]
        %v755 = vld [vmem:[#allocation7 + $0x868] sm:$0xff]
        %v756 = vld [vmem:[#allocation7 + $0x870] sm:$0xff]
        %v757 = vld [vmem:[#allocation7 + $0x878] sm:$0xff]
        %v758 = vld [vmem:[#allocation7 + $0x880] sm:$0xff]
        %v759 = vld [vmem:[#allocation7 + $0x888] sm:$0xff]
        %v760 = vld [vmem:[#allocation7 + $0x890] sm:$0xff]
        %v761 = vld [vmem:[#allocation7 + $0x898] sm:$0xff]
        %v762 = vld [vmem:[#allocation7 + $0x8a0] sm:$0xff]
        %v763 = vld [vmem:[#allocation7 + $0x8a8] sm:$0xff]
        %v764 = vld [vmem:[#allocation7 + $0x8b0] sm:$0xff]
        %v765 = vld [vmem:[#allocation7 + $0x8b8] sm:$0xff]
        %v766 = vld [vmem:[#allocation7 + $0x8c0] sm:$0xff]
        %v767 = vld [vmem:[#allocation7 + $0x8c8] sm:$0xff]
        %v768 = vld [vmem:[#allocation7 + $0x8d0] sm:$0xff]
        %v769 = vld [vmem:[#allocation7 + $0x8d8] sm:$0xff]
        %v770 = vld [vmem:[#allocation7 + $0x8e0] sm:$0xff]
        %v771 = vld [vmem:[#allocation7 + $0x8e8] sm:$0xff]
        %v772 = vld [vmem:[#allocation7 + $0x8f0] sm:$0xff]
        %v773 = vld [vmem:[#allocation7 + $0x8f8] sm:$0xff]
        %v774 = vld [vmem:[#allocation7 + $0x900] sm:$0xff]
        %v775 = vld [vmem:[#allocation7 + $0x908] sm:$0xff]
        %v776 = vld [vmem:[#allocation7 + $0x910] sm:$0xff]
        %v777 = vld [vmem:[#allocation7 + $0x918] sm:$0xff]
        %v778 = vld [vmem:[#allocation7 + $0x920] sm:$0xff]
        %v779 = vld [vmem:[#allocation7 + $0x928] sm:$0xff]
        %v780 = vld [vmem:[#allocation7 + $0x930] sm:$0xff]
        %v781 = vld [vmem:[#allocation7 + $0x938] sm:$0xff]
        %v782 = vld [vmem:[#allocation7 + $0x940] sm:$0xff]
        %v783 = vld [vmem:[#allocation7 + $0x948] sm:$0xff]
        %v784 = vld [vmem:[#allocation7 + $0x950] sm:$0xff]
        %v785 = vld [vmem:[#allocation7 + $0x958] sm:$0xff]
        %v786 = vld [vmem:[#allocation7 + $0x960] sm:$0xff]
        %v787 = vld [vmem:[#allocation7 + $0x968] sm:$0xff]
        %v788 = vld [vmem:[#allocation7 + $0x970] sm:$0xff]
        %v789 = vld [vmem:[#allocation7 + $0x978] sm:$0xff]
        %v790 = vld [vmem:[#allocation7 + $0x980] sm:$0xff]
        %v791 = vld [vmem:[#allocation7 + $0x988] sm:$0xff]
        %v792 = vld [vmem:[#allocation7 + $0x990] sm:$0xff]
        %v793 = vld [vmem:[#allocation7 + $0x998] sm:$0xff]
        %v794 = vld [vmem:[#allocation7 + $0x9a0] sm:$0xff]
        %v795 = vld [vmem:[#allocation7 + $0x9a8] sm:$0xff]
        %v796 = vld [vmem:[#allocation7 + $0x9b0] sm:$0xff]
        %v797 = vld [vmem:[#allocation7 + $0x9b8] sm:$0xff]
        %v798 = vld [vmem:[#allocation7 + $0x9c0] sm:$0xff]
        %v799 = vld [vmem:[#allocation7 + $0x9c8] sm:$0xff]
        %v800 = vld [vmem:[#allocation7 + $0x9d0] sm:$0xff]
        %v801 = vld [vmem:[#allocation7 + $0x9d8] sm:$0xff]
        %v802 = vld [vmem:[#allocation7 + $0x9e0] sm:$0xff]
        %v803 = vld [vmem:[#allocation7 + $0x9e8] sm:$0xff]
        %v804 = vld [vmem:[#allocation7 + $0x9f0] sm:$0xff]
        %v805 = vld [vmem:[#allocation7 + $0x9f8] sm:$0xff]
        %v806 = vld [vmem:[#allocation7 + $0xa00] sm:$0xff]
        %v807 = vld [vmem:[#allocation7 + $0xa08] sm:$0xff]
        %v808 = vld [vmem:[#allocation7 + $0xa10] sm:$0xff]
        %v809 = vld [vmem:[#allocation7 + $0xa18] sm:$0xff]
        %v810 = vld [vmem:[#allocation7 + $0xa20] sm:$0xff]
        %v811 = vld [vmem:[#allocation7 + $0xa28] sm:$0xff]
        %v812 = vld [vmem:[#allocation7 + $0xa30] sm:$0xff]
        %v813 = vld [vmem:[#allocation7 + $0xa38] sm:$0xff]
        %v814 = vld [vmem:[#allocation7 + $0xa40] sm:$0xff]
        %v815 = vld [vmem:[#allocation7 + $0xa48] sm:$0xff]
        %v816 = vld [vmem:[#allocation7 + $0xa50] sm:$0xff]
        %v817 = vld [vmem:[#allocation7 + $0xa58] sm:$0xff]
        %v818 = vld [vmem:[#allocation7 + $0xa60] sm:$0xff]
        %v819 = vld [vmem:[#allocation7 + $0xa68] sm:$0xff]
        %v820 = vld [vmem:[#allocation7 + $0xa70] sm:$0xff]
        %v821 = vld [vmem:[#allocation7 + $0xa78] sm:$0xff]
        %v822 = vld [vmem:[#allocation7 + $0xa80] sm:$0xff]
        %v823 = vld [vmem:[#allocation7 + $0xa88] sm:$0xff]
        %v824 = vld [vmem:[#allocation7 + $0xa90] sm:$0xff]
        %v825 = vld [vmem:[#allocation7 + $0xa98] sm:$0xff]
        %v826 = vld [vmem:[#allocation7 + $0xaa0] sm:$0xff]
        %v827 = vld [vmem:[#allocation7 + $0xaa8] sm:$0xff]
        %v828 = vld [vmem:[#allocation7 + $0xab0] sm:$0xff]
        %v829 = vld [vmem:[#allocation7 + $0xab8] sm:$0xff]
        %v830 = vld [vmem:[#allocation7 + $0xac0] sm:$0xff]
        %v831 = vld [vmem:[#allocation7 + $0xac8] sm:$0xff]
        %v832 = vld [vmem:[#allocation7 + $0xad0] sm:$0xff]
        %v833 = vld [vmem:[#allocation7 + $0xad8] sm:$0xff]
        %v834 = vld [vmem:[#allocation7 + $0xae0] sm:$0xff]
        %v835 = vld [vmem:[#allocation7 + $0xae8] sm:$0xff]
        %v836 = vld [vmem:[#allocation7 + $0xaf0] sm:$0xff]
        %v837 = vld [vmem:[#allocation7 + $0xaf8] sm:$0xff]
        %v838 = vld [vmem:[#allocation7 + $0xb00] sm:$0xff]
        %v839 = vld [vmem:[#allocation7 + $0xb08] sm:$0xff]
        %v840 = vld [vmem:[#allocation7 + $0xb10] sm:$0xff]
        %v841 = vld [vmem:[#allocation7 + $0xb18] sm:$0xff]
        %v842 = vld [vmem:[#allocation7 + $0xb20] sm:$0xff]
        %v843 = vld [vmem:[#allocation7 + $0xb28] sm:$0xff]
        %v844 = vld [vmem:[#allocation7 + $0xb30] sm:$0xff]
        %v845 = vld [vmem:[#allocation7 + $0xb38] sm:$0xff]
        %v846 = vld [vmem:[#allocation7 + $0xb40] sm:$0xff]
        %v847 = vld [vmem:[#allocation7 + $0xb48] sm:$0xff]
        %v848 = vld [vmem:[#allocation7 + $0xb50] sm:$0xff]
        %v849 = vld [vmem:[#allocation7 + $0xb58] sm:$0xff]
        %v850 = vld [vmem:[#allocation7 + $0xb60] sm:$0xff]
        %v851 = vld [vmem:[#allocation7 + $0xb68] sm:$0xff]
        %v852 = vld [vmem:[#allocation7 + $0xb70] sm:$0xff]
        %v853 = vld [vmem:[#allocation7 + $0xb78] sm:$0xff]
        %v854 = vld [vmem:[#allocation7 + $0xb80] sm:$0xff]
        %v855 = vld [vmem:[#allocation7 + $0xb88] sm:$0xff]
        %v856 = vld [vmem:[#allocation7 + $0xb90] sm:$0xff]
        %v857 = vld [vmem:[#allocation7 + $0xb98] sm:$0xff]
        %v858 = vld [vmem:[#allocation7 + $0xba0] sm:$0xff]
        %v859 = vld [vmem:[#allocation7 + $0xba8] sm:$0xff]
        %v860 = vld [vmem:[#allocation7 + $0xbb0] sm:$0xff]
        %v861 = vld [vmem:[#allocation7 + $0xbb8] sm:$0xff]
        %v862 = vld [vmem:[#allocation7 + $0xbc0] sm:$0xff]
        %v863 = vld [vmem:[#allocation7 + $0xbc8] sm:$0xff]
        %v864 = vld [vmem:[#allocation7 + $0xbd0] sm:$0xff]
        %v865 = vld [vmem:[#allocation7 + $0xbd8] sm:$0xff]
        %v866 = vld [vmem:[#allocation7 + $0xbe0] sm:$0xff]
        %v867 = vld [vmem:[#allocation7 + $0xbe8] sm:$0xff]
        %v868 = vld [vmem:[#allocation7 + $0xbf0] sm:$0xff]
        %v869 = vld [vmem:[#allocation7 + $0xbf8] sm:$0xff]
        %v870 = vld [vmem:[#allocation7 + $0xc00] sm:$0xff]
        %v871 = vld [vmem:[#allocation7 + $0xc08] sm:$0xff]
        %v872 = vld [vmem:[#allocation7 + $0xc10] sm:$0xff]
        %v873 = vld [vmem:[#allocation7 + $0xc18] sm:$0xff]
        %v874 = vld [vmem:[#allocation7 + $0xc20] sm:$0xff]
        %v875 = vld [vmem:[#allocation7 + $0xc28] sm:$0xff]
        %v876 = vld [vmem:[#allocation7 + $0xc30] sm:$0xff]
        %v877 = vld [vmem:[#allocation7 + $0xc38] sm:$0xff]
        %v878 = vld [vmem:[#allocation7 + $0xc40] sm:$0xff]
        %v879 = vld [vmem:[#allocation7 + $0xc48] sm:$0xff]
        %v880 = vld [vmem:[#allocation7 + $0xc50] sm:$0xff]
        %v881 = vld [vmem:[#allocation7 + $0xc58] sm:$0xff]
        %v882 = vld [vmem:[#allocation7 + $0xc60] sm:$0xff]
        %v883 = vld [vmem:[#allocation7 + $0xc68] sm:$0xff]
        %v884 = vld [vmem:[#allocation7 + $0xc70] sm:$0xff]
        %v885 = vld [vmem:[#allocation7 + $0xc78] sm:$0xff]
        %v886 = vld [vmem:[#allocation7 + $0xc80] sm:$0xff]
        %v887 = vld [vmem:[#allocation7 + $0xc88] sm:$0xff]
        %v888 = vld [vmem:[#allocation7 + $0xc90] sm:$0xff]
        %v889 = vld [vmem:[#allocation7 + $0xc98] sm:$0xff]
        %v890 = vld [vmem:[#allocation7 + $0xca0] sm:$0xff]
        %v891 = vld [vmem:[#allocation7 + $0xca8] sm:$0xff]
        %v892 = vld [vmem:[#allocation7 + $0xcb0] sm:$0xff]
        %v893 = vld [vmem:[#allocation7 + $0xcb8] sm:$0xff]
        %v894 = vld [vmem:[#allocation7 + $0xcc0] sm:$0xff]
        %v895 = vld [vmem:[#allocation7 + $0xcc8] sm:$0xff]
        %v896 = vld [vmem:[#allocation7 + $0xcd0] sm:$0xff]
        %v897 = vld [vmem:[#allocation7 + $0xcd8] sm:$0xff]
        %v898 = vld [vmem:[#allocation7 + $0xce0] sm:$0xff]
        %v899 = vld [vmem:[#allocation7 + $0xce8] sm:$0xff]
        %v900 = vld [vmem:[#allocation7 + $0xcf0] sm:$0xff]
        %v901 = vld [vmem:[#allocation7 + $0xcf8] sm:$0xff]
        %v902 = vld [vmem:[#allocation7 + $0xd00] sm:$0xff]
        %v903 = vld [vmem:[#allocation7 + $0xd08] sm:$0xff]
        %v904 = vld [vmem:[#allocation7 + $0xd10] sm:$0xff]
        %v905 = vld [vmem:[#allocation7 + $0xd18] sm:$0xff]
        %v906 = vld [vmem:[#allocation7 + $0xd20] sm:$0xff]
        %v907 = vld [vmem:[#allocation7 + $0xd28] sm:$0xff]
        %v908 = vld [vmem:[#allocation7 + $0xd30] sm:$0xff]
        %v909 = vld [vmem:[#allocation7 + $0xd38] sm:$0xff]
        %v910 = vld [vmem:[#allocation7 + $0xd40] sm:$0xff]
        %v911 = vld [vmem:[#allocation7 + $0xd48] sm:$0xff]
        %v912 = vld [vmem:[#allocation7 + $0xd50] sm:$0xff]
        %v913 = vld [vmem:[#allocation7 + $0xd58] sm:$0xff]
        %v914 = vld [vmem:[#allocation7 + $0xd60] sm:$0xff]
        %v915 = vld [vmem:[#allocation7 + $0xd68] sm:$0xff]
        %v916 = vld [vmem:[#allocation7 + $0xd70] sm:$0xff]
        %v917 = vld [vmem:[#allocation7 + $0xd78] sm:$0xff]
        %v918 = vld [vmem:[#allocation7 + $0xd80] sm:$0xff]
        %v919 = vld [vmem:[#allocation7 + $0xd88] sm:$0xff]
        %v920 = vld [vmem:[#allocation7 + $0xd90] sm:$0xff]
        %v921 = vld [vmem:[#allocation7 + $0xd98] sm:$0xff]
        %v922 = vld [vmem:[#allocation7 + $0xda0] sm:$0xff]
        %v923 = vld [vmem:[#allocation7 + $0xda8] sm:$0xff]
        %v924 = vld [vmem:[#allocation7 + $0xdb0] sm:$0xff]
        %v925 = vld [vmem:[#allocation7 + $0xdb8] sm:$0xff]
        %v926 = vld [vmem:[#allocation7 + $0xdc0] sm:$0xff]
        %v927 = vld [vmem:[#allocation7 + $0xdc8] sm:$0xff]
        %v928 = vld [vmem:[#allocation7 + $0xdd0] sm:$0xff]
        %v929 = vld [vmem:[#allocation7 + $0xdd8] sm:$0xff]
        %v930 = vld [vmem:[#allocation7 + $0xde0] sm:$0xff]
        %v931 = vld [vmem:[#allocation7 + $0xde8] sm:$0xff]
        %v932 = vld [vmem:[#allocation7 + $0xdf0] sm:$0xff]
        %v933 = vld [vmem:[#allocation7 + $0xdf8] sm:$0xff]
        %v934 = vld [vmem:[#allocation7 + $0xe00] sm:$0xff]
        %v935 = vld [vmem:[#allocation7 + $0xe08] sm:$0xff]
        %v936 = vld [vmem:[#allocation7 + $0xe10] sm:$0xff]
        %v937 = vld [vmem:[#allocation7 + $0xe18] sm:$0xff]
        %v938 = vld [vmem:[#allocation7 + $0xe20] sm:$0xff]
        %v939 = vld [vmem:[#allocation7 + $0xe28] sm:$0xff]
        %v940 = vld [vmem:[#allocation7 + $0xe30] sm:$0xff]
        %v941 = vld [vmem:[#allocation7 + $0xe38] sm:$0xff]
        %v942 = vld [vmem:[#allocation7 + $0xe40] sm:$0xff]
        %v943 = vld [vmem:[#allocation7 + $0xe48] sm:$0xff]
        %v944 = vld [vmem:[#allocation7 + $0xe50] sm:$0xff]
        %v945 = vld [vmem:[#allocation7 + $0xe58] sm:$0xff]
        %v946 = vld [vmem:[#allocation7 + $0xe60] sm:$0xff]
        %v947 = vld [vmem:[#allocation7 + $0xe68] sm:$0xff]
        %v948 = vld [vmem:[#allocation7 + $0xe70] sm:$0xff]
        %v949 = vld [vmem:[#allocation7 + $0xe78] sm:$0xff]
        %v950 = vld [vmem:[#allocation7 + $0xe80] sm:$0xff]
        %v951 = vld [vmem:[#allocation7 + $0xe88] sm:$0xff]
        %v952 = vld [vmem:[#allocation7 + $0xe90] sm:$0xff]
        %v953 = vld [vmem:[#allocation7 + $0xe98] sm:$0xff]
        %v954 = vld [vmem:[#allocation7 + $0xea0] sm:$0xff]
        %v955 = vld [vmem:[#allocation7 + $0xea8] sm:$0xff]
        %v956 = vld [vmem:[#allocation7 + $0xeb0] sm:$0xff]
        %v957 = vld [vmem:[#allocation7 + $0xeb8] sm:$0xff]
        %v958 = vld [vmem:[#allocation7 + $0xec0] sm:$0xff]
        %v959 = vld [vmem:[#allocation7 + $0xec8] sm:$0xff]
        %v960 = vld [vmem:[#allocation7 + $0xed0] sm:$0xff]
        %v961 = vld [vmem:[#allocation7 + $0xed8] sm:$0xff]
        %v962 = vld [vmem:[#allocation7 + $0xee0] sm:$0xff]
        %v963 = vld [vmem:[#allocation7 + $0xee8] sm:$0xff]
        %v964 = vld [vmem:[#allocation7 + $0xef0] sm:$0xff]
        %v965 = vld [vmem:[#allocation7 + $0xef8] sm:$0xff]
        %v966 = vld [vmem:[#allocation7 + $0xf00] sm:$0xff]
        %v967 = vld [vmem:[#allocation7 + $0xf08] sm:$0xff]
        %v968 = vld [vmem:[#allocation7 + $0xf10] sm:$0xff]
        %v969 = vld [vmem:[#allocation7 + $0xf18] sm:$0xff]
        %v970 = vld [vmem:[#allocation7 + $0xf20] sm:$0xff]
        %v971 = vld [vmem:[#allocation7 + $0xf28] sm:$0xff]
        %v972 = vld [vmem:[#allocation7 + $0xf30] sm:$0xff]
        %v973 = vld [vmem:[#allocation7 + $0xf38] sm:$0xff]
        %v974 = vld [vmem:[#allocation7 + $0xf40] sm:$0xff]
        %v975 = vld [vmem:[#allocation7 + $0xf48] sm:$0xff]
        %v976 = vld [vmem:[#allocation7 + $0xf50] sm:$0xff]
        %v977 = vld [vmem:[#allocation7 + $0xf58] sm:$0xff]
        %v978 = vld [vmem:[#allocation7 + $0xf60] sm:$0xff]
        %v979 = vld [vmem:[#allocation7 + $0xf68] sm:$0xff]
        %v980 = vld [vmem:[#allocation7 + $0xf70] sm:$0xff]
        %v981 = vld [vmem:[#allocation7 + $0xf78] sm:$0xff]
        %v982 = vld [vmem:[#allocation7 + $0xf80] sm:$0xff]
        %v983 = vld [vmem:[#allocation7 + $0xf88] sm:$0xff]
        %v984 = vld [vmem:[#allocation7 + $0xf90] sm:$0xff]
        %v985 = vld [vmem:[#allocation7 + $0xf98] sm:$0xff]
        %v986 = vld [vmem:[#allocation7 + $0xfa0] sm:$0xff]
        %v987 = vld [vmem:[#allocation7 + $0xfa8] sm:$0xff]
        %v988 = vld [vmem:[#allocation7 + $0xfb0] sm:$0xff]
        %v989 = vld [vmem:[#allocation7 + $0xfb8] sm:$0xff]
        %v990 = vld [vmem:[#allocation7 + $0xfc0] sm:$0xff]
        %v991 = vld [vmem:[#allocation7 + $0xfc8] sm:$0xff]
        %v992 = vld [vmem:[#allocation7 + $0xfd0] sm:$0xff]
        %v993 = vld [vmem:[#allocation7 + $0xfd8] sm:$0xff]
        %v994 = vld [vmem:[#allocation7 + $0xfe0] sm:$0xff]
        %v995 = vld [vmem:[#allocation7 + $0xfe8] sm:$0xff]
        %v996 = vld [vmem:[#allocation7 + $0xff0] sm:$0xff]
        %v997 = vld [vmem:[#allocation7 + $0xff8] sm:$0xff]
        %v998 = vld [vmem:[#allocation7 + $0x1000] sm:$0xff]
        %v999 = vld [vmem:[#allocation7 + $0x1008] sm:$0xff]
        %v1000 = vld [vmem:[#allocation7 + $0x1010] sm:$0xff]
        %v1001 = vld [vmem:[#allocation7 + $0x1018] sm:$0xff]
        %v1002 = vld [vmem:[#allocation7 + $0x1020] sm:$0xff]
        %v1003 = vld [vmem:[#allocation7 + $0x1028] sm:$0xff]
        %v1004 = vld [vmem:[#allocation7 + $0x1030] sm:$0xff]
        %v1005 = vld [vmem:[#allocation7 + $0x1038] sm:$0xff]
        %v1006 = vld [vmem:[#allocation7 + $0x1040] sm:$0xff]
        %v1007 = vld [vmem:[#allocation7 + $0x1048] sm:$0xff]
        %v1008 = vld [vmem:[#allocation7 + $0x1050] sm:$0xff]
        %v1009 = vld [vmem:[#allocation7 + $0x1058] sm:$0xff]
        %v1010 = vld [vmem:[#allocation7 + $0x1060] sm:$0xff]
        %v1011 = vld [vmem:[#allocation7 + $0x1068] sm:$0xff]
        %v1012 = vld [vmem:[#allocation7 + $0x1070] sm:$0xff]
        %v1013 = vld [vmem:[#allocation7 + $0x1078] sm:$0xff]
        %v1014 = vld [vmem:[#allocation7 + $0x1080] sm:$0xff]
        %v1015 = vld [vmem:[#allocation7 + $0x1088] sm:$0xff]
        %v1016 = vld [vmem:[#allocation7 + $0x1090] sm:$0xff]
        %v1017 = vld [vmem:[#allocation7 + $0x1098] sm:$0xff]
        %v1018 = vld [vmem:[#allocation7 + $0x10a0] sm:$0xff]
        %v1019 = vld [vmem:[#allocation7 + $0x10a8] sm:$0xff]
        %v1020 = vld [vmem:[#allocation7 + $0x10b0] sm:$0xff]
        %v1021 = vld [vmem:[#allocation7 + $0x10b8] sm:$0xff]
        %v1022 = vld [vmem:[#allocation7 + $0x10c0] sm:$0xff]
        %v1023 = vld [vmem:[#allocation7 + $0x10c8] sm:$0xff]
        %v1024 = vld [vmem:[#allocation7 + $0x10d0] sm:$0xff]
        %v1025 = vld [vmem:[#allocation7 + $0x10d8] sm:$0xff]
        %v1026 = vld [vmem:[#allocation7 + $0x10e0] sm:$0xff]
        %v1027 = vld [vmem:[#allocation7 + $0x10e8] sm:$0xff]
        %v1028 = vld [vmem:[#allocation7 + $0x10f0] sm:$0xff]
        %v1029 = vld [vmem:[#allocation7 + $0x10f8] sm:$0xff]
        %v1030 = vld [vmem:[#allocation7 + $0x1100] sm:$0xff]
        %v1031 = vld [vmem:[#allocation7 + $0x1108] sm:$0xff]
        %v1032 = vld [vmem:[#allocation7 + $0x1110] sm:$0xff]
        %v1033 = vld [vmem:[#allocation7 + $0x1118] sm:$0xff]
        %v1034 = vld [vmem:[#allocation7 + $0x1120] sm:$0xff]
        %v1035 = vld [vmem:[#allocation7 + $0x1128] sm:$0xff]
        %v1036 = vld [vmem:[#allocation7 + $0x1130] sm:$0xff]
        %v1037 = vld [vmem:[#allocation7 + $0x1138] sm:$0xff]
        %v1038 = vld [vmem:[#allocation7 + $0x1140] sm:$0xff]
        %v1039 = vld [vmem:[#allocation7 + $0x1148] sm:$0xff]
        %v1040 = vld [vmem:[#allocation7 + $0x1150] sm:$0xff]
        %v1041 = vld [vmem:[#allocation7 + $0x1158] sm:$0xff]
        %v1042 = vld [vmem:[#allocation7 + $0x1160] sm:$0xff]
        %v1043 = vld [vmem:[#allocation7 + $0x1168] sm:$0xff]
        %v1044 = vld [vmem:[#allocation7 + $0x1170] sm:$0xff]
        %v1045 = vld [vmem:[#allocation7 + $0x1178] sm:$0xff]
        %v1046 = vld [vmem:[#allocation7 + $0x1180] sm:$0xff]
        %v1047 = vld [vmem:[#allocation7 + $0x1188] sm:$0xff]
        %v1048 = vld [vmem:[#allocation7 + $0x1190] sm:$0xff]
        %v1049 = vld [vmem:[#allocation7 + $0x1198] sm:$0xff]
        %v1050 = vld [vmem:[#allocation7 + $0x11a0] sm:$0xff]
        %v1051 = vld [vmem:[#allocation7 + $0x11a8] sm:$0xff]
        %v1052 = vld [vmem:[#allocation7 + $0x11b0] sm:$0xff]
        %v1053 = vld [vmem:[#allocation7 + $0x11b8] sm:$0xff]
        %v1054 = vld [vmem:[#allocation7 + $0x11c0] sm:$0xff]
        %v1055 = vld [vmem:[#allocation7 + $0x11c8] sm:$0xff]
        %v1056 = vld [vmem:[#allocation7 + $0x11d0] sm:$0xff]
        %v1057 = vld [vmem:[#allocation7 + $0x11d8] sm:$0xff]
        %v1058 = vld [vmem:[#allocation7 + $0x11e0] sm:$0xff]
        %v1059 = vld [vmem:[#allocation7 + $0x11e8] sm:$0xff]
        %v1060 = vld [vmem:[#allocation7 + $0x11f0] sm:$0xff]
        %v1061 = vld [vmem:[#allocation7 + $0x11f8] sm:$0xff]
        %v1062 = vld [vmem:[#allocation8] sm:$0xff]
        %v1063 = vld [vmem:[#allocation8 + $0x8] sm:$0xf]
        %v1066 = vlaneseq
        %v1067 = vshrl.u32 %v1066, 7
        %v1068 = vsub.s32 0, %v1067
        %v1069 = vrot.slane %v1062, %v1068
        %v1070 = vlaneseq
        %v1071 = vshrl.u32 %v1070, 7
        %v1072 = vsub.s32 1, %v1071
        %v1073 = vrot.slane %v1062, %v1072
        %v1074 = vlaneseq
        %v1075 = vshrl.u32 %v1074, 7
        %v1076 = vsub.s32 2, %v1075
        %v1077 = vrot.slane %v1062, %v1076
        %v1078 = vlaneseq
        %v1079 = vshrl.u32 %v1078, 7
        %v1080 = vsub.s32 3, %v1079
        %v1081 = vrot.slane %v1062, %v1080
        %v1082 = vlaneseq
        %v1083 = vshrl.u32 %v1082, 7
        %v1084 = vsub.s32 4, %v1083
        %v1085 = vrot.slane %v1062, %v1084
        %v1086 = vlaneseq
        %v1087 = vshrl.u32 %v1086, 7
        %v1088 = vsub.s32 5, %v1087
        %v1089 = vrot.slane %v1062, %v1088
        %v1090 = vlaneseq
        %v1091 = vshrl.u32 %v1090, 7
        %v1092 = vsub.s32 6, %v1091
        %v1093 = vrot.slane %v1062, %v1092
        %v1094 = vlaneseq
        %v1095 = vshrl.u32 %v1094, 7
        %v1096 = vsub.s32 7, %v1095
        %v1097 = vrot.slane %v1062, %v1096
        %v1098 = vlaneseq
        %v1099 = vshrl.u32 %v1098, 7
        %v1100 = vsub.s32 0, %v1099
        %v1101 = vrot.slane %v1063, %v1100
        %v1102 = vlaneseq
        %v1103 = vshrl.u32 %v1102, 7
        %v1104 = vsub.s32 1, %v1103
        %v1105 = vrot.slane %v1063, %v1104
        %v1106 = vlaneseq
        %v1107 = vshrl.u32 %v1106, 7
        %v1108 = vsub.s32 2, %v1107
        %v1109 = vrot.slane %v1063, %v1108
        %v1110 = vlaneseq
        %v1111 = vshrl.u32 %v1110, 7
        %v1112 = vsub.s32 3, %v1111
        %v1113 = vrot.slane %v1063, %v1112
        %v1702 = vunpack.c.l.b16 %v486
        %v1703 = vunpack.c.h.b16 %v486
        %v1704 = vunpack.c.l.b16 %v487
        %v1705 = vunpack.c.h.b16 %v487
        %v1706 = vunpack.c.l.b16 %v488
        %v1707 = vunpack.c.h.b16 %v488
        %v1708 = vunpack.c.l.b16 %v489
        %v1709 = vunpack.c.h.b16 %v489
        %v1710 = vunpack.c.l.b16 %v490
        %v1711 = vunpack.c.h.b16 %v490
        %v1712 = vunpack.c.l.b16 %v491
        %v1713 = vunpack.c.h.b16 %v491
        %v1714 = vunpack.c.l.b16 %v492
        %v1715 = vunpack.c.h.b16 %v492
        %v1716 = vunpack.c.l.b16 %v493
        %v1717 = vunpack.c.h.b16 %v493
        %v1718 = vunpack.c.l.b16 %v494
        %v1719 = vunpack.c.h.b16 %v494
        %v1720 = vunpack.c.l.b16 %v495
        %v1721 = vunpack.c.h.b16 %v495
        %v1722 = vunpack.c.l.b16 %v496
        %v1723 = vunpack.c.h.b16 %v496
        %v1724 = vunpack.c.l.b16 %v497
        %v1725 = vunpack.c.h.b16 %v497
        %v1726 = vunpack.c.l.b16 %v498
        %v1727 = vunpack.c.h.b16 %v498
        %v1728 = vunpack.c.l.b16 %v499
        %v1729 = vunpack.c.h.b16 %v499
        %v1730 = vunpack.c.l.b16 %v500
        %v1731 = vunpack.c.h.b16 %v500
        %v1732 = vunpack.c.l.b16 %v501
        %v1733 = vunpack.c.h.b16 %v501
        %v1734 = vunpack.c.l.b16 %v502
        %v1735 = vunpack.c.h.b16 %v502
        %v1736 = vunpack.c.l.b16 %v503
        %v1737 = vunpack.c.h.b16 %v503
        %v1738 = vunpack.c.l.b16 %v504
        %v1739 = vunpack.c.h.b16 %v504
        %v1740 = vunpack.c.l.b16 %v505
        %v1741 = vunpack.c.h.b16 %v505
        %v1742 = vunpack.c.l.b16 %v506
        %v1743 = vunpack.c.h.b16 %v506
        %v1744 = vunpack.c.l.b16 %v507
        %v1745 = vunpack.c.h.b16 %v507
        %v1746 = vunpack.c.l.b16 %v508
        %v1747 = vunpack.c.h.b16 %v508
        %v1748 = vunpack.c.l.b16 %v509
        %v1749 = vunpack.c.h.b16 %v509
        %v1750 = vunpack.c.l.b16 %v510
        %v1751 = vunpack.c.h.b16 %v510
        %v1752 = vunpack.c.l.b16 %v511
        %v1753 = vunpack.c.h.b16 %v511
        %v1754 = vunpack.c.l.b16 %v512
        %v1755 = vunpack.c.h.b16 %v512
        %v1756 = vunpack.c.l.b16 %v513
        %v1757 = vunpack.c.h.b16 %v513
        %v1758 = vunpack.c.l.b16 %v514
        %v1759 = vunpack.c.h.b16 %v514
        %v1760 = vunpack.c.l.b16 %v515
        %v1761 = vunpack.c.h.b16 %v515
        %v1762 = vunpack.c.l.b16 %v516
        %v1763 = vunpack.c.h.b16 %v516
        %v1764 = vunpack.c.l.b16 %v517
        %v1765 = vunpack.c.h.b16 %v517
        %v1766 = vunpack.c.l.b16 %v518
        %v1767 = vunpack.c.h.b16 %v518
        %v1768 = vunpack.c.l.b16 %v519
        %v1769 = vunpack.c.h.b16 %v519
        %v1770 = vunpack.c.l.b16 %v520
        %v1771 = vunpack.c.h.b16 %v520
        %v1772 = vunpack.c.l.b16 %v521
        %v1773 = vunpack.c.h.b16 %v521
        %v1774 = vunpack.c.l.b16 %v522
        %v1775 = vunpack.c.h.b16 %v522
        %v1776 = vunpack.c.l.b16 %v523
        %v1777 = vunpack.c.h.b16 %v523
        %v1778 = vunpack.c.l.b16 %v524
        %v1779 = vunpack.c.h.b16 %v524
        %v1780 = vunpack.c.l.b16 %v525
        %v1781 = vunpack.c.h.b16 %v525
        %v1782 = vunpack.c.l.b16 %v526
        %v1783 = vunpack.c.h.b16 %v526
        %v1784 = vunpack.c.l.b16 %v527
        %v1785 = vunpack.c.h.b16 %v527
        %v1786 = vunpack.c.l.b16 %v528
        %v1787 = vunpack.c.h.b16 %v528
        %v1788 = vunpack.c.l.b16 %v529
        %v1789 = vunpack.c.h.b16 %v529
        %v1790 = vunpack.c.l.b16 %v530
        %v1791 = vunpack.c.h.b16 %v530
        %v1792 = vunpack.c.l.b16 %v531
        %v1793 = vunpack.c.h.b16 %v531
        %v1794 = vunpack.c.l.b16 %v532
        %v1795 = vunpack.c.h.b16 %v532
        %v1796 = vunpack.c.l.b16 %v533
        %v1797 = vunpack.c.h.b16 %v533
        %v1798 = vunpack.c.l.b16 %v534
        %v1799 = vunpack.c.h.b16 %v534
        %v1800 = vunpack.c.l.b16 %v535
        %v1801 = vunpack.c.h.b16 %v535
        %v1802 = vunpack.c.l.b16 %v536
        %v1803 = vunpack.c.h.b16 %v536
        %v1804 = vunpack.c.l.b16 %v537
        %v1805 = vunpack.c.h.b16 %v537
        %v1806 = vunpack.c.l.b16 %v538
        %v1807 = vunpack.c.h.b16 %v538
        %v1808 = vunpack.c.l.b16 %v539
        %v1809 = vunpack.c.h.b16 %v539
        %v1810 = vunpack.c.l.b16 %v540
        %v1811 = vunpack.c.h.b16 %v540
        %v1812 = vunpack.c.l.b16 %v541
        %v1813 = vunpack.c.h.b16 %v541
        %v1814 = vunpack.c.l.b16 %v542
        %v1815 = vunpack.c.h.b16 %v542
        %v1816 = vunpack.c.l.b16 %v543
        %v1817 = vunpack.c.h.b16 %v543
        %v1818 = vunpack.c.l.b16 %v544
        %v1819 = vunpack.c.h.b16 %v544
        %v1820 = vunpack.c.l.b16 %v545
        %v1821 = vunpack.c.h.b16 %v545
        %v1822 = vunpack.c.l.b16 %v546
        %v1823 = vunpack.c.h.b16 %v546
        %v1824 = vunpack.c.l.b16 %v547
        %v1825 = vunpack.c.h.b16 %v547
        %v1826 = vunpack.c.l.b16 %v548
        %v1827 = vunpack.c.h.b16 %v548
        %v1828 = vunpack.c.l.b16 %v549
        %v1829 = vunpack.c.h.b16 %v549
        %v1830 = vunpack.c.l.b16 %v550
        %v1831 = vunpack.c.h.b16 %v550
        %v1832 = vunpack.c.l.b16 %v551
        %v1833 = vunpack.c.h.b16 %v551
        %v1834 = vunpack.c.l.b16 %v552
        %v1835 = vunpack.c.h.b16 %v552
        %v1836 = vunpack.c.l.b16 %v553
        %v1837 = vunpack.c.h.b16 %v553
        %v1838 = vunpack.c.l.b16 %v554
        %v1839 = vunpack.c.h.b16 %v554
        %v1840 = vunpack.c.l.b16 %v555
        %v1841 = vunpack.c.h.b16 %v555
        %v1842 = vunpack.c.l.b16 %v556
        %v1843 = vunpack.c.h.b16 %v556
        %v1844 = vunpack.c.l.b16 %v557
        %v1845 = vunpack.c.h.b16 %v557
        %v1846 = vunpack.c.l.b16 %v558
        %v1847 = vunpack.c.h.b16 %v558
        %v1848 = vunpack.c.l.b16 %v559
        %v1849 = vunpack.c.h.b16 %v559
        %v1850 = vunpack.c.l.b16 %v560
        %v1851 = vunpack.c.h.b16 %v560
        %v1852 = vunpack.c.l.b16 %v561
        %v1853 = vunpack.c.h.b16 %v561
        %v1854 = vunpack.c.l.b16 %v562
        %v1855 = vunpack.c.h.b16 %v562
        %v1856 = vunpack.c.l.b16 %v563
        %v1857 = vunpack.c.h.b16 %v563
        %v1858 = vunpack.c.l.b16 %v564
        %v1859 = vunpack.c.h.b16 %v564
        %v1860 = vunpack.c.l.b16 %v565
        %v1861 = vunpack.c.h.b16 %v565
        %v1862 = vunpack.c.l.b16 %v566
        %v1863 = vunpack.c.h.b16 %v566
        %v1864 = vunpack.c.l.b16 %v567
        %v1865 = vunpack.c.h.b16 %v567
        %v1866 = vunpack.c.l.b16 %v568
        %v1867 = vunpack.c.h.b16 %v568
        %v1868 = vunpack.c.l.b16 %v569
        %v1869 = vunpack.c.h.b16 %v569
        %v1870 = vunpack.c.l.b16 %v570
        %v1871 = vunpack.c.h.b16 %v570
        %v1872 = vunpack.c.l.b16 %v571
        %v1873 = vunpack.c.h.b16 %v571
        %v1874 = vunpack.c.l.b16 %v572
        %v1875 = vunpack.c.h.b16 %v572
        %v1876 = vunpack.c.l.b16 %v573
        %v1877 = vunpack.c.h.b16 %v573
        %v1878 = vunpack.c.l.b16 %v574
        %v1879 = vunpack.c.h.b16 %v574
        %v1880 = vunpack.c.l.b16 %v575
        %v1881 = vunpack.c.h.b16 %v575
        %v1882 = vunpack.c.l.b16 %v576
        %v1883 = vunpack.c.h.b16 %v576
        %v1884 = vunpack.c.l.b16 %v577
        %v1885 = vunpack.c.h.b16 %v577
        %v1886 = vunpack.c.l.b16 %v578
        %v1887 = vunpack.c.h.b16 %v578
        %v1888 = vunpack.c.l.b16 %v579
        %v1889 = vunpack.c.h.b16 %v579
        %v1890 = vunpack.c.l.b16 %v580
        %v1891 = vunpack.c.h.b16 %v580
        %v1892 = vunpack.c.l.b16 %v581
        %v1893 = vunpack.c.h.b16 %v581
        %v1894 = vunpack.c.l.b16 %v582
        %v1895 = vunpack.c.h.b16 %v582
        %v1896 = vunpack.c.l.b16 %v583
        %v1897 = vunpack.c.h.b16 %v583
        %v1898 = vunpack.c.l.b16 %v584
        %v1899 = vunpack.c.h.b16 %v584
        %v1900 = vunpack.c.l.b16 %v585
        %v1901 = vunpack.c.h.b16 %v585
        %v1902 = vunpack.c.l.b16 %v586
        %v1903 = vunpack.c.h.b16 %v586
        %v1904 = vunpack.c.l.b16 %v587
        %v1905 = vunpack.c.h.b16 %v587
        %v1906 = vunpack.c.l.b16 %v588
        %v1907 = vunpack.c.h.b16 %v588
        %v1908 = vunpack.c.l.b16 %v589
        %v1909 = vunpack.c.h.b16 %v589
        %v1910 = vunpack.c.l.b16 %v590
        %v1911 = vunpack.c.h.b16 %v590
        %v1912 = vunpack.c.l.b16 %v591
        %v1913 = vunpack.c.h.b16 %v591
        %v1914 = vunpack.c.l.b16 %v592
        %v1915 = vunpack.c.h.b16 %v592
        %v1916 = vunpack.c.l.b16 %v593
        %v1917 = vunpack.c.h.b16 %v593
        %v1918 = vunpack.c.l.b16 %v594
        %v1919 = vunpack.c.h.b16 %v594
        %v1920 = vunpack.c.l.b16 %v595
        %v1921 = vunpack.c.h.b16 %v595
        %v1922 = vunpack.c.l.b16 %v596
        %v1923 = vunpack.c.h.b16 %v596
        %v1924 = vunpack.c.l.b16 %v597
        %v1925 = vunpack.c.h.b16 %v597
        %v1926 = vunpack.c.l.b16 %v598
        %v1927 = vunpack.c.h.b16 %v598
        %v1928 = vunpack.c.l.b16 %v599
        %v1929 = vunpack.c.h.b16 %v599
        %v1930 = vunpack.c.l.b16 %v600
        %v1931 = vunpack.c.h.b16 %v600
        %v1932 = vunpack.c.l.b16 %v601
        %v1933 = vunpack.c.h.b16 %v601
        %v1934 = vunpack.c.l.b16 %v602
        %v1935 = vunpack.c.h.b16 %v602
        %v1936 = vunpack.c.l.b16 %v603
        %v1937 = vunpack.c.h.b16 %v603
        %v1938 = vunpack.c.l.b16 %v604
        %v1939 = vunpack.c.h.b16 %v604
        %v1940 = vunpack.c.l.b16 %v605
        %v1941 = vunpack.c.h.b16 %v605
        %v1942 = vunpack.c.l.b16 %v606
        %v1943 = vunpack.c.h.b16 %v606
        %v1944 = vunpack.c.l.b16 %v607
        %v1945 = vunpack.c.h.b16 %v607
        %v1946 = vunpack.c.l.b16 %v608
        %v1947 = vunpack.c.h.b16 %v608
        %v1948 = vunpack.c.l.b16 %v609
        %v1949 = vunpack.c.h.b16 %v609
        %v1950 = vunpack.c.l.b16 %v610
        %v1951 = vunpack.c.h.b16 %v610
        %v1952 = vunpack.c.l.b16 %v611
        %v1953 = vunpack.c.h.b16 %v611
        %v1954 = vunpack.c.l.b16 %v612
        %v1955 = vunpack.c.h.b16 %v612
        %v1956 = vunpack.c.l.b16 %v613
        %v1957 = vunpack.c.h.b16 %v613
        %v1958 = vunpack.c.l.b16 %v614
        %v1959 = vunpack.c.h.b16 %v614
        %v1960 = vunpack.c.l.b16 %v615
        %v1961 = vunpack.c.h.b16 %v615
        %v1962 = vunpack.c.l.b16 %v616
        %v1963 = vunpack.c.h.b16 %v616
        %v1964 = vunpack.c.l.b16 %v617
        %v1965 = vunpack.c.h.b16 %v617
        %v1966 = vunpack.c.l.b16 %v618
        %v1967 = vunpack.c.h.b16 %v618
        %v1968 = vunpack.c.l.b16 %v619
        %v1969 = vunpack.c.h.b16 %v619
        %v1970 = vunpack.c.l.b16 %v620
        %v1971 = vunpack.c.h.b16 %v620
        %v1972 = vunpack.c.l.b16 %v621
        %v1973 = vunpack.c.h.b16 %v621
        %v1974 = vunpack.c.l.b16 %v622
        %v1975 = vunpack.c.h.b16 %v622
        %v1976 = vunpack.c.l.b16 %v623
        %v1977 = vunpack.c.h.b16 %v623
        %v1978 = vunpack.c.l.b16 %v624
        %v1979 = vunpack.c.h.b16 %v624
        %v1980 = vunpack.c.l.b16 %v625
        %v1981 = vunpack.c.h.b16 %v625
        %v1982 = vunpack.c.l.b16 %v626
        %v1983 = vunpack.c.h.b16 %v626
        %v1984 = vunpack.c.l.b16 %v627
        %v1985 = vunpack.c.h.b16 %v627
        %v1986 = vunpack.c.l.b16 %v628
        %v1987 = vunpack.c.h.b16 %v628
        %v1988 = vunpack.c.l.b16 %v629
        %v1989 = vunpack.c.h.b16 %v629
        %v1990 = vunpack.c.l.b16 %v630
        %v1991 = vunpack.c.h.b16 %v630
        %v1992 = vunpack.c.l.b16 %v631
        %v1993 = vunpack.c.h.b16 %v631
        %v1994 = vunpack.c.l.b16 %v632
        %v1995 = vunpack.c.h.b16 %v632
        %v1996 = vunpack.c.l.b16 %v633
        %v1997 = vunpack.c.h.b16 %v633
        %v1998 = vunpack.c.l.b16 %v634
        %v1999 = vunpack.c.h.b16 %v634
        %v2000 = vunpack.c.l.b16 %v635
        %v2001 = vunpack.c.h.b16 %v635
        %v2002 = vunpack.c.l.b16 %v636
        %v2003 = vunpack.c.h.b16 %v636
        %v2004 = vunpack.c.l.b16 %v637
        %v2005 = vunpack.c.h.b16 %v637
        %v2006 = vunpack.c.l.b16 %v638
        %v2007 = vunpack.c.h.b16 %v638
        %v2008 = vunpack.c.l.b16 %v639
        %v2009 = vunpack.c.h.b16 %v639
        %v2010 = vunpack.c.l.b16 %v640
        %v2011 = vunpack.c.h.b16 %v640
        %v2012 = vunpack.c.l.b16 %v641
        %v2013 = vunpack.c.h.b16 %v641
        %v2014 = vunpack.c.l.b16 %v642
        %v2015 = vunpack.c.h.b16 %v642
        %v2016 = vunpack.c.l.b16 %v643
        %v2017 = vunpack.c.h.b16 %v643
        %v2018 = vunpack.c.l.b16 %v644
        %v2019 = vunpack.c.h.b16 %v644
        %v2020 = vunpack.c.l.b16 %v645
        %v2021 = vunpack.c.h.b16 %v645
        %v2022 = vunpack.c.l.b16 %v646
        %v2023 = vunpack.c.h.b16 %v646
        %v2024 = vunpack.c.l.b16 %v647
        %v2025 = vunpack.c.h.b16 %v647
        %v2026 = vunpack.c.l.b16 %v648
        %v2027 = vunpack.c.h.b16 %v648
        %v2028 = vunpack.c.l.b16 %v649
        %v2029 = vunpack.c.h.b16 %v649
        %v2030 = vunpack.c.l.b16 %v650
        %v2031 = vunpack.c.h.b16 %v650
        %v2032 = vunpack.c.l.b16 %v651
        %v2033 = vunpack.c.h.b16 %v651
        %v2034 = vunpack.c.l.b16 %v652
        %v2035 = vunpack.c.h.b16 %v652
        %v2036 = vunpack.c.l.b16 %v653
        %v2037 = vunpack.c.h.b16 %v653
        %v2038 = vunpack.c.l.b16 %v654
        %v2039 = vunpack.c.h.b16 %v654
        %v2040 = vunpack.c.l.b16 %v655
        %v2041 = vunpack.c.h.b16 %v655
        %v2042 = vunpack.c.l.b16 %v656
        %v2043 = vunpack.c.h.b16 %v656
        %v2044 = vunpack.c.l.b16 %v657
        %v2045 = vunpack.c.h.b16 %v657
        %v2046 = vunpack.c.l.b16 %v658
        %v2047 = vunpack.c.h.b16 %v658
        %v2048 = vunpack.c.l.b16 %v659
        %v2049 = vunpack.c.h.b16 %v659
        %v2050 = vunpack.c.l.b16 %v660
        %v2051 = vunpack.c.h.b16 %v660
        %v2052 = vunpack.c.l.b16 %v661
        %v2053 = vunpack.c.h.b16 %v661
        %v2054 = vunpack.c.l.b16 %v662
        %v2055 = vunpack.c.h.b16 %v662
        %v2056 = vunpack.c.l.b16 %v663
        %v2057 = vunpack.c.h.b16 %v663
        %v2058 = vunpack.c.l.b16 %v664
        %v2059 = vunpack.c.h.b16 %v664
        %v2060 = vunpack.c.l.b16 %v665
        %v2061 = vunpack.c.h.b16 %v665
        %v2062 = vunpack.c.l.b16 %v666
        %v2063 = vunpack.c.h.b16 %v666
        %v2064 = vunpack.c.l.b16 %v667
        %v2065 = vunpack.c.h.b16 %v667
        %v2066 = vunpack.c.l.b16 %v668
        %v2067 = vunpack.c.h.b16 %v668
        %v2068 = vunpack.c.l.b16 %v669
        %v2069 = vunpack.c.h.b16 %v669
        %v2070 = vunpack.c.l.b16 %v670
        %v2071 = vunpack.c.h.b16 %v670
        %v2072 = vunpack.c.l.b16 %v671
        %v2073 = vunpack.c.h.b16 %v671
        %v2074 = vunpack.c.l.b16 %v672
        %v2075 = vunpack.c.h.b16 %v672
        %v2076 = vunpack.c.l.b16 %v673
        %v2077 = vunpack.c.h.b16 %v673
        %v2078 = vunpack.c.l.b16 %v674
        %v2079 = vunpack.c.h.b16 %v674
        %v2080 = vunpack.c.l.b16 %v675
        %v2081 = vunpack.c.h.b16 %v675
        %v2082 = vunpack.c.l.b16 %v676
        %v2083 = vunpack.c.h.b16 %v676
        %v2084 = vunpack.c.l.b16 %v677
        %v2085 = vunpack.c.h.b16 %v677
        %v2086 = vunpack.c.l.b16 %v678
        %v2087 = vunpack.c.h.b16 %v678
        %v2088 = vunpack.c.l.b16 %v679
        %v2089 = vunpack.c.h.b16 %v679
        %v2090 = vunpack.c.l.b16 %v680
        %v2091 = vunpack.c.h.b16 %v680
        %v2092 = vunpack.c.l.b16 %v681
        %v2093 = vunpack.c.h.b16 %v681
        %v2094 = vunpack.c.l.b16 %v682
        %v2095 = vunpack.c.h.b16 %v682
        %v2096 = vunpack.c.l.b16 %v683
        %v2097 = vunpack.c.h.b16 %v683
        %v2098 = vunpack.c.l.b16 %v684
        %v2099 = vunpack.c.h.b16 %v684
        %v2100 = vunpack.c.l.b16 %v685
        %v2101 = vunpack.c.h.b16 %v685
        %v2102 = vunpack.c.l.b16 %v686
        %v2103 = vunpack.c.h.b16 %v686
        %v2104 = vunpack.c.l.b16 %v687
        %v2105 = vunpack.c.h.b16 %v687
        %v2106 = vunpack.c.l.b16 %v688
        %v2107 = vunpack.c.h.b16 %v688
        %v2108 = vunpack.c.l.b16 %v689
        %v2109 = vunpack.c.h.b16 %v689
        %v2110 = vunpack.c.l.b16 %v690
        %v2111 = vunpack.c.h.b16 %v690
        %v2112 = vunpack.c.l.b16 %v691
        %v2113 = vunpack.c.h.b16 %v691
        %v2114 = vunpack.c.l.b16 %v692
        %v2115 = vunpack.c.h.b16 %v692
        %v2116 = vunpack.c.l.b16 %v693
        %v2117 = vunpack.c.h.b16 %v693
        %v2118 = vunpack.c.l.b16 %v694
        %v2119 = vunpack.c.h.b16 %v694
        %v2120 = vunpack.c.l.b16 %v695
        %v2121 = vunpack.c.h.b16 %v695
        %v2122 = vunpack.c.l.b16 %v696
        %v2123 = vunpack.c.h.b16 %v696
        %v2124 = vunpack.c.l.b16 %v697
        %v2125 = vunpack.c.h.b16 %v697
        %v2126 = vunpack.c.l.b16 %v698
        %v2127 = vunpack.c.h.b16 %v698
        %v2128 = vunpack.c.l.b16 %v699
        %v2129 = vunpack.c.h.b16 %v699
        %v2130 = vunpack.c.l.b16 %v700
        %v2131 = vunpack.c.h.b16 %v700
        %v2132 = vunpack.c.l.b16 %v701
        %v2133 = vunpack.c.h.b16 %v701
        %v2134 = vunpack.c.l.b16 %v702
        %v2135 = vunpack.c.h.b16 %v702
        %v2136 = vunpack.c.l.b16 %v703
        %v2137 = vunpack.c.h.b16 %v703
        %v2138 = vunpack.c.l.b16 %v704
        %v2139 = vunpack.c.h.b16 %v704
        %v2140 = vunpack.c.l.b16 %v705
        %v2141 = vunpack.c.h.b16 %v705
        %v2142 = vunpack.c.l.b16 %v706
        %v2143 = vunpack.c.h.b16 %v706
        %v2144 = vunpack.c.l.b16 %v707
        %v2145 = vunpack.c.h.b16 %v707
        %v2146 = vunpack.c.l.b16 %v708
        %v2147 = vunpack.c.h.b16 %v708
        %v2148 = vunpack.c.l.b16 %v709
        %v2149 = vunpack.c.h.b16 %v709
        %v2150 = vunpack.c.l.b16 %v710
        %v2151 = vunpack.c.h.b16 %v710
        %v2152 = vunpack.c.l.b16 %v711
        %v2153 = vunpack.c.h.b16 %v711
        %v2154 = vunpack.c.l.b16 %v712
        %v2155 = vunpack.c.h.b16 %v712
        %v2156 = vunpack.c.l.b16 %v713
        %v2157 = vunpack.c.h.b16 %v713
        %v2158 = vunpack.c.l.b16 %v714
        %v2159 = vunpack.c.h.b16 %v714
        %v2160 = vunpack.c.l.b16 %v715
        %v2161 = vunpack.c.h.b16 %v715
        %v2162 = vunpack.c.l.b16 %v716
        %v2163 = vunpack.c.h.b16 %v716
        %v2164 = vunpack.c.l.b16 %v717
        %v2165 = vunpack.c.h.b16 %v717
        %v2166 = vunpack.c.l.b16 %v718
        %v2167 = vunpack.c.h.b16 %v718
        %v2168 = vunpack.c.l.b16 %v719
        %v2169 = vunpack.c.h.b16 %v719
        %v2170 = vunpack.c.l.b16 %v720
        %v2171 = vunpack.c.h.b16 %v720
        %v2172 = vunpack.c.l.b16 %v721
        %v2173 = vunpack.c.h.b16 %v721
        %v2174 = vunpack.c.l.b16 %v722
        %v2175 = vunpack.c.h.b16 %v722
        %v2176 = vunpack.c.l.b16 %v723
        %v2177 = vunpack.c.h.b16 %v723
        %v2178 = vunpack.c.l.b16 %v724
        %v2179 = vunpack.c.h.b16 %v724
        %v2180 = vunpack.c.l.b16 %v725
        %v2181 = vunpack.c.h.b16 %v725
        %v2182 = vunpack.c.l.b16 %v726
        %v2183 = vunpack.c.h.b16 %v726
        %v2184 = vunpack.c.l.b16 %v727
        %v2185 = vunpack.c.h.b16 %v727
        %v2186 = vunpack.c.l.b16 %v728
        %v2187 = vunpack.c.h.b16 %v728
        %v2188 = vunpack.c.l.b16 %v729
        %v2189 = vunpack.c.h.b16 %v729
        %v2190 = vunpack.c.l.b16 %v730
        %v2191 = vunpack.c.h.b16 %v730
        %v2192 = vunpack.c.l.b16 %v731
        %v2193 = vunpack.c.h.b16 %v731
        %v2194 = vunpack.c.l.b16 %v732
        %v2195 = vunpack.c.h.b16 %v732
        %v2196 = vunpack.c.l.b16 %v733
        %v2197 = vunpack.c.h.b16 %v733
        %v2198 = vunpack.c.l.b16 %v734
        %v2199 = vunpack.c.h.b16 %v734
        %v2200 = vunpack.c.l.b16 %v735
        %v2201 = vunpack.c.h.b16 %v735
        %v2202 = vunpack.c.l.b16 %v736
        %v2203 = vunpack.c.h.b16 %v736
        %v2204 = vunpack.c.l.b16 %v737
        %v2205 = vunpack.c.h.b16 %v737
        %v2206 = vunpack.c.l.b16 %v738
        %v2207 = vunpack.c.h.b16 %v738
        %v2208 = vunpack.c.l.b16 %v739
        %v2209 = vunpack.c.h.b16 %v739
        %v2210 = vunpack.c.l.b16 %v740
        %v2211 = vunpack.c.h.b16 %v740
        %v2212 = vunpack.c.l.b16 %v741
        %v2213 = vunpack.c.h.b16 %v741
        %v2214 = vunpack.c.l.b16 %v742
        %v2215 = vunpack.c.h.b16 %v742
        %v2216 = vunpack.c.l.b16 %v743
        %v2217 = vunpack.c.h.b16 %v743
        %v2218 = vunpack.c.l.b16 %v744
        %v2219 = vunpack.c.h.b16 %v744
        %v2220 = vunpack.c.l.b16 %v745
        %v2221 = vunpack.c.h.b16 %v745
        %v2222 = vunpack.c.l.b16 %v746
        %v2223 = vunpack.c.h.b16 %v746
        %v2224 = vunpack.c.l.b16 %v747
        %v2225 = vunpack.c.h.b16 %v747
        %v2226 = vunpack.c.l.b16 %v748
        %v2227 = vunpack.c.h.b16 %v748
        %v2228 = vunpack.c.l.b16 %v749
        %v2229 = vunpack.c.h.b16 %v749
        %v2230 = vunpack.c.l.b16 %v750
        %v2231 = vunpack.c.h.b16 %v750
        %v2232 = vunpack.c.l.b16 %v751
        %v2233 = vunpack.c.h.b16 %v751
        %v2234 = vunpack.c.l.b16 %v752
        %v2235 = vunpack.c.h.b16 %v752
        %v2236 = vunpack.c.l.b16 %v753
        %v2237 = vunpack.c.h.b16 %v753
        %v2238 = vunpack.c.l.b16 %v754
        %v2239 = vunpack.c.h.b16 %v754
        %v2240 = vunpack.c.l.b16 %v755
        %v2241 = vunpack.c.h.b16 %v755
        %v2242 = vunpack.c.l.b16 %v756
        %v2243 = vunpack.c.h.b16 %v756
        %v2244 = vunpack.c.l.b16 %v757
        %v2245 = vunpack.c.h.b16 %v757
        %v2246 = vunpack.c.l.b16 %v758
        %v2247 = vunpack.c.h.b16 %v758
        %v2248 = vunpack.c.l.b16 %v759
        %v2249 = vunpack.c.h.b16 %v759
        %v2250 = vunpack.c.l.b16 %v760
        %v2251 = vunpack.c.h.b16 %v760
        %v2252 = vunpack.c.l.b16 %v761
        %v2253 = vunpack.c.h.b16 %v761
        %v2254 = vunpack.c.l.b16 %v762
        %v2255 = vunpack.c.h.b16 %v762
        %v2256 = vunpack.c.l.b16 %v763
        %v2257 = vunpack.c.h.b16 %v763
        %v2258 = vunpack.c.l.b16 %v764
        %v2259 = vunpack.c.h.b16 %v764
        %v2260 = vunpack.c.l.b16 %v765
        %v2261 = vunpack.c.h.b16 %v765
        %v2262 = vunpack.c.l.b16 %v766
        %v2263 = vunpack.c.h.b16 %v766
        %v2264 = vunpack.c.l.b16 %v767
        %v2265 = vunpack.c.h.b16 %v767
        %v2266 = vunpack.c.l.b16 %v768
        %v2267 = vunpack.c.h.b16 %v768
        %v2268 = vunpack.c.l.b16 %v769
        %v2269 = vunpack.c.h.b16 %v769
        %v2270 = vunpack.c.l.b16 %v770
        %v2271 = vunpack.c.h.b16 %v770
        %v2272 = vunpack.c.l.b16 %v771
        %v2273 = vunpack.c.h.b16 %v771
        %v2274 = vunpack.c.l.b16 %v772
        %v2275 = vunpack.c.h.b16 %v772
        %v2276 = vunpack.c.l.b16 %v773
        %v2277 = vunpack.c.h.b16 %v773
        %v2278 = vunpack.c.l.b16 %v774
        %v2279 = vunpack.c.h.b16 %v774
        %v2280 = vunpack.c.l.b16 %v775
        %v2281 = vunpack.c.h.b16 %v775
        %v2282 = vunpack.c.l.b16 %v776
        %v2283 = vunpack.c.h.b16 %v776
        %v2284 = vunpack.c.l.b16 %v777
        %v2285 = vunpack.c.h.b16 %v777
        %v2286 = vunpack.c.l.b16 %v778
        %v2287 = vunpack.c.h.b16 %v778
        %v2288 = vunpack.c.l.b16 %v779
        %v2289 = vunpack.c.h.b16 %v779
        %v2290 = vunpack.c.l.b16 %v780
        %v2291 = vunpack.c.h.b16 %v780
        %v2292 = vunpack.c.l.b16 %v781
        %v2293 = vunpack.c.h.b16 %v781
        %v2294 = vunpack.c.l.b16 %v782
        %v2295 = vunpack.c.h.b16 %v782
        %v2296 = vunpack.c.l.b16 %v783
        %v2297 = vunpack.c.h.b16 %v783
        %v2298 = vunpack.c.l.b16 %v784
        %v2299 = vunpack.c.h.b16 %v784
        %v2300 = vunpack.c.l.b16 %v785
        %v2301 = vunpack.c.h.b16 %v785
        %v2302 = vunpack.c.l.b16 %v786
        %v2303 = vunpack.c.h.b16 %v786
        %v2304 = vunpack.c.l.b16 %v787
        %v2305 = vunpack.c.h.b16 %v787
        %v2306 = vunpack.c.l.b16 %v788
        %v2307 = vunpack.c.h.b16 %v788
        %v2308 = vunpack.c.l.b16 %v789
        %v2309 = vunpack.c.h.b16 %v789
        %v2310 = vunpack.c.l.b16 %v790
        %v2311 = vunpack.c.h.b16 %v790
        %v2312 = vunpack.c.l.b16 %v791
        %v2313 = vunpack.c.h.b16 %v791
        %v2314 = vunpack.c.l.b16 %v792
        %v2315 = vunpack.c.h.b16 %v792
        %v2316 = vunpack.c.l.b16 %v793
        %v2317 = vunpack.c.h.b16 %v793
        %v2318 = vunpack.c.l.b16 %v794
        %v2319 = vunpack.c.h.b16 %v794
        %v2320 = vunpack.c.l.b16 %v795
        %v2321 = vunpack.c.h.b16 %v795
        %v2322 = vunpack.c.l.b16 %v796
        %v2323 = vunpack.c.h.b16 %v796
        %v2324 = vunpack.c.l.b16 %v797
        %v2325 = vunpack.c.h.b16 %v797
        %v2326 = vunpack.c.l.b16 %v798
        %v2327 = vunpack.c.h.b16 %v798
        %v2328 = vunpack.c.l.b16 %v799
        %v2329 = vunpack.c.h.b16 %v799
        %v2330 = vunpack.c.l.b16 %v800
        %v2331 = vunpack.c.h.b16 %v800
        %v2332 = vunpack.c.l.b16 %v801
        %v2333 = vunpack.c.h.b16 %v801
        %v2334 = vunpack.c.l.b16 %v802
        %v2335 = vunpack.c.h.b16 %v802
        %v2336 = vunpack.c.l.b16 %v803
        %v2337 = vunpack.c.h.b16 %v803
        %v2338 = vunpack.c.l.b16 %v804
        %v2339 = vunpack.c.h.b16 %v804
        %v2340 = vunpack.c.l.b16 %v805
        %v2341 = vunpack.c.h.b16 %v805
        %v2342 = vunpack.c.l.b16 %v806
        %v2343 = vunpack.c.h.b16 %v806
        %v2344 = vunpack.c.l.b16 %v807
        %v2345 = vunpack.c.h.b16 %v807
        %v2346 = vunpack.c.l.b16 %v808
        %v2347 = vunpack.c.h.b16 %v808
        %v2348 = vunpack.c.l.b16 %v809
        %v2349 = vunpack.c.h.b16 %v809
        %v2350 = vunpack.c.l.b16 %v810
        %v2351 = vunpack.c.h.b16 %v810
        %v2352 = vunpack.c.l.b16 %v811
        %v2353 = vunpack.c.h.b16 %v811
        %v2354 = vunpack.c.l.b16 %v812
        %v2355 = vunpack.c.h.b16 %v812
        %v2356 = vunpack.c.l.b16 %v813
        %v2357 = vunpack.c.h.b16 %v813
        %v2358 = vunpack.c.l.b16 %v814
        %v2359 = vunpack.c.h.b16 %v814
        %v2360 = vunpack.c.l.b16 %v815
        %v2361 = vunpack.c.h.b16 %v815
        %v2362 = vunpack.c.l.b16 %v816
        %v2363 = vunpack.c.h.b16 %v816
        %v2364 = vunpack.c.l.b16 %v817
        %v2365 = vunpack.c.h.b16 %v817
        %v2366 = vunpack.c.l.b16 %v818
        %v2367 = vunpack.c.h.b16 %v818
        %v2368 = vunpack.c.l.b16 %v819
        %v2369 = vunpack.c.h.b16 %v819
        %v2370 = vunpack.c.l.b16 %v820
        %v2371 = vunpack.c.h.b16 %v820
        %v2372 = vunpack.c.l.b16 %v821
        %v2373 = vunpack.c.h.b16 %v821
        %v2374 = vunpack.c.l.b16 %v822
        %v2375 = vunpack.c.h.b16 %v822
        %v2376 = vunpack.c.l.b16 %v823
        %v2377 = vunpack.c.h.b16 %v823
        %v2378 = vunpack.c.l.b16 %v824
        %v2379 = vunpack.c.h.b16 %v824
        %v2380 = vunpack.c.l.b16 %v825
        %v2381 = vunpack.c.h.b16 %v825
        %v2382 = vunpack.c.l.b16 %v826
        %v2383 = vunpack.c.h.b16 %v826
        %v2384 = vunpack.c.l.b16 %v827
        %v2385 = vunpack.c.h.b16 %v827
        %v2386 = vunpack.c.l.b16 %v828
        %v2387 = vunpack.c.h.b16 %v828
        %v2388 = vunpack.c.l.b16 %v829
        %v2389 = vunpack.c.h.b16 %v829
        %v2390 = vunpack.c.l.b16 %v830
        %v2391 = vunpack.c.h.b16 %v830
        %v2392 = vunpack.c.l.b16 %v831
        %v2393 = vunpack.c.h.b16 %v831
        %v2394 = vunpack.c.l.b16 %v832
        %v2395 = vunpack.c.h.b16 %v832
        %v2396 = vunpack.c.l.b16 %v833
        %v2397 = vunpack.c.h.b16 %v833
        %v2398 = vunpack.c.l.b16 %v834
        %v2399 = vunpack.c.h.b16 %v834
        %v2400 = vunpack.c.l.b16 %v835
        %v2401 = vunpack.c.h.b16 %v835
        %v2402 = vunpack.c.l.b16 %v836
        %v2403 = vunpack.c.h.b16 %v836
        %v2404 = vunpack.c.l.b16 %v837
        %v2405 = vunpack.c.h.b16 %v837
        %v2406 = vunpack.c.l.b16 %v838
        %v2407 = vunpack.c.h.b16 %v838
        %v2408 = vunpack.c.l.b16 %v839
        %v2409 = vunpack.c.h.b16 %v839
        %v2410 = vunpack.c.l.b16 %v840
        %v2411 = vunpack.c.h.b16 %v840
        %v2412 = vunpack.c.l.b16 %v841
        %v2413 = vunpack.c.h.b16 %v841
        %v2414 = vunpack.c.l.b16 %v842
        %v2415 = vunpack.c.h.b16 %v842
        %v2416 = vunpack.c.l.b16 %v843
        %v2417 = vunpack.c.h.b16 %v843
        %v2418 = vunpack.c.l.b16 %v844
        %v2419 = vunpack.c.h.b16 %v844
        %v2420 = vunpack.c.l.b16 %v845
        %v2421 = vunpack.c.h.b16 %v845
        %v2422 = vunpack.c.l.b16 %v846
        %v2423 = vunpack.c.h.b16 %v846
        %v2424 = vunpack.c.l.b16 %v847
        %v2425 = vunpack.c.h.b16 %v847
        %v2426 = vunpack.c.l.b16 %v848
        %v2427 = vunpack.c.h.b16 %v848
        %v2428 = vunpack.c.l.b16 %v849
        %v2429 = vunpack.c.h.b16 %v849
        %v2430 = vunpack.c.l.b16 %v850
        %v2431 = vunpack.c.h.b16 %v850
        %v2432 = vunpack.c.l.b16 %v851
        %v2433 = vunpack.c.h.b16 %v851
        %v2434 = vunpack.c.l.b16 %v852
        %v2435 = vunpack.c.h.b16 %v852
        %v2436 = vunpack.c.l.b16 %v853
        %v2437 = vunpack.c.h.b16 %v853
        %v2438 = vunpack.c.l.b16 %v854
        %v2439 = vunpack.c.h.b16 %v854
        %v2440 = vunpack.c.l.b16 %v855
        %v2441 = vunpack.c.h.b16 %v855
        %v2442 = vunpack.c.l.b16 %v856
        %v2443 = vunpack.c.h.b16 %v856
        %v2444 = vunpack.c.l.b16 %v857
        %v2445 = vunpack.c.h.b16 %v857
        %v2446 = vunpack.c.l.b16 %v858
        %v2447 = vunpack.c.h.b16 %v858
        %v2448 = vunpack.c.l.b16 %v859
        %v2449 = vunpack.c.h.b16 %v859
        %v2450 = vunpack.c.l.b16 %v860
        %v2451 = vunpack.c.h.b16 %v860
        %v2452 = vunpack.c.l.b16 %v861
        %v2453 = vunpack.c.h.b16 %v861
        %v2454 = vunpack.c.l.b16 %v862
        %v2455 = vunpack.c.h.b16 %v862
        %v2456 = vunpack.c.l.b16 %v863
        %v2457 = vunpack.c.h.b16 %v863
        %v2458 = vunpack.c.l.b16 %v864
        %v2459 = vunpack.c.h.b16 %v864
        %v2460 = vunpack.c.l.b16 %v865
        %v2461 = vunpack.c.h.b16 %v865
        %v2462 = vunpack.c.l.b16 %v866
        %v2463 = vunpack.c.h.b16 %v866
        %v2464 = vunpack.c.l.b16 %v867
        %v2465 = vunpack.c.h.b16 %v867
        %v2466 = vunpack.c.l.b16 %v868
        %v2467 = vunpack.c.h.b16 %v868
        %v2468 = vunpack.c.l.b16 %v869
        %v2469 = vunpack.c.h.b16 %v869
        %v2470 = vunpack.c.l.b16 %v870
        %v2471 = vunpack.c.h.b16 %v870
        %v2472 = vunpack.c.l.b16 %v871
        %v2473 = vunpack.c.h.b16 %v871
        %v2474 = vunpack.c.l.b16 %v872
        %v2475 = vunpack.c.h.b16 %v872
        %v2476 = vunpack.c.l.b16 %v873
        %v2477 = vunpack.c.h.b16 %v873
        %v2478 = vunpack.c.l.b16 %v874
        %v2479 = vunpack.c.h.b16 %v874
        %v2480 = vunpack.c.l.b16 %v875
        %v2481 = vunpack.c.h.b16 %v875
        %v2482 = vunpack.c.l.b16 %v876
        %v2483 = vunpack.c.h.b16 %v876
        %v2484 = vunpack.c.l.b16 %v877
        %v2485 = vunpack.c.h.b16 %v877
        %v2486 = vunpack.c.l.b16 %v878
        %v2487 = vunpack.c.h.b16 %v878
        %v2488 = vunpack.c.l.b16 %v879
        %v2489 = vunpack.c.h.b16 %v879
        %v2490 = vunpack.c.l.b16 %v880
        %v2491 = vunpack.c.h.b16 %v880
        %v2492 = vunpack.c.l.b16 %v881
        %v2493 = vunpack.c.h.b16 %v881
        %v2494 = vunpack.c.l.b16 %v882
        %v2495 = vunpack.c.h.b16 %v882
        %v2496 = vunpack.c.l.b16 %v883
        %v2497 = vunpack.c.h.b16 %v883
        %v2498 = vunpack.c.l.b16 %v884
        %v2499 = vunpack.c.h.b16 %v884
        %v2500 = vunpack.c.l.b16 %v885
        %v2501 = vunpack.c.h.b16 %v885
        %v2502 = vunpack.c.l.b16 %v886
        %v2503 = vunpack.c.h.b16 %v886
        %v2504 = vunpack.c.l.b16 %v887
        %v2505 = vunpack.c.h.b16 %v887
        %v2506 = vunpack.c.l.b16 %v888
        %v2507 = vunpack.c.h.b16 %v888
        %v2508 = vunpack.c.l.b16 %v889
        %v2509 = vunpack.c.h.b16 %v889
        %v2510 = vunpack.c.l.b16 %v890
        %v2511 = vunpack.c.h.b16 %v890
        %v2512 = vunpack.c.l.b16 %v891
        %v2513 = vunpack.c.h.b16 %v891
        %v2514 = vunpack.c.l.b16 %v892
        %v2515 = vunpack.c.h.b16 %v892
        %v2516 = vunpack.c.l.b16 %v893
        %v2517 = vunpack.c.h.b16 %v893
        %v2518 = vunpack.c.l.b16 %v894
        %v2519 = vunpack.c.h.b16 %v894
        %v2520 = vunpack.c.l.b16 %v895
        %v2521 = vunpack.c.h.b16 %v895
        %v2522 = vunpack.c.l.b16 %v896
        %v2523 = vunpack.c.h.b16 %v896
        %v2524 = vunpack.c.l.b16 %v897
        %v2525 = vunpack.c.h.b16 %v897
        %v2526 = vunpack.c.l.b16 %v898
        %v2527 = vunpack.c.h.b16 %v898
        %v2528 = vunpack.c.l.b16 %v899
        %v2529 = vunpack.c.h.b16 %v899
        %v2530 = vunpack.c.l.b16 %v900
        %v2531 = vunpack.c.h.b16 %v900
        %v2532 = vunpack.c.l.b16 %v901
        %v2533 = vunpack.c.h.b16 %v901
        %v2534 = vunpack.c.l.b16 %v902
        %v2535 = vunpack.c.h.b16 %v902
        %v2536 = vunpack.c.l.b16 %v903
        %v2537 = vunpack.c.h.b16 %v903
        %v2538 = vunpack.c.l.b16 %v904
        %v2539 = vunpack.c.h.b16 %v904
        %v2540 = vunpack.c.l.b16 %v905
        %v2541 = vunpack.c.h.b16 %v905
        %v2542 = vunpack.c.l.b16 %v906
        %v2543 = vunpack.c.h.b16 %v906
        %v2544 = vunpack.c.l.b16 %v907
        %v2545 = vunpack.c.h.b16 %v907
        %v2546 = vunpack.c.l.b16 %v908
        %v2547 = vunpack.c.h.b16 %v908
        %v2548 = vunpack.c.l.b16 %v909
        %v2549 = vunpack.c.h.b16 %v909
        %v2550 = vunpack.c.l.b16 %v910
        %v2551 = vunpack.c.h.b16 %v910
        %v2552 = vunpack.c.l.b16 %v911
        %v2553 = vunpack.c.h.b16 %v911
        %v2554 = vunpack.c.l.b16 %v912
        %v2555 = vunpack.c.h.b16 %v912
        %v2556 = vunpack.c.l.b16 %v913
        %v2557 = vunpack.c.h.b16 %v913
        %v2558 = vunpack.c.l.b16 %v914
        %v2559 = vunpack.c.h.b16 %v914
        %v2560 = vunpack.c.l.b16 %v915
        %v2561 = vunpack.c.h.b16 %v915
        %v2562 = vunpack.c.l.b16 %v916
        %v2563 = vunpack.c.h.b16 %v916
        %v2564 = vunpack.c.l.b16 %v917
        %v2565 = vunpack.c.h.b16 %v917
        %v2566 = vunpack.c.l.b16 %v918
        %v2567 = vunpack.c.h.b16 %v918
        %v2568 = vunpack.c.l.b16 %v919
        %v2569 = vunpack.c.h.b16 %v919
        %v2570 = vunpack.c.l.b16 %v920
        %v2571 = vunpack.c.h.b16 %v920
        %v2572 = vunpack.c.l.b16 %v921
        %v2573 = vunpack.c.h.b16 %v921
        %v2574 = vunpack.c.l.b16 %v922
        %v2575 = vunpack.c.h.b16 %v922
        %v2576 = vunpack.c.l.b16 %v923
        %v2577 = vunpack.c.h.b16 %v923
        %v2578 = vunpack.c.l.b16 %v924
        %v2579 = vunpack.c.h.b16 %v924
        %v2580 = vunpack.c.l.b16 %v925
        %v2581 = vunpack.c.h.b16 %v925
        %v2582 = vunpack.c.l.b16 %v926
        %v2583 = vunpack.c.h.b16 %v926
        %v2584 = vunpack.c.l.b16 %v927
        %v2585 = vunpack.c.h.b16 %v927
        %v2586 = vunpack.c.l.b16 %v928
        %v2587 = vunpack.c.h.b16 %v928
        %v2588 = vunpack.c.l.b16 %v929
        %v2589 = vunpack.c.h.b16 %v929
        %v2590 = vunpack.c.l.b16 %v930
        %v2591 = vunpack.c.h.b16 %v930
        %v2592 = vunpack.c.l.b16 %v931
        %v2593 = vunpack.c.h.b16 %v931
        %v2594 = vunpack.c.l.b16 %v932
        %v2595 = vunpack.c.h.b16 %v932
        %v2596 = vunpack.c.l.b16 %v933
        %v2597 = vunpack.c.h.b16 %v933
        %v2598 = vunpack.c.l.b16 %v934
        %v2599 = vunpack.c.h.b16 %v934
        %v2600 = vunpack.c.l.b16 %v935
        %v2601 = vunpack.c.h.b16 %v935
        %v2602 = vunpack.c.l.b16 %v936
        %v2603 = vunpack.c.h.b16 %v936
        %v2604 = vunpack.c.l.b16 %v937
        %v2605 = vunpack.c.h.b16 %v937
        %v2606 = vunpack.c.l.b16 %v938
        %v2607 = vunpack.c.h.b16 %v938
        %v2608 = vunpack.c.l.b16 %v939
        %v2609 = vunpack.c.h.b16 %v939
        %v2610 = vunpack.c.l.b16 %v940
        %v2611 = vunpack.c.h.b16 %v940
        %v2612 = vunpack.c.l.b16 %v941
        %v2613 = vunpack.c.h.b16 %v941
        %v2614 = vunpack.c.l.b16 %v942
        %v2615 = vunpack.c.h.b16 %v942
        %v2616 = vunpack.c.l.b16 %v943
        %v2617 = vunpack.c.h.b16 %v943
        %v2618 = vunpack.c.l.b16 %v944
        %v2619 = vunpack.c.h.b16 %v944
        %v2620 = vunpack.c.l.b16 %v945
        %v2621 = vunpack.c.h.b16 %v945
        %v2622 = vunpack.c.l.b16 %v946
        %v2623 = vunpack.c.h.b16 %v946
        %v2624 = vunpack.c.l.b16 %v947
        %v2625 = vunpack.c.h.b16 %v947
        %v2626 = vunpack.c.l.b16 %v948
        %v2627 = vunpack.c.h.b16 %v948
        %v2628 = vunpack.c.l.b16 %v949
        %v2629 = vunpack.c.h.b16 %v949
        %v2630 = vunpack.c.l.b16 %v950
        %v2631 = vunpack.c.h.b16 %v950
        %v2632 = vunpack.c.l.b16 %v951
        %v2633 = vunpack.c.h.b16 %v951
        %v2634 = vunpack.c.l.b16 %v952
        %v2635 = vunpack.c.h.b16 %v952
        %v2636 = vunpack.c.l.b16 %v953
        %v2637 = vunpack.c.h.b16 %v953
        %v2638 = vunpack.c.l.b16 %v954
        %v2639 = vunpack.c.h.b16 %v954
        %v2640 = vunpack.c.l.b16 %v955
        %v2641 = vunpack.c.h.b16 %v955
        %v2642 = vunpack.c.l.b16 %v956
        %v2643 = vunpack.c.h.b16 %v956
        %v2644 = vunpack.c.l.b16 %v957
        %v2645 = vunpack.c.h.b16 %v957
        %v2646 = vunpack.c.l.b16 %v958
        %v2647 = vunpack.c.h.b16 %v958
        %v2648 = vunpack.c.l.b16 %v959
        %v2649 = vunpack.c.h.b16 %v959
        %v2650 = vunpack.c.l.b16 %v960
        %v2651 = vunpack.c.h.b16 %v960
        %v2652 = vunpack.c.l.b16 %v961
        %v2653 = vunpack.c.h.b16 %v961
        %v2654 = vunpack.c.l.b16 %v962
        %v2655 = vunpack.c.h.b16 %v962
        %v2656 = vunpack.c.l.b16 %v963
        %v2657 = vunpack.c.h.b16 %v963
        %v2658 = vunpack.c.l.b16 %v964
        %v2659 = vunpack.c.h.b16 %v964
        %v2660 = vunpack.c.l.b16 %v965
        %v2661 = vunpack.c.h.b16 %v965
        %v2662 = vunpack.c.l.b16 %v966
        %v2663 = vunpack.c.h.b16 %v966
        %v2664 = vunpack.c.l.b16 %v967
        %v2665 = vunpack.c.h.b16 %v967
        %v2666 = vunpack.c.l.b16 %v968
        %v2667 = vunpack.c.h.b16 %v968
        %v2668 = vunpack.c.l.b16 %v969
        %v2669 = vunpack.c.h.b16 %v969
        %v2670 = vunpack.c.l.b16 %v970
        %v2671 = vunpack.c.h.b16 %v970
        %v2672 = vunpack.c.l.b16 %v971
        %v2673 = vunpack.c.h.b16 %v971
        %v2674 = vunpack.c.l.b16 %v972
        %v2675 = vunpack.c.h.b16 %v972
        %v2676 = vunpack.c.l.b16 %v973
        %v2677 = vunpack.c.h.b16 %v973
        %v2678 = vunpack.c.l.b16 %v974
        %v2679 = vunpack.c.h.b16 %v974
        %v2680 = vunpack.c.l.b16 %v975
        %v2681 = vunpack.c.h.b16 %v975
        %v2682 = vunpack.c.l.b16 %v976
        %v2683 = vunpack.c.h.b16 %v976
        %v2684 = vunpack.c.l.b16 %v977
        %v2685 = vunpack.c.h.b16 %v977
        %v2686 = vunpack.c.l.b16 %v978
        %v2687 = vunpack.c.h.b16 %v978
        %v2688 = vunpack.c.l.b16 %v979
        %v2689 = vunpack.c.h.b16 %v979
        %v2690 = vunpack.c.l.b16 %v980
        %v2691 = vunpack.c.h.b16 %v980
        %v2692 = vunpack.c.l.b16 %v981
        %v2693 = vunpack.c.h.b16 %v981
        %v2694 = vunpack.c.l.b16 %v982
        %v2695 = vunpack.c.h.b16 %v982
        %v2696 = vunpack.c.l.b16 %v983
        %v2697 = vunpack.c.h.b16 %v983
        %v2698 = vunpack.c.l.b16 %v984
        %v2699 = vunpack.c.h.b16 %v984
        %v2700 = vunpack.c.l.b16 %v985
        %v2701 = vunpack.c.h.b16 %v985
        %v2702 = vunpack.c.l.b16 %v986
        %v2703 = vunpack.c.h.b16 %v986
        %v2704 = vunpack.c.l.b16 %v987
        %v2705 = vunpack.c.h.b16 %v987
        %v2706 = vunpack.c.l.b16 %v988
        %v2707 = vunpack.c.h.b16 %v988
        %v2708 = vunpack.c.l.b16 %v989
        %v2709 = vunpack.c.h.b16 %v989
        %v2710 = vunpack.c.l.b16 %v990
        %v2711 = vunpack.c.h.b16 %v990
        %v2712 = vunpack.c.l.b16 %v991
        %v2713 = vunpack.c.h.b16 %v991
        %v2714 = vunpack.c.l.b16 %v992
        %v2715 = vunpack.c.h.b16 %v992
        %v2716 = vunpack.c.l.b16 %v993
        %v2717 = vunpack.c.h.b16 %v993
        %v2718 = vunpack.c.l.b16 %v994
        %v2719 = vunpack.c.h.b16 %v994
        %v2720 = vunpack.c.l.b16 %v995
        %v2721 = vunpack.c.h.b16 %v995
        %v2722 = vunpack.c.l.b16 %v996
        %v2723 = vunpack.c.h.b16 %v996
        %v2724 = vunpack.c.l.b16 %v997
        %v2725 = vunpack.c.h.b16 %v997
        %v2726 = vunpack.c.l.b16 %v998
        %v2727 = vunpack.c.h.b16 %v998
        %v2728 = vunpack.c.l.b16 %v999
        %v2729 = vunpack.c.h.b16 %v999
        %v2730 = vunpack.c.l.b16 %v1000
        %v2731 = vunpack.c.h.b16 %v1000
        %v2732 = vunpack.c.l.b16 %v1001
        %v2733 = vunpack.c.h.b16 %v1001
        %v2734 = vunpack.c.l.b16 %v1002
        %v2735 = vunpack.c.h.b16 %v1002
        %v2736 = vunpack.c.l.b16 %v1003
        %v2737 = vunpack.c.h.b16 %v1003
        %v2738 = vunpack.c.l.b16 %v1004
        %v2739 = vunpack.c.h.b16 %v1004
        %v2740 = vunpack.c.l.b16 %v1005
        %v2741 = vunpack.c.h.b16 %v1005
        %v2742 = vunpack.c.l.b16 %v1006
        %v2743 = vunpack.c.h.b16 %v1006
        %v2744 = vunpack.c.l.b16 %v1007
        %v2745 = vunpack.c.h.b16 %v1007
        %v2746 = vunpack.c.l.b16 %v1008
        %v2747 = vunpack.c.h.b16 %v1008
        %v2748 = vunpack.c.l.b16 %v1009
        %v2749 = vunpack.c.h.b16 %v1009
        %v2750 = vunpack.c.l.b16 %v1010
        %v2751 = vunpack.c.h.b16 %v1010
        %v2752 = vunpack.c.l.b16 %v1011
        %v2753 = vunpack.c.h.b16 %v1011
        %v2754 = vunpack.c.l.b16 %v1012
        %v2755 = vunpack.c.h.b16 %v1012
        %v2756 = vunpack.c.l.b16 %v1013
        %v2757 = vunpack.c.h.b16 %v1013
        %v2758 = vunpack.c.l.b16 %v1014
        %v2759 = vunpack.c.h.b16 %v1014
        %v2760 = vunpack.c.l.b16 %v1015
        %v2761 = vunpack.c.h.b16 %v1015
        %v2762 = vunpack.c.l.b16 %v1016
        %v2763 = vunpack.c.h.b16 %v1016
        %v2764 = vunpack.c.l.b16 %v1017
        %v2765 = vunpack.c.h.b16 %v1017
        %v2766 = vunpack.c.l.b16 %v1018
        %v2767 = vunpack.c.h.b16 %v1018
        %v2768 = vunpack.c.l.b16 %v1019
        %v2769 = vunpack.c.h.b16 %v1019
        %v2770 = vunpack.c.l.b16 %v1020
        %v2771 = vunpack.c.h.b16 %v1020
        %v2772 = vunpack.c.l.b16 %v1021
        %v2773 = vunpack.c.h.b16 %v1021
        %v2774 = vunpack.c.l.b16 %v1022
        %v2775 = vunpack.c.h.b16 %v1022
        %v2776 = vunpack.c.l.b16 %v1023
        %v2777 = vunpack.c.h.b16 %v1023
        %v2778 = vunpack.c.l.b16 %v1024
        %v2779 = vunpack.c.h.b16 %v1024
        %v2780 = vunpack.c.l.b16 %v1025
        %v2781 = vunpack.c.h.b16 %v1025
        %v2782 = vunpack.c.l.b16 %v1026
        %v2783 = vunpack.c.h.b16 %v1026
        %v2784 = vunpack.c.l.b16 %v1027
        %v2785 = vunpack.c.h.b16 %v1027
        %v2786 = vunpack.c.l.b16 %v1028
        %v2787 = vunpack.c.h.b16 %v1028
        %v2788 = vunpack.c.l.b16 %v1029
        %v2789 = vunpack.c.h.b16 %v1029
        %v2790 = vunpack.c.l.b16 %v1030
        %v2791 = vunpack.c.h.b16 %v1030
        %v2792 = vunpack.c.l.b16 %v1031
        %v2793 = vunpack.c.h.b16 %v1031
        %v2794 = vunpack.c.l.b16 %v1032
        %v2795 = vunpack.c.h.b16 %v1032
        %v2796 = vunpack.c.l.b16 %v1033
        %v2797 = vunpack.c.h.b16 %v1033
        %v2798 = vunpack.c.l.b16 %v1034
        %v2799 = vunpack.c.h.b16 %v1034
        %v2800 = vunpack.c.l.b16 %v1035
        %v2801 = vunpack.c.h.b16 %v1035
        %v2802 = vunpack.c.l.b16 %v1036
        %v2803 = vunpack.c.h.b16 %v1036
        %v2804 = vunpack.c.l.b16 %v1037
        %v2805 = vunpack.c.h.b16 %v1037
        %v2806 = vunpack.c.l.b16 %v1038
        %v2807 = vunpack.c.h.b16 %v1038
        %v2808 = vunpack.c.l.b16 %v1039
        %v2809 = vunpack.c.h.b16 %v1039
        %v2810 = vunpack.c.l.b16 %v1040
        %v2811 = vunpack.c.h.b16 %v1040
        %v2812 = vunpack.c.l.b16 %v1041
        %v2813 = vunpack.c.h.b16 %v1041
        %v2814 = vunpack.c.l.b16 %v1042
        %v2815 = vunpack.c.h.b16 %v1042
        %v2816 = vunpack.c.l.b16 %v1043
        %v2817 = vunpack.c.h.b16 %v1043
        %v2818 = vunpack.c.l.b16 %v1044
        %v2819 = vunpack.c.h.b16 %v1044
        %v2820 = vunpack.c.l.b16 %v1045
        %v2821 = vunpack.c.h.b16 %v1045
        %v2822 = vunpack.c.l.b16 %v1046
        %v2823 = vunpack.c.h.b16 %v1046
        %v2824 = vunpack.c.l.b16 %v1047
        %v2825 = vunpack.c.h.b16 %v1047
        %v2826 = vunpack.c.l.b16 %v1048
        %v2827 = vunpack.c.h.b16 %v1048
        %v2828 = vunpack.c.l.b16 %v1049
        %v2829 = vunpack.c.h.b16 %v1049
        %v2830 = vunpack.c.l.b16 %v1050
        %v2831 = vunpack.c.h.b16 %v1050
        %v2832 = vunpack.c.l.b16 %v1051
        %v2833 = vunpack.c.h.b16 %v1051
        %v2834 = vunpack.c.l.b16 %v1052
        %v2835 = vunpack.c.h.b16 %v1052
        %v2836 = vunpack.c.l.b16 %v1053
        %v2837 = vunpack.c.h.b16 %v1053
        %v2838 = vunpack.c.l.b16 %v1054
        %v2839 = vunpack.c.h.b16 %v1054
        %v2840 = vunpack.c.l.b16 %v1055
        %v2841 = vunpack.c.h.b16 %v1055
        %v2842 = vunpack.c.l.b16 %v1056
        %v2843 = vunpack.c.h.b16 %v1056
        %v2844 = vunpack.c.l.b16 %v1057
        %v2845 = vunpack.c.h.b16 %v1057
        %v2846 = vunpack.c.l.b16 %v1058
        %v2847 = vunpack.c.h.b16 %v1058
        %v2848 = vunpack.c.l.b16 %v1059
        %v2849 = vunpack.c.h.b16 %v1059
        %v2850 = vunpack.c.l.b16 %v1060
        %v2851 = vunpack.c.h.b16 %v1060
        %v2852 = vunpack.c.l.b16 %v1061
        %v2853 = vunpack.c.h.b16 %v1061
        %v2854 = vpack.c.b16 %v1714, %v1702
        %v2855 = vpack.c.b16 %v1715, %v1703
        %v2856 = vpack.c.b16 %v1716, %v1704
        %v2857 = vpack.c.b16 %v1717, %v1705
        %v2858 = vpack.c.b16 %v1718, %v1706
        %v2859 = vpack.c.b16 %v1719, %v1707
        %v2860 = vpack.c.b16 %v1720, %v1708
        %v2861 = vpack.c.b16 %v1721, %v1709
        %v2862 = vpack.c.b16 %v1722, %v1710
        %v2863 = vpack.c.b16 %v1723, %v1711
        %v2864 = vpack.c.b16 %v1724, %v1712
        %v2865 = vpack.c.b16 %v1725, %v1713
        %v2866 = vpack.c.b16 %v1738, %v1726
        %v2867 = vpack.c.b16 %v1739, %v1727
        %v2868 = vpack.c.b16 %v1740, %v1728
        %v2869 = vpack.c.b16 %v1741, %v1729
        %v2870 = vpack.c.b16 %v1742, %v1730
        %v2871 = vpack.c.b16 %v1743, %v1731
        %v2872 = vpack.c.b16 %v1744, %v1732
        %v2873 = vpack.c.b16 %v1745, %v1733
        %v2874 = vpack.c.b16 %v1746, %v1734
        %v2875 = vpack.c.b16 %v1747, %v1735
        %v2876 = vpack.c.b16 %v1748, %v1736
        %v2877 = vpack.c.b16 %v1749, %v1737
        %v2878 = vpack.c.b16 %v1762, %v1750
        %v2879 = vpack.c.b16 %v1763, %v1751
        %v2880 = vpack.c.b16 %v1764, %v1752
        %v2881 = vpack.c.b16 %v1765, %v1753
        %v2882 = vpack.c.b16 %v1766, %v1754
        %v2883 = vpack.c.b16 %v1767, %v1755
        %v2884 = vpack.c.b16 %v1768, %v1756
        %v2885 = vpack.c.b16 %v1769, %v1757
        %v2886 = vpack.c.b16 %v1770, %v1758
        %v2887 = vpack.c.b16 %v1771, %v1759
        %v2888 = vpack.c.b16 %v1772, %v1760
        %v2889 = vpack.c.b16 %v1773, %v1761
        %v2890 = vpack.c.b16 %v1786, %v1774
        %v2891 = vpack.c.b16 %v1787, %v1775
        %v2892 = vpack.c.b16 %v1788, %v1776
        %v2893 = vpack.c.b16 %v1789, %v1777
        %v2894 = vpack.c.b16 %v1790, %v1778
        %v2895 = vpack.c.b16 %v1791, %v1779
        %v2896 = vpack.c.b16 %v1792, %v1780
        %v2897 = vpack.c.b16 %v1793, %v1781
        %v2898 = vpack.c.b16 %v1794, %v1782
        %v2899 = vpack.c.b16 %v1795, %v1783
        %v2900 = vpack.c.b16 %v1796, %v1784
        %v2901 = vpack.c.b16 %v1797, %v1785
        %v2902 = vpack.c.b16 %v1810, %v1798
        %v2903 = vpack.c.b16 %v1811, %v1799
        %v2904 = vpack.c.b16 %v1812, %v1800
        %v2905 = vpack.c.b16 %v1813, %v1801
        %v2906 = vpack.c.b16 %v1814, %v1802
        %v2907 = vpack.c.b16 %v1815, %v1803
        %v2908 = vpack.c.b16 %v1816, %v1804
        %v2909 = vpack.c.b16 %v1817, %v1805
        %v2910 = vpack.c.b16 %v1818, %v1806
        %v2911 = vpack.c.b16 %v1819, %v1807
        %v2912 = vpack.c.b16 %v1820, %v1808
        %v2913 = vpack.c.b16 %v1821, %v1809
        %v2914 = vpack.c.b16 %v1834, %v1822
        %v2915 = vpack.c.b16 %v1835, %v1823
        %v2916 = vpack.c.b16 %v1836, %v1824
        %v2917 = vpack.c.b16 %v1837, %v1825
        %v2918 = vpack.c.b16 %v1838, %v1826
        %v2919 = vpack.c.b16 %v1839, %v1827
        %v2920 = vpack.c.b16 %v1840, %v1828
        %v2921 = vpack.c.b16 %v1841, %v1829
        %v2922 = vpack.c.b16 %v1842, %v1830
        %v2923 = vpack.c.b16 %v1843, %v1831
        %v2924 = vpack.c.b16 %v1844, %v1832
        %v2925 = vpack.c.b16 %v1845, %v1833
        %v2926 = vpack.c.b16 %v1858, %v1846
        %v2927 = vpack.c.b16 %v1859, %v1847
        %v2928 = vpack.c.b16 %v1860, %v1848
        %v2929 = vpack.c.b16 %v1861, %v1849
        %v2930 = vpack.c.b16 %v1862, %v1850
        %v2931 = vpack.c.b16 %v1863, %v1851
        %v2932 = vpack.c.b16 %v1864, %v1852
        %v2933 = vpack.c.b16 %v1865, %v1853
        %v2934 = vpack.c.b16 %v1866, %v1854
        %v2935 = vpack.c.b16 %v1867, %v1855
        %v2936 = vpack.c.b16 %v1868, %v1856
        %v2937 = vpack.c.b16 %v1869, %v1857
        %v2938 = vpack.c.b16 %v1882, %v1870
        %v2939 = vpack.c.b16 %v1883, %v1871
        %v2940 = vpack.c.b16 %v1884, %v1872
        %v2941 = vpack.c.b16 %v1885, %v1873
        %v2942 = vpack.c.b16 %v1886, %v1874
        %v2943 = vpack.c.b16 %v1887, %v1875
        %v2944 = vpack.c.b16 %v1888, %v1876
        %v2945 = vpack.c.b16 %v1889, %v1877
        %v2946 = vpack.c.b16 %v1890, %v1878
        %v2947 = vpack.c.b16 %v1891, %v1879
        %v2948 = vpack.c.b16 %v1892, %v1880
        %v2949 = vpack.c.b16 %v1893, %v1881
        %v2950 = vpack.c.b16 %v1906, %v1894
        %v2951 = vpack.c.b16 %v1907, %v1895
        %v2952 = vpack.c.b16 %v1908, %v1896
        %v2953 = vpack.c.b16 %v1909, %v1897
        %v2954 = vpack.c.b16 %v1910, %v1898
        %v2955 = vpack.c.b16 %v1911, %v1899
        %v2956 = vpack.c.b16 %v1912, %v1900
        %v2957 = vpack.c.b16 %v1913, %v1901
        %v2958 = vpack.c.b16 %v1914, %v1902
        %v2959 = vpack.c.b16 %v1915, %v1903
        %v2960 = vpack.c.b16 %v1916, %v1904
        %v2961 = vpack.c.b16 %v1917, %v1905
        %v2962 = vpack.c.b16 %v1930, %v1918
        %v2963 = vpack.c.b16 %v1931, %v1919
        %v2964 = vpack.c.b16 %v1932, %v1920
        %v2965 = vpack.c.b16 %v1933, %v1921
        %v2966 = vpack.c.b16 %v1934, %v1922
        %v2967 = vpack.c.b16 %v1935, %v1923
        %v2968 = vpack.c.b16 %v1936, %v1924
        %v2969 = vpack.c.b16 %v1937, %v1925
        %v2970 = vpack.c.b16 %v1938, %v1926
        %v2971 = vpack.c.b16 %v1939, %v1927
        %v2972 = vpack.c.b16 %v1940, %v1928
        %v2973 = vpack.c.b16 %v1941, %v1929
        %v2974 = vpack.c.b16 %v1954, %v1942
        %v2975 = vpack.c.b16 %v1955, %v1943
        %v2976 = vpack.c.b16 %v1956, %v1944
        %v2977 = vpack.c.b16 %v1957, %v1945
        %v2978 = vpack.c.b16 %v1958, %v1946
        %v2979 = vpack.c.b16 %v1959, %v1947
        %v2980 = vpack.c.b16 %v1960, %v1948
        %v2981 = vpack.c.b16 %v1961, %v1949
        %v2982 = vpack.c.b16 %v1962, %v1950
        %v2983 = vpack.c.b16 %v1963, %v1951
        %v2984 = vpack.c.b16 %v1964, %v1952
        %v2985 = vpack.c.b16 %v1965, %v1953
        %v2986 = vpack.c.b16 %v1978, %v1966
        %v2987 = vpack.c.b16 %v1979, %v1967
        %v2988 = vpack.c.b16 %v1980, %v1968
        %v2989 = vpack.c.b16 %v1981, %v1969
        %v2990 = vpack.c.b16 %v1982, %v1970
        %v2991 = vpack.c.b16 %v1983, %v1971
        %v2992 = vpack.c.b16 %v1984, %v1972
        %v2993 = vpack.c.b16 %v1985, %v1973
        %v2994 = vpack.c.b16 %v1986, %v1974
        %v2995 = vpack.c.b16 %v1987, %v1975
        %v2996 = vpack.c.b16 %v1988, %v1976
        %v2997 = vpack.c.b16 %v1989, %v1977
        %v2998 = vpack.c.b16 %v2002, %v1990
        %v2999 = vpack.c.b16 %v2003, %v1991
        %v3000 = vpack.c.b16 %v2004, %v1992
        %v3001 = vpack.c.b16 %v2005, %v1993
        %v3002 = vpack.c.b16 %v2006, %v1994
        %v3003 = vpack.c.b16 %v2007, %v1995
        %v3004 = vpack.c.b16 %v2008, %v1996
        %v3005 = vpack.c.b16 %v2009, %v1997
        %v3006 = vpack.c.b16 %v2010, %v1998
        %v3007 = vpack.c.b16 %v2011, %v1999
        %v3008 = vpack.c.b16 %v2012, %v2000
        %v3009 = vpack.c.b16 %v2013, %v2001
        %v3010 = vpack.c.b16 %v2026, %v2014
        %v3011 = vpack.c.b16 %v2027, %v2015
        %v3012 = vpack.c.b16 %v2028, %v2016
        %v3013 = vpack.c.b16 %v2029, %v2017
        %v3014 = vpack.c.b16 %v2030, %v2018
        %v3015 = vpack.c.b16 %v2031, %v2019
        %v3016 = vpack.c.b16 %v2032, %v2020
        %v3017 = vpack.c.b16 %v2033, %v2021
        %v3018 = vpack.c.b16 %v2034, %v2022
        %v3019 = vpack.c.b16 %v2035, %v2023
        %v3020 = vpack.c.b16 %v2036, %v2024
        %v3021 = vpack.c.b16 %v2037, %v2025
        %v3022 = vpack.c.b16 %v2050, %v2038
        %v3023 = vpack.c.b16 %v2051, %v2039
        %v3024 = vpack.c.b16 %v2052, %v2040
        %v3025 = vpack.c.b16 %v2053, %v2041
        %v3026 = vpack.c.b16 %v2054, %v2042
        %v3027 = vpack.c.b16 %v2055, %v2043
        %v3028 = vpack.c.b16 %v2056, %v2044
        %v3029 = vpack.c.b16 %v2057, %v2045
        %v3030 = vpack.c.b16 %v2058, %v2046
        %v3031 = vpack.c.b16 %v2059, %v2047
        %v3032 = vpack.c.b16 %v2060, %v2048
        %v3033 = vpack.c.b16 %v2061, %v2049
        %v3034 = vpack.c.b16 %v2074, %v2062
        %v3035 = vpack.c.b16 %v2075, %v2063
        %v3036 = vpack.c.b16 %v2076, %v2064
        %v3037 = vpack.c.b16 %v2077, %v2065
        %v3038 = vpack.c.b16 %v2078, %v2066
        %v3039 = vpack.c.b16 %v2079, %v2067
        %v3040 = vpack.c.b16 %v2080, %v2068
        %v3041 = vpack.c.b16 %v2081, %v2069
        %v3042 = vpack.c.b16 %v2082, %v2070
        %v3043 = vpack.c.b16 %v2083, %v2071
        %v3044 = vpack.c.b16 %v2084, %v2072
        %v3045 = vpack.c.b16 %v2085, %v2073
        %v3046 = vpack.c.b16 %v2098, %v2086
        %v3047 = vpack.c.b16 %v2099, %v2087
        %v3048 = vpack.c.b16 %v2100, %v2088
        %v3049 = vpack.c.b16 %v2101, %v2089
        %v3050 = vpack.c.b16 %v2102, %v2090
        %v3051 = vpack.c.b16 %v2103, %v2091
        %v3052 = vpack.c.b16 %v2104, %v2092
        %v3053 = vpack.c.b16 %v2105, %v2093
        %v3054 = vpack.c.b16 %v2106, %v2094
        %v3055 = vpack.c.b16 %v2107, %v2095
        %v3056 = vpack.c.b16 %v2108, %v2096
        %v3057 = vpack.c.b16 %v2109, %v2097
        %v3058 = vpack.c.b16 %v2122, %v2110
        %v3059 = vpack.c.b16 %v2123, %v2111
        %v3060 = vpack.c.b16 %v2124, %v2112
        %v3061 = vpack.c.b16 %v2125, %v2113
        %v3062 = vpack.c.b16 %v2126, %v2114
        %v3063 = vpack.c.b16 %v2127, %v2115
        %v3064 = vpack.c.b16 %v2128, %v2116
        %v3065 = vpack.c.b16 %v2129, %v2117
        %v3066 = vpack.c.b16 %v2130, %v2118
        %v3067 = vpack.c.b16 %v2131, %v2119
        %v3068 = vpack.c.b16 %v2132, %v2120
        %v3069 = vpack.c.b16 %v2133, %v2121
        %v3070 = vpack.c.b16 %v2146, %v2134
        %v3071 = vpack.c.b16 %v2147, %v2135
        %v3072 = vpack.c.b16 %v2148, %v2136
        %v3073 = vpack.c.b16 %v2149, %v2137
        %v3074 = vpack.c.b16 %v2150, %v2138
        %v3075 = vpack.c.b16 %v2151, %v2139
        %v3076 = vpack.c.b16 %v2152, %v2140
        %v3077 = vpack.c.b16 %v2153, %v2141
        %v3078 = vpack.c.b16 %v2154, %v2142
        %v3079 = vpack.c.b16 %v2155, %v2143
        %v3080 = vpack.c.b16 %v2156, %v2144
        %v3081 = vpack.c.b16 %v2157, %v2145
        %v3082 = vpack.c.b16 %v2170, %v2158
        %v3083 = vpack.c.b16 %v2171, %v2159
        %v3084 = vpack.c.b16 %v2172, %v2160
        %v3085 = vpack.c.b16 %v2173, %v2161
        %v3086 = vpack.c.b16 %v2174, %v2162
        %v3087 = vpack.c.b16 %v2175, %v2163
        %v3088 = vpack.c.b16 %v2176, %v2164
        %v3089 = vpack.c.b16 %v2177, %v2165
        %v3090 = vpack.c.b16 %v2178, %v2166
        %v3091 = vpack.c.b16 %v2179, %v2167
        %v3092 = vpack.c.b16 %v2180, %v2168
        %v3093 = vpack.c.b16 %v2181, %v2169
        %v3094 = vpack.c.b16 %v2194, %v2182
        %v3095 = vpack.c.b16 %v2195, %v2183
        %v3096 = vpack.c.b16 %v2196, %v2184
        %v3097 = vpack.c.b16 %v2197, %v2185
        %v3098 = vpack.c.b16 %v2198, %v2186
        %v3099 = vpack.c.b16 %v2199, %v2187
        %v3100 = vpack.c.b16 %v2200, %v2188
        %v3101 = vpack.c.b16 %v2201, %v2189
        %v3102 = vpack.c.b16 %v2202, %v2190
        %v3103 = vpack.c.b16 %v2203, %v2191
        %v3104 = vpack.c.b16 %v2204, %v2192
        %v3105 = vpack.c.b16 %v2205, %v2193
        %v3106 = vpack.c.b16 %v2218, %v2206
        %v3107 = vpack.c.b16 %v2219, %v2207
        %v3108 = vpack.c.b16 %v2220, %v2208
        %v3109 = vpack.c.b16 %v2221, %v2209
        %v3110 = vpack.c.b16 %v2222, %v2210
        %v3111 = vpack.c.b16 %v2223, %v2211
        %v3112 = vpack.c.b16 %v2224, %v2212
        %v3113 = vpack.c.b16 %v2225, %v2213
        %v3114 = vpack.c.b16 %v2226, %v2214
        %v3115 = vpack.c.b16 %v2227, %v2215
        %v3116 = vpack.c.b16 %v2228, %v2216
        %v3117 = vpack.c.b16 %v2229, %v2217
        %v3118 = vpack.c.b16 %v2242, %v2230
        %v3119 = vpack.c.b16 %v2243, %v2231
        %v3120 = vpack.c.b16 %v2244, %v2232
        %v3121 = vpack.c.b16 %v2245, %v2233
        %v3122 = vpack.c.b16 %v2246, %v2234
        %v3123 = vpack.c.b16 %v2247, %v2235
        %v3124 = vpack.c.b16 %v2248, %v2236
        %v3125 = vpack.c.b16 %v2249, %v2237
        %v3126 = vpack.c.b16 %v2250, %v2238
        %v3127 = vpack.c.b16 %v2251, %v2239
        %v3128 = vpack.c.b16 %v2252, %v2240
        %v3129 = vpack.c.b16 %v2253, %v2241
        %v3130 = vpack.c.b16 %v2266, %v2254
        %v3131 = vpack.c.b16 %v2267, %v2255
        %v3132 = vpack.c.b16 %v2268, %v2256
        %v3133 = vpack.c.b16 %v2269, %v2257
        %v3134 = vpack.c.b16 %v2270, %v2258
        %v3135 = vpack.c.b16 %v2271, %v2259
        %v3136 = vpack.c.b16 %v2272, %v2260
        %v3137 = vpack.c.b16 %v2273, %v2261
        %v3138 = vpack.c.b16 %v2274, %v2262
        %v3139 = vpack.c.b16 %v2275, %v2263
        %v3140 = vpack.c.b16 %v2276, %v2264
        %v3141 = vpack.c.b16 %v2277, %v2265
        %v3142 = vpack.c.b16 %v2290, %v2278
        %v3143 = vpack.c.b16 %v2291, %v2279
        %v3144 = vpack.c.b16 %v2292, %v2280
        %v3145 = vpack.c.b16 %v2293, %v2281
        %v3146 = vpack.c.b16 %v2294, %v2282
        %v3147 = vpack.c.b16 %v2295, %v2283
        %v3148 = vpack.c.b16 %v2296, %v2284
        %v3149 = vpack.c.b16 %v2297, %v2285
        %v3150 = vpack.c.b16 %v2298, %v2286
        %v3151 = vpack.c.b16 %v2299, %v2287
        %v3152 = vpack.c.b16 %v2300, %v2288
        %v3153 = vpack.c.b16 %v2301, %v2289
        %v3154 = vpack.c.b16 %v2314, %v2302
        %v3155 = vpack.c.b16 %v2315, %v2303
        %v3156 = vpack.c.b16 %v2316, %v2304
        %v3157 = vpack.c.b16 %v2317, %v2305
        %v3158 = vpack.c.b16 %v2318, %v2306
        %v3159 = vpack.c.b16 %v2319, %v2307
        %v3160 = vpack.c.b16 %v2320, %v2308
        %v3161 = vpack.c.b16 %v2321, %v2309
        %v3162 = vpack.c.b16 %v2322, %v2310
        %v3163 = vpack.c.b16 %v2323, %v2311
        %v3164 = vpack.c.b16 %v2324, %v2312
        %v3165 = vpack.c.b16 %v2325, %v2313
        %v3166 = vpack.c.b16 %v2338, %v2326
        %v3167 = vpack.c.b16 %v2339, %v2327
        %v3168 = vpack.c.b16 %v2340, %v2328
        %v3169 = vpack.c.b16 %v2341, %v2329
        %v3170 = vpack.c.b16 %v2342, %v2330
        %v3171 = vpack.c.b16 %v2343, %v2331
        %v3172 = vpack.c.b16 %v2344, %v2332
        %v3173 = vpack.c.b16 %v2345, %v2333
        %v3174 = vpack.c.b16 %v2346, %v2334
        %v3175 = vpack.c.b16 %v2347, %v2335
        %v3176 = vpack.c.b16 %v2348, %v2336
        %v3177 = vpack.c.b16 %v2349, %v2337
        %v3178 = vpack.c.b16 %v2362, %v2350
        %v3179 = vpack.c.b16 %v2363, %v2351
        %v3180 = vpack.c.b16 %v2364, %v2352
        %v3181 = vpack.c.b16 %v2365, %v2353
        %v3182 = vpack.c.b16 %v2366, %v2354
        %v3183 = vpack.c.b16 %v2367, %v2355
        %v3184 = vpack.c.b16 %v2368, %v2356
        %v3185 = vpack.c.b16 %v2369, %v2357
        %v3186 = vpack.c.b16 %v2370, %v2358
        %v3187 = vpack.c.b16 %v2371, %v2359
        %v3188 = vpack.c.b16 %v2372, %v2360
        %v3189 = vpack.c.b16 %v2373, %v2361
        %v3190 = vpack.c.b16 %v2386, %v2374
        %v3191 = vpack.c.b16 %v2387, %v2375
        %v3192 = vpack.c.b16 %v2388, %v2376
        %v3193 = vpack.c.b16 %v2389, %v2377
        %v3194 = vpack.c.b16 %v2390, %v2378
        %v3195 = vpack.c.b16 %v2391, %v2379
        %v3196 = vpack.c.b16 %v2392, %v2380
        %v3197 = vpack.c.b16 %v2393, %v2381
        %v3198 = vpack.c.b16 %v2394, %v2382
        %v3199 = vpack.c.b16 %v2395, %v2383
        %v3200 = vpack.c.b16 %v2396, %v2384
        %v3201 = vpack.c.b16 %v2397, %v2385
        %v3202 = vpack.c.b16 %v2410, %v2398
        %v3203 = vpack.c.b16 %v2411, %v2399
        %v3204 = vpack.c.b16 %v2412, %v2400
        %v3205 = vpack.c.b16 %v2413, %v2401
        %v3206 = vpack.c.b16 %v2414, %v2402
        %v3207 = vpack.c.b16 %v2415, %v2403
        %v3208 = vpack.c.b16 %v2416, %v2404
        %v3209 = vpack.c.b16 %v2417, %v2405
        %v3210 = vpack.c.b16 %v2418, %v2406
        %v3211 = vpack.c.b16 %v2419, %v2407
        %v3212 = vpack.c.b16 %v2420, %v2408
        %v3213 = vpack.c.b16 %v2421, %v2409
        %v3214 = vpack.c.b16 %v2434, %v2422
        %v3215 = vpack.c.b16 %v2435, %v2423
        %v3216 = vpack.c.b16 %v2436, %v2424
        %v3217 = vpack.c.b16 %v2437, %v2425
        %v3218 = vpack.c.b16 %v2438, %v2426
        %v3219 = vpack.c.b16 %v2439, %v2427
        %v3220 = vpack.c.b16 %v2440, %v2428
        %v3221 = vpack.c.b16 %v2441, %v2429
        %v3222 = vpack.c.b16 %v2442, %v2430
        %v3223 = vpack.c.b16 %v2443, %v2431
        %v3224 = vpack.c.b16 %v2444, %v2432
        %v3225 = vpack.c.b16 %v2445, %v2433
        %v3226 = vpack.c.b16 %v2458, %v2446
        %v3227 = vpack.c.b16 %v2459, %v2447
        %v3228 = vpack.c.b16 %v2460, %v2448
        %v3229 = vpack.c.b16 %v2461, %v2449
        %v3230 = vpack.c.b16 %v2462, %v2450
        %v3231 = vpack.c.b16 %v2463, %v2451
        %v3232 = vpack.c.b16 %v2464, %v2452
        %v3233 = vpack.c.b16 %v2465, %v2453
        %v3234 = vpack.c.b16 %v2466, %v2454
        %v3235 = vpack.c.b16 %v2467, %v2455
        %v3236 = vpack.c.b16 %v2468, %v2456
        %v3237 = vpack.c.b16 %v2469, %v2457
        %v3238 = vpack.c.b16 %v2482, %v2470
        %v3239 = vpack.c.b16 %v2483, %v2471
        %v3240 = vpack.c.b16 %v2484, %v2472
        %v3241 = vpack.c.b16 %v2485, %v2473
        %v3242 = vpack.c.b16 %v2486, %v2474
        %v3243 = vpack.c.b16 %v2487, %v2475
        %v3244 = vpack.c.b16 %v2488, %v2476
        %v3245 = vpack.c.b16 %v2489, %v2477
        %v3246 = vpack.c.b16 %v2490, %v2478
        %v3247 = vpack.c.b16 %v2491, %v2479
        %v3248 = vpack.c.b16 %v2492, %v2480
        %v3249 = vpack.c.b16 %v2493, %v2481
        %v3250 = vpack.c.b16 %v2506, %v2494
        %v3251 = vpack.c.b16 %v2507, %v2495
        %v3252 = vpack.c.b16 %v2508, %v2496
        %v3253 = vpack.c.b16 %v2509, %v2497
        %v3254 = vpack.c.b16 %v2510, %v2498
        %v3255 = vpack.c.b16 %v2511, %v2499
        %v3256 = vpack.c.b16 %v2512, %v2500
        %v3257 = vpack.c.b16 %v2513, %v2501
        %v3258 = vpack.c.b16 %v2514, %v2502
        %v3259 = vpack.c.b16 %v2515, %v2503
        %v3260 = vpack.c.b16 %v2516, %v2504
        %v3261 = vpack.c.b16 %v2517, %v2505
        %v3262 = vpack.c.b16 %v2530, %v2518
        %v3263 = vpack.c.b16 %v2531, %v2519
        %v3264 = vpack.c.b16 %v2532, %v2520
        %v3265 = vpack.c.b16 %v2533, %v2521
        %v3266 = vpack.c.b16 %v2534, %v2522
        %v3267 = vpack.c.b16 %v2535, %v2523
        %v3268 = vpack.c.b16 %v2536, %v2524
        %v3269 = vpack.c.b16 %v2537, %v2525
        %v3270 = vpack.c.b16 %v2538, %v2526
        %v3271 = vpack.c.b16 %v2539, %v2527
        %v3272 = vpack.c.b16 %v2540, %v2528
        %v3273 = vpack.c.b16 %v2541, %v2529
        %v3274 = vpack.c.b16 %v2554, %v2542
        %v3275 = vpack.c.b16 %v2555, %v2543
        %v3276 = vpack.c.b16 %v2556, %v2544
        %v3277 = vpack.c.b16 %v2557, %v2545
        %v3278 = vpack.c.b16 %v2558, %v2546
        %v3279 = vpack.c.b16 %v2559, %v2547
        %v3280 = vpack.c.b16 %v2560, %v2548
        %v3281 = vpack.c.b16 %v2561, %v2549
        %v3282 = vpack.c.b16 %v2562, %v2550
        %v3283 = vpack.c.b16 %v2563, %v2551
        %v3284 = vpack.c.b16 %v2564, %v2552
        %v3285 = vpack.c.b16 %v2565, %v2553
        %v3286 = vpack.c.b16 %v2578, %v2566
        %v3287 = vpack.c.b16 %v2579, %v2567
        %v3288 = vpack.c.b16 %v2580, %v2568
        %v3289 = vpack.c.b16 %v2581, %v2569
        %v3290 = vpack.c.b16 %v2582, %v2570
        %v3291 = vpack.c.b16 %v2583, %v2571
        %v3292 = vpack.c.b16 %v2584, %v2572
        %v3293 = vpack.c.b16 %v2585, %v2573
        %v3294 = vpack.c.b16 %v2586, %v2574
        %v3295 = vpack.c.b16 %v2587, %v2575
        %v3296 = vpack.c.b16 %v2588, %v2576
        %v3297 = vpack.c.b16 %v2589, %v2577
        %v3298 = vpack.c.b16 %v2602, %v2590
        %v3299 = vpack.c.b16 %v2603, %v2591
        %v3300 = vpack.c.b16 %v2604, %v2592
        %v3301 = vpack.c.b16 %v2605, %v2593
        %v3302 = vpack.c.b16 %v2606, %v2594
        %v3303 = vpack.c.b16 %v2607, %v2595
        %v3304 = vpack.c.b16 %v2608, %v2596
        %v3305 = vpack.c.b16 %v2609, %v2597
        %v3306 = vpack.c.b16 %v2610, %v2598
        %v3307 = vpack.c.b16 %v2611, %v2599
        %v3308 = vpack.c.b16 %v2612, %v2600
        %v3309 = vpack.c.b16 %v2613, %v2601
        %v3310 = vpack.c.b16 %v2626, %v2614
        %v3311 = vpack.c.b16 %v2627, %v2615
        %v3312 = vpack.c.b16 %v2628, %v2616
        %v3313 = vpack.c.b16 %v2629, %v2617
        %v3314 = vpack.c.b16 %v2630, %v2618
        %v3315 = vpack.c.b16 %v2631, %v2619
        %v3316 = vpack.c.b16 %v2632, %v2620
        %v3317 = vpack.c.b16 %v2633, %v2621
        %v3318 = vpack.c.b16 %v2634, %v2622
        %v3319 = vpack.c.b16 %v2635, %v2623
        %v3320 = vpack.c.b16 %v2636, %v2624
        %v3321 = vpack.c.b16 %v2637, %v2625
        %v3322 = vpack.c.b16 %v2650, %v2638
        %v3323 = vpack.c.b16 %v2651, %v2639
        %v3324 = vpack.c.b16 %v2652, %v2640
        %v3325 = vpack.c.b16 %v2653, %v2641
        %v3326 = vpack.c.b16 %v2654, %v2642
        %v3327 = vpack.c.b16 %v2655, %v2643
        %v3328 = vpack.c.b16 %v2656, %v2644
        %v3329 = vpack.c.b16 %v2657, %v2645
        %v3330 = vpack.c.b16 %v2658, %v2646
        %v3331 = vpack.c.b16 %v2659, %v2647
        %v3332 = vpack.c.b16 %v2660, %v2648
        %v3333 = vpack.c.b16 %v2661, %v2649
        %v3334 = vpack.c.b16 %v2674, %v2662
        %v3335 = vpack.c.b16 %v2675, %v2663
        %v3336 = vpack.c.b16 %v2676, %v2664
        %v3337 = vpack.c.b16 %v2677, %v2665
        %v3338 = vpack.c.b16 %v2678, %v2666
        %v3339 = vpack.c.b16 %v2679, %v2667
        %v3340 = vpack.c.b16 %v2680, %v2668
        %v3341 = vpack.c.b16 %v2681, %v2669
        %v3342 = vpack.c.b16 %v2682, %v2670
        %v3343 = vpack.c.b16 %v2683, %v2671
        %v3344 = vpack.c.b16 %v2684, %v2672
        %v3345 = vpack.c.b16 %v2685, %v2673
        %v3346 = vpack.c.b16 %v2698, %v2686
        %v3347 = vpack.c.b16 %v2699, %v2687
        %v3348 = vpack.c.b16 %v2700, %v2688
        %v3349 = vpack.c.b16 %v2701, %v2689
        %v3350 = vpack.c.b16 %v2702, %v2690
        %v3351 = vpack.c.b16 %v2703, %v2691
        %v3352 = vpack.c.b16 %v2704, %v2692
        %v3353 = vpack.c.b16 %v2705, %v2693
        %v3354 = vpack.c.b16 %v2706, %v2694
        %v3355 = vpack.c.b16 %v2707, %v2695
        %v3356 = vpack.c.b16 %v2708, %v2696
        %v3357 = vpack.c.b16 %v2709, %v2697
        %v3358 = vpack.c.b16 %v2722, %v2710
        %v3359 = vpack.c.b16 %v2723, %v2711
        %v3360 = vpack.c.b16 %v2724, %v2712
        %v3361 = vpack.c.b16 %v2725, %v2713
        %v3362 = vpack.c.b16 %v2726, %v2714
        %v3363 = vpack.c.b16 %v2727, %v2715
        %v3364 = vpack.c.b16 %v2728, %v2716
        %v3365 = vpack.c.b16 %v2729, %v2717
        %v3366 = vpack.c.b16 %v2730, %v2718
        %v3367 = vpack.c.b16 %v2731, %v2719
        %v3368 = vpack.c.b16 %v2732, %v2720
        %v3369 = vpack.c.b16 %v2733, %v2721
        %v3370 = vpack.c.b16 %v2746, %v2734
        %v3371 = vpack.c.b16 %v2747, %v2735
        %v3372 = vpack.c.b16 %v2748, %v2736
        %v3373 = vpack.c.b16 %v2749, %v2737
        %v3374 = vpack.c.b16 %v2750, %v2738
        %v3375 = vpack.c.b16 %v2751, %v2739
        %v3376 = vpack.c.b16 %v2752, %v2740
        %v3377 = vpack.c.b16 %v2753, %v2741
        %v3378 = vpack.c.b16 %v2754, %v2742
        %v3379 = vpack.c.b16 %v2755, %v2743
        %v3380 = vpack.c.b16 %v2756, %v2744
        %v3381 = vpack.c.b16 %v2757, %v2745
        %v3382 = vpack.c.b16 %v2770, %v2758
        %v3383 = vpack.c.b16 %v2771, %v2759
        %v3384 = vpack.c.b16 %v2772, %v2760
        %v3385 = vpack.c.b16 %v2773, %v2761
        %v3386 = vpack.c.b16 %v2774, %v2762
        %v3387 = vpack.c.b16 %v2775, %v2763
        %v3388 = vpack.c.b16 %v2776, %v2764
        %v3389 = vpack.c.b16 %v2777, %v2765
        %v3390 = vpack.c.b16 %v2778, %v2766
        %v3391 = vpack.c.b16 %v2779, %v2767
        %v3392 = vpack.c.b16 %v2780, %v2768
        %v3393 = vpack.c.b16 %v2781, %v2769
        %v3394 = vpack.c.b16 %v2794, %v2782
        %v3395 = vpack.c.b16 %v2795, %v2783
        %v3396 = vpack.c.b16 %v2796, %v2784
        %v3397 = vpack.c.b16 %v2797, %v2785
        %v3398 = vpack.c.b16 %v2798, %v2786
        %v3399 = vpack.c.b16 %v2799, %v2787
        %v3400 = vpack.c.b16 %v2800, %v2788
        %v3401 = vpack.c.b16 %v2801, %v2789
        %v3402 = vpack.c.b16 %v2802, %v2790
        %v3403 = vpack.c.b16 %v2803, %v2791
        %v3404 = vpack.c.b16 %v2804, %v2792
        %v3405 = vpack.c.b16 %v2805, %v2793
        %v3406 = vpack.c.b16 %v2818, %v2806
        %v3407 = vpack.c.b16 %v2819, %v2807
        %v3408 = vpack.c.b16 %v2820, %v2808
        %v3409 = vpack.c.b16 %v2821, %v2809
        %v3410 = vpack.c.b16 %v2822, %v2810
        %v3411 = vpack.c.b16 %v2823, %v2811
        %v3412 = vpack.c.b16 %v2824, %v2812
        %v3413 = vpack.c.b16 %v2825, %v2813
        %v3414 = vpack.c.b16 %v2826, %v2814
        %v3415 = vpack.c.b16 %v2827, %v2815
        %v3416 = vpack.c.b16 %v2828, %v2816
        %v3417 = vpack.c.b16 %v2829, %v2817
        %v3418 = vpack.c.b16 %v2842, %v2830
        %v3419 = vpack.c.b16 %v2843, %v2831
        %v3420 = vpack.c.b16 %v2844, %v2832
        %v3421 = vpack.c.b16 %v2845, %v2833
        %v3422 = vpack.c.b16 %v2846, %v2834
        %v3423 = vpack.c.b16 %v2847, %v2835
        %v3424 = vpack.c.b16 %v2848, %v2836
        %v3425 = vpack.c.b16 %v2849, %v2837
        %v3426 = vpack.c.b16 %v2850, %v2838
        %v3427 = vpack.c.b16 %v2851, %v2839
        %v3428 = vpack.c.b16 %v2852, %v2840
        %v3429 = vpack.c.b16 %v2853, %v2841
        %4006 = vmatprep.subr.bf16.mxu0 %v2855
        %4007 = vmatpush1.bf16.msra.mxu0 %v2854
        %4008 = vmatprep.subr.bf16.mxu0 %v2867
        %4009 = vmatpush1.bf16.msra.mxu0 %v2866
        %4010 = vmatprep.subr.bf16.mxu0 %v2879
        %4011 = vmatpush1.bf16.msra.mxu0 %v2878
        %4012 = vmatprep.subr.bf16.mxu0 %v2891
        %4013 = vmatpush1.bf16.msra.mxu0 %v2890
        %4014 = vmatprep.subr.bf16.mxu0 %v2903
        %4015 = vmatpush1.bf16.msra.mxu0 %v2902
        %4016 = vmatprep.subr.bf16.mxu0 %v2915
        %4017 = vmatpush1.bf16.msra.mxu0 %v2914
        %4018 = vmatprep.subr.bf16.mxu0 %v2927
        %4019 = vmatpush1.bf16.msra.mxu0 %v2926
        %4020 = vmatprep.subr.bf16.mxu0 %v2939
        %4021 = vmatpush1.bf16.msra.mxu0 %v2938
        %4022 = vmatprep.subr.bf16.mxu0 %v2951
        %4023 = vmatpush1.bf16.msra.mxu0 %v2950
        %4024 = vmatprep.subr.bf16.mxu0 %v2963
        %4025 = vmatpush1.bf16.msra.mxu0 %v2962
        %4026 = vmatprep.subr.bf16.mxu0 %v2975
        %4027 = vmatpush1.bf16.msra.mxu0 %v2974
        %4028 = vmatprep.subr.bf16.mxu0 %v2987
        %4029 = vmatpush1.bf16.msra.mxu0 %v2986
        %4030 = vmatprep.subr.bf16.mxu0 %v2999
        %4031 = vmatpush1.bf16.msra.mxu0 %v2998
        %4032 = vmatprep.subr.bf16.mxu0 %v3011
        %4033 = vmatpush1.bf16.msra.mxu0 %v3010
        %4034 = vmatprep.subr.bf16.mxu0 %v3023
        %4035 = vmatpush1.bf16.msra.mxu0 %v3022
        %4036 = vmatprep.subr.bf16.mxu0 %v3035
        %4037 = vmatpush1.bf16.msra.mxu0 %v3034
        %4038 = vmatprep.mubr.bf16.mxu0 %v481
        %4039 = vmatmul.mubr.bf16.gmra.mrb[0].mxu0 %v480
        %v4040 = vpop.f32.mrb[0].mxu0
        %v4041 = vadd.f32 %v1069, %v4040
        %v4042 = vpop.f32.mrb[0].mxu0
        %v4043 = vadd.f32 %v1073, %v4042
        %v4044 = vpop.f32.mrb[0].mxu0
        %v4045 = vpop.f32.mrb[0].mxu0
        %4046 = vdwg.mxu0
        %4047 = vmatprep.subr.bf16.mxu0 %v3047
        %4048 = vmatpush1.bf16.msra.mxu0 %v3046
        %4049 = vmatprep.subr.bf16.mxu0 %v3059
        %4050 = vmatpush1.bf16.msra.mxu0 %v3058
        %4051 = vmatprep.subr.bf16.mxu0 %v3071
        %4052 = vmatpush1.bf16.msra.mxu0 %v3070
        %4053 = vmatprep.subr.bf16.mxu0 %v3083
        %4054 = vmatpush1.bf16.msra.mxu0 %v3082
        %4055 = vmatprep.subr.bf16.mxu0 %v3095
        %4056 = vmatpush1.bf16.msra.mxu0 %v3094
        %4057 = vmatprep.subr.bf16.mxu0 %v3107
        %4058 = vmatpush1.bf16.msra.mxu0 %v3106
        %4059 = vmatprep.subr.bf16.mxu0 %v3119
        %4060 = vmatpush1.bf16.msra.mxu0 %v3118
        %4061 = vmatprep.subr.bf16.mxu0 %v3131
        %4062 = vmatpush1.bf16.msra.mxu0 %v3130
        %4063 = vmatprep.subr.bf16.mxu0 %v3143
        %4064 = vmatpush1.bf16.msra.mxu0 %v3142
        %4065 = vmatprep.subr.bf16.mxu0 %v3155
        %4066 = vmatpush1.bf16.msra.mxu0 %v3154
        %4067 = vmatprep.subr.bf16.mxu0 %v3167
        %4068 = vmatpush1.bf16.msra.mxu0 %v3166
        %4069 = vmatprep.subr.bf16.mxu0 %v3179
        %4070 = vmatpush1.bf16.msra.mxu0 %v3178
        %4071 = vmatprep.subr.bf16.mxu0 %v3191
        %4072 = vmatpush1.bf16.msra.mxu0 %v3190
        %4073 = vmatprep.subr.bf16.mxu0 %v3203
        %4074 = vmatpush1.bf16.msra.mxu0 %v3202
        %4075 = vmatprep.subr.bf16.mxu0 %v3215
        %4076 = vmatpush1.bf16.msra.mxu0 %v3214
        %4077 = vmatprep.subr.bf16.mxu0 %v3227
        %4078 = vmatpush1.bf16.msra.mxu0 %v3226
        %4079 = vmatprep.mubr.bf16.mxu0 %v483
        %4080 = vmatmul.mubr.bf16.gmra.mrb[0].mxu0 %v482
        %v4081 = vpop.f32.mrb[0].mxu0
        %v4082 = vadd.f32 %v4041, %v4081
        %v4083 = vpop.f32.mrb[0].mxu0
        %v4084 = vadd.f32 %v4043, %v4083
        %v4085 = vpop.f32.mrb[0].mxu0
        %v4086 = vpop.f32.mrb[0].mxu0
        %4087 = vdwg.mxu0
        %4088 = vmatprep.subr.bf16.mxu0 %v3239
        %4089 = vmatpush1.bf16.msra.mxu0 %v3238
        %4090 = vmatprep.subr.bf16.mxu0 %v3251
        %4091 = vmatpush1.bf16.msra.mxu0 %v3250
        %4092 = vmatprep.subr.bf16.mxu0 %v3263
        %4093 = vmatpush1.bf16.msra.mxu0 %v3262
        %4094 = vmatprep.subr.bf16.mxu0 %v3275
        %4095 = vmatpush1.bf16.msra.mxu0 %v3274
        %4096 = vmatprep.subr.bf16.mxu0 %v3287
        %4097 = vmatpush1.bf16.msra.mxu0 %v3286
        %4098 = vmatprep.subr.bf16.mxu0 %v3299
        %4099 = vmatpush1.bf16.msra.mxu0 %v3298
        %4100 = vmatprep.subr.bf16.mxu0 %v3311
        %4101 = vmatpush1.bf16.msra.mxu0 %v3310
        %4102 = vmatprep.subr.bf16.mxu0 %v3323
        %4103 = vmatpush1.bf16.msra.mxu0 %v3322
        %4104 = vmatprep.subr.bf16.mxu0 %v3335
        %4105 = vmatpush1.bf16.msra.mxu0 %v3334
        %4106 = vmatprep.subr.bf16.mxu0 %v3347
        %4107 = vmatpush1.bf16.msra.mxu0 %v3346
        %4108 = vmatprep.subr.bf16.mxu0 %v3359
        %4109 = vmatpush1.bf16.msra.mxu0 %v3358
        %4110 = vmatprep.subr.bf16.mxu0 %v3371
        %4111 = vmatpush1.bf16.msra.mxu0 %v3370
        %4112 = vmatprep.subr.bf16.mxu0 %v3383
        %4113 = vmatpush1.bf16.msra.mxu0 %v3382
        %4114 = vmatprep.subr.bf16.mxu0 %v3395
        %4115 = vmatpush1.bf16.msra.mxu0 %v3394
        %4116 = vmatprep.subr.bf16.mxu0 %v3407
        %4117 = vmatpush1.bf16.msra.mxu0 %v3406
        %4118 = vmatprep.subr.bf16.mxu0 %v3419
        %4119 = vmatpush1.bf16.msra.mxu0 %v3418
        %4120 = vmatprep.mubr.bf16.mxu0 %v485
        %4121 = vmatmul.mubr.bf16.gmra.mrb[0].mxu0 %v484
        %v4122 = vpop.f32.mrb[0].mxu0
        %v4123 = vadd.f32 %v4082, %v4122
        %v4124 = vpop.f32.mrb[0].mxu0
        %v4125 = vadd.f32 %v4084, %v4124
        %v4126 = vpop.f32.mrb[0].mxu0
        %v4127 = vpop.f32.mrb[0].mxu0
        %4128 = vdwg.mxu0
        %4129 = vmatprep.subr.bf16.mxu0 %v2857
        %4130 = vmatpush1.bf16.msra.mxu0 %v2856
        %4131 = vmatprep.subr.bf16.mxu0 %v2869
        %4132 = vmatpush1.bf16.msra.mxu0 %v2868
        %4133 = vmatprep.subr.bf16.mxu0 %v2881
        %4134 = vmatpush1.bf16.msra.mxu0 %v2880
        %4135 = vmatprep.subr.bf16.mxu0 %v2893
        %4136 = vmatpush1.bf16.msra.mxu0 %v2892
        %4137 = vmatprep.subr.bf16.mxu0 %v2905
        %4138 = vmatpush1.bf16.msra.mxu0 %v2904
        %4139 = vmatprep.subr.bf16.mxu0 %v2917
        %4140 = vmatpush1.bf16.msra.mxu0 %v2916
        %4141 = vmatprep.subr.bf16.mxu0 %v2929
        %4142 = vmatpush1.bf16.msra.mxu0 %v2928
        %4143 = vmatprep.subr.bf16.mxu0 %v2941
        %4144 = vmatpush1.bf16.msra.mxu0 %v2940
        %4145 = vmatprep.subr.bf16.mxu0 %v2953
        %4146 = vmatpush1.bf16.msra.mxu0 %v2952
        %4147 = vmatprep.subr.bf16.mxu0 %v2965
        %4148 = vmatpush1.bf16.msra.mxu0 %v2964
        %4149 = vmatprep.subr.bf16.mxu0 %v2977
        %4150 = vmatpush1.bf16.msra.mxu0 %v2976
        %4151 = vmatprep.subr.bf16.mxu0 %v2989
        %4152 = vmatpush1.bf16.msra.mxu0 %v2988
        %4153 = vmatprep.subr.bf16.mxu0 %v3001
        %4154 = vmatpush1.bf16.msra.mxu0 %v3000
        %4155 = vmatprep.subr.bf16.mxu0 %v3013
        %4156 = vmatpush1.bf16.msra.mxu0 %v3012
        %4157 = vmatprep.subr.bf16.mxu0 %v3025
        %4158 = vmatpush1.bf16.msra.mxu0 %v3024
        %4159 = vmatprep.subr.bf16.mxu0 %v3037
        %4160 = vmatpush1.bf16.msra.mxu0 %v3036
        %4161 = vmatprep.mubr.bf16.mxu0 %v481
        %4162 = vmatmul.mubr.bf16.gmra.mrb[0].mxu0 %v480
        %v4163 = vpop.f32.mrb[0].mxu0
        %v4164 = vadd.f32 %v1077, %v4163
        %v4165 = vpop.f32.mrb[0].mxu0
        %v4166 = vadd.f32 %v1081, %v4165
        %v4167 = vpop.f32.mrb[0].mxu0
        %v4168 = vpop.f32.mrb[0].mxu0
        %4169 = vdwg.mxu0
        %4170 = vmatprep.subr.bf16.mxu0 %v3049
        %4171 = vmatpush1.bf16.msra.mxu0 %v3048
        %4172 = vmatprep.subr.bf16.mxu0 %v3061
        %4173 = vmatpush1.bf16.msra.mxu0 %v3060
        %4174 = vmatprep.subr.bf16.mxu0 %v3073
        %4175 = vmatpush1.bf16.msra.mxu0 %v3072
        %4176 = vmatprep.subr.bf16.mxu0 %v3085
        %4177 = vmatpush1.bf16.msra.mxu0 %v3084
        %4178 = vmatprep.subr.bf16.mxu0 %v3097
        %4179 = vmatpush1.bf16.msra.mxu0 %v3096
        %4180 = vmatprep.subr.bf16.mxu0 %v3109
        %4181 = vmatpush1.bf16.msra.mxu0 %v3108
        %4182 = vmatprep.subr.bf16.mxu0 %v3121
        %4183 = vmatpush1.bf16.msra.mxu0 %v3120
        %4184 = vmatprep.subr.bf16.mxu0 %v3133
        %4185 = vmatpush1.bf16.msra.mxu0 %v3132
        %4186 = vmatprep.subr.bf16.mxu0 %v3145
        %4187 = vmatpush1.bf16.msra.mxu0 %v3144
        %4188 = vmatprep.subr.bf16.mxu0 %v3157
        %4189 = vmatpush1.bf16.msra.mxu0 %v3156
        %4190 = vmatprep.subr.bf16.mxu0 %v3169
        %4191 = vmatpush1.bf16.msra.mxu0 %v3168
        %4192 = vmatprep.subr.bf16.mxu0 %v3181
        %4193 = vmatpush1.bf16.msra.mxu0 %v3180
        %4194 = vmatprep.subr.bf16.mxu0 %v3193
        %4195 = vmatpush1.bf16.msra.mxu0 %v3192
        %4196 = vmatprep.subr.bf16.mxu0 %v3205
        %4197 = vmatpush1.bf16.msra.mxu0 %v3204
        %4198 = vmatprep.subr.bf16.mxu0 %v3217
        %4199 = vmatpush1.bf16.msra.mxu0 %v3216
        %4200 = vmatprep.subr.bf16.mxu0 %v3229
        %4201 = vmatpush1.bf16.msra.mxu0 %v3228
        %4202 = vmatprep.mubr.bf16.mxu0 %v483
        %4203 = vmatmul.mubr.bf16.gmra.mrb[0].mxu0 %v482
        %v4204 = vpop.f32.mrb[0].mxu0
        %v4205 = vadd.f32 %v4164, %v4204
        %v4206 = vpop.f32.mrb[0].mxu0
        %v4207 = vadd.f32 %v4166, %v4206
        %v4208 = vpop.f32.mrb[0].mxu0
        %v4209 = vpop.f32.mrb[0].mxu0
        %4210 = vdwg.mxu0
        %4211 = vmatprep.subr.bf16.mxu0 %v3241
        %4212 = vmatpush1.bf16.msra.mxu0 %v3240
        %4213 = vmatprep.subr.bf16.mxu0 %v3253
        %4214 = vmatpush1.bf16.msra.mxu0 %v3252
        %4215 = vmatprep.subr.bf16.mxu0 %v3265
        %4216 = vmatpush1.bf16.msra.mxu0 %v3264
        %4217 = vmatprep.subr.bf16.mxu0 %v3277
        %4218 = vmatpush1.bf16.msra.mxu0 %v3276
        %4219 = vmatprep.subr.bf16.mxu0 %v3289
        %4220 = vmatpush1.bf16.msra.mxu0 %v3288
        %4221 = vmatprep.subr.bf16.mxu0 %v3301
        %4222 = vmatpush1.bf16.msra.mxu0 %v3300
        %4223 = vmatprep.subr.bf16.mxu0 %v3313
        %4224 = vmatpush1.bf16.msra.mxu0 %v3312
        %4225 = vmatprep.subr.bf16.mxu0 %v3325
        %4226 = vmatpush1.bf16.msra.mxu0 %v3324
        %4227 = vmatprep.subr.bf16.mxu0 %v3337
        %4228 = vmatpush1.bf16.msra.mxu0 %v3336
        %4229 = vmatprep.subr.bf16.mxu0 %v3349
        %4230 = vmatpush1.bf16.msra.mxu0 %v3348
        %4231 = vmatprep.subr.bf16.mxu0 %v3361
        %4232 = vmatpush1.bf16.msra.mxu0 %v3360
        %4233 = vmatprep.subr.bf16.mxu0 %v3373
        %4234 = vmatpush1.bf16.msra.mxu0 %v3372
        %4235 = vmatprep.subr.bf16.mxu0 %v3385
        %4236 = vmatpush1.bf16.msra.mxu0 %v3384
        %4237 = vmatprep.subr.bf16.mxu0 %v3397
        %4238 = vmatpush1.bf16.msra.mxu0 %v3396
        %4239 = vmatprep.subr.bf16.mxu0 %v3409
        %4240 = vmatpush1.bf16.msra.mxu0 %v3408
        %4241 = vmatprep.subr.bf16.mxu0 %v3421
        %4242 = vmatpush1.bf16.msra.mxu0 %v3420
        %4243 = vmatprep.mubr.bf16.mxu0 %v485
        %4244 = vmatmul.mubr.bf16.gmra.mrb[0].mxu0 %v484
        %v4245 = vpop.f32.mrb[0].mxu0
        %v4246 = vadd.f32 %v4205, %v4245
        %v4247 = vpop.f32.mrb[0].mxu0
        %v4248 = vadd.f32 %v4207, %v4247
        %v4249 = vpop.f32.mrb[0].mxu0
        %v4250 = vpop.f32.mrb[0].mxu0
        %4251 = vdwg.mxu0
        %4252 = vmatprep.subr.bf16.mxu0 %v2859
        %4253 = vmatpush1.bf16.msra.mxu0 %v2858
        %4254 = vmatprep.subr.bf16.mxu0 %v2871
        %4255 = vmatpush1.bf16.msra.mxu0 %v2870
        %4256 = vmatprep.subr.bf16.mxu0 %v2883
        %4257 = vmatpush1.bf16.msra.mxu0 %v2882
        %4258 = vmatprep.subr.bf16.mxu0 %v2895
        %4259 = vmatpush1.bf16.msra.mxu0 %v2894
        %4260 = vmatprep.subr.bf16.mxu0 %v2907
        %4261 = vmatpush1.bf16.msra.mxu0 %v2906
        %4262 = vmatprep.subr.bf16.mxu0 %v2919
        %4263 = vmatpush1.bf16.msra.mxu0 %v2918
        %4264 = vmatprep.subr.bf16.mxu0 %v2931
        %4265 = vmatpush1.bf16.msra.mxu0 %v2930
        %4266 = vmatprep.subr.bf16.mxu0 %v2943
        %4267 = vmatpush1.bf16.msra.mxu0 %v2942
        %4268 = vmatprep.subr.bf16.mxu0 %v2955
        %4269 = vmatpush1.bf16.msra.mxu0 %v2954
        %4270 = vmatprep.subr.bf16.mxu0 %v2967
        %4271 = vmatpush1.bf16.msra.mxu0 %v2966
        %4272 = vmatprep.subr.bf16.mxu0 %v2979
        %4273 = vmatpush1.bf16.msra.mxu0 %v2978
        %4274 = vmatprep.subr.bf16.mxu0 %v2991
        %4275 = vmatpush1.bf16.msra.mxu0 %v2990
        %4276 = vmatprep.subr.bf16.mxu0 %v3003
        %4277 = vmatpush1.bf16.msra.mxu0 %v3002
        %4278 = vmatprep.subr.bf16.mxu0 %v3015
        %4279 = vmatpush1.bf16.msra.mxu0 %v3014
        %4280 = vmatprep.subr.bf16.mxu0 %v3027
        %4281 = vmatpush1.bf16.msra.mxu0 %v3026
        %4282 = vmatprep.subr.bf16.mxu0 %v3039
        %4283 = vmatpush1.bf16.msra.mxu0 %v3038
        %4284 = vmatprep.mubr.bf16.mxu0 %v481
        %4285 = vmatmul.mubr.bf16.gmra.mrb[0].mxu0 %v480
        %v4286 = vpop.f32.mrb[0].mxu0
        %v4287 = vadd.f32 %v1085, %v4286
        %v4288 = vpop.f32.mrb[0].mxu0
        %v4289 = vadd.f32 %v1089, %v4288
        %v4290 = vpop.f32.mrb[0].mxu0
        %v4291 = vpop.f32.mrb[0].mxu0
        %4292 = vdwg.mxu0
        %4293 = vmatprep.subr.bf16.mxu0 %v3051
        %4294 = vmatpush1.bf16.msra.mxu0 %v3050
        %4295 = vmatprep.subr.bf16.mxu0 %v3063
        %4296 = vmatpush1.bf16.msra.mxu0 %v3062
        %4297 = vmatprep.subr.bf16.mxu0 %v3075
        %4298 = vmatpush1.bf16.msra.mxu0 %v3074
        %4299 = vmatprep.subr.bf16.mxu0 %v3087
        %4300 = vmatpush1.bf16.msra.mxu0 %v3086
        %4301 = vmatprep.subr.bf16.mxu0 %v3099
        %4302 = vmatpush1.bf16.msra.mxu0 %v3098
        %4303 = vmatprep.subr.bf16.mxu0 %v3111
        %4304 = vmatpush1.bf16.msra.mxu0 %v3110
        %4305 = vmatprep.subr.bf16.mxu0 %v3123
        %4306 = vmatpush1.bf16.msra.mxu0 %v3122
        %4307 = vmatprep.subr.bf16.mxu0 %v3135
        %4308 = vmatpush1.bf16.msra.mxu0 %v3134
        %4309 = vmatprep.subr.bf16.mxu0 %v3147
        %4310 = vmatpush1.bf16.msra.mxu0 %v3146
        %4311 = vmatprep.subr.bf16.mxu0 %v3159
        %4312 = vmatpush1.bf16.msra.mxu0 %v3158
        %4313 = vmatprep.subr.bf16.mxu0 %v3171
        %4314 = vmatpush1.bf16.msra.mxu0 %v3170
        %4315 = vmatprep.subr.bf16.mxu0 %v3183
        %4316 = vmatpush1.bf16.msra.mxu0 %v3182
        %4317 = vmatprep.subr.bf16.mxu0 %v3195
        %4318 = vmatpush1.bf16.msra.mxu0 %v3194
        %4319 = vmatprep.subr.bf16.mxu0 %v3207
        %4320 = vmatpush1.bf16.msra.mxu0 %v3206
        %4321 = vmatprep.subr.bf16.mxu0 %v3219
        %4322 = vmatpush1.bf16.msra.mxu0 %v3218
        %4323 = vmatprep.subr.bf16.mxu0 %v3231
        %4324 = vmatpush1.bf16.msra.mxu0 %v3230
        %4325 = vmatprep.mubr.bf16.mxu0 %v483
        %4326 = vmatmul.mubr.bf16.gmra.mrb[0].mxu0 %v482
        %v4327 = vpop.f32.mrb[0].mxu0
        %v4328 = vadd.f32 %v4287, %v4327
        %v4329 = vpop.f32.mrb[0].mxu0
        %v4330 = vadd.f32 %v4289, %v4329
        %v4331 = vpop.f32.mrb[0].mxu0
        %v4332 = vpop.f32.mrb[0].mxu0
        %4333 = vdwg.mxu0
        %4334 = vmatprep.subr.bf16.mxu0 %v3243
        %4335 = vmatpush1.bf16.msra.mxu0 %v3242
        %4336 = vmatprep.subr.bf16.mxu0 %v3255
        %4337 = vmatpush1.bf16.msra.mxu0 %v3254
        %4338 = vmatprep.subr.bf16.mxu0 %v3267
        %4339 = vmatpush1.bf16.msra.mxu0 %v3266
        %4340 = vmatprep.subr.bf16.mxu0 %v3279
        %4341 = vmatpush1.bf16.msra.mxu0 %v3278
        %4342 = vmatprep.subr.bf16.mxu0 %v3291
        %4343 = vmatpush1.bf16.msra.mxu0 %v3290
        %4344 = vmatprep.subr.bf16.mxu0 %v3303
        %4345 = vmatpush1.bf16.msra.mxu0 %v3302
        %4346 = vmatprep.subr.bf16.mxu0 %v3315
        %4347 = vmatpush1.bf16.msra.mxu0 %v3314
        %4348 = vmatprep.subr.bf16.mxu0 %v3327
        %4349 = vmatpush1.bf16.msra.mxu0 %v3326
        %4350 = vmatprep.subr.bf16.mxu0 %v3339
        %4351 = vmatpush1.bf16.msra.mxu0 %v3338
        %4352 = vmatprep.subr.bf16.mxu0 %v3351
        %4353 = vmatpush1.bf16.msra.mxu0 %v3350
        %4354 = vmatprep.subr.bf16.mxu0 %v3363
        %4355 = vmatpush1.bf16.msra.mxu0 %v3362
        %4356 = vmatprep.subr.bf16.mxu0 %v3375
        %4357 = vmatpush1.bf16.msra.mxu0 %v3374
        %4358 = vmatprep.subr.bf16.mxu0 %v3387
        %4359 = vmatpush1.bf16.msra.mxu0 %v3386
        %4360 = vmatprep.subr.bf16.mxu0 %v3399
        %4361 = vmatpush1.bf16.msra.mxu0 %v3398
        %4362 = vmatprep.subr.bf16.mxu0 %v3411
        %4363 = vmatpush1.bf16.msra.mxu0 %v3410
        %4364 = vmatprep.subr.bf16.mxu0 %v3423
        %4365 = vmatpush1.bf16.msra.mxu0 %v3422
        %4366 = vmatprep.mubr.bf16.mxu0 %v485
        %4367 = vmatmul.mubr.bf16.gmra.mrb[0].mxu0 %v484
        %v4368 = vpop.f32.mrb[0].mxu0
        %v4369 = vadd.f32 %v4328, %v4368
        %v4370 = vpop.f32.mrb[0].mxu0
        %v4371 = vadd.f32 %v4330, %v4370
        %v4372 = vpop.f32.mrb[0].mxu0
        %v4373 = vpop.f32.mrb[0].mxu0
        %4374 = vdwg.mxu0
        %4375 = vmatprep.subr.bf16.mxu0 %v2861
        %4376 = vmatpush1.bf16.msra.mxu0 %v2860
        %4377 = vmatprep.subr.bf16.mxu0 %v2873
        %4378 = vmatpush1.bf16.msra.mxu0 %v2872
        %4379 = vmatprep.subr.bf16.mxu0 %v2885
        %4380 = vmatpush1.bf16.msra.mxu0 %v2884
        %4381 = vmatprep.subr.bf16.mxu0 %v2897
        %4382 = vmatpush1.bf16.msra.mxu0 %v2896
        %4383 = vmatprep.subr.bf16.mxu0 %v2909
        %4384 = vmatpush1.bf16.msra.mxu0 %v2908
        %4385 = vmatprep.subr.bf16.mxu0 %v2921
        %4386 = vmatpush1.bf16.msra.mxu0 %v2920
        %4387 = vmatprep.subr.bf16.mxu0 %v2933
        %4388 = vmatpush1.bf16.msra.mxu0 %v2932
        %4389 = vmatprep.subr.bf16.mxu0 %v2945
        %4390 = vmatpush1.bf16.msra.mxu0 %v2944
        %4391 = vmatprep.subr.bf16.mxu0 %v2957
        %4392 = vmatpush1.bf16.msra.mxu0 %v2956
        %4393 = vmatprep.subr.bf16.mxu0 %v2969
        %4394 = vmatpush1.bf16.msra.mxu0 %v2968
        %4395 = vmatprep.subr.bf16.mxu0 %v2981
        %4396 = vmatpush1.bf16.msra.mxu0 %v2980
        %4397 = vmatprep.subr.bf16.mxu0 %v2993
        %4398 = vmatpush1.bf16.msra.mxu0 %v2992
        %4399 = vmatprep.subr.bf16.mxu0 %v3005
        %4400 = vmatpush1.bf16.msra.mxu0 %v3004
        %4401 = vmatprep.subr.bf16.mxu0 %v3017
        %4402 = vmatpush1.bf16.msra.mxu0 %v3016
        %4403 = vmatprep.subr.bf16.mxu0 %v3029
        %4404 = vmatpush1.bf16.msra.mxu0 %v3028
        %4405 = vmatprep.subr.bf16.mxu0 %v3041
        %4406 = vmatpush1.bf16.msra.mxu0 %v3040
        %4407 = vmatprep.mubr.bf16.mxu0 %v481
        %4408 = vmatmul.mubr.bf16.gmra.mrb[0].mxu0 %v480
        %v4409 = vpop.f32.mrb[0].mxu0
        %v4410 = vadd.f32 %v1093, %v4409
        %v4411 = vpop.f32.mrb[0].mxu0
        %v4412 = vadd.f32 %v1097, %v4411
        %v4413 = vpop.f32.mrb[0].mxu0
        %v4414 = vpop.f32.mrb[0].mxu0
        %4415 = vdwg.mxu0
        %4416 = vmatprep.subr.bf16.mxu0 %v3053
        %4417 = vmatpush1.bf16.msra.mxu0 %v3052
        %4418 = vmatprep.subr.bf16.mxu0 %v3065
        %4419 = vmatpush1.bf16.msra.mxu0 %v3064
        %4420 = vmatprep.subr.bf16.mxu0 %v3077
        %4421 = vmatpush1.bf16.msra.mxu0 %v3076
        %4422 = vmatprep.subr.bf16.mxu0 %v3089
        %4423 = vmatpush1.bf16.msra.mxu0 %v3088
        %4424 = vmatprep.subr.bf16.mxu0 %v3101
        %4425 = vmatpush1.bf16.msra.mxu0 %v3100
        %4426 = vmatprep.subr.bf16.mxu0 %v3113
        %4427 = vmatpush1.bf16.msra.mxu0 %v3112
        %4428 = vmatprep.subr.bf16.mxu0 %v3125
        %4429 = vmatpush1.bf16.msra.mxu0 %v3124
        %4430 = vmatprep.subr.bf16.mxu0 %v3137
        %4431 = vmatpush1.bf16.msra.mxu0 %v3136
        %4432 = vmatprep.subr.bf16.mxu0 %v3149
        %4433 = vmatpush1.bf16.msra.mxu0 %v3148
        %4434 = vmatprep.subr.bf16.mxu0 %v3161
        %4435 = vmatpush1.bf16.msra.mxu0 %v3160
        %4436 = vmatprep.subr.bf16.mxu0 %v3173
        %4437 = vmatpush1.bf16.msra.mxu0 %v3172
        %4438 = vmatprep.subr.bf16.mxu0 %v3185
        %4439 = vmatpush1.bf16.msra.mxu0 %v3184
        %4440 = vmatprep.subr.bf16.mxu0 %v3197
        %4441 = vmatpush1.bf16.msra.mxu0 %v3196
        %4442 = vmatprep.subr.bf16.mxu0 %v3209
        %4443 = vmatpush1.bf16.msra.mxu0 %v3208
        %4444 = vmatprep.subr.bf16.mxu0 %v3221
        %4445 = vmatpush1.bf16.msra.mxu0 %v3220
        %4446 = vmatprep.subr.bf16.mxu0 %v3233
        %4447 = vmatpush1.bf16.msra.mxu0 %v3232
        %4448 = vmatprep.mubr.bf16.mxu0 %v483
        %4449 = vmatmul.mubr.bf16.gmra.mrb[0].mxu0 %v482
        %v4450 = vpop.f32.mrb[0].mxu0
        %v4451 = vadd.f32 %v4410, %v4450
        %v4452 = vpop.f32.mrb[0].mxu0
        %v4453 = vadd.f32 %v4412, %v4452
        %v4454 = vpop.f32.mrb[0].mxu0
        %v4455 = vpop.f32.mrb[0].mxu0
        %4456 = vdwg.mxu0
        %4457 = vmatprep.subr.bf16.mxu0 %v3245
        %4458 = vmatpush1.bf16.msra.mxu0 %v3244
        %4459 = vmatprep.subr.bf16.mxu0 %v3257
        %4460 = vmatpush1.bf16.msra.mxu0 %v3256
        %4461 = vmatprep.subr.bf16.mxu0 %v3269
        %4462 = vmatpush1.bf16.msra.mxu0 %v3268
        %4463 = vmatprep.subr.bf16.mxu0 %v3281
        %4464 = vmatpush1.bf16.msra.mxu0 %v3280
        %4465 = vmatprep.subr.bf16.mxu0 %v3293
        %4466 = vmatpush1.bf16.msra.mxu0 %v3292
        %4467 = vmatprep.subr.bf16.mxu0 %v3305
        %4468 = vmatpush1.bf16.msra.mxu0 %v3304
        %4469 = vmatprep.subr.bf16.mxu0 %v3317
        %4470 = vmatpush1.bf16.msra.mxu0 %v3316
        %4471 = vmatprep.subr.bf16.mxu0 %v3329
        %4472 = vmatpush1.bf16.msra.mxu0 %v3328
        %4473 = vmatprep.subr.bf16.mxu0 %v3341
        %4474 = vmatpush1.bf16.msra.mxu0 %v3340
        %4475 = vmatprep.subr.bf16.mxu0 %v3353
        %4476 = vmatpush1.bf16.msra.mxu0 %v3352
        %4477 = vmatprep.subr.bf16.mxu0 %v3365
        %4478 = vmatpush1.bf16.msra.mxu0 %v3364
        %4479 = vmatprep.subr.bf16.mxu0 %v3377
        %4480 = vmatpush1.bf16.msra.mxu0 %v3376
        %4481 = vmatprep.subr.bf16.mxu0 %v3389
        %4482 = vmatpush1.bf16.msra.mxu0 %v3388
        %4483 = vmatprep.subr.bf16.mxu0 %v3401
        %4484 = vmatpush1.bf16.msra.mxu0 %v3400
        %4485 = vmatprep.subr.bf16.mxu0 %v3413
        %4486 = vmatpush1.bf16.msra.mxu0 %v3412
        %4487 = vmatprep.subr.bf16.mxu0 %v3425
        %4488 = vmatpush1.bf16.msra.mxu0 %v3424
        %4489 = vmatprep.mubr.bf16.mxu0 %v485
        %4490 = vmatmul.mubr.bf16.gmra.mrb[0].mxu0 %v484
        %v4491 = vpop.f32.mrb[0].mxu0
        %v4492 = vadd.f32 %v4451, %v4491
        %v4493 = vpop.f32.mrb[0].mxu0
        %v4494 = vadd.f32 %v4453, %v4493
        %v4495 = vpop.f32.mrb[0].mxu0
        %v4496 = vpop.f32.mrb[0].mxu0
        %4497 = vdwg.mxu0
        %4498 = vmatprep.subr.bf16.mxu0 %v2863
        %4499 = vmatpush1.bf16.msra.mxu0 %v2862
        %4500 = vmatprep.subr.bf16.mxu0 %v2875
        %4501 = vmatpush1.bf16.msra.mxu0 %v2874
        %4502 = vmatprep.subr.bf16.mxu0 %v2887
        %4503 = vmatpush1.bf16.msra.mxu0 %v2886
        %4504 = vmatprep.subr.bf16.mxu0 %v2899
        %4505 = vmatpush1.bf16.msra.mxu0 %v2898
        %4506 = vmatprep.subr.bf16.mxu0 %v2911
        %4507 = vmatpush1.bf16.msra.mxu0 %v2910
        %4508 = vmatprep.subr.bf16.mxu0 %v2923
        %4509 = vmatpush1.bf16.msra.mxu0 %v2922
        %4510 = vmatprep.subr.bf16.mxu0 %v2935
        %4511 = vmatpush1.bf16.msra.mxu0 %v2934
        %4512 = vmatprep.subr.bf16.mxu0 %v2947
        %4513 = vmatpush1.bf16.msra.mxu0 %v2946
        %4514 = vmatprep.subr.bf16.mxu0 %v2959
        %4515 = vmatpush1.bf16.msra.mxu0 %v2958
        %4516 = vmatprep.subr.bf16.mxu0 %v2971
        %4517 = vmatpush1.bf16.msra.mxu0 %v2970
        %4518 = vmatprep.subr.bf16.mxu0 %v2983
        %4519 = vmatpush1.bf16.msra.mxu0 %v2982
        %4520 = vmatprep.subr.bf16.mxu0 %v2995
        %4521 = vmatpush1.bf16.msra.mxu0 %v2994
        %4522 = vmatprep.subr.bf16.mxu0 %v3007
        %4523 = vmatpush1.bf16.msra.mxu0 %v3006
        %4524 = vmatprep.subr.bf16.mxu0 %v3019
        %4525 = vmatpush1.bf16.msra.mxu0 %v3018
        %4526 = vmatprep.subr.bf16.mxu0 %v3031
        %4527 = vmatpush1.bf16.msra.mxu0 %v3030
        %4528 = vmatprep.subr.bf16.mxu0 %v3043
        %4529 = vmatpush1.bf16.msra.mxu0 %v3042
        %4530 = vmatprep.mubr.bf16.mxu0 %v481
        %4531 = vmatmul.mubr.bf16.gmra.mrb[0].mxu0 %v480
        %v4532 = vpop.f32.mrb[0].mxu0
        %v4533 = vadd.f32 %v1101, %v4532
        %v4534 = vpop.f32.mrb[0].mxu0
        %v4535 = vadd.f32 %v1105, %v4534
        %v4536 = vpop.f32.mrb[0].mxu0
        %v4537 = vpop.f32.mrb[0].mxu0
        %4538 = vdwg.mxu0
        %4539 = vmatprep.subr.bf16.mxu0 %v3055
        %4540 = vmatpush1.bf16.msra.mxu0 %v3054
        %4541 = vmatprep.subr.bf16.mxu0 %v3067
        %4542 = vmatpush1.bf16.msra.mxu0 %v3066
        %4543 = vmatprep.subr.bf16.mxu0 %v3079
        %4544 = vmatpush1.bf16.msra.mxu0 %v3078
        %4545 = vmatprep.subr.bf16.mxu0 %v3091
        %4546 = vmatpush1.bf16.msra.mxu0 %v3090
        %4547 = vmatprep.subr.bf16.mxu0 %v3103
        %4548 = vmatpush1.bf16.msra.mxu0 %v3102
        %4549 = vmatprep.subr.bf16.mxu0 %v3115
        %4550 = vmatpush1.bf16.msra.mxu0 %v3114
        %4551 = vmatprep.subr.bf16.mxu0 %v3127
        %4552 = vmatpush1.bf16.msra.mxu0 %v3126
        %4553 = vmatprep.subr.bf16.mxu0 %v3139
        %4554 = vmatpush1.bf16.msra.mxu0 %v3138
        %4555 = vmatprep.subr.bf16.mxu0 %v3151
        %4556 = vmatpush1.bf16.msra.mxu0 %v3150
        %4557 = vmatprep.subr.bf16.mxu0 %v3163
        %4558 = vmatpush1.bf16.msra.mxu0 %v3162
        %4559 = vmatprep.subr.bf16.mxu0 %v3175
        %4560 = vmatpush1.bf16.msra.mxu0 %v3174
        %4561 = vmatprep.subr.bf16.mxu0 %v3187
        %4562 = vmatpush1.bf16.msra.mxu0 %v3186
        %4563 = vmatprep.subr.bf16.mxu0 %v3199
        %4564 = vmatpush1.bf16.msra.mxu0 %v3198
        %4565 = vmatprep.subr.bf16.mxu0 %v3211
        %4566 = vmatpush1.bf16.msra.mxu0 %v3210
        %4567 = vmatprep.subr.bf16.mxu0 %v3223
        %4568 = vmatpush1.bf16.msra.mxu0 %v3222
        %4569 = vmatprep.subr.bf16.mxu0 %v3235
        %4570 = vmatpush1.bf16.msra.mxu0 %v3234
        %4571 = vmatprep.mubr.bf16.mxu0 %v483
        %4572 = vmatmul.mubr.bf16.gmra.mrb[0].mxu0 %v482
        %v4573 = vpop.f32.mrb[0].mxu0
        %v4574 = vadd.f32 %v4533, %v4573
        %v4575 = vpop.f32.mrb[0].mxu0
        %v4576 = vadd.f32 %v4535, %v4575
        %v4577 = vpop.f32.mrb[0].mxu0
        %v4578 = vpop.f32.mrb[0].mxu0
        %4579 = vdwg.mxu0
        %4580 = vmatprep.subr.bf16.mxu0 %v3247
        %4581 = vmatpush1.bf16.msra.mxu0 %v3246
        %4582 = vmatprep.subr.bf16.mxu0 %v3259
        %4583 = vmatpush1.bf16.msra.mxu0 %v3258
        %4584 = vmatprep.subr.bf16.mxu0 %v3271
        %4585 = vmatpush1.bf16.msra.mxu0 %v3270
        %4586 = vmatprep.subr.bf16.mxu0 %v3283
        %4587 = vmatpush1.bf16.msra.mxu0 %v3282
        %4588 = vmatprep.subr.bf16.mxu0 %v3295
        %4589 = vmatpush1.bf16.msra.mxu0 %v3294
        %4590 = vmatprep.subr.bf16.mxu0 %v3307
        %4591 = vmatpush1.bf16.msra.mxu0 %v3306
        %4592 = vmatprep.subr.bf16.mxu0 %v3319
        %4593 = vmatpush1.bf16.msra.mxu0 %v3318
        %4594 = vmatprep.subr.bf16.mxu0 %v3331
        %4595 = vmatpush1.bf16.msra.mxu0 %v3330
        %4596 = vmatprep.subr.bf16.mxu0 %v3343
        %4597 = vmatpush1.bf16.msra.mxu0 %v3342
        %4598 = vmatprep.subr.bf16.mxu0 %v3355
        %4599 = vmatpush1.bf16.msra.mxu0 %v3354
        %4600 = vmatprep.subr.bf16.mxu0 %v3367
        %4601 = vmatpush1.bf16.msra.mxu0 %v3366
        %4602 = vmatprep.subr.bf16.mxu0 %v3379
        %4603 = vmatpush1.bf16.msra.mxu0 %v3378
        %4604 = vmatprep.subr.bf16.mxu0 %v3391
        %4605 = vmatpush1.bf16.msra.mxu0 %v3390
        %4606 = vmatprep.subr.bf16.mxu0 %v3403
        %4607 = vmatpush1.bf16.msra.mxu0 %v3402
        %4608 = vmatprep.subr.bf16.mxu0 %v3415
        %4609 = vmatpush1.bf16.msra.mxu0 %v3414
        %4610 = vmatprep.subr.bf16.mxu0 %v3427
        %4611 = vmatpush1.bf16.msra.mxu0 %v3426
        %4612 = vmatprep.mubr.bf16.mxu0 %v485
        %4613 = vmatmul.mubr.bf16.gmra.mrb[0].mxu0 %v484
        %v4614 = vpop.f32.mrb[0].mxu0
        %v4615 = vadd.f32 %v4574, %v4614
        %v4616 = vpop.f32.mrb[0].mxu0
        %v4617 = vadd.f32 %v4576, %v4616
        %v4618 = vpop.f32.mrb[0].mxu0
        %v4619 = vpop.f32.mrb[0].mxu0
        %4620 = vdwg.mxu0
        %4621 = vmatprep.subr.bf16.mxu0 %v2865
        %4622 = vmatpush1.bf16.msra.mxu0 %v2864
        %4623 = vmatprep.subr.bf16.mxu0 %v2877
        %4624 = vmatpush1.bf16.msra.mxu0 %v2876
        %4625 = vmatprep.subr.bf16.mxu0 %v2889
        %4626 = vmatpush1.bf16.msra.mxu0 %v2888
        %4627 = vmatprep.subr.bf16.mxu0 %v2901
        %4628 = vmatpush1.bf16.msra.mxu0 %v2900
        %4629 = vmatprep.subr.bf16.mxu0 %v2913
        %4630 = vmatpush1.bf16.msra.mxu0 %v2912
        %4631 = vmatprep.subr.bf16.mxu0 %v2925
        %4632 = vmatpush1.bf16.msra.mxu0 %v2924
        %4633 = vmatprep.subr.bf16.mxu0 %v2937
        %4634 = vmatpush1.bf16.msra.mxu0 %v2936
        %4635 = vmatprep.subr.bf16.mxu0 %v2949
        %4636 = vmatpush1.bf16.msra.mxu0 %v2948
        %4637 = vmatprep.subr.bf16.mxu0 %v2961
        %4638 = vmatpush1.bf16.msra.mxu0 %v2960
        %4639 = vmatprep.subr.bf16.mxu0 %v2973
        %4640 = vmatpush1.bf16.msra.mxu0 %v2972
        %4641 = vmatprep.subr.bf16.mxu0 %v2985
        %4642 = vmatpush1.bf16.msra.mxu0 %v2984
        %4643 = vmatprep.subr.bf16.mxu0 %v2997
        %4644 = vmatpush1.bf16.msra.mxu0 %v2996
        %4645 = vmatprep.subr.bf16.mxu0 %v3009
        %4646 = vmatpush1.bf16.msra.mxu0 %v3008
        %4647 = vmatprep.subr.bf16.mxu0 %v3021
        %4648 = vmatpush1.bf16.msra.mxu0 %v3020
        %4649 = vmatprep.subr.bf16.mxu0 %v3033
        %4650 = vmatpush1.bf16.msra.mxu0 %v3032
        %4651 = vmatprep.subr.bf16.mxu0 %v3045
        %4652 = vmatpush1.bf16.msra.mxu0 %v3044
        %4653 = vmatprep.mubr.bf16.mxu0 %v481
        %4654 = vmatmul.mubr.bf16.gmra.mrb[0].mxu0 %v480
        %v4655 = vpop.f32.mrb[0].mxu0
        %v4656 = vadd.f32 %v1109, %v4655
        %v4657 = vpop.f32.mrb[0].mxu0
        %v4658 = vadd.f32 %v1113, %v4657
        %v4659 = vpop.f32.mrb[0].mxu0
        %v4660 = vpop.f32.mrb[0].mxu0
        %4661 = vdwg.mxu0
        %4662 = vmatprep.subr.bf16.mxu0 %v3057
        %4663 = vmatpush1.bf16.msra.mxu0 %v3056
        %4664 = vmatprep.subr.bf16.mxu0 %v3069
        %4665 = vmatpush1.bf16.msra.mxu0 %v3068
        %4666 = vmatprep.subr.bf16.mxu0 %v3081
        %4667 = vmatpush1.bf16.msra.mxu0 %v3080
        %4668 = vmatprep.subr.bf16.mxu0 %v3093
        %4669 = vmatpush1.bf16.msra.mxu0 %v3092
        %4670 = vmatprep.subr.bf16.mxu0 %v3105
        %4671 = vmatpush1.bf16.msra.mxu0 %v3104
        %4672 = vmatprep.subr.bf16.mxu0 %v3117
        %4673 = vmatpush1.bf16.msra.mxu0 %v3116
        %4674 = vmatprep.subr.bf16.mxu0 %v3129
        %4675 = vmatpush1.bf16.msra.mxu0 %v3128
        %4676 = vmatprep.subr.bf16.mxu0 %v3141
        %4677 = vmatpush1.bf16.msra.mxu0 %v3140
        %4678 = vmatprep.subr.bf16.mxu0 %v3153
        %4679 = vmatpush1.bf16.msra.mxu0 %v3152
        %4680 = vmatprep.subr.bf16.mxu0 %v3165
        %4681 = vmatpush1.bf16.msra.mxu0 %v3164
        %4682 = vmatprep.subr.bf16.mxu0 %v3177
        %4683 = vmatpush1.bf16.msra.mxu0 %v3176
        %4684 = vmatprep.subr.bf16.mxu0 %v3189
        %4685 = vmatpush1.bf16.msra.mxu0 %v3188
        %4686 = vmatprep.subr.bf16.mxu0 %v3201
        %4687 = vmatpush1.bf16.msra.mxu0 %v3200
        %4688 = vmatprep.subr.bf16.mxu0 %v3213
        %4689 = vmatpush1.bf16.msra.mxu0 %v3212
        %4690 = vmatprep.subr.bf16.mxu0 %v3225
        %4691 = vmatpush1.bf16.msra.mxu0 %v3224
        %4692 = vmatprep.subr.bf16.mxu0 %v3237
        %4693 = vmatpush1.bf16.msra.mxu0 %v3236
        %4694 = vmatprep.mubr.bf16.mxu0 %v483
        %4695 = vmatmul.mubr.bf16.gmra.mrb[0].mxu0 %v482
        %v4696 = vpop.f32.mrb[0].mxu0
        %v4697 = vadd.f32 %v4656, %v4696
        %v4698 = vpop.f32.mrb[0].mxu0
        %v4699 = vadd.f32 %v4658, %v4698
        %v4700 = vpop.f32.mrb[0].mxu0
        %v4701 = vpop.f32.mrb[0].mxu0
        %4702 = vdwg.mxu0
        %4703 = vmatprep.subr.bf16.mxu0 %v3249
        %4704 = vmatpush1.bf16.msra.mxu0 %v3248
        %4705 = vmatprep.subr.bf16.mxu0 %v3261
        %4706 = vmatpush1.bf16.msra.mxu0 %v3260
        %4707 = vmatprep.subr.bf16.mxu0 %v3273
        %4708 = vmatpush1.bf16.msra.mxu0 %v3272
        %4709 = vmatprep.subr.bf16.mxu0 %v3285
        %4710 = vmatpush1.bf16.msra.mxu0 %v3284
        %4711 = vmatprep.subr.bf16.mxu0 %v3297
        %4712 = vmatpush1.bf16.msra.mxu0 %v3296
        %4713 = vmatprep.subr.bf16.mxu0 %v3309
        %4714 = vmatpush1.bf16.msra.mxu0 %v3308
        %4715 = vmatprep.subr.bf16.mxu0 %v3321
        %4716 = vmatpush1.bf16.msra.mxu0 %v3320
        %4717 = vmatprep.subr.bf16.mxu0 %v3333
        %4718 = vmatpush1.bf16.msra.mxu0 %v3332
        %4719 = vmatprep.subr.bf16.mxu0 %v3345
        %4720 = vmatpush1.bf16.msra.mxu0 %v3344
        %4721 = vmatprep.subr.bf16.mxu0 %v3357
        %4722 = vmatpush1.bf16.msra.mxu0 %v3356
        %4723 = vmatprep.subr.bf16.mxu0 %v3369
        %4724 = vmatpush1.bf16.msra.mxu0 %v3368
        %4725 = vmatprep.subr.bf16.mxu0 %v3381
        %4726 = vmatpush1.bf16.msra.mxu0 %v3380
        %4727 = vmatprep.subr.bf16.mxu0 %v3393
        %4728 = vmatpush1.bf16.msra.mxu0 %v3392
        %4729 = vmatprep.subr.bf16.mxu0 %v3405
        %4730 = vmatpush1.bf16.msra.mxu0 %v3404
        %4731 = vmatprep.subr.bf16.mxu0 %v3417
        %4732 = vmatpush1.bf16.msra.mxu0 %v3416
        %4733 = vmatprep.subr.bf16.mxu0 %v3429
        %4734 = vmatpush1.bf16.msra.mxu0 %v3428
        %4735 = vmatprep.mubr.bf16.mxu0 %v485
        %4736 = vmatmul.mubr.bf16.gmra.mrb[0].mxu0 %v484
        %v4737 = vpop.f32.mrb[0].mxu0
        %v4738 = vadd.f32 %v4697, %v4737
        %v4739 = vpop.f32.mrb[0].mxu0
        %v4740 = vadd.f32 %v4699, %v4739
        %v4741 = vpop.f32.mrb[0].mxu0
        %v4742 = vpop.f32.mrb[0].mxu0
        %4743 = vdwg.mxu0
        %v4744 = vpack.c.bf16 %v4123, %v4123
        %v4745 = vpack.c.bf16 %v4125, %v4125
        %v4746 = vpack.c.bf16 %v4246, %v4246
        %v4747 = vpack.c.bf16 %v4248, %v4248
        %v4748 = vpack.c.bf16 %v4369, %v4369
        %v4749 = vpack.c.bf16 %v4371, %v4371
        %v4750 = vpack.c.bf16 %v4492, %v4492
        %v4751 = vpack.c.bf16 %v4494, %v4494
        %v4752 = vpack.c.bf16 %v4615, %v4615
        %v4753 = vpack.c.bf16 %v4617, %v4617
        %v4754 = vpack.c.bf16 %v4738, %v4738
        %v4755 = vpack.c.bf16 %v4740, %v4740
        %v4756 = vld [vmem:[%s405] sm:$0x1]
        %v4758 = vlaneseq
        %v4759 = vshrl.u32 %v4758, 7
        %v4760 = vsub.s32 0, %v4759
        %v4761 = vrot.slane %v4756, %v4760
        %vm4763 = vcmask 523264
        %v4765 = vsel %vm4763, %v4744, 0
        %v4768 = vsel %vm4763, %v4748, 0
        %4770 = vmatprep.subr.bf16.mxu0 0
        %4771 = vmatpush1.bf16.xpose.msra.mxu0 %v4768
        %4772 = vmatprep.subr.bf16.mxu0 0
        %4773 = vmatpush1.bf16.xpose.msra.mxu0 0
        %4774 = vmatprep.subr.bf16.mxu0 0
        %4775 = vmatpush1.bf16.xpose.msra.mxu0 0
        %4776 = vmatprep.subr.bf16.mxu0 0
        %4777 = vmatpush1.bf16.xpose.msra.mxu0 0
        %4778 = vmatprep.subr.bf16.mxu0 0
        %4779 = vmatpush1.bf16.xpose.msra.mxu0 0
        %4780 = vmatprep.subr.bf16.mxu0 0
        %4781 = vmatpush1.bf16.xpose.msra.mxu0 0
        %4782 = vmatprep.subr.bf16.mxu0 0
        %4783 = vmatpush1.bf16.xpose.msra.mxu0 0
        %4784 = vmatprep.subr.bf16.mxu0 0
        %4785 = vmatpush1.bf16.xpose.msra.mxu0 0
        %4786 = vmatprep.subr.bf16.mxu0 0
        %4787 = vmatpush1.bf16.xpose.msra.mxu0 0
        %4788 = vmatprep.subr.bf16.mxu0 0
        %4789 = vmatpush1.bf16.xpose.msra.mxu0 0
        %4790 = vmatprep.subr.bf16.mxu0 0
        %4791 = vmatpush1.bf16.xpose.msra.mxu0 0
        %4792 = vmatprep.subr.bf16.mxu0 0
        %4793 = vmatpush1.bf16.xpose.msra.mxu0 0
        %4794 = vmatprep.subr.bf16.mxu0 0
        %4795 = vmatpush1.bf16.xpose.msra.mxu0 0
        %4796 = vmatprep.subr.bf16.mxu0 0
        %4797 = vmatpush1.bf16.xpose.msra.mxu0 0
        %4798 = vmatprep.subr.bf16.mxu0 0
        %4799 = vmatpush1.bf16.xpose.msra.mxu0 0
        %4800 = vmatprep.subr.bf16.mxu0 0
        %4801 = vmatpush1.bf16.xpose.msra.mxu0 0
        %4802 = vmatprep.mubr.bf16.mxu0 0
        %4803 = vmatmul.mubr.bf16.gmra.mrb[0].mxu0 %v4765
        %v4804 = vpop.f32.mrb[0].mxu0
        %v4805 = vadd.f32 %v4761, %v4804
        %v4806 = vpop.f32.mrb[0].mxu0
        %v4807 = vpop.f32.mrb[0].mxu0
        %v4808 = vpop.f32.mrb[0].mxu0
        %4809 = vdwg.mxu0
        %vm4810 = vcmask 64512
        %v4811 = vsel %vm4810, %v4805, -inf
        %4812 = vmax.xlane.f32.xlu0 %v4811
        %v4813 = vpop.xlane.xlu0 %4812
        %v4814 = vsub.f32 %v4805, %v4813
        %v4815 = vmul.f32 %v4814, 1.442695
        %v4816 = vpow.pop %v4815
        %v4817 = vsel %vm4810, %v4816, 0.0
        %4818 = vadd.xlane.f32.xlu0 %v4817
        %v4819 = vpop.xlane.xlu0 %4818
        %v4820 = vrcp.pop %v4819
        %v4821 = vmul.f32 %v4816, %v4820
        %v4822 = vpack.c.bf16 %v4821, %v4821
        %v4824 = vsel %vm4810, %v4822, 0
        %vm4826 = vcmask 1043456
        %v4828 = vsel %vm4826, %v4752, 0
        %4830 = vmatprep.subr.bf16.mxu0 0
        %4831 = vmatpush1.bf16.msra.mxu0 %v4828
        %4832 = vmatprep.subr.bf16.mxu0 0
        %4833 = vmatpush1.bf16.msra.mxu0 0
        %4834 = vmatprep.subr.bf16.mxu0 0
        %4835 = vmatpush1.bf16.msra.mxu0 0
        %4836 = vmatprep.subr.bf16.mxu0 0
        %4837 = vmatpush1.bf16.msra.mxu0 0
        %4838 = vmatprep.subr.bf16.mxu0 0
        %4839 = vmatpush1.bf16.msra.mxu0 0
        %4840 = vmatprep.subr.bf16.mxu0 0
        %4841 = vmatpush1.bf16.msra.mxu0 0
        %4842 = vmatprep.subr.bf16.mxu0 0
        %4843 = vmatpush1.bf16.msra.mxu0 0
        %4844 = vmatprep.subr.bf16.mxu0 0
        %4845 = vmatpush1.bf16.msra.mxu0 0
        %4846 = vmatprep.subr.bf16.mxu0 0
        %4847 = vmatpush1.bf16.msra.mxu0 0
        %4848 = vmatprep.subr.bf16.mxu0 0
        %4849 = vmatpush1.bf16.msra.mxu0 0
        %4850 = vmatprep.subr.bf16.mxu0 0
        %4851 = vmatpush1.bf16.msra.mxu0 0
        %4852 = vmatprep.subr.bf16.mxu0 0
        %4853 = vmatpush1.bf16.msra.mxu0 0
        %4854 = vmatprep.subr.bf16.mxu0 0
        %4855 = vmatpush1.bf16.msra.mxu0 0
        %4856 = vmatprep.subr.bf16.mxu0 0
        %4857 = vmatpush1.bf16.msra.mxu0 0
        %4858 = vmatprep.subr.bf16.mxu0 0
        %4859 = vmatpush1.bf16.msra.mxu0 0
        %4860 = vmatprep.subr.bf16.mxu0 0
        %4861 = vmatpush1.bf16.msra.mxu0 0
        %4862 = vmatprep.mubr.bf16.mxu0 0
        %4863 = vmatmul.mubr.bf16.gmra.mrb[0].mxu0 %v4824
        %v4864 = vpop.f32.mrb[0].mxu0
        %v4865 = vadd.f32 0.0, %v4864
        %v4866 = vpop.f32.mrb[0].mxu0
        %v4867 = vpop.f32.mrb[0].mxu0
        %v4868 = vpop.f32.mrb[0].mxu0
        %4869 = vdwg.mxu0
        %v4870 = vpack.c.bf16 %v4865, %v4865
        %vm4871 = vcmask 60416
        %4872 = vst.msk [vmem:[%s472] sm:$0xf] %vm4871, %v4822
        %4874 = vrot.lane.b32.xlu0 %v4744, 64
        %v4875 = vpop.permute.xlu0 %4874
        %4877 = vrot.lane.b32.xlu0 %v4748, 64
        %v4878 = vpop.permute.xlu0 %4877
        %v4880 = vsel %vm4763, %v4875, 0
        %v4883 = vsel %vm4763, %v4878, 0
        %4885 = vmatprep.subr.bf16.mxu0 0
        %4886 = vmatpush1.bf16.xpose.msra.mxu0 %v4883
        %4887 = vmatprep.subr.bf16.mxu0 0
        %4888 = vmatpush1.bf16.xpose.msra.mxu0 0
        %4889 = vmatprep.subr.bf16.mxu0 0
        %4890 = vmatpush1.bf16.xpose.msra.mxu0 0
        %4891 = vmatprep.subr.bf16.mxu0 0
        %4892 = vmatpush1.bf16.xpose.msra.mxu0 0
        %4893 = vmatprep.subr.bf16.mxu0 0
        %4894 = vmatpush1.bf16.xpose.msra.mxu0 0
        %4895 = vmatprep.subr.bf16.mxu0 0
        %4896 = vmatpush1.bf16.xpose.msra.mxu0 0
        %4897 = vmatprep.subr.bf16.mxu0 0
        %4898 = vmatpush1.bf16.xpose.msra.mxu0 0
        %4899 = vmatprep.subr.bf16.mxu0 0
        %4900 = vmatpush1.bf16.xpose.msra.mxu0 0
        %4901 = vmatprep.subr.bf16.mxu0 0
        %4902 = vmatpush1.bf16.xpose.msra.mxu0 0
        %4903 = vmatprep.subr.bf16.mxu0 0
        %4904 = vmatpush1.bf16.xpose.msra.mxu0 0
        %4905 = vmatprep.subr.bf16.mxu0 0
        %4906 = vmatpush1.bf16.xpose.msra.mxu0 0
        %4907 = vmatprep.subr.bf16.mxu0 0
        %4908 = vmatpush1.bf16.xpose.msra.mxu0 0
        %4909 = vmatprep.subr.bf16.mxu0 0
        %4910 = vmatpush1.bf16.xpose.msra.mxu0 0
        %4911 = vmatprep.subr.bf16.mxu0 0
        %4912 = vmatpush1.bf16.xpose.msra.mxu0 0
        %4913 = vmatprep.subr.bf16.mxu0 0
        %4914 = vmatpush1.bf16.xpose.msra.mxu0 0
        %4915 = vmatprep.subr.bf16.mxu0 0
        %4916 = vmatpush1.bf16.xpose.msra.mxu0 0
        %4917 = vmatprep.mubr.bf16.mxu0 0
        %4918 = vmatmul.mubr.bf16.gmra.mrb[0].mxu0 %v4880
        %v4919 = vpop.f32.mrb[0].mxu0
        %v4920 = vadd.f32 %v4761, %v4919
        %v4921 = vpop.f32.mrb[0].mxu0
        %v4922 = vpop.f32.mrb[0].mxu0
        %v4923 = vpop.f32.mrb[0].mxu0
        %4924 = vdwg.mxu0
        %v4925 = vsel %vm4810, %v4920, -inf
        %4926 = vmax.xlane.f32.xlu0 %v4925
        %v4927 = vpop.xlane.xlu0 %4926
        %v4928 = vsub.f32 %v4920, %v4927
        %v4929 = vmul.f32 %v4928, 1.442695
        %v4930 = vpow.pop %v4929
        %v4931 = vsel %vm4810, %v4930, 0.0
        %4932 = vadd.xlane.f32.xlu0 %v4931
        %v4933 = vpop.xlane.xlu0 %4932
        %v4934 = vrcp.pop %v4933
        %v4935 = vmul.f32 %v4930, %v4934
        %v4936 = vpack.c.bf16 %v4935, %v4935
        %4938 = vrot.lane.b32.xlu0 %v4752, 64
        %v4939 = vpop.permute.xlu0 %4938
        %v4941 = vsel %vm4810, %v4936, 0
        %v4944 = vsel %vm4826, %v4939, 0
        %4946 = vmatprep.subr.bf16.mxu0 0
        %4947 = vmatpush1.bf16.msra.mxu0 %v4944
        %4948 = vmatprep.subr.bf16.mxu0 0
        %4949 = vmatpush1.bf16.msra.mxu0 0
        %4950 = vmatprep.subr.bf16.mxu0 0
        %4951 = vmatpush1.bf16.msra.mxu0 0
        %4952 = vmatprep.subr.bf16.mxu0 0
        %4953 = vmatpush1.bf16.msra.mxu0 0
        %4954 = vmatprep.subr.bf16.mxu0 0
        %4955 = vmatpush1.bf16.msra.mxu0 0
        %4956 = vmatprep.subr.bf16.mxu0 0
        %4957 = vmatpush1.bf16.msra.mxu0 0
        %4958 = vmatprep.subr.bf16.mxu0 0
        %4959 = vmatpush1.bf16.msra.mxu0 0
        %4960 = vmatprep.subr.bf16.mxu0 0
        %4961 = vmatpush1.bf16.msra.mxu0 0
        %4962 = vmatprep.subr.bf16.mxu0 0
        %4963 = vmatpush1.bf16.msra.mxu0 0
        %4964 = vmatprep.subr.bf16.mxu0 0
        %4965 = vmatpush1.bf16.msra.mxu0 0
        %4966 = vmatprep.subr.bf16.mxu0 0
        %4967 = vmatpush1.bf16.msra.mxu0 0
        %4968 = vmatprep.subr.bf16.mxu0 0
        %4969 = vmatpush1.bf16.msra.mxu0 0
        %4970 = vmatprep.subr.bf16.mxu0 0
        %4971 = vmatpush1.bf16.msra.mxu0 0
        %4972 = vmatprep.subr.bf16.mxu0 0
        %4973 = vmatpush1.bf16.msra.mxu0 0
        %4974 = vmatprep.subr.bf16.mxu0 0
        %4975 = vmatpush1.bf16.msra.mxu0 0
        %4976 = vmatprep.subr.bf16.mxu0 0
        %4977 = vmatpush1.bf16.msra.mxu0 0
        %4978 = vmatprep.mubr.bf16.mxu0 0
        %4979 = vmatmul.mubr.bf16.gmra.mrb[0].mxu0 %v4941
        %v4980 = vpop.f32.mrb[0].mxu0
        %v4981 = vadd.f32 0.0, %v4980
        %v4982 = vpop.f32.mrb[0].mxu0
        %v4983 = vpop.f32.mrb[0].mxu0
        %v4984 = vpop.f32.mrb[0].mxu0
        %4985 = vdwg.mxu0
        %v4986 = vpack.c.bf16 %v4981, %v4981
        %s4987 = scalar_lea.vmem %s472, 4 [#allocation17]
        %4988 = vst.msk [vmem:[%s4987] sm:$0xf] %vm4871, %v4936
        %v4990 = vsel %vm4763, %v4745, 0
        %v4993 = vsel %vm4763, %v4749, 0
        %4995 = vmatprep.subr.bf16.mxu0 0
        %4996 = vmatpush1.bf16.xpose.msra.mxu0 %v4993
        %4997 = vmatprep.subr.bf16.mxu0 0
        %4998 = vmatpush1.bf16.xpose.msra.mxu0 0
        %4999 = vmatprep.subr.bf16.mxu0 0
        %5000 = vmatpush1.bf16.xpose.msra.mxu0 0
        %5001 = vmatprep.subr.bf16.mxu0 0
        %5002 = vmatpush1.bf16.xpose.msra.mxu0 0
        %5003 = vmatprep.subr.bf16.mxu0 0
        %5004 = vmatpush1.bf16.xpose.msra.mxu0 0
        %5005 = vmatprep.subr.bf16.mxu0 0
        %5006 = vmatpush1.bf16.xpose.msra.mxu0 0
        %5007 = vmatprep.subr.bf16.mxu0 0
        %5008 = vmatpush1.bf16.xpose.msra.mxu0 0
        %5009 = vmatprep.subr.bf16.mxu0 0
        %5010 = vmatpush1.bf16.xpose.msra.mxu0 0
        %5011 = vmatprep.subr.bf16.mxu0 0
        %5012 = vmatpush1.bf16.xpose.msra.mxu0 0
        %5013 = vmatprep.subr.bf16.mxu0 0
        %5014 = vmatpush1.bf16.xpose.msra.mxu0 0
        %5015 = vmatprep.subr.bf16.mxu0 0
        %5016 = vmatpush1.bf16.xpose.msra.mxu0 0
        %5017 = vmatprep.subr.bf16.mxu0 0
        %5018 = vmatpush1.bf16.xpose.msra.mxu0 0
        %5019 = vmatprep.subr.bf16.mxu0 0
        %5020 = vmatpush1.bf16.xpose.msra.mxu0 0
        %5021 = vmatprep.subr.bf16.mxu0 0
        %5022 = vmatpush1.bf16.xpose.msra.mxu0 0
        %5023 = vmatprep.subr.bf16.mxu0 0
        %5024 = vmatpush1.bf16.xpose.msra.mxu0 0
        %5025 = vmatprep.subr.bf16.mxu0 0
        %5026 = vmatpush1.bf16.xpose.msra.mxu0 0
        %5027 = vmatprep.mubr.bf16.mxu0 0
        %5028 = vmatmul.mubr.bf16.gmra.mrb[0].mxu0 %v4990
        %v5029 = vpop.f32.mrb[0].mxu0
        %v5030 = vadd.f32 %v4761, %v5029
        %v5031 = vpop.f32.mrb[0].mxu0
        %v5032 = vpop.f32.mrb[0].mxu0
        %v5033 = vpop.f32.mrb[0].mxu0
        %5034 = vdwg.mxu0
        %v5035 = vsel %vm4810, %v5030, -inf
        %5036 = vmax.xlane.f32.xlu0 %v5035
        %v5037 = vpop.xlane.xlu0 %5036
        %v5038 = vsub.f32 %v5030, %v5037
        %v5039 = vmul.f32 %v5038, 1.442695
        %v5040 = vpow.pop %v5039
        %v5041 = vsel %vm4810, %v5040, 0.0
        %5042 = vadd.xlane.f32.xlu0 %v5041
        %v5043 = vpop.xlane.xlu0 %5042
        %v5044 = vrcp.pop %v5043
        %v5045 = vmul.f32 %v5040, %v5044
        %v5046 = vpack.c.bf16 %v5045, %v5045
        %v5048 = vsel %vm4810, %v5046, 0
        %v5051 = vsel %vm4826, %v4753, 0
        %5053 = vmatprep.subr.bf16.mxu0 0
        %5054 = vmatpush1.bf16.msra.mxu0 %v5051
        %5055 = vmatprep.subr.bf16.mxu0 0
        %5056 = vmatpush1.bf16.msra.mxu0 0
        %5057 = vmatprep.subr.bf16.mxu0 0
        %5058 = vmatpush1.bf16.msra.mxu0 0
        %5059 = vmatprep.subr.bf16.mxu0 0
        %5060 = vmatpush1.bf16.msra.mxu0 0
        %5061 = vmatprep.subr.bf16.mxu0 0
        %5062 = vmatpush1.bf16.msra.mxu0 0
        %5063 = vmatprep.subr.bf16.mxu0 0
        %5064 = vmatpush1.bf16.msra.mxu0 0
        %5065 = vmatprep.subr.bf16.mxu0 0
        %5066 = vmatpush1.bf16.msra.mxu0 0
        %5067 = vmatprep.subr.bf16.mxu0 0
        %5068 = vmatpush1.bf16.msra.mxu0 0
        %5069 = vmatprep.subr.bf16.mxu0 0
        %5070 = vmatpush1.bf16.msra.mxu0 0
        %5071 = vmatprep.subr.bf16.mxu0 0
        %5072 = vmatpush1.bf16.msra.mxu0 0
        %5073 = vmatprep.subr.bf16.mxu0 0
        %5074 = vmatpush1.bf16.msra.mxu0 0
        %5075 = vmatprep.subr.bf16.mxu0 0
        %5076 = vmatpush1.bf16.msra.mxu0 0
        %5077 = vmatprep.subr.bf16.mxu0 0
        %5078 = vmatpush1.bf16.msra.mxu0 0
        %5079 = vmatprep.subr.bf16.mxu0 0
        %5080 = vmatpush1.bf16.msra.mxu0 0
        %5081 = vmatprep.subr.bf16.mxu0 0
        %5082 = vmatpush1.bf16.msra.mxu0 0
        %5083 = vmatprep.subr.bf16.mxu0 0
        %5084 = vmatpush1.bf16.msra.mxu0 0
        %5085 = vmatprep.mubr.bf16.mxu0 0
        %5086 = vmatmul.mubr.bf16.gmra.mrb[0].mxu0 %v5048
        %v5087 = vpop.f32.mrb[0].mxu0
        %v5088 = vadd.f32 0.0, %v5087
        %v5089 = vpop.f32.mrb[0].mxu0
        %v5090 = vpop.f32.mrb[0].mxu0
        %v5091 = vpop.f32.mrb[0].mxu0
        %5092 = vdwg.mxu0
        %v5093 = vpack.c.bf16 %v5088, %v5088
        %s5094 = scalar_lea.vmem %s472, 8 [#allocation17]
        %5095 = vst.msk [vmem:[%s5094] sm:$0xf] %vm4871, %v5046
        %5097 = vrot.lane.b32.xlu0 %v4745, 64
        %v5098 = vpop.permute.xlu0 %5097
        %5100 = vrot.lane.b32.xlu0 %v4749, 64
        %v5101 = vpop.permute.xlu0 %5100
        %v5103 = vsel %vm4763, %v5098, 0
        %v5106 = vsel %vm4763, %v5101, 0
        %5108 = vmatprep.subr.bf16.mxu0 0
        %5109 = vmatpush1.bf16.xpose.msra.mxu0 %v5106
        %5110 = vmatprep.subr.bf16.mxu0 0
        %5111 = vmatpush1.bf16.xpose.msra.mxu0 0
        %5112 = vmatprep.subr.bf16.mxu0 0
        %5113 = vmatpush1.bf16.xpose.msra.mxu0 0
        %5114 = vmatprep.subr.bf16.mxu0 0
        %5115 = vmatpush1.bf16.xpose.msra.mxu0 0
        %5116 = vmatprep.subr.bf16.mxu0 0
        %5117 = vmatpush1.bf16.xpose.msra.mxu0 0
        %5118 = vmatprep.subr.bf16.mxu0 0
        %5119 = vmatpush1.bf16.xpose.msra.mxu0 0
        %5120 = vmatprep.subr.bf16.mxu0 0
        %5121 = vmatpush1.bf16.xpose.msra.mxu0 0
        %5122 = vmatprep.subr.bf16.mxu0 0
        %5123 = vmatpush1.bf16.xpose.msra.mxu0 0
        %5124 = vmatprep.subr.bf16.mxu0 0
        %5125 = vmatpush1.bf16.xpose.msra.mxu0 0
        %5126 = vmatprep.subr.bf16.mxu0 0
        %5127 = vmatpush1.bf16.xpose.msra.mxu0 0
        %5128 = vmatprep.subr.bf16.mxu0 0
        %5129 = vmatpush1.bf16.xpose.msra.mxu0 0
        %5130 = vmatprep.subr.bf16.mxu0 0
        %5131 = vmatpush1.bf16.xpose.msra.mxu0 0
        %5132 = vmatprep.subr.bf16.mxu0 0
        %5133 = vmatpush1.bf16.xpose.msra.mxu0 0
        %5134 = vmatprep.subr.bf16.mxu0 0
        %5135 = vmatpush1.bf16.xpose.msra.mxu0 0
        %5136 = vmatprep.subr.bf16.mxu0 0
        %5137 = vmatpush1.bf16.xpose.msra.mxu0 0
        %5138 = vmatprep.subr.bf16.mxu0 0
        %5139 = vmatpush1.bf16.xpose.msra.mxu0 0
        %5140 = vmatprep.mubr.bf16.mxu0 0
        %5141 = vmatmul.mubr.bf16.gmra.mrb[0].mxu0 %v5103
        %v5142 = vpop.f32.mrb[0].mxu0
        %v5143 = vadd.f32 %v4761, %v5142
        %v5144 = vpop.f32.mrb[0].mxu0
        %v5145 = vpop.f32.mrb[0].mxu0
        %v5146 = vpop.f32.mrb[0].mxu0
        %5147 = vdwg.mxu0
        %v5148 = vsel %vm4810, %v5143, -inf
        %5149 = vmax.xlane.f32.xlu0 %v5148
        %v5150 = vpop.xlane.xlu0 %5149
        %v5151 = vsub.f32 %v5143, %v5150
        %v5152 = vmul.f32 %v5151, 1.442695
        %v5153 = vpow.pop %v5152
        %v5154 = vsel %vm4810, %v5153, 0.0
        %5155 = vadd.xlane.f32.xlu0 %v5154
        %v5156 = vpop.xlane.xlu0 %5155
        %v5157 = vrcp.pop %v5156
        %v5158 = vmul.f32 %v5153, %v5157
        %v5159 = vpack.c.bf16 %v5158, %v5158
        %5161 = vrot.lane.b32.xlu0 %v4753, 64
        %v5162 = vpop.permute.xlu0 %5161
        %v5164 = vsel %vm4810, %v5159, 0
        %v5167 = vsel %vm4826, %v5162, 0
        %5169 = vmatprep.subr.bf16.mxu0 0
        %5170 = vmatpush1.bf16.msra.mxu0 %v5167
        %5171 = vmatprep.subr.bf16.mxu0 0
        %5172 = vmatpush1.bf16.msra.mxu0 0
        %5173 = vmatprep.subr.bf16.mxu0 0
        %5174 = vmatpush1.bf16.msra.mxu0 0
        %5175 = vmatprep.subr.bf16.mxu0 0
        %5176 = vmatpush1.bf16.msra.mxu0 0
        %5177 = vmatprep.subr.bf16.mxu0 0
        %5178 = vmatpush1.bf16.msra.mxu0 0
        %5179 = vmatprep.subr.bf16.mxu0 0
        %5180 = vmatpush1.bf16.msra.mxu0 0
        %5181 = vmatprep.subr.bf16.mxu0 0
        %5182 = vmatpush1.bf16.msra.mxu0 0
        %5183 = vmatprep.subr.bf16.mxu0 0
        %5184 = vmatpush1.bf16.msra.mxu0 0
        %5185 = vmatprep.subr.bf16.mxu0 0
        %5186 = vmatpush1.bf16.msra.mxu0 0
        %5187 = vmatprep.subr.bf16.mxu0 0
        %5188 = vmatpush1.bf16.msra.mxu0 0
        %5189 = vmatprep.subr.bf16.mxu0 0
        %5190 = vmatpush1.bf16.msra.mxu0 0
        %5191 = vmatprep.subr.bf16.mxu0 0
        %5192 = vmatpush1.bf16.msra.mxu0 0
        %5193 = vmatprep.subr.bf16.mxu0 0
        %5194 = vmatpush1.bf16.msra.mxu0 0
        %5195 = vmatprep.subr.bf16.mxu0 0
        %5196 = vmatpush1.bf16.msra.mxu0 0
        %5197 = vmatprep.subr.bf16.mxu0 0
        %5198 = vmatpush1.bf16.msra.mxu0 0
        %5199 = vmatprep.subr.bf16.mxu0 0
        %5200 = vmatpush1.bf16.msra.mxu0 0
        %5201 = vmatprep.mubr.bf16.mxu0 0
        %5202 = vmatmul.mubr.bf16.gmra.mrb[0].mxu0 %v5164
        %v5203 = vpop.f32.mrb[0].mxu0
        %v5204 = vadd.f32 0.0, %v5203
        %v5205 = vpop.f32.mrb[0].mxu0
        %v5206 = vpop.f32.mrb[0].mxu0
        %v5207 = vpop.f32.mrb[0].mxu0
        %5208 = vdwg.mxu0
        %v5209 = vpack.c.bf16 %v5204, %v5204
        %s5210 = scalar_lea.vmem %s472, 12 [#allocation17]
        %5211 = vst.msk [vmem:[%s5210] sm:$0xf] %vm4871, %v5159
        %v5213 = vsel %vm4763, %v4746, 0
        %v5216 = vsel %vm4763, %v4750, 0
        %5218 = vmatprep.subr.bf16.mxu0 0
        %5219 = vmatpush1.bf16.xpose.msra.mxu0 %v5216
        %5220 = vmatprep.subr.bf16.mxu0 0
        %5221 = vmatpush1.bf16.xpose.msra.mxu0 0
        %5222 = vmatprep.subr.bf16.mxu0 0
        %5223 = vmatpush1.bf16.xpose.msra.mxu0 0
        %5224 = vmatprep.subr.bf16.mxu0 0
        %5225 = vmatpush1.bf16.xpose.msra.mxu0 0
        %5226 = vmatprep.subr.bf16.mxu0 0
        %5227 = vmatpush1.bf16.xpose.msra.mxu0 0
        %5228 = vmatprep.subr.bf16.mxu0 0
        %5229 = vmatpush1.bf16.xpose.msra.mxu0 0
        %5230 = vmatprep.subr.bf16.mxu0 0
        %5231 = vmatpush1.bf16.xpose.msra.mxu0 0
        %5232 = vmatprep.subr.bf16.mxu0 0
        %5233 = vmatpush1.bf16.xpose.msra.mxu0 0
        %5234 = vmatprep.subr.bf16.mxu0 0
        %5235 = vmatpush1.bf16.xpose.msra.mxu0 0
        %5236 = vmatprep.subr.bf16.mxu0 0
        %5237 = vmatpush1.bf16.xpose.msra.mxu0 0
        %5238 = vmatprep.subr.bf16.mxu0 0
        %5239 = vmatpush1.bf16.xpose.msra.mxu0 0
        %5240 = vmatprep.subr.bf16.mxu0 0
        %5241 = vmatpush1.bf16.xpose.msra.mxu0 0
        %5242 = vmatprep.subr.bf16.mxu0 0
        %5243 = vmatpush1.bf16.xpose.msra.mxu0 0
        %5244 = vmatprep.subr.bf16.mxu0 0
        %5245 = vmatpush1.bf16.xpose.msra.mxu0 0
        %5246 = vmatprep.subr.bf16.mxu0 0
        %5247 = vmatpush1.bf16.xpose.msra.mxu0 0
        %5248 = vmatprep.subr.bf16.mxu0 0
        %5249 = vmatpush1.bf16.xpose.msra.mxu0 0
        %5250 = vmatprep.mubr.bf16.mxu0 0
        %5251 = vmatmul.mubr.bf16.gmra.mrb[0].mxu0 %v5213
        %v5252 = vpop.f32.mrb[0].mxu0
        %v5253 = vadd.f32 %v4761, %v5252
        %v5254 = vpop.f32.mrb[0].mxu0
        %v5255 = vpop.f32.mrb[0].mxu0
        %v5256 = vpop.f32.mrb[0].mxu0
        %5257 = vdwg.mxu0
        %v5258 = vsel %vm4810, %v5253, -inf
        %5259 = vmax.xlane.f32.xlu0 %v5258
        %v5260 = vpop.xlane.xlu0 %5259
        %v5261 = vsub.f32 %v5253, %v5260
        %v5262 = vmul.f32 %v5261, 1.442695
        %v5263 = vpow.pop %v5262
        %v5264 = vsel %vm4810, %v5263, 0.0
        %5265 = vadd.xlane.f32.xlu0 %v5264
        %v5266 = vpop.xlane.xlu0 %5265
        %v5267 = vrcp.pop %v5266
        %v5268 = vmul.f32 %v5263, %v5267
        %v5269 = vpack.c.bf16 %v5268, %v5268
        %v5271 = vsel %vm4810, %v5269, 0
        %v5274 = vsel %vm4826, %v4754, 0
        %5276 = vmatprep.subr.bf16.mxu0 0
        %5277 = vmatpush1.bf16.msra.mxu0 %v5274
        %5278 = vmatprep.subr.bf16.mxu0 0
        %5279 = vmatpush1.bf16.msra.mxu0 0
        %5280 = vmatprep.subr.bf16.mxu0 0
        %5281 = vmatpush1.bf16.msra.mxu0 0
        %5282 = vmatprep.subr.bf16.mxu0 0
        %5283 = vmatpush1.bf16.msra.mxu0 0
        %5284 = vmatprep.subr.bf16.mxu0 0
        %5285 = vmatpush1.bf16.msra.mxu0 0
        %5286 = vmatprep.subr.bf16.mxu0 0
        %5287 = vmatpush1.bf16.msra.mxu0 0
        %5288 = vmatprep.subr.bf16.mxu0 0
        %5289 = vmatpush1.bf16.msra.mxu0 0
        %5290 = vmatprep.subr.bf16.mxu0 0
        %5291 = vmatpush1.bf16.msra.mxu0 0
        %5292 = vmatprep.subr.bf16.mxu0 0
        %5293 = vmatpush1.bf16.msra.mxu0 0
        %5294 = vmatprep.subr.bf16.mxu0 0
        %5295 = vmatpush1.bf16.msra.mxu0 0
        %5296 = vmatprep.subr.bf16.mxu0 0
        %5297 = vmatpush1.bf16.msra.mxu0 0
        %5298 = vmatprep.subr.bf16.mxu0 0
        %5299 = vmatpush1.bf16.msra.mxu0 0
        %5300 = vmatprep.subr.bf16.mxu0 0
        %5301 = vmatpush1.bf16.msra.mxu0 0
        %5302 = vmatprep.subr.bf16.mxu0 0
        %5303 = vmatpush1.bf16.msra.mxu0 0
        %5304 = vmatprep.subr.bf16.mxu0 0
        %5305 = vmatpush1.bf16.msra.mxu0 0
        %5306 = vmatprep.subr.bf16.mxu0 0
        %5307 = vmatpush1.bf16.msra.mxu0 0
        %5308 = vmatprep.mubr.bf16.mxu0 0
        %5309 = vmatmul.mubr.bf16.gmra.mrb[0].mxu0 %v5271
        %v5310 = vpop.f32.mrb[0].mxu0
        %v5311 = vadd.f32 0.0, %v5310
        %v5312 = vpop.f32.mrb[0].mxu0
        %v5313 = vpop.f32.mrb[0].mxu0
        %v5314 = vpop.f32.mrb[0].mxu0
        %5315 = vdwg.mxu0
        %v5316 = vpack.c.bf16 %v5311, %v5311
        %s5317 = scalar_lea.vmem %s472, 16 [#allocation17]
        %5318 = vst.msk [vmem:[%s5317] sm:$0xf] %vm4871, %v5269
        %5320 = vrot.lane.b32.xlu0 %v4746, 64
        %v5321 = vpop.permute.xlu0 %5320
        %5323 = vrot.lane.b32.xlu0 %v4750, 64
        %v5324 = vpop.permute.xlu0 %5323
        %v5326 = vsel %vm4763, %v5321, 0
        %v5329 = vsel %vm4763, %v5324, 0
        %5331 = vmatprep.subr.bf16.mxu0 0
        %5332 = vmatpush1.bf16.xpose.msra.mxu0 %v5329
        %5333 = vmatprep.subr.bf16.mxu0 0
        %5334 = vmatpush1.bf16.xpose.msra.mxu0 0
        %5335 = vmatprep.subr.bf16.mxu0 0
        %5336 = vmatpush1.bf16.xpose.msra.mxu0 0
        %5337 = vmatprep.subr.bf16.mxu0 0
        %5338 = vmatpush1.bf16.xpose.msra.mxu0 0
        %5339 = vmatprep.subr.bf16.mxu0 0
        %5340 = vmatpush1.bf16.xpose.msra.mxu0 0
        %5341 = vmatprep.subr.bf16.mxu0 0
        %5342 = vmatpush1.bf16.xpose.msra.mxu0 0
        %5343 = vmatprep.subr.bf16.mxu0 0
        %5344 = vmatpush1.bf16.xpose.msra.mxu0 0
        %5345 = vmatprep.subr.bf16.mxu0 0
        %5346 = vmatpush1.bf16.xpose.msra.mxu0 0
        %5347 = vmatprep.subr.bf16.mxu0 0
        %5348 = vmatpush1.bf16.xpose.msra.mxu0 0
        %5349 = vmatprep.subr.bf16.mxu0 0
        %5350 = vmatpush1.bf16.xpose.msra.mxu0 0
        %5351 = vmatprep.subr.bf16.mxu0 0
        %5352 = vmatpush1.bf16.xpose.msra.mxu0 0
        %5353 = vmatprep.subr.bf16.mxu0 0
        %5354 = vmatpush1.bf16.xpose.msra.mxu0 0
        %5355 = vmatprep.subr.bf16.mxu0 0
        %5356 = vmatpush1.bf16.xpose.msra.mxu0 0
        %5357 = vmatprep.subr.bf16.mxu0 0
        %5358 = vmatpush1.bf16.xpose.msra.mxu0 0
        %5359 = vmatprep.subr.bf16.mxu0 0
        %5360 = vmatpush1.bf16.xpose.msra.mxu0 0
        %5361 = vmatprep.subr.bf16.mxu0 0
        %5362 = vmatpush1.bf16.xpose.msra.mxu0 0
        %5363 = vmatprep.mubr.bf16.mxu0 0
        %5364 = vmatmul.mubr.bf16.gmra.mrb[0].mxu0 %v5326
        %v5365 = vpop.f32.mrb[0].mxu0
        %v5366 = vadd.f32 %v4761, %v5365
        %v5367 = vpop.f32.mrb[0].mxu0
        %v5368 = vpop.f32.mrb[0].mxu0
        %v5369 = vpop.f32.mrb[0].mxu0
        %5370 = vdwg.mxu0
        %v5371 = vsel %vm4810, %v5366, -inf
        %5372 = vmax.xlane.f32.xlu0 %v5371
        %v5373 = vpop.xlane.xlu0 %5372
        %v5374 = vsub.f32 %v5366, %v5373
        %v5375 = vmul.f32 %v5374, 1.442695
        %v5376 = vpow.pop %v5375
        %v5377 = vsel %vm4810, %v5376, 0.0
        %5378 = vadd.xlane.f32.xlu0 %v5377
        %v5379 = vpop.xlane.xlu0 %5378
        %v5380 = vrcp.pop %v5379
        %v5381 = vmul.f32 %v5376, %v5380
        %v5382 = vpack.c.bf16 %v5381, %v5381
        %5384 = vrot.lane.b32.xlu0 %v4754, 64
        %v5385 = vpop.permute.xlu0 %5384
        %v5387 = vsel %vm4810, %v5382, 0
        %v5390 = vsel %vm4826, %v5385, 0
        %5392 = vmatprep.subr.bf16.mxu0 0
        %5393 = vmatpush1.bf16.msra.mxu0 %v5390
        %5394 = vmatprep.subr.bf16.mxu0 0
        %5395 = vmatpush1.bf16.msra.mxu0 0
        %5396 = vmatprep.subr.bf16.mxu0 0
        %5397 = vmatpush1.bf16.msra.mxu0 0
        %5398 = vmatprep.subr.bf16.mxu0 0
        %5399 = vmatpush1.bf16.msra.mxu0 0
        %5400 = vmatprep.subr.bf16.mxu0 0
        %5401 = vmatpush1.bf16.msra.mxu0 0
        %5402 = vmatprep.subr.bf16.mxu0 0
        %5403 = vmatpush1.bf16.msra.mxu0 0
        %5404 = vmatprep.subr.bf16.mxu0 0
        %5405 = vmatpush1.bf16.msra.mxu0 0
        %5406 = vmatprep.subr.bf16.mxu0 0
        %5407 = vmatpush1.bf16.msra.mxu0 0
        %5408 = vmatprep.subr.bf16.mxu0 0
        %5409 = vmatpush1.bf16.msra.mxu0 0
        %5410 = vmatprep.subr.bf16.mxu0 0
        %5411 = vmatpush1.bf16.msra.mxu0 0
        %5412 = vmatprep.subr.bf16.mxu0 0
        %5413 = vmatpush1.bf16.msra.mxu0 0
        %5414 = vmatprep.subr.bf16.mxu0 0
        %5415 = vmatpush1.bf16.msra.mxu0 0
        %5416 = vmatprep.subr.bf16.mxu0 0
        %5417 = vmatpush1.bf16.msra.mxu0 0
        %5418 = vmatprep.subr.bf16.mxu0 0
        %5419 = vmatpush1.bf16.msra.mxu0 0
        %5420 = vmatprep.subr.bf16.mxu0 0
        %5421 = vmatpush1.bf16.msra.mxu0 0
        %5422 = vmatprep.subr.bf16.mxu0 0
        %5423 = vmatpush1.bf16.msra.mxu0 0
        %5424 = vmatprep.mubr.bf16.mxu0 0
        %5425 = vmatmul.mubr.bf16.gmra.mrb[0].mxu0 %v5387
        %v5426 = vpop.f32.mrb[0].mxu0
        %v5427 = vadd.f32 0.0, %v5426
        %v5428 = vpop.f32.mrb[0].mxu0
        %v5429 = vpop.f32.mrb[0].mxu0
        %v5430 = vpop.f32.mrb[0].mxu0
        %5431 = vdwg.mxu0
        %v5432 = vpack.c.bf16 %v5427, %v5427
        %s5433 = scalar_lea.vmem %s472, 20 [#allocation17]
        %5434 = vst.msk [vmem:[%s5433] sm:$0xf] %vm4871, %v5382
        %v5436 = vsel %vm4763, %v4747, 0
        %v5439 = vsel %vm4763, %v4751, 0
        %5441 = vmatprep.subr.bf16.mxu0 0
        %5442 = vmatpush1.bf16.xpose.msra.mxu0 %v5439
        %5443 = vmatprep.subr.bf16.mxu0 0
        %5444 = vmatpush1.bf16.xpose.msra.mxu0 0
        %5445 = vmatprep.subr.bf16.mxu0 0
        %5446 = vmatpush1.bf16.xpose.msra.mxu0 0
        %5447 = vmatprep.subr.bf16.mxu0 0
        %5448 = vmatpush1.bf16.xpose.msra.mxu0 0
        %5449 = vmatprep.subr.bf16.mxu0 0
        %5450 = vmatpush1.bf16.xpose.msra.mxu0 0
        %5451 = vmatprep.subr.bf16.mxu0 0
        %5452 = vmatpush1.bf16.xpose.msra.mxu0 0
        %5453 = vmatprep.subr.bf16.mxu0 0
        %5454 = vmatpush1.bf16.xpose.msra.mxu0 0
        %5455 = vmatprep.subr.bf16.mxu0 0
        %5456 = vmatpush1.bf16.xpose.msra.mxu0 0
        %5457 = vmatprep.subr.bf16.mxu0 0
        %5458 = vmatpush1.bf16.xpose.msra.mxu0 0
        %5459 = vmatprep.subr.bf16.mxu0 0
        %5460 = vmatpush1.bf16.xpose.msra.mxu0 0
        %5461 = vmatprep.subr.bf16.mxu0 0
        %5462 = vmatpush1.bf16.xpose.msra.mxu0 0
        %5463 = vmatprep.subr.bf16.mxu0 0
        %5464 = vmatpush1.bf16.xpose.msra.mxu0 0
        %5465 = vmatprep.subr.bf16.mxu0 0
        %5466 = vmatpush1.bf16.xpose.msra.mxu0 0
        %5467 = vmatprep.subr.bf16.mxu0 0
        %5468 = vmatpush1.bf16.xpose.msra.mxu0 0
        %5469 = vmatprep.subr.bf16.mxu0 0
        %5470 = vmatpush1.bf16.xpose.msra.mxu0 0
        %5471 = vmatprep.subr.bf16.mxu0 0
        %5472 = vmatpush1.bf16.xpose.msra.mxu0 0
        %5473 = vmatprep.mubr.bf16.mxu0 0
        %5474 = vmatmul.mubr.bf16.gmra.mrb[0].mxu0 %v5436
        %v5475 = vpop.f32.mrb[0].mxu0
        %v5476 = vadd.f32 %v4761, %v5475
        %v5477 = vpop.f32.mrb[0].mxu0
        %v5478 = vpop.f32.mrb[0].mxu0
        %v5479 = vpop.f32.mrb[0].mxu0
        %5480 = vdwg.mxu0
        %v5481 = vsel %vm4810, %v5476, -inf
        %5482 = vmax.xlane.f32.xlu0 %v5481
        %v5483 = vpop.xlane.xlu0 %5482
        %v5484 = vsub.f32 %v5476, %v5483
        %v5485 = vmul.f32 %v5484, 1.442695
        %v5486 = vpow.pop %v5485
        %v5487 = vsel %vm4810, %v5486, 0.0
        %5488 = vadd.xlane.f32.xlu0 %v5487
        %v5489 = vpop.xlane.xlu0 %5488
        %v5490 = vrcp.pop %v5489
        %v5491 = vmul.f32 %v5486, %v5490
        %v5492 = vpack.c.bf16 %v5491, %v5491
        %v5494 = vsel %vm4810, %v5492, 0
        %v5497 = vsel %vm4826, %v4755, 0
        %5499 = vmatprep.subr.bf16.mxu0 0
        %5500 = vmatpush1.bf16.msra.mxu0 %v5497
        %5501 = vmatprep.subr.bf16.mxu0 0
        %5502 = vmatpush1.bf16.msra.mxu0 0
        %5503 = vmatprep.subr.bf16.mxu0 0
        %5504 = vmatpush1.bf16.msra.mxu0 0
        %5505 = vmatprep.subr.bf16.mxu0 0
        %5506 = vmatpush1.bf16.msra.mxu0 0
        %5507 = vmatprep.subr.bf16.mxu0 0
        %5508 = vmatpush1.bf16.msra.mxu0 0
        %5509 = vmatprep.subr.bf16.mxu0 0
        %5510 = vmatpush1.bf16.msra.mxu0 0
        %5511 = vmatprep.subr.bf16.mxu0 0
        %5512 = vmatpush1.bf16.msra.mxu0 0
        %5513 = vmatprep.subr.bf16.mxu0 0
        %5514 = vmatpush1.bf16.msra.mxu0 0
        %5515 = vmatprep.subr.bf16.mxu0 0
        %5516 = vmatpush1.bf16.msra.mxu0 0
        %5517 = vmatprep.subr.bf16.mxu0 0
        %5518 = vmatpush1.bf16.msra.mxu0 0
        %5519 = vmatprep.subr.bf16.mxu0 0
        %5520 = vmatpush1.bf16.msra.mxu0 0
        %5521 = vmatprep.subr.bf16.mxu0 0
        %5522 = vmatpush1.bf16.msra.mxu0 0
        %5523 = vmatprep.subr.bf16.mxu0 0
        %5524 = vmatpush1.bf16.msra.mxu0 0
        %5525 = vmatprep.subr.bf16.mxu0 0
        %5526 = vmatpush1.bf16.msra.mxu0 0
        %5527 = vmatprep.subr.bf16.mxu0 0
        %5528 = vmatpush1.bf16.msra.mxu0 0
        %5529 = vmatprep.subr.bf16.mxu0 0
        %5530 = vmatpush1.bf16.msra.mxu0 0
        %5531 = vmatprep.mubr.bf16.mxu0 0
        %5532 = vmatmul.mubr.bf16.gmra.mrb[0].mxu0 %v5494
        %v5533 = vpop.f32.mrb[0].mxu0
        %v5534 = vadd.f32 0.0, %v5533
        %v5535 = vpop.f32.mrb[0].mxu0
        %v5536 = vpop.f32.mrb[0].mxu0
        %v5537 = vpop.f32.mrb[0].mxu0
        %5538 = vdwg.mxu0
        %v5539 = vpack.c.bf16 %v5534, %v5534
        %s5540 = scalar_lea.vmem %s472, 24 [#allocation17]
        %5541 = vst.msk [vmem:[%s5540] sm:$0xf] %vm4871, %v5492
        %5543 = vrot.lane.b32.xlu0 %v4747, 64
        %v5544 = vpop.permute.xlu0 %5543
        %5546 = vrot.lane.b32.xlu0 %v4751, 64
        %v5547 = vpop.permute.xlu0 %5546
        %v5549 = vsel %vm4763, %v5544, 0
        %v5552 = vsel %vm4763, %v5547, 0
        %5554 = vmatprep.subr.bf16.mxu0 0
        %5555 = vmatpush1.bf16.xpose.msra.mxu0 %v5552
        %5556 = vmatprep.subr.bf16.mxu0 0
        %5557 = vmatpush1.bf16.xpose.msra.mxu0 0
        %5558 = vmatprep.subr.bf16.mxu0 0
        %5559 = vmatpush1.bf16.xpose.msra.mxu0 0
        %5560 = vmatprep.subr.bf16.mxu0 0
        %5561 = vmatpush1.bf16.xpose.msra.mxu0 0
        %5562 = vmatprep.subr.bf16.mxu0 0
        %5563 = vmatpush1.bf16.xpose.msra.mxu0 0
        %5564 = vmatprep.subr.bf16.mxu0 0
        %5565 = vmatpush1.bf16.xpose.msra.mxu0 0
        %5566 = vmatprep.subr.bf16.mxu0 0
        %5567 = vmatpush1.bf16.xpose.msra.mxu0 0
        %5568 = vmatprep.subr.bf16.mxu0 0
        %5569 = vmatpush1.bf16.xpose.msra.mxu0 0
        %5570 = vmatprep.subr.bf16.mxu0 0
        %5571 = vmatpush1.bf16.xpose.msra.mxu0 0
        %5572 = vmatprep.subr.bf16.mxu0 0
        %5573 = vmatpush1.bf16.xpose.msra.mxu0 0
        %5574 = vmatprep.subr.bf16.mxu0 0
        %5575 = vmatpush1.bf16.xpose.msra.mxu0 0
        %5576 = vmatprep.subr.bf16.mxu0 0
        %5577 = vmatpush1.bf16.xpose.msra.mxu0 0
        %5578 = vmatprep.subr.bf16.mxu0 0
        %5579 = vmatpush1.bf16.xpose.msra.mxu0 0
        %5580 = vmatprep.subr.bf16.mxu0 0
        %5581 = vmatpush1.bf16.xpose.msra.mxu0 0
        %5582 = vmatprep.subr.bf16.mxu0 0
        %5583 = vmatpush1.bf16.xpose.msra.mxu0 0
        %5584 = vmatprep.subr.bf16.mxu0 0
        %5585 = vmatpush1.bf16.xpose.msra.mxu0 0
        %5586 = vmatprep.mubr.bf16.mxu0 0
        %5587 = vmatmul.mubr.bf16.gmra.mrb[0].mxu0 %v5549
        %v5588 = vpop.f32.mrb[0].mxu0
        %v5589 = vadd.f32 %v4761, %v5588
        %v5590 = vpop.f32.mrb[0].mxu0
        %v5591 = vpop.f32.mrb[0].mxu0
        %v5592 = vpop.f32.mrb[0].mxu0
        %5593 = vdwg.mxu0
        %v5594 = vsel %vm4810, %v5589, -inf
        %5595 = vmax.xlane.f32.xlu0 %v5594
        %v5596 = vpop.xlane.xlu0 %5595
        %v5597 = vsub.f32 %v5589, %v5596
        %v5598 = vmul.f32 %v5597, 1.442695
        %v5599 = vpow.pop %v5598
        %v5600 = vsel %vm4810, %v5599, 0.0
        %5601 = vadd.xlane.f32.xlu0 %v5600
        %v5602 = vpop.xlane.xlu0 %5601
        %v5603 = vrcp.pop %v5602
        %v5604 = vmul.f32 %v5599, %v5603
        %v5605 = vpack.c.bf16 %v5604, %v5604
        %5607 = vrot.lane.b32.xlu0 %v4755, 64
        %v5608 = vpop.permute.xlu0 %5607
        %v5610 = vsel %vm4810, %v5605, 0
        %v5613 = vsel %vm4826, %v5608, 0
        %5615 = vmatprep.subr.bf16.mxu0 0
        %5616 = vmatpush1.bf16.msra.mxu0 %v5613
        %5617 = vmatprep.subr.bf16.mxu0 0
        %5618 = vmatpush1.bf16.msra.mxu0 0
        %5619 = vmatprep.subr.bf16.mxu0 0
        %5620 = vmatpush1.bf16.msra.mxu0 0
        %5621 = vmatprep.subr.bf16.mxu0 0
        %5622 = vmatpush1.bf16.msra.mxu0 0
        %5623 = vmatprep.subr.bf16.mxu0 0
        %5624 = vmatpush1.bf16.msra.mxu0 0
        %5625 = vmatprep.subr.bf16.mxu0 0
        %5626 = vmatpush1.bf16.msra.mxu0 0
        %5627 = vmatprep.subr.bf16.mxu0 0
        %5628 = vmatpush1.bf16.msra.mxu0 0
        %5629 = vmatprep.subr.bf16.mxu0 0
        %5630 = vmatpush1.bf16.msra.mxu0 0
        %5631 = vmatprep.subr.bf16.mxu0 0
        %5632 = vmatpush1.bf16.msra.mxu0 0
        %5633 = vmatprep.subr.bf16.mxu0 0
        %5634 = vmatpush1.bf16.msra.mxu0 0
        %5635 = vmatprep.subr.bf16.mxu0 0
        %5636 = vmatpush1.bf16.msra.mxu0 0
        %5637 = vmatprep.subr.bf16.mxu0 0
        %5638 = vmatpush1.bf16.msra.mxu0 0
        %5639 = vmatprep.subr.bf16.mxu0 0
        %5640 = vmatpush1.bf16.msra.mxu0 0
        %5641 = vmatprep.subr.bf16.mxu0 0
        %5642 = vmatpush1.bf16.msra.mxu0 0
        %5643 = vmatprep.subr.bf16.mxu0 0
        %5644 = vmatpush1.bf16.msra.mxu0 0
        %5645 = vmatprep.subr.bf16.mxu0 0
        %5646 = vmatpush1.bf16.msra.mxu0 0
        %5647 = vmatprep.mubr.bf16.mxu0 0
        %5648 = vmatmul.mubr.bf16.gmra.mrb[0].mxu0 %v5610
        %v5649 = vpop.f32.mrb[0].mxu0
        %v5650 = vadd.f32 0.0, %v5649
        %v5651 = vpop.f32.mrb[0].mxu0
        %v5652 = vpop.f32.mrb[0].mxu0
        %v5653 = vpop.f32.mrb[0].mxu0
        %5654 = vdwg.mxu0
        %v5655 = vpack.c.bf16 %v5650, %v5650
        %s5656 = scalar_lea.vmem %s472, 28 [#allocation17]
        %5657 = vst.msk [vmem:[%s5656] sm:$0xf] %vm4871, %v5605
        %5659 = vrot.lane.b32.xlu0 %v4986, 64
        %v5660 = vpop.permute.xlu0 %5659
        %5662 = vrot.lane.b32.xlu0 %v5209, 64
        %v5663 = vpop.permute.xlu0 %5662
        %5665 = vrot.lane.b32.xlu0 %v5432, 64
        %v5666 = vpop.permute.xlu0 %5665
        %5668 = vrot.lane.b32.xlu0 %v5655, 64
        %v5669 = vpop.permute.xlu0 %5668
        %v5672 = vsel %vm4763, %v4870, %v5660
        %v5676 = vsel %vm4763, %v5093, %v5663
        %v5680 = vsel %vm4763, %v5316, %v5666
        %v5684 = vsel %vm4763, %v5539, %v5669
        %v5686 = vld [vmem:[#allocation10] sm:$0xff]
        %v5687 = vld [vmem:[#allocation10 + $0x8] sm:$0xff]
        %v5688 = vld [vmem:[#allocation10 + $0x10] sm:$0xff]
        %v5689 = vld [vmem:[#allocation10 + $0x18] sm:$0xff]
        %v5690 = vld [vmem:[#allocation10 + $0x20] sm:$0xff]
        %v5691 = vld [vmem:[#allocation10 + $0x28] sm:$0xff]
        %v5692 = vld [vmem:[#allocation10 + $0x30] sm:$0xff]
        %v5693 = vld [vmem:[#allocation10 + $0x38] sm:$0xff]
        %v5694 = vld [vmem:[#allocation10 + $0x40] sm:$0xff]
        %v5695 = vld [vmem:[#allocation10 + $0x48] sm:$0xff]
        %v5696 = vld [vmem:[#allocation10 + $0x50] sm:$0xff]
        %v5697 = vld [vmem:[#allocation10 + $0x58] sm:$0xff]
        %v5698 = vld [vmem:[#allocation10 + $0x60] sm:$0xff]
        %v5699 = vld [vmem:[#allocation10 + $0x68] sm:$0xff]
        %v5700 = vld [vmem:[#allocation10 + $0x70] sm:$0xff]
        %v5701 = vld [vmem:[#allocation10 + $0x78] sm:$0xff]
        %v5702 = vld [vmem:[#allocation10 + $0x80] sm:$0xff]
        %v5703 = vld [vmem:[#allocation10 + $0x88] sm:$0xff]
        %v5704 = vld [vmem:[#allocation10 + $0x90] sm:$0xff]
        %v5705 = vld [vmem:[#allocation10 + $0x98] sm:$0xff]
        %v5706 = vld [vmem:[#allocation10 + $0xa0] sm:$0xff]
        %v5707 = vld [vmem:[#allocation10 + $0xa8] sm:$0xff]
        %v5708 = vld [vmem:[#allocation10 + $0xb0] sm:$0xff]
        %v5709 = vld [vmem:[#allocation10 + $0xb8] sm:$0xff]
        %v5710 = vld [vmem:[#allocation10 + $0xc0] sm:$0xff]
        %v5711 = vld [vmem:[#allocation10 + $0xc8] sm:$0xff]
        %v5712 = vld [vmem:[#allocation10 + $0xd0] sm:$0xff]
        %v5713 = vld [vmem:[#allocation10 + $0xd8] sm:$0xff]
        %v5714 = vld [vmem:[#allocation10 + $0xe0] sm:$0xff]
        %v5715 = vld [vmem:[#allocation10 + $0xe8] sm:$0xff]
        %v5716 = vld [vmem:[#allocation10 + $0xf0] sm:$0xff]
        %v5717 = vld [vmem:[#allocation10 + $0xf8] sm:$0xff]
        %v5718 = vld [vmem:[#allocation10 + $0x100] sm:$0xff]
        %v5719 = vld [vmem:[#allocation10 + $0x108] sm:$0xff]
        %v5720 = vld [vmem:[#allocation10 + $0x110] sm:$0xff]
        %v5721 = vld [vmem:[#allocation10 + $0x118] sm:$0xff]
        %v5722 = vld [vmem:[#allocation10 + $0x120] sm:$0xff]
        %v5723 = vld [vmem:[#allocation10 + $0x128] sm:$0xff]
        %v5724 = vld [vmem:[#allocation10 + $0x130] sm:$0xff]
        %v5725 = vld [vmem:[#allocation10 + $0x138] sm:$0xff]
        %v5726 = vld [vmem:[#allocation10 + $0x140] sm:$0xff]
        %v5727 = vld [vmem:[#allocation10 + $0x148] sm:$0xff]
        %v5728 = vld [vmem:[#allocation10 + $0x150] sm:$0xff]
        %v5729 = vld [vmem:[#allocation10 + $0x158] sm:$0xff]
        %v5730 = vld [vmem:[#allocation10 + $0x160] sm:$0xff]
        %v5731 = vld [vmem:[#allocation10 + $0x168] sm:$0xff]
        %v5732 = vld [vmem:[#allocation10 + $0x170] sm:$0xff]
        %v5733 = vld [vmem:[#allocation10 + $0x178] sm:$0xff]
        %v5734 = vld [vmem:[#allocation10 + $0x180] sm:$0xff]
        %v5735 = vld [vmem:[#allocation10 + $0x188] sm:$0xff]
        %v5736 = vld [vmem:[#allocation10 + $0x190] sm:$0xff]
        %v5737 = vld [vmem:[#allocation10 + $0x198] sm:$0xff]
        %v5738 = vld [vmem:[#allocation10 + $0x1a0] sm:$0xff]
        %v5739 = vld [vmem:[#allocation10 + $0x1a8] sm:$0xff]
        %v5740 = vld [vmem:[#allocation10 + $0x1b0] sm:$0xff]
        %v5741 = vld [vmem:[#allocation10 + $0x1b8] sm:$0xff]
        %v5742 = vld [vmem:[#allocation10 + $0x1c0] sm:$0xff]
        %v5743 = vld [vmem:[#allocation10 + $0x1c8] sm:$0xff]
        %v5744 = vld [vmem:[#allocation10 + $0x1d0] sm:$0xff]
        %v5745 = vld [vmem:[#allocation10 + $0x1d8] sm:$0xff]
        %v5746 = vld [vmem:[#allocation10 + $0x1e0] sm:$0xff]
        %v5747 = vld [vmem:[#allocation10 + $0x1e8] sm:$0xff]
        %v5748 = vld [vmem:[#allocation10 + $0x1f0] sm:$0xff]
        %v5749 = vld [vmem:[#allocation10 + $0x1f8] sm:$0xff]
        %v5750 = vld [vmem:[#allocation10 + $0x200] sm:$0xff]
        %v5751 = vld [vmem:[#allocation10 + $0x208] sm:$0xff]
        %v5752 = vld [vmem:[#allocation10 + $0x210] sm:$0xff]
        %v5753 = vld [vmem:[#allocation10 + $0x218] sm:$0xff]
        %v5754 = vld [vmem:[#allocation10 + $0x220] sm:$0xff]
        %v5755 = vld [vmem:[#allocation10 + $0x228] sm:$0xff]
        %v5756 = vld [vmem:[#allocation10 + $0x230] sm:$0xff]
        %v5757 = vld [vmem:[#allocation10 + $0x238] sm:$0xff]
        %v5758 = vld [vmem:[#allocation10 + $0x240] sm:$0xff]
        %v5759 = vld [vmem:[#allocation10 + $0x248] sm:$0xff]
        %v5760 = vld [vmem:[#allocation10 + $0x250] sm:$0xff]
        %v5761 = vld [vmem:[#allocation10 + $0x258] sm:$0xff]
        %v5762 = vld [vmem:[#allocation10 + $0x260] sm:$0xff]
        %v5763 = vld [vmem:[#allocation10 + $0x268] sm:$0xff]
        %v5764 = vld [vmem:[#allocation10 + $0x270] sm:$0xff]
        %v5765 = vld [vmem:[#allocation10 + $0x278] sm:$0xff]
        %v5766 = vld [vmem:[#allocation10 + $0x280] sm:$0xff]
        %v5767 = vld [vmem:[#allocation10 + $0x288] sm:$0xff]
        %v5768 = vld [vmem:[#allocation10 + $0x290] sm:$0xff]
        %v5769 = vld [vmem:[#allocation10 + $0x298] sm:$0xff]
        %v5770 = vld [vmem:[#allocation10 + $0x2a0] sm:$0xff]
        %v5771 = vld [vmem:[#allocation10 + $0x2a8] sm:$0xff]
        %v5772 = vld [vmem:[#allocation10 + $0x2b0] sm:$0xff]
        %v5773 = vld [vmem:[#allocation10 + $0x2b8] sm:$0xff]
        %v5774 = vld [vmem:[#allocation10 + $0x2c0] sm:$0xff]
        %v5775 = vld [vmem:[#allocation10 + $0x2c8] sm:$0xff]
        %v5776 = vld [vmem:[#allocation10 + $0x2d0] sm:$0xff]
        %v5777 = vld [vmem:[#allocation10 + $0x2d8] sm:$0xff]
        %v5778 = vld [vmem:[#allocation10 + $0x2e0] sm:$0xff]
        %v5779 = vld [vmem:[#allocation10 + $0x2e8] sm:$0xff]
        %v5780 = vld [vmem:[#allocation10 + $0x2f0] sm:$0xff]
        %v5781 = vld [vmem:[#allocation10 + $0x2f8] sm:$0xff]
        %v5782 = vld [vmem:[#allocation10 + $0x300] sm:$0xff]
        %v5783 = vld [vmem:[#allocation10 + $0x308] sm:$0xff]
        %v5784 = vld [vmem:[#allocation10 + $0x310] sm:$0xff]
        %v5785 = vld [vmem:[#allocation10 + $0x318] sm:$0xff]
        %v5786 = vld [vmem:[#allocation10 + $0x320] sm:$0xff]
        %v5787 = vld [vmem:[#allocation10 + $0x328] sm:$0xff]
        %v5788 = vld [vmem:[#allocation10 + $0x330] sm:$0xff]
        %v5789 = vld [vmem:[#allocation10 + $0x338] sm:$0xff]
        %v5790 = vld [vmem:[#allocation10 + $0x340] sm:$0xff]
        %v5791 = vld [vmem:[#allocation10 + $0x348] sm:$0xff]
        %v5792 = vld [vmem:[#allocation10 + $0x350] sm:$0xff]
        %v5793 = vld [vmem:[#allocation10 + $0x358] sm:$0xff]
        %v5794 = vld [vmem:[#allocation10 + $0x360] sm:$0xff]
        %v5795 = vld [vmem:[#allocation10 + $0x368] sm:$0xff]
        %v5796 = vld [vmem:[#allocation10 + $0x370] sm:$0xff]
        %v5797 = vld [vmem:[#allocation10 + $0x378] sm:$0xff]
        %v5798 = vld [vmem:[#allocation10 + $0x380] sm:$0xff]
        %v5799 = vld [vmem:[#allocation10 + $0x388] sm:$0xff]
        %v5800 = vld [vmem:[#allocation10 + $0x390] sm:$0xff]
        %v5801 = vld [vmem:[#allocation10 + $0x398] sm:$0xff]
        %v5802 = vld [vmem:[#allocation10 + $0x3a0] sm:$0xff]
        %v5803 = vld [vmem:[#allocation10 + $0x3a8] sm:$0xff]
        %v5804 = vld [vmem:[#allocation10 + $0x3b0] sm:$0xff]
        %v5805 = vld [vmem:[#allocation10 + $0x3b8] sm:$0xff]
        %v5806 = vld [vmem:[#allocation10 + $0x3c0] sm:$0xff]
        %v5807 = vld [vmem:[#allocation10 + $0x3c8] sm:$0xff]
        %v5808 = vld [vmem:[#allocation10 + $0x3d0] sm:$0xff]
        %v5809 = vld [vmem:[#allocation10 + $0x3d8] sm:$0xff]
        %v5810 = vld [vmem:[#allocation10 + $0x3e0] sm:$0xff]
        %v5811 = vld [vmem:[#allocation10 + $0x3e8] sm:$0xff]
        %v5812 = vld [vmem:[#allocation10 + $0x3f0] sm:$0xff]
        %v5813 = vld [vmem:[#allocation10 + $0x3f8] sm:$0xff]
        %v5814 = vld [vmem:[#allocation10 + $0x400] sm:$0xff]
        %v5815 = vld [vmem:[#allocation10 + $0x408] sm:$0xff]
        %v5816 = vld [vmem:[#allocation10 + $0x410] sm:$0xff]
        %v5817 = vld [vmem:[#allocation10 + $0x418] sm:$0xff]
        %v5818 = vld [vmem:[#allocation10 + $0x420] sm:$0xff]
        %v5819 = vld [vmem:[#allocation10 + $0x428] sm:$0xff]
        %v5820 = vld [vmem:[#allocation10 + $0x430] sm:$0xff]
        %v5821 = vld [vmem:[#allocation10 + $0x438] sm:$0xff]
        %v5822 = vld [vmem:[#allocation10 + $0x440] sm:$0xff]
        %v5823 = vld [vmem:[#allocation10 + $0x448] sm:$0xff]
        %v5824 = vld [vmem:[#allocation10 + $0x450] sm:$0xff]
        %v5825 = vld [vmem:[#allocation10 + $0x458] sm:$0xff]
        %v5826 = vld [vmem:[#allocation10 + $0x460] sm:$0xff]
        %v5827 = vld [vmem:[#allocation10 + $0x468] sm:$0xff]
        %v5828 = vld [vmem:[#allocation10 + $0x470] sm:$0xff]
        %v5829 = vld [vmem:[#allocation10 + $0x478] sm:$0xff]
        %v5830 = vld [vmem:[#allocation10 + $0x480] sm:$0xff]
        %v5831 = vld [vmem:[#allocation10 + $0x488] sm:$0xff]
        %v5832 = vld [vmem:[#allocation10 + $0x490] sm:$0xff]
        %v5833 = vld [vmem:[#allocation10 + $0x498] sm:$0xff]
        %v5834 = vld [vmem:[#allocation10 + $0x4a0] sm:$0xff]
        %v5835 = vld [vmem:[#allocation10 + $0x4a8] sm:$0xff]
        %v5836 = vld [vmem:[#allocation10 + $0x4b0] sm:$0xff]
        %v5837 = vld [vmem:[#allocation10 + $0x4b8] sm:$0xff]
        %v5838 = vld [vmem:[#allocation10 + $0x4c0] sm:$0xff]
        %v5839 = vld [vmem:[#allocation10 + $0x4c8] sm:$0xff]
        %v5840 = vld [vmem:[#allocation10 + $0x4d0] sm:$0xff]
        %v5841 = vld [vmem:[#allocation10 + $0x4d8] sm:$0xff]
        %v5842 = vld [vmem:[#allocation10 + $0x4e0] sm:$0xff]
        %v5843 = vld [vmem:[#allocation10 + $0x4e8] sm:$0xff]
        %v5844 = vld [vmem:[#allocation10 + $0x4f0] sm:$0xff]
        %v5845 = vld [vmem:[#allocation10 + $0x4f8] sm:$0xff]
        %v5846 = vld [vmem:[#allocation10 + $0x500] sm:$0xff]
        %v5847 = vld [vmem:[#allocation10 + $0x508] sm:$0xff]
        %v5848 = vld [vmem:[#allocation10 + $0x510] sm:$0xff]
        %v5849 = vld [vmem:[#allocation10 + $0x518] sm:$0xff]
        %v5850 = vld [vmem:[#allocation10 + $0x520] sm:$0xff]
        %v5851 = vld [vmem:[#allocation10 + $0x528] sm:$0xff]
        %v5852 = vld [vmem:[#allocation10 + $0x530] sm:$0xff]
        %v5853 = vld [vmem:[#allocation10 + $0x538] sm:$0xff]
        %v5854 = vld [vmem:[#allocation10 + $0x540] sm:$0xff]
        %v5855 = vld [vmem:[#allocation10 + $0x548] sm:$0xff]
        %v5856 = vld [vmem:[#allocation10 + $0x550] sm:$0xff]
        %v5857 = vld [vmem:[#allocation10 + $0x558] sm:$0xff]
        %v5858 = vld [vmem:[#allocation10 + $0x560] sm:$0xff]
        %v5859 = vld [vmem:[#allocation10 + $0x568] sm:$0xff]
        %v5860 = vld [vmem:[#allocation10 + $0x570] sm:$0xff]
        %v5861 = vld [vmem:[#allocation10 + $0x578] sm:$0xff]
        %v5862 = vld [vmem:[#allocation10 + $0x580] sm:$0xff]
        %v5863 = vld [vmem:[#allocation10 + $0x588] sm:$0xff]
        %v5864 = vld [vmem:[#allocation10 + $0x590] sm:$0xff]
        %v5865 = vld [vmem:[#allocation10 + $0x598] sm:$0xff]
        %v5866 = vld [vmem:[#allocation10 + $0x5a0] sm:$0xff]
        %v5867 = vld [vmem:[#allocation10 + $0x5a8] sm:$0xff]
        %v5868 = vld [vmem:[#allocation10 + $0x5b0] sm:$0xff]
        %v5869 = vld [vmem:[#allocation10 + $0x5b8] sm:$0xff]
        %v5870 = vld [vmem:[#allocation10 + $0x5c0] sm:$0xff]
        %v5871 = vld [vmem:[#allocation10 + $0x5c8] sm:$0xff]
        %v5872 = vld [vmem:[#allocation10 + $0x5d0] sm:$0xff]
        %v5873 = vld [vmem:[#allocation10 + $0x5d8] sm:$0xff]
        %v5874 = vld [vmem:[#allocation10 + $0x5e0] sm:$0xff]
        %v5875 = vld [vmem:[#allocation10 + $0x5e8] sm:$0xff]
        %v5876 = vld [vmem:[#allocation10 + $0x5f0] sm:$0xff]
        %v5877 = vld [vmem:[#allocation10 + $0x5f8] sm:$0xff]
        %v5878 = vld [vmem:[#allocation11] sm:$0x3f]
        %v5880 = vlaneseq
        %v5881 = vshrl.u32 %v5880, 7
        %v5882 = vsub.s32 0, %v5881
        %v5883 = vrot.slane %v5878, %v5882
        %v5884 = vlaneseq
        %v5885 = vshrl.u32 %v5884, 7
        %v5886 = vsub.s32 1, %v5885
        %v5887 = vrot.slane %v5878, %v5886
        %v5888 = vlaneseq
        %v5889 = vshrl.u32 %v5888, 7
        %v5890 = vsub.s32 2, %v5889
        %v5891 = vrot.slane %v5878, %v5890
        %v5892 = vlaneseq
        %v5893 = vshrl.u32 %v5892, 7
        %v5894 = vsub.s32 3, %v5893
        %v5895 = vrot.slane %v5878, %v5894
        %v5896 = vlaneseq
        %v5897 = vshrl.u32 %v5896, 7
        %v5898 = vsub.s32 4, %v5897
        %v5899 = vrot.slane %v5878, %v5898
        %v5900 = vlaneseq
        %v5901 = vshrl.u32 %v5900, 7
        %v5902 = vsub.s32 5, %v5901
        %v5903 = vrot.slane %v5878, %v5902
        %v6102 = vunpack.c.l.b16 %v5686
        %v6103 = vunpack.c.h.b16 %v5686
        %v6104 = vunpack.c.l.b16 %v5687
        %v6105 = vunpack.c.h.b16 %v5687
        %v6106 = vunpack.c.l.b16 %v5688
        %v6107 = vunpack.c.h.b16 %v5688
        %v6108 = vunpack.c.l.b16 %v5689
        %v6109 = vunpack.c.h.b16 %v5689
        %v6110 = vunpack.c.l.b16 %v5690
        %v6111 = vunpack.c.h.b16 %v5690
        %v6112 = vunpack.c.l.b16 %v5691
        %v6113 = vunpack.c.h.b16 %v5691
        %v6114 = vunpack.c.l.b16 %v5692
        %v6115 = vunpack.c.h.b16 %v5692
        %v6116 = vunpack.c.l.b16 %v5693
        %v6117 = vunpack.c.h.b16 %v5693
        %v6118 = vunpack.c.l.b16 %v5694
        %v6119 = vunpack.c.h.b16 %v5694
        %v6120 = vunpack.c.l.b16 %v5695
        %v6121 = vunpack.c.h.b16 %v5695
        %v6122 = vunpack.c.l.b16 %v5696
        %v6123 = vunpack.c.h.b16 %v5696
        %v6124 = vunpack.c.l.b16 %v5697
        %v6125 = vunpack.c.h.b16 %v5697
        %v6126 = vunpack.c.l.b16 %v5698
        %v6127 = vunpack.c.h.b16 %v5698
        %v6128 = vunpack.c.l.b16 %v5699
        %v6129 = vunpack.c.h.b16 %v5699
        %v6130 = vunpack.c.l.b16 %v5700
        %v6131 = vunpack.c.h.b16 %v5700
        %v6132 = vunpack.c.l.b16 %v5701
        %v6133 = vunpack.c.h.b16 %v5701
        %v6134 = vunpack.c.l.b16 %v5702
        %v6135 = vunpack.c.h.b16 %v5702
        %v6136 = vunpack.c.l.b16 %v5703
        %v6137 = vunpack.c.h.b16 %v5703
        %v6138 = vunpack.c.l.b16 %v5704
        %v6139 = vunpack.c.h.b16 %v5704
        %v6140 = vunpack.c.l.b16 %v5705
        %v6141 = vunpack.c.h.b16 %v5705
        %v6142 = vunpack.c.l.b16 %v5706
        %v6143 = vunpack.c.h.b16 %v5706
        %v6144 = vunpack.c.l.b16 %v5707
        %v6145 = vunpack.c.h.b16 %v5707
        %v6146 = vunpack.c.l.b16 %v5708
        %v6147 = vunpack.c.h.b16 %v5708
        %v6148 = vunpack.c.l.b16 %v5709
        %v6149 = vunpack.c.h.b16 %v5709
        %v6150 = vunpack.c.l.b16 %v5710
        %v6151 = vunpack.c.h.b16 %v5710
        %v6152 = vunpack.c.l.b16 %v5711
        %v6153 = vunpack.c.h.b16 %v5711
        %v6154 = vunpack.c.l.b16 %v5712
        %v6155 = vunpack.c.h.b16 %v5712
        %v6156 = vunpack.c.l.b16 %v5713
        %v6157 = vunpack.c.h.b16 %v5713
        %v6158 = vunpack.c.l.b16 %v5714
        %v6159 = vunpack.c.h.b16 %v5714
        %v6160 = vunpack.c.l.b16 %v5715
        %v6161 = vunpack.c.h.b16 %v5715
        %v6162 = vunpack.c.l.b16 %v5716
        %v6163 = vunpack.c.h.b16 %v5716
        %v6164 = vunpack.c.l.b16 %v5717
        %v6165 = vunpack.c.h.b16 %v5717
        %v6166 = vunpack.c.l.b16 %v5718
        %v6167 = vunpack.c.h.b16 %v5718
        %v6168 = vunpack.c.l.b16 %v5719
        %v6169 = vunpack.c.h.b16 %v5719
        %v6170 = vunpack.c.l.b16 %v5720
        %v6171 = vunpack.c.h.b16 %v5720
        %v6172 = vunpack.c.l.b16 %v5721
        %v6173 = vunpack.c.h.b16 %v5721
        %v6174 = vunpack.c.l.b16 %v5722
        %v6175 = vunpack.c.h.b16 %v5722
        %v6176 = vunpack.c.l.b16 %v5723
        %v6177 = vunpack.c.h.b16 %v5723
        %v6178 = vunpack.c.l.b16 %v5724
        %v6179 = vunpack.c.h.b16 %v5724
        %v6180 = vunpack.c.l.b16 %v5725
        %v6181 = vunpack.c.h.b16 %v5725
        %v6182 = vunpack.c.l.b16 %v5726
        %v6183 = vunpack.c.h.b16 %v5726
        %v6184 = vunpack.c.l.b16 %v5727
        %v6185 = vunpack.c.h.b16 %v5727
        %v6186 = vunpack.c.l.b16 %v5728
        %v6187 = vunpack.c.h.b16 %v5728
        %v6188 = vunpack.c.l.b16 %v5729
        %v6189 = vunpack.c.h.b16 %v5729
        %v6190 = vunpack.c.l.b16 %v5730
        %v6191 = vunpack.c.h.b16 %v5730
        %v6192 = vunpack.c.l.b16 %v5731
        %v6193 = vunpack.c.h.b16 %v5731
        %v6194 = vunpack.c.l.b16 %v5732
        %v6195 = vunpack.c.h.b16 %v5732
        %v6196 = vunpack.c.l.b16 %v5733
        %v6197 = vunpack.c.h.b16 %v5733
        %v6198 = vunpack.c.l.b16 %v5734
        %v6199 = vunpack.c.h.b16 %v5734
        %v6200 = vunpack.c.l.b16 %v5735
        %v6201 = vunpack.c.h.b16 %v5735
        %v6202 = vunpack.c.l.b16 %v5736
        %v6203 = vunpack.c.h.b16 %v5736
        %v6204 = vunpack.c.l.b16 %v5737
        %v6205 = vunpack.c.h.b16 %v5737
        %v6206 = vunpack.c.l.b16 %v5738
        %v6207 = vunpack.c.h.b16 %v5738
        %v6208 = vunpack.c.l.b16 %v5739
        %v6209 = vunpack.c.h.b16 %v5739
        %v6210 = vunpack.c.l.b16 %v5740
        %v6211 = vunpack.c.h.b16 %v5740
        %v6212 = vunpack.c.l.b16 %v5741
        %v6213 = vunpack.c.h.b16 %v5741
        %v6214 = vunpack.c.l.b16 %v5742
        %v6215 = vunpack.c.h.b16 %v5742
        %v6216 = vunpack.c.l.b16 %v5743
        %v6217 = vunpack.c.h.b16 %v5743
        %v6218 = vunpack.c.l.b16 %v5744
        %v6219 = vunpack.c.h.b16 %v5744
        %v6220 = vunpack.c.l.b16 %v5745
        %v6221 = vunpack.c.h.b16 %v5745
        %v6222 = vunpack.c.l.b16 %v5746
        %v6223 = vunpack.c.h.b16 %v5746
        %v6224 = vunpack.c.l.b16 %v5747
        %v6225 = vunpack.c.h.b16 %v5747
        %v6226 = vunpack.c.l.b16 %v5748
        %v6227 = vunpack.c.h.b16 %v5748
        %v6228 = vunpack.c.l.b16 %v5749
        %v6229 = vunpack.c.h.b16 %v5749
        %v6230 = vunpack.c.l.b16 %v5750
        %v6231 = vunpack.c.h.b16 %v5750
        %v6232 = vunpack.c.l.b16 %v5751
        %v6233 = vunpack.c.h.b16 %v5751
        %v6234 = vunpack.c.l.b16 %v5752
        %v6235 = vunpack.c.h.b16 %v5752
        %v6236 = vunpack.c.l.b16 %v5753
        %v6237 = vunpack.c.h.b16 %v5753
        %v6238 = vunpack.c.l.b16 %v5754
        %v6239 = vunpack.c.h.b16 %v5754
        %v6240 = vunpack.c.l.b16 %v5755
        %v6241 = vunpack.c.h.b16 %v5755
        %v6242 = vunpack.c.l.b16 %v5756
        %v6243 = vunpack.c.h.b16 %v5756
        %v6244 = vunpack.c.l.b16 %v5757
        %v6245 = vunpack.c.h.b16 %v5757
        %v6246 = vunpack.c.l.b16 %v5758
        %v6247 = vunpack.c.h.b16 %v5758
        %v6248 = vunpack.c.l.b16 %v5759
        %v6249 = vunpack.c.h.b16 %v5759
        %v6250 = vunpack.c.l.b16 %v5760
        %v6251 = vunpack.c.h.b16 %v5760
        %v6252 = vunpack.c.l.b16 %v5761
        %v6253 = vunpack.c.h.b16 %v5761
        %v6254 = vunpack.c.l.b16 %v5762
        %v6255 = vunpack.c.h.b16 %v5762
        %v6256 = vunpack.c.l.b16 %v5763
        %v6257 = vunpack.c.h.b16 %v5763
        %v6258 = vunpack.c.l.b16 %v5764
        %v6259 = vunpack.c.h.b16 %v5764
        %v6260 = vunpack.c.l.b16 %v5765
        %v6261 = vunpack.c.h.b16 %v5765
        %v6262 = vunpack.c.l.b16 %v5766
        %v6263 = vunpack.c.h.b16 %v5766
        %v6264 = vunpack.c.l.b16 %v5767
        %v6265 = vunpack.c.h.b16 %v5767
        %v6266 = vunpack.c.l.b16 %v5768
        %v6267 = vunpack.c.h.b16 %v5768
        %v6268 = vunpack.c.l.b16 %v5769
        %v6269 = vunpack.c.h.b16 %v5769
        %v6270 = vunpack.c.l.b16 %v5770
        %v6271 = vunpack.c.h.b16 %v5770
        %v6272 = vunpack.c.l.b16 %v5771
        %v6273 = vunpack.c.h.b16 %v5771
        %v6274 = vunpack.c.l.b16 %v5772
        %v6275 = vunpack.c.h.b16 %v5772
        %v6276 = vunpack.c.l.b16 %v5773
        %v6277 = vunpack.c.h.b16 %v5773
        %v6278 = vunpack.c.l.b16 %v5774
        %v6279 = vunpack.c.h.b16 %v5774
        %v6280 = vunpack.c.l.b16 %v5775
        %v6281 = vunpack.c.h.b16 %v5775
        %v6282 = vunpack.c.l.b16 %v5776
        %v6283 = vunpack.c.h.b16 %v5776
        %v6284 = vunpack.c.l.b16 %v5777
        %v6285 = vunpack.c.h.b16 %v5777
        %v6286 = vunpack.c.l.b16 %v5778
        %v6287 = vunpack.c.h.b16 %v5778
        %v6288 = vunpack.c.l.b16 %v5779
        %v6289 = vunpack.c.h.b16 %v5779
        %v6290 = vunpack.c.l.b16 %v5780
        %v6291 = vunpack.c.h.b16 %v5780
        %v6292 = vunpack.c.l.b16 %v5781
        %v6293 = vunpack.c.h.b16 %v5781
        %v6294 = vunpack.c.l.b16 %v5782
        %v6295 = vunpack.c.h.b16 %v5782
        %v6296 = vunpack.c.l.b16 %v5783
        %v6297 = vunpack.c.h.b16 %v5783
        %v6298 = vunpack.c.l.b16 %v5784
        %v6299 = vunpack.c.h.b16 %v5784
        %v6300 = vunpack.c.l.b16 %v5785
        %v6301 = vunpack.c.h.b16 %v5785
        %v6302 = vunpack.c.l.b16 %v5786
        %v6303 = vunpack.c.h.b16 %v5786
        %v6304 = vunpack.c.l.b16 %v5787
        %v6305 = vunpack.c.h.b16 %v5787
        %v6306 = vunpack.c.l.b16 %v5788
        %v6307 = vunpack.c.h.b16 %v5788
        %v6308 = vunpack.c.l.b16 %v5789
        %v6309 = vunpack.c.h.b16 %v5789
        %v6310 = vunpack.c.l.b16 %v5790
        %v6311 = vunpack.c.h.b16 %v5790
        %v6312 = vunpack.c.l.b16 %v5791
        %v6313 = vunpack.c.h.b16 %v5791
        %v6314 = vunpack.c.l.b16 %v5792
        %v6315 = vunpack.c.h.b16 %v5792
        %v6316 = vunpack.c.l.b16 %v5793
        %v6317 = vunpack.c.h.b16 %v5793
        %v6318 = vunpack.c.l.b16 %v5794
        %v6319 = vunpack.c.h.b16 %v5794
        %v6320 = vunpack.c.l.b16 %v5795
        %v6321 = vunpack.c.h.b16 %v5795
        %v6322 = vunpack.c.l.b16 %v5796
        %v6323 = vunpack.c.h.b16 %v5796
        %v6324 = vunpack.c.l.b16 %v5797
        %v6325 = vunpack.c.h.b16 %v5797
        %v6326 = vunpack.c.l.b16 %v5798
        %v6327 = vunpack.c.h.b16 %v5798
        %v6328 = vunpack.c.l.b16 %v5799
        %v6329 = vunpack.c.h.b16 %v5799
        %v6330 = vunpack.c.l.b16 %v5800
        %v6331 = vunpack.c.h.b16 %v5800
        %v6332 = vunpack.c.l.b16 %v5801
        %v6333 = vunpack.c.h.b16 %v5801
        %v6334 = vunpack.c.l.b16 %v5802
        %v6335 = vunpack.c.h.b16 %v5802
        %v6336 = vunpack.c.l.b16 %v5803
        %v6337 = vunpack.c.h.b16 %v5803
        %v6338 = vunpack.c.l.b16 %v5804
        %v6339 = vunpack.c.h.b16 %v5804
        %v6340 = vunpack.c.l.b16 %v5805
        %v6341 = vunpack.c.h.b16 %v5805
        %v6342 = vunpack.c.l.b16 %v5806
        %v6343 = vunpack.c.h.b16 %v5806
        %v6344 = vunpack.c.l.b16 %v5807
        %v6345 = vunpack.c.h.b16 %v5807
        %v6346 = vunpack.c.l.b16 %v5808
        %v6347 = vunpack.c.h.b16 %v5808
        %v6348 = vunpack.c.l.b16 %v5809
        %v6349 = vunpack.c.h.b16 %v5809
        %v6350 = vunpack.c.l.b16 %v5810
        %v6351 = vunpack.c.h.b16 %v5810
        %v6352 = vunpack.c.l.b16 %v5811
        %v6353 = vunpack.c.h.b16 %v5811
        %v6354 = vunpack.c.l.b16 %v5812
        %v6355 = vunpack.c.h.b16 %v5812
        %v6356 = vunpack.c.l.b16 %v5813
        %v6357 = vunpack.c.h.b16 %v5813
        %v6358 = vunpack.c.l.b16 %v5814
        %v6359 = vunpack.c.h.b16 %v5814
        %v6360 = vunpack.c.l.b16 %v5815
        %v6361 = vunpack.c.h.b16 %v5815
        %v6362 = vunpack.c.l.b16 %v5816
        %v6363 = vunpack.c.h.b16 %v5816
        %v6364 = vunpack.c.l.b16 %v5817
        %v6365 = vunpack.c.h.b16 %v5817
        %v6366 = vunpack.c.l.b16 %v5818
        %v6367 = vunpack.c.h.b16 %v5818
        %v6368 = vunpack.c.l.b16 %v5819
        %v6369 = vunpack.c.h.b16 %v5819
        %v6370 = vunpack.c.l.b16 %v5820
        %v6371 = vunpack.c.h.b16 %v5820
        %v6372 = vunpack.c.l.b16 %v5821
        %v6373 = vunpack.c.h.b16 %v5821
        %v6374 = vunpack.c.l.b16 %v5822
        %v6375 = vunpack.c.h.b16 %v5822
        %v6376 = vunpack.c.l.b16 %v5823
        %v6377 = vunpack.c.h.b16 %v5823
        %v6378 = vunpack.c.l.b16 %v5824
        %v6379 = vunpack.c.h.b16 %v5824
        %v6380 = vunpack.c.l.b16 %v5825
        %v6381 = vunpack.c.h.b16 %v5825
        %v6382 = vunpack.c.l.b16 %v5826
        %v6383 = vunpack.c.h.b16 %v5826
        %v6384 = vunpack.c.l.b16 %v5827
        %v6385 = vunpack.c.h.b16 %v5827
        %v6386 = vunpack.c.l.b16 %v5828
        %v6387 = vunpack.c.h.b16 %v5828
        %v6388 = vunpack.c.l.b16 %v5829
        %v6389 = vunpack.c.h.b16 %v5829
        %v6390 = vunpack.c.l.b16 %v5830
        %v6391 = vunpack.c.h.b16 %v5830
        %v6392 = vunpack.c.l.b16 %v5831
        %v6393 = vunpack.c.h.b16 %v5831
        %v6394 = vunpack.c.l.b16 %v5832
        %v6395 = vunpack.c.h.b16 %v5832
        %v6396 = vunpack.c.l.b16 %v5833
        %v6397 = vunpack.c.h.b16 %v5833
        %v6398 = vunpack.c.l.b16 %v5834
        %v6399 = vunpack.c.h.b16 %v5834
        %v6400 = vunpack.c.l.b16 %v5835
        %v6401 = vunpack.c.h.b16 %v5835
        %v6402 = vunpack.c.l.b16 %v5836
        %v6403 = vunpack.c.h.b16 %v5836
        %v6404 = vunpack.c.l.b16 %v5837
        %v6405 = vunpack.c.h.b16 %v5837
        %v6406 = vunpack.c.l.b16 %v5838
        %v6407 = vunpack.c.h.b16 %v5838
        %v6408 = vunpack.c.l.b16 %v5839
        %v6409 = vunpack.c.h.b16 %v5839
        %v6410 = vunpack.c.l.b16 %v5840
        %v6411 = vunpack.c.h.b16 %v5840
        %v6412 = vunpack.c.l.b16 %v5841
        %v6413 = vunpack.c.h.b16 %v5841
        %v6414 = vunpack.c.l.b16 %v5842
        %v6415 = vunpack.c.h.b16 %v5842
        %v6416 = vunpack.c.l.b16 %v5843
        %v6417 = vunpack.c.h.b16 %v5843
        %v6418 = vunpack.c.l.b16 %v5844
        %v6419 = vunpack.c.h.b16 %v5844
        %v6420 = vunpack.c.l.b16 %v5845
        %v6421 = vunpack.c.h.b16 %v5845
        %v6422 = vunpack.c.l.b16 %v5846
        %v6423 = vunpack.c.h.b16 %v5846
        %v6424 = vunpack.c.l.b16 %v5847
        %v6425 = vunpack.c.h.b16 %v5847
        %v6426 = vunpack.c.l.b16 %v5848
        %v6427 = vunpack.c.h.b16 %v5848
        %v6428 = vunpack.c.l.b16 %v5849
        %v6429 = vunpack.c.h.b16 %v5849
        %v6430 = vunpack.c.l.b16 %v5850
        %v6431 = vunpack.c.h.b16 %v5850
        %v6432 = vunpack.c.l.b16 %v5851
        %v6433 = vunpack.c.h.b16 %v5851
        %v6434 = vunpack.c.l.b16 %v5852
        %v6435 = vunpack.c.h.b16 %v5852
        %v6436 = vunpack.c.l.b16 %v5853
        %v6437 = vunpack.c.h.b16 %v5853
        %v6438 = vunpack.c.l.b16 %v5854
        %v6439 = vunpack.c.h.b16 %v5854
        %v6440 = vunpack.c.l.b16 %v5855
        %v6441 = vunpack.c.h.b16 %v5855
        %v6442 = vunpack.c.l.b16 %v5856
        %v6443 = vunpack.c.h.b16 %v5856
        %v6444 = vunpack.c.l.b16 %v5857
        %v6445 = vunpack.c.h.b16 %v5857
        %v6446 = vunpack.c.l.b16 %v5858
        %v6447 = vunpack.c.h.b16 %v5858
        %v6448 = vunpack.c.l.b16 %v5859
        %v6449 = vunpack.c.h.b16 %v5859
        %v6450 = vunpack.c.l.b16 %v5860
        %v6451 = vunpack.c.h.b16 %v5860
        %v6452 = vunpack.c.l.b16 %v5861
        %v6453 = vunpack.c.h.b16 %v5861
        %v6454 = vunpack.c.l.b16 %v5862
        %v6455 = vunpack.c.h.b16 %v5862
        %v6456 = vunpack.c.l.b16 %v5863
        %v6457 = vunpack.c.h.b16 %v5863
        %v6458 = vunpack.c.l.b16 %v5864
        %v6459 = vunpack.c.h.b16 %v5864
        %v6460 = vunpack.c.l.b16 %v5865
        %v6461 = vunpack.c.h.b16 %v5865
        %v6462 = vunpack.c.l.b16 %v5866
        %v6463 = vunpack.c.h.b16 %v5866
        %v6464 = vunpack.c.l.b16 %v5867
        %v6465 = vunpack.c.h.b16 %v5867
        %v6466 = vunpack.c.l.b16 %v5868
        %v6467 = vunpack.c.h.b16 %v5868
        %v6468 = vunpack.c.l.b16 %v5869
        %v6469 = vunpack.c.h.b16 %v5869
        %v6470 = vunpack.c.l.b16 %v5870
        %v6471 = vunpack.c.h.b16 %v5870
        %v6472 = vunpack.c.l.b16 %v5871
        %v6473 = vunpack.c.h.b16 %v5871
        %v6474 = vunpack.c.l.b16 %v5872
        %v6475 = vunpack.c.h.b16 %v5872
        %v6476 = vunpack.c.l.b16 %v5873
        %v6477 = vunpack.c.h.b16 %v5873
        %v6478 = vunpack.c.l.b16 %v5874
        %v6479 = vunpack.c.h.b16 %v5874
        %v6480 = vunpack.c.l.b16 %v5875
        %v6481 = vunpack.c.h.b16 %v5875
        %v6482 = vunpack.c.l.b16 %v5876
        %v6483 = vunpack.c.h.b16 %v5876
        %v6484 = vunpack.c.l.b16 %v5877
        %v6485 = vunpack.c.h.b16 %v5877
        %v6486 = vpack.c.b16 %v6108, %v6102
        %v6487 = vpack.c.b16 %v6109, %v6103
        %v6488 = vpack.c.b16 %v6110, %v6104
        %v6489 = vpack.c.b16 %v6111, %v6105
        %v6490 = vpack.c.b16 %v6112, %v6106
        %v6491 = vpack.c.b16 %v6113, %v6107
        %v6492 = vpack.c.b16 %v6120, %v6114
        %v6493 = vpack.c.b16 %v6121, %v6115
        %v6494 = vpack.c.b16 %v6122, %v6116
        %v6495 = vpack.c.b16 %v6123, %v6117
        %v6496 = vpack.c.b16 %v6124, %v6118
        %v6497 = vpack.c.b16 %v6125, %v6119
        %v6498 = vpack.c.b16 %v6132, %v6126
        %v6499 = vpack.c.b16 %v6133, %v6127
        %v6500 = vpack.c.b16 %v6134, %v6128
        %v6501 = vpack.c.b16 %v6135, %v6129
        %v6502 = vpack.c.b16 %v6136, %v6130
        %v6503 = vpack.c.b16 %v6137, %v6131
        %v6504 = vpack.c.b16 %v6144, %v6138
        %v6505 = vpack.c.b16 %v6145, %v6139
        %v6506 = vpack.c.b16 %v6146, %v6140
        %v6507 = vpack.c.b16 %v6147, %v6141
        %v6508 = vpack.c.b16 %v6148, %v6142
        %v6509 = vpack.c.b16 %v6149, %v6143
        %v6510 = vpack.c.b16 %v6156, %v6150
        %v6511 = vpack.c.b16 %v6157, %v6151
        %v6512 = vpack.c.b16 %v6158, %v6152
        %v6513 = vpack.c.b16 %v6159, %v6153
        %v6514 = vpack.c.b16 %v6160, %v6154
        %v6515 = vpack.c.b16 %v6161, %v6155
        %v6516 = vpack.c.b16 %v6168, %v6162
        %v6517 = vpack.c.b16 %v6169, %v6163
        %v6518 = vpack.c.b16 %v6170, %v6164
        %v6519 = vpack.c.b16 %v6171, %v6165
        %v6520 = vpack.c.b16 %v6172, %v6166
        %v6521 = vpack.c.b16 %v6173, %v6167
        %v6522 = vpack.c.b16 %v6180, %v6174
        %v6523 = vpack.c.b16 %v6181, %v6175
        %v6524 = vpack.c.b16 %v6182, %v6176
        %v6525 = vpack.c.b16 %v6183, %v6177
        %v6526 = vpack.c.b16 %v6184, %v6178
        %v6527 = vpack.c.b16 %v6185, %v6179
        %v6528 = vpack.c.b16 %v6192, %v6186
        %v6529 = vpack.c.b16 %v6193, %v6187
        %v6530 = vpack.c.b16 %v6194, %v6188
        %v6531 = vpack.c.b16 %v6195, %v6189
        %v6532 = vpack.c.b16 %v6196, %v6190
        %v6533 = vpack.c.b16 %v6197, %v6191
        %v6534 = vpack.c.b16 %v6204, %v6198
        %v6535 = vpack.c.b16 %v6205, %v6199
        %v6536 = vpack.c.b16 %v6206, %v6200
        %v6537 = vpack.c.b16 %v6207, %v6201
        %v6538 = vpack.c.b16 %v6208, %v6202
        %v6539 = vpack.c.b16 %v6209, %v6203
        %v6540 = vpack.c.b16 %v6216, %v6210
        %v6541 = vpack.c.b16 %v6217, %v6211
        %v6542 = vpack.c.b16 %v6218, %v6212
        %v6543 = vpack.c.b16 %v6219, %v6213
        %v6544 = vpack.c.b16 %v6220, %v6214
        %v6545 = vpack.c.b16 %v6221, %v6215
        %v6546 = vpack.c.b16 %v6228, %v6222
        %v6547 = vpack.c.b16 %v6229, %v6223
        %v6548 = vpack.c.b16 %v6230, %v6224
        %v6549 = vpack.c.b16 %v6231, %v6225
        %v6550 = vpack.c.b16 %v6232, %v6226
        %v6551 = vpack.c.b16 %v6233, %v6227
        %v6552 = vpack.c.b16 %v6240, %v6234
        %v6553 = vpack.c.b16 %v6241, %v6235
        %v6554 = vpack.c.b16 %v6242, %v6236
        %v6555 = vpack.c.b16 %v6243, %v6237
        %v6556 = vpack.c.b16 %v6244, %v6238
        %v6557 = vpack.c.b16 %v6245, %v6239
        %v6558 = vpack.c.b16 %v6252, %v6246
        %v6559 = vpack.c.b16 %v6253, %v6247
        %v6560 = vpack.c.b16 %v6254, %v6248
        %v6561 = vpack.c.b16 %v6255, %v6249
        %v6562 = vpack.c.b16 %v6256, %v6250
        %v6563 = vpack.c.b16 %v6257, %v6251
        %v6564 = vpack.c.b16 %v6264, %v6258
        %v6565 = vpack.c.b16 %v6265, %v6259
        %v6566 = vpack.c.b16 %v6266, %v6260
        %v6567 = vpack.c.b16 %v6267, %v6261
        %v6568 = vpack.c.b16 %v6268, %v6262
        %v6569 = vpack.c.b16 %v6269, %v6263
        %v6570 = vpack.c.b16 %v6276, %v6270
        %v6571 = vpack.c.b16 %v6277, %v6271
        %v6572 = vpack.c.b16 %v6278, %v6272
        %v6573 = vpack.c.b16 %v6279, %v6273
        %v6574 = vpack.c.b16 %v6280, %v6274
        %v6575 = vpack.c.b16 %v6281, %v6275
        %v6576 = vpack.c.b16 %v6288, %v6282
        %v6577 = vpack.c.b16 %v6289, %v6283
        %v6578 = vpack.c.b16 %v6290, %v6284
        %v6579 = vpack.c.b16 %v6291, %v6285
        %v6580 = vpack.c.b16 %v6292, %v6286
        %v6581 = vpack.c.b16 %v6293, %v6287
        %v6582 = vpack.c.b16 %v6300, %v6294
        %v6583 = vpack.c.b16 %v6301, %v6295
        %v6584 = vpack.c.b16 %v6302, %v6296
        %v6585 = vpack.c.b16 %v6303, %v6297
        %v6586 = vpack.c.b16 %v6304, %v6298
        %v6587 = vpack.c.b16 %v6305, %v6299
        %v6588 = vpack.c.b16 %v6312, %v6306
        %v6589 = vpack.c.b16 %v6313, %v6307
        %v6590 = vpack.c.b16 %v6314, %v6308
        %v6591 = vpack.c.b16 %v6315, %v6309
        %v6592 = vpack.c.b16 %v6316, %v6310
        %v6593 = vpack.c.b16 %v6317, %v6311
        %v6594 = vpack.c.b16 %v6324, %v6318
        %v6595 = vpack.c.b16 %v6325, %v6319
        %v6596 = vpack.c.b16 %v6326, %v6320
        %v6597 = vpack.c.b16 %v6327, %v6321
        %v6598 = vpack.c.b16 %v6328, %v6322
        %v6599 = vpack.c.b16 %v6329, %v6323
        %v6600 = vpack.c.b16 %v6336, %v6330
        %v6601 = vpack.c.b16 %v6337, %v6331
        %v6602 = vpack.c.b16 %v6338, %v6332
        %v6603 = vpack.c.b16 %v6339, %v6333
        %v6604 = vpack.c.b16 %v6340, %v6334
        %v6605 = vpack.c.b16 %v6341, %v6335
        %v6606 = vpack.c.b16 %v6348, %v6342
        %v6607 = vpack.c.b16 %v6349, %v6343
        %v6608 = vpack.c.b16 %v6350, %v6344
        %v6609 = vpack.c.b16 %v6351, %v6345
        %v6610 = vpack.c.b16 %v6352, %v6346
        %v6611 = vpack.c.b16 %v6353, %v6347
        %v6612 = vpack.c.b16 %v6360, %v6354
        %v6613 = vpack.c.b16 %v6361, %v6355
        %v6614 = vpack.c.b16 %v6362, %v6356
        %v6615 = vpack.c.b16 %v6363, %v6357
        %v6616 = vpack.c.b16 %v6364, %v6358
        %v6617 = vpack.c.b16 %v6365, %v6359
        %v6618 = vpack.c.b16 %v6372, %v6366
        %v6619 = vpack.c.b16 %v6373, %v6367
        %v6620 = vpack.c.b16 %v6374, %v6368
        %v6621 = vpack.c.b16 %v6375, %v6369
        %v6622 = vpack.c.b16 %v6376, %v6370
        %v6623 = vpack.c.b16 %v6377, %v6371
        %v6624 = vpack.c.b16 %v6384, %v6378
        %v6625 = vpack.c.b16 %v6385, %v6379
        %v6626 = vpack.c.b16 %v6386, %v6380
        %v6627 = vpack.c.b16 %v6387, %v6381
        %v6628 = vpack.c.b16 %v6388, %v6382
        %v6629 = vpack.c.b16 %v6389, %v6383
        %v6630 = vpack.c.b16 %v6396, %v6390
        %v6631 = vpack.c.b16 %v6397, %v6391
        %v6632 = vpack.c.b16 %v6398, %v6392
        %v6633 = vpack.c.b16 %v6399, %v6393
        %v6634 = vpack.c.b16 %v6400, %v6394
        %v6635 = vpack.c.b16 %v6401, %v6395
        %v6636 = vpack.c.b16 %v6408, %v6402
        %v6637 = vpack.c.b16 %v6409, %v6403
        %v6638 = vpack.c.b16 %v6410, %v6404
        %v6639 = vpack.c.b16 %v6411, %v6405
        %v6640 = vpack.c.b16 %v6412, %v6406
        %v6641 = vpack.c.b16 %v6413, %v6407
        %v6642 = vpack.c.b16 %v6420, %v6414
        %v6643 = vpack.c.b16 %v6421, %v6415
        %v6644 = vpack.c.b16 %v6422, %v6416
        %v6645 = vpack.c.b16 %v6423, %v6417
        %v6646 = vpack.c.b16 %v6424, %v6418
        %v6647 = vpack.c.b16 %v6425, %v6419
        %v6648 = vpack.c.b16 %v6432, %v6426
        %v6649 = vpack.c.b16 %v6433, %v6427
        %v6650 = vpack.c.b16 %v6434, %v6428
        %v6651 = vpack.c.b16 %v6435, %v6429
        %v6652 = vpack.c.b16 %v6436, %v6430
        %v6653 = vpack.c.b16 %v6437, %v6431
        %v6654 = vpack.c.b16 %v6444, %v6438
        %v6655 = vpack.c.b16 %v6445, %v6439
        %v6656 = vpack.c.b16 %v6446, %v6440
        %v6657 = vpack.c.b16 %v6447, %v6441
        %v6658 = vpack.c.b16 %v6448, %v6442
        %v6659 = vpack.c.b16 %v6449, %v6443
        %v6660 = vpack.c.b16 %v6456, %v6450
        %v6661 = vpack.c.b16 %v6457, %v6451
        %v6662 = vpack.c.b16 %v6458, %v6452
        %v6663 = vpack.c.b16 %v6459, %v6453
        %v6664 = vpack.c.b16 %v6460, %v6454
        %v6665 = vpack.c.b16 %v6461, %v6455
        %v6666 = vpack.c.b16 %v6468, %v6462
        %v6667 = vpack.c.b16 %v6469, %v6463
        %v6668 = vpack.c.b16 %v6470, %v6464
        %v6669 = vpack.c.b16 %v6471, %v6465
        %v6670 = vpack.c.b16 %v6472, %v6466
        %v6671 = vpack.c.b16 %v6473, %v6467
        %v6672 = vpack.c.b16 %v6480, %v6474
        %v6673 = vpack.c.b16 %v6481, %v6475
        %v6674 = vpack.c.b16 %v6482, %v6476
        %v6675 = vpack.c.b16 %v6483, %v6477
        %v6676 = vpack.c.b16 %v6484, %v6478
        %v6677 = vpack.c.b16 %v6485, %v6479
        %6870 = vmatprep.subr.bf16.mxu0 %v6487
        %6871 = vmatpush1.bf16.msra.mxu0 %v6486
        %6872 = vmatprep.subr.bf16.mxu0 %v6493
        %6873 = vmatpush1.bf16.msra.mxu0 %v6492
        %6874 = vmatprep.subr.bf16.mxu0 %v6499
        %6875 = vmatpush1.bf16.msra.mxu0 %v6498
        %6876 = vmatprep.subr.bf16.mxu0 %v6505
        %6877 = vmatpush1.bf16.msra.mxu0 %v6504
        %6878 = vmatprep.subr.bf16.mxu0 %v6511
        %6879 = vmatpush1.bf16.msra.mxu0 %v6510
        %6880 = vmatprep.subr.bf16.mxu0 %v6517
        %6881 = vmatpush1.bf16.msra.mxu0 %v6516
        %6882 = vmatprep.subr.bf16.mxu0 %v6523
        %6883 = vmatpush1.bf16.msra.mxu0 %v6522
        %6884 = vmatprep.subr.bf16.mxu0 %v6529
        %6885 = vmatpush1.bf16.msra.mxu0 %v6528
        %6886 = vmatprep.subr.bf16.mxu0 %v6535
        %6887 = vmatpush1.bf16.msra.mxu0 %v6534
        %6888 = vmatprep.subr.bf16.mxu0 %v6541
        %6889 = vmatpush1.bf16.msra.mxu0 %v6540
        %6890 = vmatprep.subr.bf16.mxu0 %v6547
        %6891 = vmatpush1.bf16.msra.mxu0 %v6546
        %6892 = vmatprep.subr.bf16.mxu0 %v6553
        %6893 = vmatpush1.bf16.msra.mxu0 %v6552
        %6894 = vmatprep.subr.bf16.mxu0 %v6559
        %6895 = vmatpush1.bf16.msra.mxu0 %v6558
        %6896 = vmatprep.subr.bf16.mxu0 %v6565
        %6897 = vmatpush1.bf16.msra.mxu0 %v6564
        %6898 = vmatprep.subr.bf16.mxu0 %v6571
        %6899 = vmatpush1.bf16.msra.mxu0 %v6570
        %6900 = vmatprep.subr.bf16.mxu0 %v6577
        %6901 = vmatpush1.bf16.msra.mxu0 %v6576
        %6902 = vmatprep.mubr.bf16.mxu0 %v5676
        %6903 = vmatmul.mubr.bf16.gmra.mrb[0].mxu0 %v5672
        %v6904 = vpop.f32.mrb[0].mxu0
        %v6905 = vadd.f32 %v5883, %v6904
        %v6906 = vpop.f32.mrb[0].mxu0
        %v6907 = vadd.f32 %v5887, %v6906
        %v6908 = vpop.f32.mrb[0].mxu0
        %v6909 = vpop.f32.mrb[0].mxu0
        %6910 = vdwg.mxu0
        %6911 = vmatprep.subr.bf16.mxu0 %v6583
        %6912 = vmatpush1.bf16.msra.mxu0 %v6582
        %6913 = vmatprep.subr.bf16.mxu0 %v6589
        %6914 = vmatpush1.bf16.msra.mxu0 %v6588
        %6915 = vmatprep.subr.bf16.mxu0 %v6595
        %6916 = vmatpush1.bf16.msra.mxu0 %v6594
        %6917 = vmatprep.subr.bf16.mxu0 %v6601
        %6918 = vmatpush1.bf16.msra.mxu0 %v6600
        %6919 = vmatprep.subr.bf16.mxu0 %v6607
        %6920 = vmatpush1.bf16.msra.mxu0 %v6606
        %6921 = vmatprep.subr.bf16.mxu0 %v6613
        %6922 = vmatpush1.bf16.msra.mxu0 %v6612
        %6923 = vmatprep.subr.bf16.mxu0 %v6619
        %6924 = vmatpush1.bf16.msra.mxu0 %v6618
        %6925 = vmatprep.subr.bf16.mxu0 %v6625
        %6926 = vmatpush1.bf16.msra.mxu0 %v6624
        %6927 = vmatprep.subr.bf16.mxu0 %v6631
        %6928 = vmatpush1.bf16.msra.mxu0 %v6630
        %6929 = vmatprep.subr.bf16.mxu0 %v6637
        %6930 = vmatpush1.bf16.msra.mxu0 %v6636
        %6931 = vmatprep.subr.bf16.mxu0 %v6643
        %6932 = vmatpush1.bf16.msra.mxu0 %v6642
        %6933 = vmatprep.subr.bf16.mxu0 %v6649
        %6934 = vmatpush1.bf16.msra.mxu0 %v6648
        %6935 = vmatprep.subr.bf16.mxu0 %v6655
        %6936 = vmatpush1.bf16.msra.mxu0 %v6654
        %6937 = vmatprep.subr.bf16.mxu0 %v6661
        %6938 = vmatpush1.bf16.msra.mxu0 %v6660
        %6939 = vmatprep.subr.bf16.mxu0 %v6667
        %6940 = vmatpush1.bf16.msra.mxu0 %v6666
        %6941 = vmatprep.subr.bf16.mxu0 %v6673
        %6942 = vmatpush1.bf16.msra.mxu0 %v6672
        %6943 = vmatprep.mubr.bf16.mxu0 %v5684
        %6944 = vmatmul.mubr.bf16.gmra.mrb[0].mxu0 %v5680
        %v6945 = vpop.f32.mrb[0].mxu0
        %v6946 = vadd.f32 %v6905, %v6945
        %v6947 = vpop.f32.mrb[0].mxu0
        %v6948 = vadd.f32 %v6907, %v6947
        %v6949 = vpop.f32.mrb[0].mxu0
        %v6950 = vpop.f32.mrb[0].mxu0
        %6951 = vdwg.mxu0
        %6952 = vmatprep.subr.bf16.mxu0 %v6489
        %6953 = vmatpush1.bf16.msra.mxu0 %v6488
        %6954 = vmatprep.subr.bf16.mxu0 %v6495
        %6955 = vmatpush1.bf16.msra.mxu0 %v6494
        %6956 = vmatprep.subr.bf16.mxu0 %v6501
        %6957 = vmatpush1.bf16.msra.mxu0 %v6500
        %6958 = vmatprep.subr.bf16.mxu0 %v6507
        %6959 = vmatpush1.bf16.msra.mxu0 %v6506
        %6960 = vmatprep.subr.bf16.mxu0 %v6513
        %6961 = vmatpush1.bf16.msra.mxu0 %v6512
        %6962 = vmatprep.subr.bf16.mxu0 %v6519
        %6963 = vmatpush1.bf16.msra.mxu0 %v6518
        %6964 = vmatprep.subr.bf16.mxu0 %v6525
        %6965 = vmatpush1.bf16.msra.mxu0 %v6524
        %6966 = vmatprep.subr.bf16.mxu0 %v6531
        %6967 = vmatpush1.bf16.msra.mxu0 %v6530
        %6968 = vmatprep.subr.bf16.mxu0 %v6537
        %6969 = vmatpush1.bf16.msra.mxu0 %v6536
        %6970 = vmatprep.subr.bf16.mxu0 %v6543
        %6971 = vmatpush1.bf16.msra.mxu0 %v6542
        %6972 = vmatprep.subr.bf16.mxu0 %v6549
        %6973 = vmatpush1.bf16.msra.mxu0 %v6548
        %6974 = vmatprep.subr.bf16.mxu0 %v6555
        %6975 = vmatpush1.bf16.msra.mxu0 %v6554
        %6976 = vmatprep.subr.bf16.mxu0 %v6561
        %6977 = vmatpush1.bf16.msra.mxu0 %v6560
        %6978 = vmatprep.subr.bf16.mxu0 %v6567
        %6979 = vmatpush1.bf16.msra.mxu0 %v6566
        %6980 = vmatprep.subr.bf16.mxu0 %v6573
        %6981 = vmatpush1.bf16.msra.mxu0 %v6572
        %6982 = vmatprep.subr.bf16.mxu0 %v6579
        %6983 = vmatpush1.bf16.msra.mxu0 %v6578
        %6984 = vmatprep.mubr.bf16.mxu0 %v5676
        %6985 = vmatmul.mubr.bf16.gmra.mrb[0].mxu0 %v5672
        %v6986 = vpop.f32.mrb[0].mxu0
        %v6987 = vadd.f32 %v5891, %v6986
        %v6988 = vpop.f32.mrb[0].mxu0
        %v6989 = vadd.f32 %v5895, %v6988
        %v6990 = vpop.f32.mrb[0].mxu0
        %v6991 = vpop.f32.mrb[0].mxu0
        %6992 = vdwg.mxu0
        %6993 = vmatprep.subr.bf16.mxu0 %v6585
        %6994 = vmatpush1.bf16.msra.mxu0 %v6584
        %6995 = vmatprep.subr.bf16.mxu0 %v6591
        %6996 = vmatpush1.bf16.msra.mxu0 %v6590
        %6997 = vmatprep.subr.bf16.mxu0 %v6597
        %6998 = vmatpush1.bf16.msra.mxu0 %v6596
        %6999 = vmatprep.subr.bf16.mxu0 %v6603
        %7000 = vmatpush1.bf16.msra.mxu0 %v6602
        %7001 = vmatprep.subr.bf16.mxu0 %v6609
        %7002 = vmatpush1.bf16.msra.mxu0 %v6608
        %7003 = vmatprep.subr.bf16.mxu0 %v6615
        %7004 = vmatpush1.bf16.msra.mxu0 %v6614
        %7005 = vmatprep.subr.bf16.mxu0 %v6621
        %7006 = vmatpush1.bf16.msra.mxu0 %v6620
        %7007 = vmatprep.subr.bf16.mxu0 %v6627
        %7008 = vmatpush1.bf16.msra.mxu0 %v6626
        %7009 = vmatprep.subr.bf16.mxu0 %v6633
        %7010 = vmatpush1.bf16.msra.mxu0 %v6632
        %7011 = vmatprep.subr.bf16.mxu0 %v6639
        %7012 = vmatpush1.bf16.msra.mxu0 %v6638
        %7013 = vmatprep.subr.bf16.mxu0 %v6645
        %7014 = vmatpush1.bf16.msra.mxu0 %v6644
        %7015 = vmatprep.subr.bf16.mxu0 %v6651
        %7016 = vmatpush1.bf16.msra.mxu0 %v6650
        %7017 = vmatprep.subr.bf16.mxu0 %v6657
        %7018 = vmatpush1.bf16.msra.mxu0 %v6656
        %7019 = vmatprep.subr.bf16.mxu0 %v6663
        %7020 = vmatpush1.bf16.msra.mxu0 %v6662
        %7021 = vmatprep.subr.bf16.mxu0 %v6669
        %7022 = vmatpush1.bf16.msra.mxu0 %v6668
        %7023 = vmatprep.subr.bf16.mxu0 %v6675
        %7024 = vmatpush1.bf16.msra.mxu0 %v6674
        %7025 = vmatprep.mubr.bf16.mxu0 %v5684
        %7026 = vmatmul.mubr.bf16.gmra.mrb[0].mxu0 %v5680
        %v7027 = vpop.f32.mrb[0].mxu0
        %v7028 = vadd.f32 %v6987, %v7027
        %v7029 = vpop.f32.mrb[0].mxu0
        %v7030 = vadd.f32 %v6989, %v7029
        %v7031 = vpop.f32.mrb[0].mxu0
        %v7032 = vpop.f32.mrb[0].mxu0
        %7033 = vdwg.mxu0
        %7034 = vmatprep.subr.bf16.mxu0 %v6491
        %7035 = vmatpush1.bf16.msra.mxu0 %v6490
        %7036 = vmatprep.subr.bf16.mxu0 %v6497
        %7037 = vmatpush1.bf16.msra.mxu0 %v6496
        %7038 = vmatprep.subr.bf16.mxu0 %v6503
        %7039 = vmatpush1.bf16.msra.mxu0 %v6502
        %7040 = vmatprep.subr.bf16.mxu0 %v6509
        %7041 = vmatpush1.bf16.msra.mxu0 %v6508
        %7042 = vmatprep.subr.bf16.mxu0 %v6515
        %7043 = vmatpush1.bf16.msra.mxu0 %v6514
        %7044 = vmatprep.subr.bf16.mxu0 %v6521
        %7045 = vmatpush1.bf16.msra.mxu0 %v6520
        %7046 = vmatprep.subr.bf16.mxu0 %v6527
        %7047 = vmatpush1.bf16.msra.mxu0 %v6526
        %7048 = vmatprep.subr.bf16.mxu0 %v6533
        %7049 = vmatpush1.bf16.msra.mxu0 %v6532
        %7050 = vmatprep.subr.bf16.mxu0 %v6539
        %7051 = vmatpush1.bf16.msra.mxu0 %v6538
        %7052 = vmatprep.subr.bf16.mxu0 %v6545
        %7053 = vmatpush1.bf16.msra.mxu0 %v6544
        %7054 = vmatprep.subr.bf16.mxu0 %v6551
        %7055 = vmatpush1.bf16.msra.mxu0 %v6550
        %7056 = vmatprep.subr.bf16.mxu0 %v6557
        %7057 = vmatpush1.bf16.msra.mxu0 %v6556
        %7058 = vmatprep.subr.bf16.mxu0 %v6563
        %7059 = vmatpush1.bf16.msra.mxu0 %v6562
        %7060 = vmatprep.subr.bf16.mxu0 %v6569
        %7061 = vmatpush1.bf16.msra.mxu0 %v6568
        %7062 = vmatprep.subr.bf16.mxu0 %v6575
        %7063 = vmatpush1.bf16.msra.mxu0 %v6574
        %7064 = vmatprep.subr.bf16.mxu0 %v6581
        %7065 = vmatpush1.bf16.msra.mxu0 %v6580
        %7066 = vmatprep.mubr.bf16.mxu0 %v5676
        %7067 = vmatmul.mubr.bf16.gmra.mrb[0].mxu0 %v5672
        %v7068 = vpop.f32.mrb[0].mxu0
        %v7069 = vadd.f32 %v5899, %v7068
        %v7070 = vpop.f32.mrb[0].mxu0
        %v7071 = vadd.f32 %v5903, %v7070
        %v7072 = vpop.f32.mrb[0].mxu0
        %v7073 = vpop.f32.mrb[0].mxu0
        %7074 = vdwg.mxu0
        %7075 = vmatprep.subr.bf16.mxu0 %v6587
        %7076 = vmatpush1.bf16.msra.mxu0 %v6586
        %7077 = vmatprep.subr.bf16.mxu0 %v6593
        %7078 = vmatpush1.bf16.msra.mxu0 %v6592
        %7079 = vmatprep.subr.bf16.mxu0 %v6599
        %7080 = vmatpush1.bf16.msra.mxu0 %v6598
        %7081 = vmatprep.subr.bf16.mxu0 %v6605
        %7082 = vmatpush1.bf16.msra.mxu0 %v6604
        %7083 = vmatprep.subr.bf16.mxu0 %v6611
        %7084 = vmatpush1.bf16.msra.mxu0 %v6610
        %7085 = vmatprep.subr.bf16.mxu0 %v6617
        %7086 = vmatpush1.bf16.msra.mxu0 %v6616
        %7087 = vmatprep.subr.bf16.mxu0 %v6623
        %7088 = vmatpush1.bf16.msra.mxu0 %v6622
        %7089 = vmatprep.subr.bf16.mxu0 %v6629
        %7090 = vmatpush1.bf16.msra.mxu0 %v6628
        %7091 = vmatprep.subr.bf16.mxu0 %v6635
        %7092 = vmatpush1.bf16.msra.mxu0 %v6634
        %7093 = vmatprep.subr.bf16.mxu0 %v6641
        %7094 = vmatpush1.bf16.msra.mxu0 %v6640
        %7095 = vmatprep.subr.bf16.mxu0 %v6647
        %7096 = vmatpush1.bf16.msra.mxu0 %v6646
        %7097 = vmatprep.subr.bf16.mxu0 %v6653
        %7098 = vmatpush1.bf16.msra.mxu0 %v6652
        %7099 = vmatprep.subr.bf16.mxu0 %v6659
        %7100 = vmatpush1.bf16.msra.mxu0 %v6658
        %7101 = vmatprep.subr.bf16.mxu0 %v6665
        %7102 = vmatpush1.bf16.msra.mxu0 %v6664
        %7103 = vmatprep.subr.bf16.mxu0 %v6671
        %7104 = vmatpush1.bf16.msra.mxu0 %v6670
        %7105 = vmatprep.subr.bf16.mxu0 %v6677
        %7106 = vmatpush1.bf16.msra.mxu0 %v6676
        %7107 = vmatprep.mubr.bf16.mxu0 %v5684
        %7108 = vmatmul.mubr.bf16.gmra.mrb[0].mxu0 %v5680
        %v7109 = vpop.f32.mrb[0].mxu0
        %v7110 = vadd.f32 %v7069, %v7109
        %v7111 = vpop.f32.mrb[0].mxu0
        %v7112 = vadd.f32 %v7071, %v7111
        %v7113 = vpop.f32.mrb[0].mxu0
        %v7114 = vpop.f32.mrb[0].mxu0
        %7115 = vdwg.mxu0
        %v7116 = vadd.f32 %v6946, %v474
        %v7117 = vadd.f32 %v6948, %v475
        %v7118 = vadd.f32 %v7028, %v476
        %v7119 = vadd.f32 %v7030, %v477
        %v7120 = vadd.f32 %v7110, %v478
        %v7121 = vadd.f32 %v7112, %v479
        %v7122 = vadd.f32 %v7116, %v7117
        %v7123 = vadd.f32 %v7122, %v7118
        %v7124 = vadd.f32 %v7123, %v7119
        %v7125 = vadd.f32 %v7124, %v7120
        %v7126 = vadd.f32 %v7125, %v7121
        %7127 = vadd.xlane.f32.xlu0 %v7126
        %v7128 = vpop.xlane.xlu0 %7127
        %v7129 = vrcp.pop 768.0
        %v7130 = vmul.f32 %v7128, %v7129
        %v7131 = vsub.f32 %v7116, %v7130
        %v7132 = vsub.f32 %v7117, %v7130
        %v7133 = vsub.f32 %v7118, %v7130
        %v7134 = vsub.f32 %v7119, %v7130
        %v7135 = vsub.f32 %v7120, %v7130
        %v7136 = vsub.f32 %v7121, %v7130
        %v7137 = vmul.f32 %v7131, %v7131
        %v7138 = vmul.f32 %v7132, %v7132
        %v7139 = vmul.f32 %v7133, %v7133
        %v7140 = vmul.f32 %v7134, %v7134
        %v7141 = vmul.f32 %v7135, %v7135
        %v7142 = vmul.f32 %v7136, %v7136
        %v7143 = vadd.f32 %v7137, %v7138
        %v7144 = vadd.f32 %v7143, %v7139
        %v7145 = vadd.f32 %v7144, %v7140
        %v7146 = vadd.f32 %v7145, %v7141
        %v7147 = vadd.f32 %v7146, %v7142
        %7148 = vadd.xlane.f32.xlu0 %v7147
        %v7149 = vpop.xlane.xlu0 %7148
        %v7150 = vmul.f32 %v7149, %v7129
        %v7151 = vadd.f32 %v7150, 1e-05
        %v7152 = vrsqrt.pop %v7151
        %v7153 = vmul.f32 %v7131, %v7152
        %v7154 = vmul.f32 %v7132, %v7152
        %v7155 = vmul.f32 %v7133, %v7152
        %v7156 = vmul.f32 %v7134, %v7152
        %v7157 = vmul.f32 %v7135, %v7152
        %v7158 = vmul.f32 %v7136, %v7152
        %v7159 = vld [vmem:[#allocation13] sm:$0x3f]
        %v7161 = vlaneseq
        %v7162 = vshrl.u32 %v7161, 7
        %v7163 = vsub.s32 0, %v7162
        %v7164 = vrot.slane %v7159, %v7163
        %v7165 = vlaneseq
        %v7166 = vshrl.u32 %v7165, 7
        %v7167 = vsub.s32 1, %v7166
        %v7168 = vrot.slane %v7159, %v7167
        %v7169 = vlaneseq
        %v7170 = vshrl.u32 %v7169, 7
        %v7171 = vsub.s32 2, %v7170
        %v7172 = vrot.slane %v7159, %v7171
        %v7173 = vlaneseq
        %v7174 = vshrl.u32 %v7173, 7
        %v7175 = vsub.s32 3, %v7174
        %v7176 = vrot.slane %v7159, %v7175
        %v7177 = vlaneseq
        %v7178 = vshrl.u32 %v7177, 7
        %v7179 = vsub.s32 4, %v7178
        %v7180 = vrot.slane %v7159, %v7179
        %v7181 = vlaneseq
        %v7182 = vshrl.u32 %v7181, 7
        %v7183 = vsub.s32 5, %v7182
        %v7184 = vrot.slane %v7159, %v7183
        %v7191 = vmul.f32 %v7153, %v7164
        %v7192 = vmul.f32 %v7154, %v7168
        %v7193 = vmul.f32 %v7155, %v7172
        %v7194 = vmul.f32 %v7156, %v7176
        %v7195 = vmul.f32 %v7157, %v7180
        %v7196 = vmul.f32 %v7158, %v7184
        %v7197 = vld [vmem:[#allocation14] sm:$0x3f]
        %v7199 = vlaneseq
        %v7200 = vshrl.u32 %v7199, 7
        %v7201 = vsub.s32 0, %v7200
        %v7202 = vrot.slane %v7197, %v7201
        %v7203 = vlaneseq
        %v7204 = vshrl.u32 %v7203, 7
        %v7205 = vsub.s32 1, %v7204
        %v7206 = vrot.slane %v7197, %v7205
        %v7207 = vlaneseq
        %v7208 = vshrl.u32 %v7207, 7
        %v7209 = vsub.s32 2, %v7208
        %v7210 = vrot.slane %v7197, %v7209
        %v7211 = vlaneseq
        %v7212 = vshrl.u32 %v7211, 7
        %v7213 = vsub.s32 3, %v7212
        %v7214 = vrot.slane %v7197, %v7213
        %v7215 = vlaneseq
        %v7216 = vshrl.u32 %v7215, 7
        %v7217 = vsub.s32 4, %v7216
        %v7218 = vrot.slane %v7197, %v7217
        %v7219 = vlaneseq
        %v7220 = vshrl.u32 %v7219, 7
        %v7221 = vsub.s32 5, %v7220
        %v7222 = vrot.slane %v7197, %v7221
        %v7229 = vadd.f32 %v7191, %v7202
        %v7230 = vadd.f32 %v7192, %v7206
        %v7231 = vadd.f32 %v7193, %v7210
        %v7232 = vadd.f32 %v7194, %v7214
        %v7233 = vadd.f32 %v7195, %v7218
        %v7234 = vadd.f32 %v7196, %v7222
        %7235 = vst [vmem:[%s465] sm:$0xff] %v7229
        %7236 = vst [vmem:[%s465 + $0x8] sm:$0xff] %v7230
        %7237 = vst [vmem:[%s465 + $0x10] sm:$0xff] %v7231
        %7238 = vst [vmem:[%s465 + $0x18] sm:$0xff] %v7232
        %7239 = vst [vmem:[%s465 + $0x20] sm:$0xff] %v7233
        %7240 = vst [vmem:[%s465 + $0x28] sm:$0xff] %v7234
        %s7241 = sand.u32 %s222, 1
        %s7242 = scalar_lea.sflag [#allocation4], %s7241
        %s7243 = sand.u32 %s222, 1
        %s7244 = smul.addr %s7243, 48
        %s7245 = scalar_lea.vmem [#allocation16], %s7244
        %s7246 = sand.u32 %s248, 1
        %s7247 = scalar_lea.sflag [#allocation18], %s7246
        %s7248 = sand.u32 %s248, 1
        %s7249 = smul.addr %s7248, 32
        %s7250 = scalar_lea.vmem [#allocation17], %s7249
        // Predicated region
        $region85: #{tpu_custom_call.1} parent=51 // pred_check
          %p7251 = pneg %p232
        $region86: #{tpu_custom_call.1} parent=51 // pred_check_branch
          %7253 = sbr.rel (%p7251) target = $region88
        $region87: #{tpu_custom_call.1} parent=51 // pred_region
          %s7255 = ssub.s32 768, 768
          %7256 = vsyncadd %s7242, %s7255
          %s7257 = smul.addr %s36, 6
          %s7258 = smul.addr %s7257, 128
          %s7259 = scalar_lea.hbm %s8, %s7258
          %s7261 = sshll.u32 %s7245, 4
          %s7262 = int_to_ptr.vmem [resolvable:$true] %s7261
          %7264 = dma.vmem_to_hbm [thread:$0]  %s7262, 768, %s7259, %s7242
        $region88: #{tpu_custom_call.1} parent=51 // pred_fallthru
          _
        // Predicated region
        $region89: #{tpu_custom_call.1} parent=51 // pred_check
          %p7265 = pneg %p258
        $region90: #{tpu_custom_call.1} parent=51 // pred_check_branch
          %7267 = sbr.rel (%p7265) target = $region92
        $region91: #{tpu_custom_call.1} parent=51 // pred_region
          %s7269 = ssub.s32 512, 512
          %7270 = vsyncadd %s7247, %s7269
          %s7271 = smul.addr %s36, 8
          %s7272 = smul.addr %s7271, 64
          %s7273 = scalar_lea.hbm %s9, %s7272
          %s7274 = sshll.u32 %s7250, 4
          %s7275 = int_to_ptr.vmem [resolvable:$true] %s7274
          %7280 = dma.vmem_to_hbm [thread:$0]  %s7275, 512, %s7273, %s7247, 64, 64, 4
        $region92: #{tpu_custom_call.1} parent=51 // pred_fallthru
          _
      $region52: #{tpu_custom_call.1} parent=5 // pred_fallthru
        _
      %p7281 = scmp.le.s32.totalorder 2, %s31
      // Predicated region
      $region93: #{tpu_custom_call.1} parent=5 // pred_check
        %p7282 = pneg %p7281
      $region94: #{tpu_custom_call.1} parent=5 // pred_check_branch
        %7284 = sbr.rel (%p7282) target = $region96
      $region95: #{tpu_custom_call.1} parent=5 // pred_region
        %s7285 = ssub.s32 %s31, 2
        // Predicated region
        $region97: #{tpu_custom_call.1} parent=95 // pred_check
          %p7286 = pneg %p238
        $region98: #{tpu_custom_call.1} parent=95 // pred_check_branch
          %7288 = sbr.rel (%p7286) target = $region100
        $region99: #{tpu_custom_call.1} parent=95 // pred_region
          %s7289 = sand.u32 %s223, 1
          %s7290 = scalar_lea.sflag [#allocation4], %s7289
          %s7291 = sand.u32 %s223, 1
          %s7292 = smul.addr %s7291, 48
          %s7293 = scalar_lea.vmem [#allocation16], %s7292
          %7294 = dma.done %s7290, 768
        $region100: #{tpu_custom_call.1} parent=95 // pred_fallthru
          _
        // Predicated region
        $region101: #{tpu_custom_call.1} parent=95 // pred_check
          %p7295 = pneg %p264
        $region102: #{tpu_custom_call.1} parent=95 // pred_check_branch
          %7297 = sbr.rel (%p7295) target = $region104
        $region103: #{tpu_custom_call.1} parent=95 // pred_region
          %s7298 = sand.u32 %s249, 1
          %s7299 = scalar_lea.sflag [#allocation18], %s7298
          %s7300 = sand.u32 %s249, 1
          %s7301 = smul.addr %s7300, 32
          %s7302 = scalar_lea.vmem [#allocation17], %s7301
          %7303 = dma.done %s7299, 512
        $region104: #{tpu_custom_call.1} parent=95 // pred_fallthru
          _
      $region96: #{tpu_custom_call.1} parent=5 // pred_fallthru
        _
    $region6: #{tpu_custom_call.1} parent=1 // loop_footer
      %s35 = sadd.s32 1, %s31
    $region7: #{tpu_custom_call.1} parent=1 // loop_footer_branch
      %30 = sbr.rel target = $region3
    $region8: #{tpu_custom_call.1} parent=1 // loop_exit
      _
    %7304 = vsyncpa [#allocation3], 1
    %s7305 = scalar_lea.sflag [#allocation3], 1
    %7306 = vsyncpa %s7305, 1
    %7307 = vsyncpa [#allocation6], 1
    %s7308 = scalar_lea.sflag [#allocation6], 1
    %7309 = vsyncpa %s7308, 1
    %7310 = vsyncpa [#allocation9], 1
    %7311 = vsyncpa [#allocation12], 1
    %7312 = vsyncpa [#allocation15], 1
    %7313 = vsyncpa [#allocation4], 1
    %s7314 = scalar_lea.sflag [#allocation4], 1
    %7315 = vsyncpa %s7314, 1
    %7316 = vsyncpa [#allocation18], 1
    %s7317 = scalar_lea.sflag [#allocation18], 1
    %7318 = vsyncpa %s7317, 1

</llo_original>
